<compile_context>
chip_gen: v6e
topology: v6e:2x2x1
jax: 0.10.0
libtpu: 0.0.40
codegen_flags: <defaults>
</compile_context>

<pallas_src>
import numpy as np
import jax
import jax.numpy as jnp
from jax.experimental import pallas as pl
from jax.experimental.pallas import tpu as pltpu

POOL_OUT = 128               # fixed by nn.AdaptiveAvgPool2d((128, 128))
FC_IN = POOL_OUT * POOL_OUT  # 16384, fixed by nn.Linear(128*128, latent_dim)


def adaptive_avg_matrix(in_size: int, out_size: int) -> jnp.ndarray:
    """Row-stochastic matrix reproducing nn.AdaptiveAvgPool1d windowing exactly."""
    m = np.zeros((out_size, in_size), dtype=np.float32)
    for i in range(out_size):
        start = (i * in_size) // out_size
        end = -((-(i + 1) * in_size) // out_size)  # ceil((i+1)*in/out)
        m[i, start:end] = 1.0 / (end - start)
    return jnp.asarray(m)


# ------------------------- Pallas kernel 1: adaptive avg pool ------------------------- #
def _pool_kernel(x_ref, ph_ref, pwt_ref, o_ref):
    # x_ref: (1, H, W) f32, ph_ref: (128, H) f32, pwt_ref: (W, 128) f32, o_ref: (1,128,128) bf16
    xm = x_ref[0]                                   # (H, W)
    H, W = xm.shape
    if W >= H:
        # Contract the larger spatial dim (W) first: intermediate is (H, 128).
        tmp = jnp.dot(xm, pwt_ref[...], preferred_element_type=jnp.float32)      # (H, 128)
        pooled = jnp.dot(ph_ref[...], tmp, preferred_element_type=jnp.float32)   # (128, 128)
    else:
        tmp = jnp.dot(ph_ref[...], xm, preferred_element_type=jnp.float32)       # (128, W)
        pooled = jnp.dot(tmp, pwt_ref[...], preferred_element_type=jnp.float32)  # (128, 128)
    o_ref[0] = pooled.astype(o_ref.dtype)


def adaptive_pool(x, ph, pwt):
    B, H, W = x.shape
    # Double-buffered full-frame input + resident pooling matrices + bf16 output + headroom,
    # clamped to 64 MiB (smallest physical VMEM: v7x).  Frames beyond ~2800x2800 f32 would
    # require tiling the Ph @ x contraction; not needed at these sizes.
    est = 2 * 4 * (H * W) + 4 * (POOL_OUT * H + W * POOL_OUT) \
        + 2 * 2 * POOL_OUT * POOL_OUT + (8 << 20)
    vmem_limit = int(min(max(est, 32 << 20), 64 << 20))
    return pl.pallas_call(
        _pool_kernel,
        out_shape=jax.ShapeDtypeStruct((B, POOL_OUT, POOL_OUT), jnp.bfloat16),
        grid_spec=pltpu.PrefetchScalarGridSpec(
            num_scalar_prefetch=0,
            grid=(B,),
            in_specs=[
                pl.BlockSpec((1, H, W), lambda b: (b, 0, 0)),
                pl.BlockSpec((POOL_OUT, H), lambda b: (0, 0)),   # resident (constant index map)
                pl.BlockSpec((W, POOL_OUT), lambda b: (0, 0)),   # resident (constant index map)
            ],
            out_specs=pl.BlockSpec((1, POOL_OUT, POOL_OUT), lambda b: (b, 0, 0)),
        ),
        compiler_params=pltpu.CompilerParams(
            dimension_semantics=("parallel",),
            vmem_limit_bytes=vmem_limit,
        ),
    )(x, ph, pwt)


# ------------------------- Pallas kernel 2: fully-connected layer --------------------- #
def _fc_kernel(x_ref, w_ref, b_ref, o_ref):
    # x_ref: (B, K) bf16, w_ref: (1, K, tn) bf16, b_ref: (1, tn) f32, o_ref: (B, tn) f32.
    # Single full-K matmul per N tile: no accumulator scratch, bias fused into the store.
    o_ref[...] = (
        jnp.dot(x_ref[...], w_ref[0], preferred_element_type=jnp.float32) + b_ref[...]
    ).astype(o_ref.dtype)


def pack_fc_weight(w, tn=128):
    """Cast to bf16 and pre-tile to (N//tn, K, tn) so each weight block is fully contiguous."""
    K, N = w.shape
    if N % tn != 0:
        tn = N  # fall back to a single N tile
    wq = w.astype(jnp.bfloat16)
    return wq.reshape(K, N // tn, tn).transpose(1, 0, 2)


def fc(x_flat, w_packed, b):
    # x_flat: (B, K) bf16, w_packed: (N//tn, K, tn) bf16, b: (1, N) f32
    B, K = x_flat.shape
    n_tiles, Kw, tn = w_packed.shape
    assert Kw == K
    N = n_tiles * tn
    return pl.pallas_call(
        _fc_kernel,
        out_shape=jax.ShapeDtypeStruct((B, N), jnp.float32),
        grid_spec=pltpu.PrefetchScalarGridSpec(
            num_scalar_prefetch=0,
            grid=(n_tiles,),                                   # parallel over output tiles
            in_specs=[
                pl.BlockSpec((B, K), lambda n: (0, 0)),        # resident bf16 activations
                pl.BlockSpec((1, K, tn), lambda n: (n, 0, 0)), # contiguous 4 MiB weight tile
                pl.BlockSpec((1, tn), lambda n: (0, n)),
            ],
            out_specs=pl.BlockSpec((B, tn), lambda n: (0, n)),  # lane-dense (tn = 128)
        ),
        compiler_params=pltpu.CompilerParams(
            dimension_semantics=("parallel",),
        ),
    )(x_flat, w_packed, b)


# --------------------------------- Module wrapper -------------------------------------- #
@jax.jit
def spectrogram_encoder_forward(x, fc_w_packed, fc_b, ph, pwt):
    pooled = adaptive_pool(x, ph, pwt)             # (B, 128, 128) bf16
    flat = pooled.reshape(pooled.shape[0], -1)     # (B, 16384)  -- row-major, same as torch .view
    return fc(flat, fc_w_packed, fc_b)             # (B, latent_dim) f32


def reference_forward(x, fc_w_bf16, fc_b, ph, pwt):
    pooled = jnp.einsum("oh,bhw,wp->bop", ph, x, pwt,
                        precision=jax.lax.Precision.HIGHEST)
    flat = pooled.reshape(pooled.shape[0], -1).astype(jnp.bfloat16).astype(jnp.float32)
    return jnp.dot(flat, fc_w_bf16.astype(jnp.float32),
                   precision=jax.lax.Precision.HIGHEST) + fc_b


if __name__ == "__main__":
    B, H, W = 2, 256, 256
    latent_dim = 256

    key = jax.random.PRNGKey(0)
    kx, kw, kb = jax.random.split(key, 3)

    x = jax.random.normal(kx, (B, H, W), dtype=jnp.float32)

    # Deterministic parameter init (Linear(16384, latent_dim)), uniform like PyTorch default.
    bound = 1.0 / np.sqrt(FC_IN)
    fc_w = jax.random.uniform(kw, (FC_IN, latent_dim), jnp.float32, -bound, bound)
    fc_b = jax.random.uniform(kb, (1, latent_dim), jnp.float32, -bound, bound)

    # bf16 weight streaming (dominant HBM cost halved), pre-tiled for contiguous DMAs.
    fc_w_bf16 = fc_w.astype(jnp.bfloat16)
    fc_w_packed = pack_fc_weight(fc_w)

    # Exact adaptive-avg-pool matrices (handle any H, W, including non-divisible sizes).
    ph = adaptive_avg_matrix(H, POOL_OUT)           # (128, H)
    pwt = adaptive_avg_matrix(W, POOL_OUT).T        # (W, 128)

    out = spectrogram_encoder_forward(x, fc_w_packed, fc_b, ph, pwt)
    out = jax.block_until_ready(out)

    ref = reference_forward(x, fc_w_bf16, fc_b, ph, pwt)
    assert out.shape == (B, latent_dim)
    # bf16 activation/weight path: compare against a matching bf16 reference, loose tolerance.
    np.testing.assert_allclose(np.asarray(out), np.asarray(ref), rtol=2e-2, atol=2e-2)

    print("KERNEL_OK")
</pallas_src>

<mosaic_0001>
module attributes {stable_mosaic.version = 11 : i64} {
  func.func @_pool_kernel(%arg0: i32, %arg1: memref<1x256x256xf32, #tpu.memory_space<vmem>>, %arg2: memref<128x256xf32, #tpu.memory_space<vmem>>, %arg3: memref<256x128xf32, #tpu.memory_space<vmem>>, %arg4: memref<1x128x128xbf16, #tpu.memory_space<vmem>>) attributes {dimension_semantics = [#tpu.dimension_semantics<parallel>], iteration_bounds = array<i64: 2>, scalar_prefetch = 0 : i64, scratch_operands = 0 : i64, tpu.core_type = #tpu.core_type<tc>, window_params = [{transform_indices = @transform_0, window_bounds = array<i64: 1, 256, 256>}, {pipeline_mode = #tpu.pipeline_mode<synchronous>, transform_indices = @transform_1, window_bounds = array<i64: 128, 256>}, {pipeline_mode = #tpu.pipeline_mode<synchronous>, transform_indices = @transform_2, window_bounds = array<i64: 256, 128>}, {transform_indices = @transform_3, window_bounds = array<i64: 1, 128, 128>}]} {
    %c0 = arith.constant 0 : index
    %c0_0 = arith.constant 0 : index
    %c0_1 = arith.constant 0 : index
    %0 = vector.load %arg1[%c0, %c0_0, %c0_1] : memref<1x256x256xf32, #tpu.memory_space<vmem>>, vector<1x256x256xf32>
    %1 = vector.shape_cast %0 : vector<1x256x256xf32> to vector<256x256xf32>
    %c0_2 = arith.constant 0 : index
    %c0_3 = arith.constant 0 : index
    %2 = vector.load %arg3[%c0_2, %c0_3] : memref<256x128xf32, #tpu.memory_space<vmem>>, vector<256x128xf32>
    %cst = arith.constant dense<0.000000e+00> : vector<256x128xf32>
    %3 = tpu.matmul %1, %2, %cst {dimension_numbers = #tpu.dot_dimension_numbers<[1], [0], [0], [1], [0, 0, 1, 1], [], []>} : vector<256x256xf32>, vector<256x128xf32>, vector<256x128xf32> -> vector<256x128xf32>
    %c0_4 = arith.constant 0 : index
    %c0_5 = arith.constant 0 : index
    %4 = vector.load %arg2[%c0_4, %c0_5] : memref<128x256xf32, #tpu.memory_space<vmem>>, vector<128x256xf32>
    %cst_6 = arith.constant dense<0.000000e+00> : vector<128x128xf32>
    %5 = tpu.matmul %4, %3, %cst_6 {dimension_numbers = #tpu.dot_dimension_numbers<[1], [0], [0], [1], [0, 0, 1, 1], [], []>} : vector<128x256xf32>, vector<256x128xf32>, vector<128x128xf32> -> vector<128x128xf32>
    %6 = arith.truncf %5 : vector<128x128xf32> to vector<128x128xbf16>
    %c0_7 = arith.constant 0 : index
    %c0_8 = arith.constant 0 : index
    %c0_9 = arith.constant 0 : index
    %7 = vector.load %arg4[%c0_7, %c0_8, %c0_9] : memref<1x128x128xbf16, #tpu.memory_space<vmem>>, vector<1x128x128xbf16>
    %8 = vector.shape_cast %7 : vector<1x128x128xbf16> to vector<128x128xbf16>
    %9 = vector.shape_cast %6 : vector<128x128xbf16> to vector<1x128x128xbf16>
    tpu.vector_store %arg4[%c0_7, %c0_8, %c0_9], %9 {strides = array<i32>} : memref<1x128x128xbf16, #tpu.memory_space<vmem>>, vector<1x128x128xbf16>,
    return
  }
  func.func @transform_0(%arg0: i32) -> (i32, i32, i32) {
    %c0_i32 = arith.constant 0 : i32
    %c0_i32_0 = arith.constant 0 : i32
    %c0_i32_1 = arith.constant 0 : i32
    return %arg0, %c0_i32, %c0_i32_0 : i32, i32, i32
  }
  func.func @transform_1(%arg0: i32) -> (i32, i32) {
    %c0_i32 = arith.constant 0 : i32
    %c0_i32_0 = arith.constant 0 : i32
    %c0_i32_1 = arith.constant 0 : i32
    return %c0_i32, %c0_i32_0 : i32, i32
  }
  func.func @transform_2(%arg0: i32) -> (i32, i32) {
    %c0_i32 = arith.constant 0 : i32
    %c0_i32_0 = arith.constant 0 : i32
    %c0_i32_1 = arith.constant 0 : i32
    return %c0_i32, %c0_i32_0 : i32, i32
  }
  func.func @transform_3(%arg0: i32) -> (i32, i32, i32) {
    %c0_i32 = arith.constant 0 : i32
    %c0_i32_0 = arith.constant 0 : i32
    %c0_i32_1 = arith.constant 0 : i32
    return %arg0, %c0_i32, %c0_i32_0 : i32, i32, i32
  }
}

module attributes {stable_mosaic.version = 11 : i64} {
  func.func @_fc_kernel(%arg0: i32, %arg1: memref<2x16384xbf16, #tpu.memory_space<vmem>>, %arg2: memref<1x16384x128xbf16, #tpu.memory_space<vmem>>, %arg3: memref<1x128xf32, #tpu.memory_space<vmem>>, %arg4: memref<2x128xf32, #tpu.memory_space<vmem>>) attributes {dimension_semantics = [#tpu.dimension_semantics<parallel>], iteration_bounds = array<i64: 2>, scalar_prefetch = 0 : i64, scratch_operands = 0 : i64, tpu.core_type = #tpu.core_type<tc>, window_params = [{pipeline_mode = #tpu.pipeline_mode<synchronous>, transform_indices = @transform_0, window_bounds = array<i64: 2, 16384>}, {transform_indices = @transform_1, window_bounds = array<i64: 1, 16384, 128>}, {transform_indices = @transform_2, window_bounds = array<i64: 1, 128>}, {transform_indices = @transform_3, window_bounds = array<i64: 2, 128>}]} {
    %c0 = arith.constant 0 : index
    %c0_0 = arith.constant 0 : index
    %0 = vector.load %arg1[%c0, %c0_0] : memref<2x16384xbf16, #tpu.memory_space<vmem>>, vector<2x16384xbf16>
    %c0_1 = arith.constant 0 : index
    %c0_2 = arith.constant 0 : index
    %c0_3 = arith.constant 0 : index
    %1 = vector.load %arg2[%c0_1, %c0_2, %c0_3] : memref<1x16384x128xbf16, #tpu.memory_space<vmem>>, vector<1x16384x128xbf16>
    %2 = vector.shape_cast %1 : vector<1x16384x128xbf16> to vector<16384x128xbf16>
    %cst = arith.constant dense<0.000000e+00> : vector<2x128xf32>
    %3 = tpu.matmul %0, %2, %cst {dimension_numbers = #tpu.dot_dimension_numbers<[1], [0], [0], [1], [0, 0, 1, 1], [], []>} : vector<2x16384xbf16>, vector<16384x128xbf16>, vector<2x128xf32> -> vector<2x128xf32>
    %c0_4 = arith.constant 0 : index
    %c0_5 = arith.constant 0 : index
    %4 = vector.load %arg3[%c0_4, %c0_5] : memref<1x128xf32, #tpu.memory_space<vmem>>, vector<1x128xf32>
    %5 = vector.broadcast %4 : vector<1x128xf32> to vector<2x128xf32>
    %6 = arith.addf %3, %5 : vector<2x128xf32>
    %c0_6 = arith.constant 0 : index
    %c0_7 = arith.constant 0 : index
    %7 = vector.load %arg4[%c0_6, %c0_7] : memref<2x128xf32, #tpu.memory_space<vmem>>, vector<2x128xf32>
    tpu.vector_store %arg4[%c0_6, %c0_7], %6 {strides = array<i32>} : memref<2x128xf32, #tpu.memory_space<vmem>>, vector<2x128xf32>,
    return
  }
  func.func @transform_0(%arg0: i32) -> (i32, i32) {
    %c0_i32 = arith.constant 0 : i32
    %c0_i32_0 = arith.constant 0 : i32
    %c0_i32_1 = arith.constant 0 : i32
    return %c0_i32, %c0_i32_0 : i32, i32
  }
  func.func @transform_1(%arg0: i32) -> (i32, i32, i32) {
    %c0_i32 = arith.constant 0 : i32
    %c0_i32_0 = arith.constant 0 : i32
    %c0_i32_1 = arith.constant 0 : i32
    return %arg0, %c0_i32, %c0_i32_0 : i32, i32, i32
  }
  func.func @transform_2(%arg0: i32) -> (i32, i32) {
    %c0_i32 = arith.constant 0 : i32
    %c0_i32_0 = arith.constant 0 : i32
    return %c0_i32, %arg0 : i32, i32
  }
  func.func @transform_3(%arg0: i32) -> (i32, i32) {
    %c0_i32 = arith.constant 0 : i32
    %c0_i32_0 = arith.constant 0 : i32
    return %c0_i32, %arg0 : i32, i32
  }
}

</mosaic_0001>

<llo_original>
// kernel: spectrogram_encoder_forward.2
$region0: #{spectrogram_encoder_forward.2}
  #allocation0 [shape = 'u32[]', space=smem, size = 0x4, offset = 0x4, fixed_abs, tag = 'smem constant byte address 0x4 - core index']
  #allocation1 [shape = 'u32[144,128]{1,0:T(1,128)}', space=vmem, size = 0x12000, scoped, tag = 'internal scratch']
  %s0 = inlined_call_operand.hbm [shape: f32[2,256,256], index: 0, kind: input, shape index: {}]
  %s1 = inlined_call_operand.hbm [shape: f32[128,256], index: 1, kind: input, shape index: {}]
  %s2 = inlined_call_operand.hbm [shape: f32[256,128], index: 2, kind: input, shape index: {}]
  %s3 = inlined_call_operand.vmem [shape: bf16[2,128,128], index: 3, kind: output, shape index: {}]
  %s4 = sld [smem:[#allocation0]]
  $region57: #{spectrogram_encoder_forward.2} parent=0
    _
  %s6 = ssub.s32 1, %s4
  %s7 = scalar_select 0, %s6, %s4
  $region1: #{spectrogram_encoder_forward.2} parent=0
    #allocation2 [shape = 'u8[524288]{0}', space=vmem, size = 0x80000, scoped, tag = 'input window, operand 0']
    #allocation3 [shape = 's32[2]{0}', space=sflag, size = 0x8, scoped, tag = 'scoped memory for spectrogram_encoder_forward.2']
    #allocation4 [shape = 'u8[131072]{0}', space=vmem, size = 0x20000, scoped, tag = 'input window, operand 1, single buffered']
    #allocation5 [shape = 's32[1]{0}', space=sflag, size = 0x4, scoped, tag = 'scoped memory for spectrogram_encoder_forward.2']
    #allocation6 [shape = 'u8[131072]{0}', space=vmem, size = 0x20000, scoped, tag = 'input window, operand 2, single buffered']
    %8 = vsyncpa [#allocation3], 0
    %s9 = scalar_lea.sflag [#allocation3], 1
    %10 = vsyncpa %s9, 0
    %11 = vsyncpa [#allocation5], 0
    loop: start=0, step=1, limit=4
    $region2: #{spectrogram_encoder_forward.2} parent=1 // loop_pre_header
      _
    $region3: #{spectrogram_encoder_forward.2} parent=1 // loop_header
      %s13 = sphi 0, %s17
      %p14 = scmp.ge.s32.totalorder %s13, 4
      %s23 = sphi 0, %s25
      %s26 = sphi 0, %s23
      %s27 = sphi 0, %s26
      %s43 = sphi 0, %s27
      %s47 = sphi 0, %s47
      %s49 = sphi 0, %s47
      %s50 = sphi 0, %s49
      %s64 = sphi 0, %s50
      %s68 = sphi 0, %s68
      %s70 = sphi 0, %s68
      %s71 = sphi 0, %s70
      %s85 = sphi 0, %s71
      %s91 = sphi 0, %s93
      %s94 = sphi 0, %s91
      %s95 = sphi 0, %s94
      %s111 = sphi 0, %s95
    $region4: #{spectrogram_encoder_forward.2} parent=1 // loop_header_branch
      %16 = sbr.rel (%p14) target = $region8
    $region5: #{spectrogram_encoder_forward.2} parent=1 // loop_body
      %s18 = ssub.s32 %s13, 1
      %s19 = ssub.s32 %s13, 2
      %s20 = sadd.s32 %s13, 1
      %s21 = ssub.s32 %s13, %s20
      %p22 = scmp.eq.s32.totalorder %s21, 0
      %s24 = sadd.s32 %s23, 1
      %s25 = scalar_select %p22, %s23, %s24
      %p28 = pneg %p22
      %p29 = scmp.eq.s32.totalorder %s13, 1
      %p30 = por %p28, %p29
      %p31 = scmp.ne.s32.totalorder %s23, %s26
      %p32 = scmp.eq.s32.totalorder %s13, 0
      %p33 = por %p31, %p32
      %p34 = scmp.ne.s32.totalorder %s23, %s26
      %p35 = scmp.eq.s32.totalorder %s18, 1
      %p36 = por %p34, %p35
      %p37 = scmp.ne.s32.totalorder %s26, %s27
      %p38 = scmp.eq.s32.totalorder %s18, 0
      %p39 = por %p37, %p38
      %p40 = scmp.ne.s32.totalorder %s26, %s27
      %p41 = scmp.eq.s32.totalorder %s19, 1
      %p42 = por %p40, %p41
      %p44 = scmp.ne.s32.totalorder %s27, %s43
      %p45 = scmp.eq.s32.totalorder %s19, 0
      %p46 = por %p44, %p45
      %s48 = sadd.s32 %s47, 1
      %p51 = scmp.eq.s32.totalorder %s13, 1
      %p52 = scmp.ne.s32.totalorder %s47, %s49
      %p53 = scmp.eq.s32.totalorder %s13, 0
      %p54 = por %p52, %p53
      %p55 = scmp.ne.s32.totalorder %s47, %s49
      %p56 = scmp.eq.s32.totalorder %s18, 1
      %p57 = por %p55, %p56
      %p58 = scmp.ne.s32.totalorder %s49, %s50
      %p59 = scmp.eq.s32.totalorder %s18, 0
      %p60 = por %p58, %p59
      %p61 = scmp.ne.s32.totalorder %s49, %s50
      %p62 = scmp.eq.s32.totalorder %s19, 1
      %p63 = por %p61, %p62
      %p65 = scmp.ne.s32.totalorder %s50, %s64
      %p66 = scmp.eq.s32.totalorder %s19, 0
      %p67 = por %p65, %p66
      %s69 = sadd.s32 %s68, 1
      %p72 = scmp.eq.s32.totalorder %s13, 1
      %p73 = scmp.ne.s32.totalorder %s68, %s70
      %p74 = scmp.eq.s32.totalorder %s13, 0
      %p75 = por %p73, %p74
      %p76 = scmp.ne.s32.totalorder %s68, %s70
      %p77 = scmp.eq.s32.totalorder %s18, 1
      %p78 = por %p76, %p77
      %p79 = scmp.ne.s32.totalorder %s70, %s71
      %p80 = scmp.eq.s32.totalorder %s18, 0
      %p81 = por %p79, %p80
      %p82 = scmp.ne.s32.totalorder %s70, %s71
      %p83 = scmp.eq.s32.totalorder %s19, 1
      %p84 = por %p82, %p83
      %p86 = scmp.ne.s32.totalorder %s71, %s85
      %p87 = scmp.eq.s32.totalorder %s19, 0
      %p88 = por %p86, %p87
      %s89 = ssub.s32 %s13, %s20
      %p90 = scmp.eq.s32.totalorder %s89, 0
      %s92 = sadd.s32 %s91, 1
      %s93 = scalar_select %p90, %s91, %s92
      %p96 = pneg %p90
      %p97 = scmp.eq.s32.totalorder %s13, 1
      %p98 = por %p96, %p97
      %p99 = scmp.ne.s32.totalorder %s91, %s94
      %p100 = scmp.eq.s32.totalorder %s13, 0
      %p101 = por %p99, %p100
      %p102 = scmp.ne.s32.totalorder %s91, %s94
      %p103 = scmp.eq.s32.totalorder %s18, 1
      %p104 = por %p102, %p103
      %p105 = scmp.ne.s32.totalorder %s94, %s95
      %p106 = scmp.eq.s32.totalorder %s18, 0
      %p107 = por %p105, %p106
      %p108 = scmp.ne.s32.totalorder %s94, %s95
      %p109 = scmp.eq.s32.totalorder %s19, 1
      %p110 = por %p108, %p109
      %p112 = scmp.ne.s32.totalorder %s95, %s111
      %p113 = scmp.eq.s32.totalorder %s19, 0
      %p114 = por %p112, %p113
      %p115 = scmp.le.s32.totalorder 1, %s13
      %p116 = scmp.lt.s32.totalorder %s13, 3
      %p117 = pnand %p115, %p116
      %p118 = pneg %p117
      // Predicated region
      $region9: #{spectrogram_encoder_forward.2} parent=5 // pred_check
        _
      $region10: #{spectrogram_encoder_forward.2} parent=5 // pred_check_branch
        %120 = sbr.rel (%p117) target = $region12
      $region11: #{spectrogram_encoder_forward.2} parent=5 // pred_region
        %s121 = ssub.s32 %s13, 1
        // Predicated region
        $region13: #{spectrogram_encoder_forward.2} parent=11 // pred_check
          %p122 = pneg %p60
        $region14: #{spectrogram_encoder_forward.2} parent=11 // pred_check_branch
          %124 = sbr.rel (%p122) target = $region16
        $region15: #{spectrogram_encoder_forward.2} parent=11 // pred_region
          %s126 = ssub.s32 4096, 4096
          %127 = vsyncadd [#allocation5], %s126
          %s128 = sshll.u32 [#allocation4], 4
          %s129 = int_to_ptr.vmem [resolvable:$true] %s128
          %134 = dma.hbm_to_vmem [thread:$0]  %s1, 4096, %s129, [#allocation5], 256, 256, 16
        $region16: #{spectrogram_encoder_forward.2} parent=11 // pred_fallthru
          _
        // Predicated region
        $region17: #{spectrogram_encoder_forward.2} parent=11 // pred_check
          %p135 = pneg %p81
        $region18: #{spectrogram_encoder_forward.2} parent=11 // pred_check_branch
          %137 = sbr.rel (%p135) target = $region20
        $region19: #{spectrogram_encoder_forward.2} parent=11 // pred_region
          %s139 = ssub.s32 4096, 4096
          %140 = vsyncadd [#allocation5], %s139
          %s141 = sshll.u32 [#allocation6], 4
          %s142 = int_to_ptr.vmem [resolvable:$true] %s141
          %147 = dma.hbm_to_vmem [thread:$0]  %s2, 4096, %s142, [#allocation5], 128, 128, 8
        $region20: #{spectrogram_encoder_forward.2} parent=11 // pred_fallthru
          _
      $region12: #{spectrogram_encoder_forward.2} parent=5 // pred_fallthru
        _
      %p148 = scmp.lt.s32.totalorder %s13, 2
      // Predicated region
      $region21: #{spectrogram_encoder_forward.2} parent=5 // pred_check
        %p149 = pneg %p148
      $region22: #{spectrogram_encoder_forward.2} parent=5 // pred_check_branch
        %151 = sbr.rel (%p149) target = $region24
      $region23: #{spectrogram_encoder_forward.2} parent=5 // pred_region
        // Predicated region
        $region25: #{spectrogram_encoder_forward.2} parent=23 // pred_check
          %p152 = pneg %p33
        $region26: #{spectrogram_encoder_forward.2} parent=23 // pred_check_branch
          %154 = sbr.rel (%p152) target = $region28
        $region27: #{spectrogram_encoder_forward.2} parent=23 // pred_region
          %s155 = sand.u32 %s23, 1
          %s156 = scalar_lea.sflag [#allocation3], %s155
          %s157 = sand.u32 %s23, 1
          %s158 = smul.addr %s157, 512
          %s159 = scalar_lea.vmem [#allocation2], %s158
          %s161 = ssub.s32 8192, 8192
          %162 = vsyncadd %s156, %s161
          %s163 = smul.addr %s13, 64
          %s164 = smul.addr %s163, 128
          %s165 = scalar_lea.hbm %s0, %s164
          %s166 = sshll.u32 %s159, 4
          %s167 = int_to_ptr.vmem [resolvable:$true] %s166
          %172 = dma.hbm_to_vmem [thread:$0]  %s165, 8192, %s167, %s156, 256, 256, 16
        $region28: #{spectrogram_encoder_forward.2} parent=23 // pred_fallthru
          _
      $region24: #{spectrogram_encoder_forward.2} parent=5 // pred_fallthru
        _
      %p173 = scmp.le.s32.totalorder 1, %s13
      %p174 = scmp.lt.s32.totalorder %s13, 3
      %p175 = pnand %p173, %p174
      %p176 = pneg %p175
      // Predicated region
      $region29: #{spectrogram_encoder_forward.2} parent=5 // pred_check
        _
      $region30: #{spectrogram_encoder_forward.2} parent=5 // pred_check_branch
        %178 = sbr.rel (%p175) target = $region32
      $region31: #{spectrogram_encoder_forward.2} parent=5 // pred_region
        %s179 = ssub.s32 %s13, 1
        %s180 = sand.u32 %s26, 1
        %s181 = scalar_lea.sflag [#allocation3], %s180
        %s182 = sand.u32 %s26, 1
        %s183 = smul.addr %s182, 512
        %s184 = scalar_lea.vmem [#allocation2], %s183
        // Predicated region
        $region33: #{spectrogram_encoder_forward.2} parent=31 // pred_check
          %p185 = pneg %p39
        $region34: #{spectrogram_encoder_forward.2} parent=31 // pred_check_branch
          %187 = sbr.rel (%p185) target = $region36
        $region35: #{spectrogram_encoder_forward.2} parent=31 // pred_region
          %188 = dma.done %s181, 8192
        $region36: #{spectrogram_encoder_forward.2} parent=31 // pred_fallthru
          _
        // Predicated region
        $region37: #{spectrogram_encoder_forward.2} parent=31 // pred_check
          %p189 = pneg %p60
        $region38: #{spectrogram_encoder_forward.2} parent=31 // pred_check_branch
          %191 = sbr.rel (%p189) target = $region40
        $region39: #{spectrogram_encoder_forward.2} parent=31 // pred_region
          %192 = dma.done [#allocation5], 4096
        $region40: #{spectrogram_encoder_forward.2} parent=31 // pred_fallthru
          _
        // Predicated region
        $region41: #{spectrogram_encoder_forward.2} parent=31 // pred_check
          %p193 = pneg %p81
        $region42: #{spectrogram_encoder_forward.2} parent=31 // pred_check_branch
          %195 = sbr.rel (%p193) target = $region44
        $region43: #{spectrogram_encoder_forward.2} parent=31 // pred_region
          %196 = dma.done [#allocation5], 4096
        $region44: #{spectrogram_encoder_forward.2} parent=31 // pred_fallthru
          _
        %s197 = sand.u32 %s26, 1
        %s198 = scalar_lea.sflag [#allocation3], %s197
        %s199 = sand.u32 %s26, 1
        %s200 = smul.addr %s199, 512
        %s201 = scalar_lea.vmem [#allocation2], %s200
        %p202 = pneg %p39
        %p203 = pneg %p36
        %p204 = pneg %p60
        %p205 = pneg %p57
        %p206 = pneg %p81
        %p207 = pneg %p78
        %p208 = pneg %p107
        %p209 = pneg %p104
        %p210 = scmp.lt.s32.totalorder %s18, 1
        %s211 = scalar_select %p210, %s18, 1
        %s212 = smul.addr %s211, 16
        %s213 = smul.addr %s212, 4
        %s214 = scalar_lea.vmem %s3, %s213
        %p215 = scmp.lt.s32.totalorder %s18, 1
        %s216 = scalar_select %p215, %s18, 1
        %s217 = smul.addr %s216, 16
        %s218 = smul.addr %s217, 4
        %s219 = scalar_lea.vmem %s3, %s218
        %v220 = vld [vmem:[%s184] sm:$0xff]
        %v221 = vld [vmem:[%s184 + $0x8] sm:$0xff]
        %v222 = vld [vmem:[%s184 + $0x10] sm:$0xff]
        %v223 = vld [vmem:[%s184 + $0x18] sm:$0xff]
        %v224 = vld [vmem:[%s184 + $0x20] sm:$0xff]
        %v225 = vld [vmem:[%s184 + $0x28] sm:$0xff]
        %v226 = vld [vmem:[%s184 + $0x30] sm:$0xff]
        %v227 = vld [vmem:[%s184 + $0x38] sm:$0xff]
        %v228 = vld [vmem:[%s184 + $0x40] sm:$0xff]
        %v229 = vld [vmem:[%s184 + $0x48] sm:$0xff]
        %v230 = vld [vmem:[%s184 + $0x50] sm:$0xff]
        %v231 = vld [vmem:[%s184 + $0x58] sm:$0xff]
        %v232 = vld [vmem:[%s184 + $0x60] sm:$0xff]
        %v233 = vld [vmem:[%s184 + $0x68] sm:$0xff]
        %v234 = vld [vmem:[%s184 + $0x70] sm:$0xff]
        %v235 = vld [vmem:[%s184 + $0x78] sm:$0xff]
        %v236 = vld [vmem:[%s184 + $0x80] sm:$0xff]
        %v237 = vld [vmem:[%s184 + $0x88] sm:$0xff]
        %v238 = vld [vmem:[%s184 + $0x90] sm:$0xff]
        %v239 = vld [vmem:[%s184 + $0x98] sm:$0xff]
        %v240 = vld [vmem:[%s184 + $0xa0] sm:$0xff]
        %v241 = vld [vmem:[%s184 + $0xa8] sm:$0xff]
        %v242 = vld [vmem:[%s184 + $0xb0] sm:$0xff]
        %v243 = vld [vmem:[%s184 + $0xb8] sm:$0xff]
        %v244 = vld [vmem:[%s184 + $0xc0] sm:$0xff]
        %v245 = vld [vmem:[%s184 + $0xc8] sm:$0xff]
        %v246 = vld [vmem:[%s184 + $0xd0] sm:$0xff]
        %v247 = vld [vmem:[%s184 + $0xd8] sm:$0xff]
        %v248 = vld [vmem:[%s184 + $0xe0] sm:$0xff]
        %v249 = vld [vmem:[%s184 + $0xe8] sm:$0xff]
        %v250 = vld [vmem:[%s184 + $0xf0] sm:$0xff]
        %v251 = vld [vmem:[%s184 + $0xf8] sm:$0xff]
        %v252 = vld [vmem:[%s184 + $0x100] sm:$0xff]
        %v253 = vld [vmem:[%s184 + $0x108] sm:$0xff]
        %v254 = vld [vmem:[%s184 + $0x110] sm:$0xff]
        %v255 = vld [vmem:[%s184 + $0x118] sm:$0xff]
        %v256 = vld [vmem:[%s184 + $0x120] sm:$0xff]
        %v257 = vld [vmem:[%s184 + $0x128] sm:$0xff]
        %v258 = vld [vmem:[%s184 + $0x130] sm:$0xff]
        %v259 = vld [vmem:[%s184 + $0x138] sm:$0xff]
        %v260 = vld [vmem:[%s184 + $0x140] sm:$0xff]
        %v261 = vld [vmem:[%s184 + $0x148] sm:$0xff]
        %v262 = vld [vmem:[%s184 + $0x150] sm:$0xff]
        %v263 = vld [vmem:[%s184 + $0x158] sm:$0xff]
        %v264 = vld [vmem:[%s184 + $0x160] sm:$0xff]
        %v265 = vld [vmem:[%s184 + $0x168] sm:$0xff]
        %v266 = vld [vmem:[%s184 + $0x170] sm:$0xff]
        %v267 = vld [vmem:[%s184 + $0x178] sm:$0xff]
        %v268 = vld [vmem:[%s184 + $0x180] sm:$0xff]
        %v269 = vld [vmem:[%s184 + $0x188] sm:$0xff]
        %v270 = vld [vmem:[%s184 + $0x190] sm:$0xff]
        %v271 = vld [vmem:[%s184 + $0x198] sm:$0xff]
        %v272 = vld [vmem:[%s184 + $0x1a0] sm:$0xff]
        %v273 = vld [vmem:[%s184 + $0x1a8] sm:$0xff]
        %v274 = vld [vmem:[%s184 + $0x1b0] sm:$0xff]
        %v275 = vld [vmem:[%s184 + $0x1b8] sm:$0xff]
        %v276 = vld [vmem:[%s184 + $0x1c0] sm:$0xff]
        %v277 = vld [vmem:[%s184 + $0x1c8] sm:$0xff]
        %v278 = vld [vmem:[%s184 + $0x1d0] sm:$0xff]
        %v279 = vld [vmem:[%s184 + $0x1d8] sm:$0xff]
        %v280 = vld [vmem:[%s184 + $0x1e0] sm:$0xff]
        %v281 = vld [vmem:[%s184 + $0x1e8] sm:$0xff]
        %v282 = vld [vmem:[%s184 + $0x1f0] sm:$0xff]
        %v283 = vld [vmem:[%s184 + $0x1f8] sm:$0xff]
        %v284 = vld [vmem:[#allocation6] sm:$0xff]
        %v285 = vld [vmem:[#allocation6 + $0x8] sm:$0xff]
        %v286 = vld [vmem:[#allocation6 + $0x10] sm:$0xff]
        %v287 = vld [vmem:[#allocation6 + $0x18] sm:$0xff]
        %v288 = vld [vmem:[#allocation6 + $0x20] sm:$0xff]
        %v289 = vld [vmem:[#allocation6 + $0x28] sm:$0xff]
        %v290 = vld [vmem:[#allocation6 + $0x30] sm:$0xff]
        %v291 = vld [vmem:[#allocation6 + $0x38] sm:$0xff]
        %v292 = vld [vmem:[#allocation6 + $0x40] sm:$0xff]
        %v293 = vld [vmem:[#allocation6 + $0x48] sm:$0xff]
        %v294 = vld [vmem:[#allocation6 + $0x50] sm:$0xff]
        %v295 = vld [vmem:[#allocation6 + $0x58] sm:$0xff]
        %v296 = vld [vmem:[#allocation6 + $0x60] sm:$0xff]
        %v297 = vld [vmem:[#allocation6 + $0x68] sm:$0xff]
        %v298 = vld [vmem:[#allocation6 + $0x70] sm:$0xff]
        %v299 = vld [vmem:[#allocation6 + $0x78] sm:$0xff]
        %v300 = vld [vmem:[#allocation6 + $0x80] sm:$0xff]
        %v301 = vld [vmem:[#allocation6 + $0x88] sm:$0xff]
        %v302 = vld [vmem:[#allocation6 + $0x90] sm:$0xff]
        %v303 = vld [vmem:[#allocation6 + $0x98] sm:$0xff]
        %v304 = vld [vmem:[#allocation6 + $0xa0] sm:$0xff]
        %v305 = vld [vmem:[#allocation6 + $0xa8] sm:$0xff]
        %v306 = vld [vmem:[#allocation6 + $0xb0] sm:$0xff]
        %v307 = vld [vmem:[#allocation6 + $0xb8] sm:$0xff]
        %v308 = vld [vmem:[#allocation6 + $0xc0] sm:$0xff]
        %v309 = vld [vmem:[#allocation6 + $0xc8] sm:$0xff]
        %v310 = vld [vmem:[#allocation6 + $0xd0] sm:$0xff]
        %v311 = vld [vmem:[#allocation6 + $0xd8] sm:$0xff]
        %v312 = vld [vmem:[#allocation6 + $0xe0] sm:$0xff]
        %v313 = vld [vmem:[#allocation6 + $0xe8] sm:$0xff]
        %v314 = vld [vmem:[#allocation6 + $0xf0] sm:$0xff]
        %v315 = vld [vmem:[#allocation6 + $0xf8] sm:$0xff]
        %316 = vmatprep.subr.mxu0 0.0
        %317 = vmatpush1.msra.mxu0 %v299
        %318 = vmatprep.subr.mxu0 0.0
        %319 = vmatpush1.msra.mxu0 %v298
        %320 = vmatprep.subr.mxu0 0.0
        %321 = vmatpush1.msra.mxu0 %v297
        %322 = vmatprep.subr.mxu0 0.0
        %323 = vmatpush1.msra.mxu0 %v296
        %324 = vmatprep.subr.mxu0 0.0
        %325 = vmatpush1.msra.mxu0 %v295
        %326 = vmatprep.subr.mxu0 0.0
        %327 = vmatpush1.msra.mxu0 %v294
        %328 = vmatprep.subr.mxu0 0.0
        %329 = vmatpush1.msra.mxu0 %v293
        %330 = vmatprep.subr.mxu0 0.0
        %331 = vmatpush1.msra.mxu0 %v292
        %332 = vmatprep.subr.mxu0 0.0
        %333 = vmatpush1.msra.mxu0 %v291
        %334 = vmatprep.subr.mxu0 0.0
        %335 = vmatpush1.msra.mxu0 %v290
        %336 = vmatprep.subr.mxu0 0.0
        %337 = vmatpush1.msra.mxu0 %v289
        %338 = vmatprep.subr.mxu0 0.0
        %339 = vmatpush1.msra.mxu0 %v288
        %340 = vmatprep.subr.mxu0 0.0
        %341 = vmatpush1.msra.mxu0 %v287
        %342 = vmatprep.subr.mxu0 0.0
        %343 = vmatpush1.msra.mxu0 %v286
        %344 = vmatprep.subr.mxu0 0.0
        %345 = vmatpush1.msra.mxu0 %v285
        %346 = vmatprep.subr.mxu0 0.0
        %347 = vmatpush1.msra.mxu0 %v284
        %348 = vmatprep.subr.mxu0 0.0
        %349 = vmatpush2.msra.mxu0 %v315
        %350 = vmatprep.subr.mxu0 0.0
        %351 = vmatpush2.msra.mxu0 %v314
        %352 = vmatprep.subr.mxu0 0.0
        %353 = vmatpush2.msra.mxu0 %v313
        %354 = vmatprep.subr.mxu0 0.0
        %355 = vmatpush2.msra.mxu0 %v312
        %356 = vmatprep.subr.mxu0 0.0
        %357 = vmatpush2.msra.mxu0 %v311
        %358 = vmatprep.subr.mxu0 0.0
        %359 = vmatpush2.msra.mxu0 %v310
        %360 = vmatprep.subr.mxu0 0.0
        %361 = vmatpush2.msra.mxu0 %v309
        %362 = vmatprep.subr.mxu0 0.0
        %363 = vmatpush2.msra.mxu0 %v308
        %364 = vmatprep.subr.mxu0 0.0
        %365 = vmatpush2.msra.mxu0 %v307
        %366 = vmatprep.subr.mxu0 0.0
        %367 = vmatpush2.msra.mxu0 %v306
        %368 = vmatprep.subr.mxu0 0.0
        %369 = vmatpush2.msra.mxu0 %v305
        %370 = vmatprep.subr.mxu0 0.0
        %371 = vmatpush2.msra.mxu0 %v304
        %372 = vmatprep.subr.mxu0 0.0
        %373 = vmatpush2.msra.mxu0 %v303
        %374 = vmatprep.subr.mxu0 0.0
        %375 = vmatpush2.msra.mxu0 %v302
        %376 = vmatprep.subr.mxu0 0.0
        %377 = vmatpush2.msra.mxu0 %v301
        %378 = vmatprep.subr.mxu0 0.0
        %379 = vmatpush2.msra.mxu0 %v300
        %380 = vmatprep.mubr.f32.mxu0 %v221
        %381 = vmatmul.mubr.f32.gmra.mxu0 %v220
        %v382 = vpop.f32.mrf.mxu0
        %v383 = vadd.f32 0.0, %v382
        %v384 = vpop.f32.mrf.mxu0
        %385 = vmatprep.mubr.f32.mxu0 %v223
        %386 = vmatmul.mubr.f32.gmra.mxu0 %v222
        %v387 = vpop.f32.mrf.mxu0
        %v388 = vadd.f32 0.0, %v387
        %v389 = vpop.f32.mrf.mxu0
        %390 = vmatprep.mubr.f32.mxu0 %v225
        %391 = vmatmul.mubr.f32.gmra.mxu0 %v224
        %v392 = vpop.f32.mrf.mxu0
        %v393 = vadd.f32 0.0, %v392
        %v394 = vpop.f32.mrf.mxu0
        %395 = vmatprep.mubr.f32.mxu0 %v227
        %396 = vmatmul.mubr.f32.gmra.mxu0 %v226
        %v397 = vpop.f32.mrf.mxu0
        %v398 = vadd.f32 0.0, %v397
        %v399 = vpop.f32.mrf.mxu0
        %400 = vmatprep.mubr.f32.mxu0 %v229
        %401 = vmatmul.mubr.f32.gmra.mxu0 %v228
        %v402 = vpop.f32.mrf.mxu0
        %v403 = vadd.f32 0.0, %v402
        %v404 = vpop.f32.mrf.mxu0
        %405 = vmatprep.mubr.f32.mxu0 %v231
        %406 = vmatmul.mubr.f32.gmra.mxu0 %v230
        %v407 = vpop.f32.mrf.mxu0
        %v408 = vadd.f32 0.0, %v407
        %v409 = vpop.f32.mrf.mxu0
        %410 = vmatprep.mubr.f32.mxu0 %v233
        %411 = vmatmul.mubr.f32.gmra.mxu0 %v232
        %v412 = vpop.f32.mrf.mxu0
        %v413 = vadd.f32 0.0, %v412
        %v414 = vpop.f32.mrf.mxu0
        %415 = vmatprep.mubr.f32.mxu0 %v235
        %416 = vmatmul.mubr.f32.gmra.mxu0 %v234
        %v417 = vpop.f32.mrf.mxu0
        %v418 = vadd.f32 0.0, %v417
        %v419 = vpop.f32.mrf.mxu0
        %420 = vmatprep.mubr.f32.mxu0 %v237
        %421 = vmatmul.mubr.f32.gmra.mxu0 %v236
        %v422 = vpop.f32.mrf.mxu0
        %v423 = vadd.f32 0.0, %v422
        %v424 = vpop.f32.mrf.mxu0
        %425 = vmatprep.mubr.f32.mxu0 %v239
        %426 = vmatmul.mubr.f32.gmra.mxu0 %v238
        %v427 = vpop.f32.mrf.mxu0
        %v428 = vadd.f32 0.0, %v427
        %v429 = vpop.f32.mrf.mxu0
        %430 = vmatprep.mubr.f32.mxu0 %v241
        %431 = vmatmul.mubr.f32.gmra.mxu0 %v240
        %v432 = vpop.f32.mrf.mxu0
        %v433 = vadd.f32 0.0, %v432
        %v434 = vpop.f32.mrf.mxu0
        %435 = vmatprep.mubr.f32.mxu0 %v243
        %436 = vmatmul.mubr.f32.gmra.mxu0 %v242
        %v437 = vpop.f32.mrf.mxu0
        %v438 = vadd.f32 0.0, %v437
        %v439 = vpop.f32.mrf.mxu0
        %440 = vmatprep.mubr.f32.mxu0 %v245
        %441 = vmatmul.mubr.f32.gmra.mxu0 %v244
        %v442 = vpop.f32.mrf.mxu0
        %v443 = vadd.f32 0.0, %v442
        %v444 = vpop.f32.mrf.mxu0
        %445 = vmatprep.mubr.f32.mxu0 %v247
        %446 = vmatmul.mubr.f32.gmra.mxu0 %v246
        %v447 = vpop.f32.mrf.mxu0
        %v448 = vadd.f32 0.0, %v447
        %v449 = vpop.f32.mrf.mxu0
        %450 = vmatprep.mubr.f32.mxu0 %v249
        %451 = vmatmul.mubr.f32.gmra.mxu0 %v248
        %v452 = vpop.f32.mrf.mxu0
        %v453 = vadd.f32 0.0, %v452
        %v454 = vpop.f32.mrf.mxu0
        %455 = vmatprep.mubr.f32.mxu0 %v251
        %456 = vmatmul.mubr.f32.gmra.mxu0 %v250
        %v457 = vpop.f32.mrf.mxu0
        %v458 = vadd.f32 0.0, %v457
        %v459 = vpop.f32.mrf.mxu0
        %460 = vmatprep.mubr.f32.mxu0 %v253
        %461 = vmatmul.mubr.f32.gmra.mxu0 %v252
        %v462 = vpop.f32.mrf.mxu0
        %v463 = vadd.f32 0.0, %v462
        %v464 = vpop.f32.mrf.mxu0
        %465 = vmatprep.mubr.f32.mxu0 %v255
        %466 = vmatmul.mubr.f32.gmra.mxu0 %v254
        %v467 = vpop.f32.mrf.mxu0
        %v468 = vadd.f32 0.0, %v467
        %v469 = vpop.f32.mrf.mxu0
        %470 = vmatprep.mubr.f32.mxu0 %v257
        %471 = vmatmul.mubr.f32.gmra.mxu0 %v256
        %v472 = vpop.f32.mrf.mxu0
        %v473 = vadd.f32 0.0, %v472
        %v474 = vpop.f32.mrf.mxu0
        %475 = vmatprep.mubr.f32.mxu0 %v259
        %476 = vmatmul.mubr.f32.gmra.mxu0 %v258
        %v477 = vpop.f32.mrf.mxu0
        %v478 = vadd.f32 0.0, %v477
        %v479 = vpop.f32.mrf.mxu0
        %480 = vmatprep.mubr.f32.mxu0 %v261
        %481 = vmatmul.mubr.f32.gmra.mxu0 %v260
        %v482 = vpop.f32.mrf.mxu0
        %v483 = vadd.f32 0.0, %v482
        %v484 = vpop.f32.mrf.mxu0
        %485 = vmatprep.mubr.f32.mxu0 %v263
        %486 = vmatmul.mubr.f32.gmra.mxu0 %v262
        %v487 = vpop.f32.mrf.mxu0
        %v488 = vadd.f32 0.0, %v487
        %v489 = vpop.f32.mrf.mxu0
        %490 = vmatprep.mubr.f32.mxu0 %v265
        %491 = vmatmul.mubr.f32.gmra.mxu0 %v264
        %v492 = vpop.f32.mrf.mxu0
        %v493 = vadd.f32 0.0, %v492
        %v494 = vpop.f32.mrf.mxu0
        %495 = vmatprep.mubr.f32.mxu0 %v267
        %496 = vmatmul.mubr.f32.gmra.mxu0 %v266
        %v497 = vpop.f32.mrf.mxu0
        %v498 = vadd.f32 0.0, %v497
        %v499 = vpop.f32.mrf.mxu0
        %500 = vmatprep.mubr.f32.mxu0 %v269
        %501 = vmatmul.mubr.f32.gmra.mxu0 %v268
        %v502 = vpop.f32.mrf.mxu0
        %v503 = vadd.f32 0.0, %v502
        %v504 = vpop.f32.mrf.mxu0
        %505 = vmatprep.mubr.f32.mxu0 %v271
        %506 = vmatmul.mubr.f32.gmra.mxu0 %v270
        %v507 = vpop.f32.mrf.mxu0
        %v508 = vadd.f32 0.0, %v507
        %v509 = vpop.f32.mrf.mxu0
        %510 = vmatprep.mubr.f32.mxu0 %v273
        %511 = vmatmul.mubr.f32.gmra.mxu0 %v272
        %v512 = vpop.f32.mrf.mxu0
        %v513 = vadd.f32 0.0, %v512
        %v514 = vpop.f32.mrf.mxu0
        %515 = vmatprep.mubr.f32.mxu0 %v275
        %516 = vmatmul.mubr.f32.gmra.mxu0 %v274
        %v517 = vpop.f32.mrf.mxu0
        %v518 = vadd.f32 0.0, %v517
        %v519 = vpop.f32.mrf.mxu0
        %520 = vmatprep.mubr.f32.mxu0 %v277
        %521 = vmatmul.mubr.f32.gmra.mxu0 %v276
        %v522 = vpop.f32.mrf.mxu0
        %v523 = vadd.f32 0.0, %v522
        %v524 = vpop.f32.mrf.mxu0
        %525 = vmatprep.mubr.f32.mxu0 %v279
        %526 = vmatmul.mubr.f32.gmra.mxu0 %v278
        %v527 = vpop.f32.mrf.mxu0
        %v528 = vadd.f32 0.0, %v527
        %v529 = vpop.f32.mrf.mxu0
        %530 = vmatprep.mubr.f32.mxu0 %v281
        %531 = vmatmul.mubr.f32.gmra.mxu0 %v280
        %v532 = vpop.f32.mrf.mxu0
        %v533 = vadd.f32 0.0, %v532
        %v534 = vpop.f32.mrf.mxu0
        %535 = vmatprep.mubr.f32.mxu0 %v283
        %536 = vmatmul.mubr.f32.gmra.mxu0 %v282
        %v537 = vpop.f32.mrf.mxu0
        %v538 = vadd.f32 0.0, %v537
        %v539 = vpop.f32.mrf.mxu0
        %540 = vdwg.mxu0
        %v541 = vld [vmem:[#allocation4] sm:$0xff]
        %v542 = vld [vmem:[#allocation4 + $0x8] sm:$0xff]
        %v543 = vld [vmem:[#allocation4 + $0x10] sm:$0xff]
        %v544 = vld [vmem:[#allocation4 + $0x18] sm:$0xff]
        %v545 = vld [vmem:[#allocation4 + $0x20] sm:$0xff]
        %v546 = vld [vmem:[#allocation4 + $0x28] sm:$0xff]
        %v547 = vld [vmem:[#allocation4 + $0x30] sm:$0xff]
        %v548 = vld [vmem:[#allocation4 + $0x38] sm:$0xff]
        %v549 = vld [vmem:[#allocation4 + $0x40] sm:$0xff]
        %v550 = vld [vmem:[#allocation4 + $0x48] sm:$0xff]
        %v551 = vld [vmem:[#allocation4 + $0x50] sm:$0xff]
        %v552 = vld [vmem:[#allocation4 + $0x58] sm:$0xff]
        %v553 = vld [vmem:[#allocation4 + $0x60] sm:$0xff]
        %v554 = vld [vmem:[#allocation4 + $0x68] sm:$0xff]
        %v555 = vld [vmem:[#allocation4 + $0x70] sm:$0xff]
        %v556 = vld [vmem:[#allocation4 + $0x78] sm:$0xff]
        %v557 = vld [vmem:[#allocation4 + $0x80] sm:$0xff]
        %v558 = vld [vmem:[#allocation4 + $0x88] sm:$0xff]
        %v559 = vld [vmem:[#allocation4 + $0x90] sm:$0xff]
        %v560 = vld [vmem:[#allocation4 + $0x98] sm:$0xff]
        %v561 = vld [vmem:[#allocation4 + $0xa0] sm:$0xff]
        %v562 = vld [vmem:[#allocation4 + $0xa8] sm:$0xff]
        %v563 = vld [vmem:[#allocation4 + $0xb0] sm:$0xff]
        %v564 = vld [vmem:[#allocation4 + $0xb8] sm:$0xff]
        %v565 = vld [vmem:[#allocation4 + $0xc0] sm:$0xff]
        %v566 = vld [vmem:[#allocation4 + $0xc8] sm:$0xff]
        %v567 = vld [vmem:[#allocation4 + $0xd0] sm:$0xff]
        %v568 = vld [vmem:[#allocation4 + $0xd8] sm:$0xff]
        %v569 = vld [vmem:[#allocation4 + $0xe0] sm:$0xff]
        %v570 = vld [vmem:[#allocation4 + $0xe8] sm:$0xff]
        %v571 = vld [vmem:[#allocation4 + $0xf0] sm:$0xff]
        %v572 = vld [vmem:[#allocation4 + $0xf8] sm:$0xff]
        %573 = vmatprep.subr.mxu0 0.0
        %574 = vmatpush1.msra.mxu0 %v458
        %575 = vmatprep.subr.mxu0 0.0
        %576 = vmatpush1.msra.mxu0 %v453
        %577 = vmatprep.subr.mxu0 0.0
        %578 = vmatpush1.msra.mxu0 %v448
        %579 = vmatprep.subr.mxu0 0.0
        %580 = vmatpush1.msra.mxu0 %v443
        %581 = vmatprep.subr.mxu0 0.0
        %582 = vmatpush1.msra.mxu0 %v438
        %583 = vmatprep.subr.mxu0 0.0
        %584 = vmatpush1.msra.mxu0 %v433
        %585 = vmatprep.subr.mxu0 0.0
        %586 = vmatpush1.msra.mxu0 %v428
        %587 = vmatprep.subr.mxu0 0.0
        %588 = vmatpush1.msra.mxu0 %v423
        %589 = vmatprep.subr.mxu0 0.0
        %590 = vmatpush1.msra.mxu0 %v418
        %591 = vmatprep.subr.mxu0 0.0
        %592 = vmatpush1.msra.mxu0 %v413
        %593 = vmatprep.subr.mxu0 0.0
        %594 = vmatpush1.msra.mxu0 %v408
        %595 = vmatprep.subr.mxu0 0.0
        %596 = vmatpush1.msra.mxu0 %v403
        %597 = vmatprep.subr.mxu0 0.0
        %598 = vmatpush1.msra.mxu0 %v398
        %599 = vmatprep.subr.mxu0 0.0
        %600 = vmatpush1.msra.mxu0 %v393
        %601 = vmatprep.subr.mxu0 0.0
        %602 = vmatpush1.msra.mxu0 %v388
        %603 = vmatprep.subr.mxu0 0.0
        %604 = vmatpush1.msra.mxu0 %v383
        %605 = vmatprep.subr.mxu0 0.0
        %606 = vmatpush2.msra.mxu0 %v538
        %607 = vmatprep.subr.mxu0 0.0
        %608 = vmatpush2.msra.mxu0 %v533
        %609 = vmatprep.subr.mxu0 0.0
        %610 = vmatpush2.msra.mxu0 %v528
        %611 = vmatprep.subr.mxu0 0.0
        %612 = vmatpush2.msra.mxu0 %v523
        %613 = vmatprep.subr.mxu0 0.0
        %614 = vmatpush2.msra.mxu0 %v518
        %615 = vmatprep.subr.mxu0 0.0
        %616 = vmatpush2.msra.mxu0 %v513
        %617 = vmatprep.subr.mxu0 0.0
        %618 = vmatpush2.msra.mxu0 %v508
        %619 = vmatprep.subr.mxu0 0.0
        %620 = vmatpush2.msra.mxu0 %v503
        %621 = vmatprep.subr.mxu0 0.0
        %622 = vmatpush2.msra.mxu0 %v498
        %623 = vmatprep.subr.mxu0 0.0
        %624 = vmatpush2.msra.mxu0 %v493
        %625 = vmatprep.subr.mxu0 0.0
        %626 = vmatpush2.msra.mxu0 %v488
        %627 = vmatprep.subr.mxu0 0.0
        %628 = vmatpush2.msra.mxu0 %v483
        %629 = vmatprep.subr.mxu0 0.0
        %630 = vmatpush2.msra.mxu0 %v478
        %631 = vmatprep.subr.mxu0 0.0
        %632 = vmatpush2.msra.mxu0 %v473
        %633 = vmatprep.subr.mxu0 0.0
        %634 = vmatpush2.msra.mxu0 %v468
        %635 = vmatprep.subr.mxu0 0.0
        %636 = vmatpush2.msra.mxu0 %v463
        %637 = vmatprep.mubr.f32.mxu0 %v542
        %638 = vmatmul.mubr.f32.gmra.mxu0 %v541
        %v639 = vpop.f32.mrf.mxu0
        %v640 = vadd.f32 0.0, %v639
        %v641 = vpop.f32.mrf.mxu0
        %642 = vmatprep.mubr.f32.mxu0 %v544
        %643 = vmatmul.mubr.f32.gmra.mxu0 %v543
        %v644 = vpop.f32.mrf.mxu0
        %v645 = vadd.f32 0.0, %v644
        %v646 = vpop.f32.mrf.mxu0
        %647 = vmatprep.mubr.f32.mxu0 %v546
        %648 = vmatmul.mubr.f32.gmra.mxu0 %v545
        %v649 = vpop.f32.mrf.mxu0
        %v650 = vadd.f32 0.0, %v649
        %v651 = vpop.f32.mrf.mxu0
        %652 = vmatprep.mubr.f32.mxu0 %v548
        %653 = vmatmul.mubr.f32.gmra.mxu0 %v547
        %v654 = vpop.f32.mrf.mxu0
        %v655 = vadd.f32 0.0, %v654
        %v656 = vpop.f32.mrf.mxu0
        %657 = vmatprep.mubr.f32.mxu0 %v550
        %658 = vmatmul.mubr.f32.gmra.mxu0 %v549
        %v659 = vpop.f32.mrf.mxu0
        %v660 = vadd.f32 0.0, %v659
        %v661 = vpop.f32.mrf.mxu0
        %662 = vmatprep.mubr.f32.mxu0 %v552
        %663 = vmatmul.mubr.f32.gmra.mxu0 %v551
        %v664 = vpop.f32.mrf.mxu0
        %v665 = vadd.f32 0.0, %v664
        %v666 = vpop.f32.mrf.mxu0
        %667 = vmatprep.mubr.f32.mxu0 %v554
        %668 = vmatmul.mubr.f32.gmra.mxu0 %v553
        %v669 = vpop.f32.mrf.mxu0
        %v670 = vadd.f32 0.0, %v669
        %v671 = vpop.f32.mrf.mxu0
        %672 = vmatprep.mubr.f32.mxu0 %v556
        %673 = vmatmul.mubr.f32.gmra.mxu0 %v555
        %v674 = vpop.f32.mrf.mxu0
        %v675 = vadd.f32 0.0, %v674
        %v676 = vpop.f32.mrf.mxu0
        %677 = vmatprep.mubr.f32.mxu0 %v558
        %678 = vmatmul.mubr.f32.gmra.mxu0 %v557
        %v679 = vpop.f32.mrf.mxu0
        %v680 = vadd.f32 0.0, %v679
        %v681 = vpop.f32.mrf.mxu0
        %682 = vmatprep.mubr.f32.mxu0 %v560
        %683 = vmatmul.mubr.f32.gmra.mxu0 %v559
        %v684 = vpop.f32.mrf.mxu0
        %v685 = vadd.f32 0.0, %v684
        %v686 = vpop.f32.mrf.mxu0
        %687 = vmatprep.mubr.f32.mxu0 %v562
        %688 = vmatmul.mubr.f32.gmra.mxu0 %v561
        %v689 = vpop.f32.mrf.mxu0
        %v690 = vadd.f32 0.0, %v689
        %v691 = vpop.f32.mrf.mxu0
        %692 = vmatprep.mubr.f32.mxu0 %v564
        %693 = vmatmul.mubr.f32.gmra.mxu0 %v563
        %v694 = vpop.f32.mrf.mxu0
        %v695 = vadd.f32 0.0, %v694
        %v696 = vpop.f32.mrf.mxu0
        %697 = vmatprep.mubr.f32.mxu0 %v566
        %698 = vmatmul.mubr.f32.gmra.mxu0 %v565
        %v699 = vpop.f32.mrf.mxu0
        %v700 = vadd.f32 0.0, %v699
        %v701 = vpop.f32.mrf.mxu0
        %702 = vmatprep.mubr.f32.mxu0 %v568
        %703 = vmatmul.mubr.f32.gmra.mxu0 %v567
        %v704 = vpop.f32.mrf.mxu0
        %v705 = vadd.f32 0.0, %v704
        %v706 = vpop.f32.mrf.mxu0
        %707 = vmatprep.mubr.f32.mxu0 %v570
        %708 = vmatmul.mubr.f32.gmra.mxu0 %v569
        %v709 = vpop.f32.mrf.mxu0
        %v710 = vadd.f32 0.0, %v709
        %v711 = vpop.f32.mrf.mxu0
        %712 = vmatprep.mubr.f32.mxu0 %v572
        %713 = vmatmul.mubr.f32.gmra.mxu0 %v571
        %v714 = vpop.f32.mrf.mxu0
        %v715 = vadd.f32 0.0, %v714
        %v716 = vpop.f32.mrf.mxu0
        %717 = vdwg.mxu0
        %v718 = vpack.c.bf16 %v645, %v640
        %v719 = vpack.c.bf16 %v655, %v650
        %v720 = vpack.c.bf16 %v665, %v660
        %v721 = vpack.c.bf16 %v675, %v670
        %v722 = vpack.c.bf16 %v685, %v680
        %v723 = vpack.c.bf16 %v695, %v690
        %v724 = vpack.c.bf16 %v705, %v700
        %v725 = vpack.c.bf16 %v715, %v710
        %v734 = vunpack.c.l.b16 %v718
        %v735 = vunpack.c.h.b16 %v718
        %v736 = vunpack.c.l.b16 %v719
        %v737 = vunpack.c.h.b16 %v719
        %v738 = vunpack.c.l.b16 %v720
        %v739 = vunpack.c.h.b16 %v720
        %v740 = vunpack.c.l.b16 %v721
        %v741 = vunpack.c.h.b16 %v721
        %v742 = vunpack.c.l.b16 %v722
        %v743 = vunpack.c.h.b16 %v722
        %v744 = vunpack.c.l.b16 %v723
        %v745 = vunpack.c.h.b16 %v723
        %v746 = vunpack.c.l.b16 %v724
        %v747 = vunpack.c.h.b16 %v724
        %v748 = vunpack.c.l.b16 %v725
        %v749 = vunpack.c.h.b16 %v725
        %v750 = vpack.c.b16 %v734, %v734
        %v751 = vpack.c.b16 %v735, %v735
        %v752 = vpack.c.b16 %v736, %v736
        %v753 = vpack.c.b16 %v737, %v737
        %v754 = vpack.c.b16 %v738, %v738
        %v755 = vpack.c.b16 %v739, %v739
        %v756 = vpack.c.b16 %v740, %v740
        %v757 = vpack.c.b16 %v741, %v741
        %v758 = vpack.c.b16 %v742, %v742
        %v759 = vpack.c.b16 %v743, %v743
        %v760 = vpack.c.b16 %v744, %v744
        %v761 = vpack.c.b16 %v745, %v745
        %v762 = vpack.c.b16 %v746, %v746
        %v763 = vpack.c.b16 %v747, %v747
        %v764 = vpack.c.b16 %v748, %v748
        %v765 = vpack.c.b16 %v749, %v749
        %782 = vst [vmem:[%s219] sm:$0xf] %v750
        %783 = vst [vmem:[%s219 + $0x4] sm:$0xf] %v751
        %784 = vst [vmem:[%s219 + $0x8] sm:$0xf] %v752
        %785 = vst [vmem:[%s219 + $0xc] sm:$0xf] %v753
        %786 = vst [vmem:[%s219 + $0x10] sm:$0xf] %v754
        %787 = vst [vmem:[%s219 + $0x14] sm:$0xf] %v755
        %788 = vst [vmem:[%s219 + $0x18] sm:$0xf] %v756
        %789 = vst [vmem:[%s219 + $0x1c] sm:$0xf] %v757
        %790 = vst [vmem:[%s219 + $0x20] sm:$0xf] %v758
        %791 = vst [vmem:[%s219 + $0x24] sm:$0xf] %v759
        %792 = vst [vmem:[%s219 + $0x28] sm:$0xf] %v760
        %793 = vst [vmem:[%s219 + $0x2c] sm:$0xf] %v761
        %794 = vst [vmem:[%s219 + $0x30] sm:$0xf] %v762
        %795 = vst [vmem:[%s219 + $0x34] sm:$0xf] %v763
        %796 = vst [vmem:[%s219 + $0x38] sm:$0xf] %v764
        %797 = vst [vmem:[%s219 + $0x3c] sm:$0xf] %v765
        %p798 = scmp.lt.s32.totalorder %s18, 1
        %s799 = scalar_select %p798, %s18, 1
        %s800 = smul.addr %s799, 16
        %s801 = smul.addr %s800, 4
        %s802 = scalar_lea.vmem %s3, %s801
        // Predicated region
        $region45: #{spectrogram_encoder_forward.2} parent=31 // pred_check
          %p803 = pneg %p104
        $region46: #{spectrogram_encoder_forward.2} parent=31 // pred_check_branch
          %805 = sbr.rel (%p803) target = $region48
        $region47: #{spectrogram_encoder_forward.2} parent=31 // pred_region
          _
        $region48: #{spectrogram_encoder_forward.2} parent=31 // pred_fallthru
          _
      $region32: #{spectrogram_encoder_forward.2} parent=5 // pred_fallthru
        _
      %p806 = scmp.le.s32.totalorder 2, %s13
      // Predicated region
      $region49: #{spectrogram_encoder_forward.2} parent=5 // pred_check
        %p807 = pneg %p806
      $region50: #{spectrogram_encoder_forward.2} parent=5 // pred_check_branch
        %809 = sbr.rel (%p807) target = $region52
      $region51: #{spectrogram_encoder_forward.2} parent=5 // pred_region
        %s810 = ssub.s32 %s13, 2
        // Predicated region
        $region53: #{spectrogram_encoder_forward.2} parent=51 // pred_check
          %p811 = pneg %p110
        $region54: #{spectrogram_encoder_forward.2} parent=51 // pred_check_branch
          %813 = sbr.rel (%p811) target = $region56
        $region55: #{spectrogram_encoder_forward.2} parent=51 // pred_region
          %p814 = scmp.lt.s32.totalorder %s19, 1
          %s815 = scalar_select %p814, %s19, 1
          %s816 = smul.addr %s815, 16
          %s817 = smul.addr %s816, 4
          %s818 = scalar_lea.vmem %s3, %s817
        $region56: #{spectrogram_encoder_forward.2} parent=51 // pred_fallthru
          _
      $region52: #{spectrogram_encoder_forward.2} parent=5 // pred_fallthru
        _
    $region6: #{spectrogram_encoder_forward.2} parent=1 // loop_footer
      %s17 = sadd.s32 1, %s13
    $region7: #{spectrogram_encoder_forward.2} parent=1 // loop_footer_branch
      %12 = sbr.rel target = $region3
    $region8: #{spectrogram_encoder_forward.2} parent=1 // loop_exit
      _
    %819 = vsyncpa [#allocation3], 1
    %s820 = scalar_lea.sflag [#allocation3], 1
    %821 = vsyncpa %s820, 1
    %822 = vsyncpa [#allocation5], 1

// kernel: spectrogram_encoder_forward.3
$region0: #{spectrogram_encoder_forward.3}
  #allocation0 [shape = 'u32[]', space=smem, size = 0x4, offset = 0x4, fixed_abs, tag = 'smem constant byte address 0x4 - core index']
  #allocation1 [shape = 'u32[144,128]{1,0:T(1,128)}', space=vmem, size = 0x12000, scoped, tag = 'internal scratch']
  %s0 = inlined_call_operand.vmem [shape: bf16[2,16384], index: 0, kind: input, shape index: {}]
  %s1 = inlined_call_operand.hbm [shape: bf16[2,16384,128], index: 1, kind: input, shape index: {}]
  %s2 = inlined_call_operand.hbm [shape: f32[1,256], index: 2, kind: input, shape index: {}]
  %s3 = inlined_call_operand.hbm [shape: f32[2,256], index: 3, kind: output, shape index: {}]
  %s4 = sld [smem:[#allocation0]]
  $region53: #{spectrogram_encoder_forward.3} parent=0
    _
  %s6 = ssub.s32 1, %s4
  %s7 = scalar_select 0, %s6, %s4
  $region1: #{spectrogram_encoder_forward.3} parent=0
    #allocation2 [shape = 'u8[8388608]{0}', space=vmem, size = 0x800000, scoped, tag = 'input window, operand 1']
    #allocation3 [shape = 's32[2]{0}', space=sflag, size = 0x8, scoped, tag = 'scoped memory for spectrogram_encoder_forward.3']
    #allocation4 [shape = 's32[2]{0}', space=sflag, size = 0x8, scoped, tag = 'scoped memory for spectrogram_encoder_forward.3']
    #allocation5 [shape = 'u8[1024]{0}', space=vmem, size = 0x400, scoped, tag = 'input window, operand 2']
    #allocation6 [shape = 's32[2]{0}', space=sflag, size = 0x8, scoped, tag = 'scoped memory for spectrogram_encoder_forward.3']
    #allocation7 [shape = 'u8[2048]{0}', space=vmem, size = 0x800, scoped, tag = 'output window, operand 0']
    %8 = vsyncpa [#allocation3], 0
    %s9 = scalar_lea.sflag [#allocation3], 1
    %10 = vsyncpa %s9, 0
    %11 = vsyncpa [#allocation6], 0
    %s12 = scalar_lea.sflag [#allocation6], 1
    %13 = vsyncpa %s12, 0
    %14 = vsyncpa [#allocation4], 0
    %s15 = scalar_lea.sflag [#allocation4], 1
    %16 = vsyncpa %s15, 0
    loop: start=0, step=1, limit=4
    $region2: #{spectrogram_encoder_forward.3} parent=1 // loop_pre_header
      _
    $region3: #{spectrogram_encoder_forward.3} parent=1 // loop_header
      %s18 = sphi 0, %s22
      %p19 = scmp.ge.s32.totalorder %s18, 4
      %s26 = sphi 0, %s26
      %s28 = sphi 0, %s26
      %s29 = sphi 0, %s28
      %s43 = sphi 0, %s29
      %s49 = sphi 0, %s51
      %s52 = sphi 0, %s49
      %s53 = sphi 0, %s52
      %s69 = sphi 0, %s53
      %s75 = sphi 0, %s77
      %s78 = sphi 0, %s75
      %s79 = sphi 0, %s78
      %s95 = sphi 0, %s79
      %s101 = sphi 0, %s103
      %s104 = sphi 0, %s101
      %s105 = sphi 0, %s104
      %s121 = sphi 0, %s105
    $region4: #{spectrogram_encoder_forward.3} parent=1 // loop_header_branch
      %21 = sbr.rel (%p19) target = $region8
    $region5: #{spectrogram_encoder_forward.3} parent=1 // loop_body
      %s23 = ssub.s32 %s18, 1
      %s24 = ssub.s32 %s18, 2
      %s25 = sadd.s32 %s18, 1
      %s27 = sadd.s32 %s26, 1
      %p30 = scmp.eq.s32.totalorder %s18, 1
      %p31 = scmp.ne.s32.totalorder %s26, %s28
      %p32 = scmp.eq.s32.totalorder %s18, 0
      %p33 = por %p31, %p32
      %p34 = scmp.ne.s32.totalorder %s26, %s28
      %p35 = scmp.eq.s32.totalorder %s23, 1
      %p36 = por %p34, %p35
      %p37 = scmp.ne.s32.totalorder %s28, %s29
      %p38 = scmp.eq.s32.totalorder %s23, 0
      %p39 = por %p37, %p38
      %p40 = scmp.ne.s32.totalorder %s28, %s29
      %p41 = scmp.eq.s32.totalorder %s24, 1
      %p42 = por %p40, %p41
      %p44 = scmp.ne.s32.totalorder %s29, %s43
      %p45 = scmp.eq.s32.totalorder %s24, 0
      %p46 = por %p44, %p45
      %s47 = ssub.s32 %s18, %s25
      %p48 = scmp.eq.s32.totalorder %s47, 0
      %s50 = sadd.s32 %s49, 1
      %s51 = scalar_select %p48, %s49, %s50
      %p54 = pneg %p48
      %p55 = scmp.eq.s32.totalorder %s18, 1
      %p56 = por %p54, %p55
      %p57 = scmp.ne.s32.totalorder %s49, %s52
      %p58 = scmp.eq.s32.totalorder %s18, 0
      %p59 = por %p57, %p58
      %p60 = scmp.ne.s32.totalorder %s49, %s52
      %p61 = scmp.eq.s32.totalorder %s23, 1
      %p62 = por %p60, %p61
      %p63 = scmp.ne.s32.totalorder %s52, %s53
      %p64 = scmp.eq.s32.totalorder %s23, 0
      %p65 = por %p63, %p64
      %p66 = scmp.ne.s32.totalorder %s52, %s53
      %p67 = scmp.eq.s32.totalorder %s24, 1
      %p68 = por %p66, %p67
      %p70 = scmp.ne.s32.totalorder %s53, %s69
      %p71 = scmp.eq.s32.totalorder %s24, 0
      %p72 = por %p70, %p71
      %s73 = ssub.s32 %s18, %s25
      %p74 = scmp.eq.s32.totalorder %s73, 0
      %s76 = sadd.s32 %s75, 1
      %s77 = scalar_select %p74, %s75, %s76
      %p80 = pneg %p74
      %p81 = scmp.eq.s32.totalorder %s18, 1
      %p82 = por %p80, %p81
      %p83 = scmp.ne.s32.totalorder %s75, %s78
      %p84 = scmp.eq.s32.totalorder %s18, 0
      %p85 = por %p83, %p84
      %p86 = scmp.ne.s32.totalorder %s75, %s78
      %p87 = scmp.eq.s32.totalorder %s23, 1
      %p88 = por %p86, %p87
      %p89 = scmp.ne.s32.totalorder %s78, %s79
      %p90 = scmp.eq.s32.totalorder %s23, 0
      %p91 = por %p89, %p90
      %p92 = scmp.ne.s32.totalorder %s78, %s79
      %p93 = scmp.eq.s32.totalorder %s24, 1
      %p94 = por %p92, %p93
      %p96 = scmp.ne.s32.totalorder %s79, %s95
      %p97 = scmp.eq.s32.totalorder %s24, 0
      %p98 = por %p96, %p97
      %s99 = ssub.s32 %s18, %s25
      %p100 = scmp.eq.s32.totalorder %s99, 0
      %s102 = sadd.s32 %s101, 1
      %s103 = scalar_select %p100, %s101, %s102
      %p106 = pneg %p100
      %p107 = scmp.eq.s32.totalorder %s18, 1
      %p108 = por %p106, %p107
      %p109 = scmp.ne.s32.totalorder %s101, %s104
      %p110 = scmp.eq.s32.totalorder %s18, 0
      %p111 = por %p109, %p110
      %p112 = scmp.ne.s32.totalorder %s101, %s104
      %p113 = scmp.eq.s32.totalorder %s23, 1
      %p114 = por %p112, %p113
      %p115 = scmp.ne.s32.totalorder %s104, %s105
      %p116 = scmp.eq.s32.totalorder %s23, 0
      %p117 = por %p115, %p116
      %p118 = scmp.ne.s32.totalorder %s104, %s105
      %p119 = scmp.eq.s32.totalorder %s24, 1
      %p120 = por %p118, %p119
      %p122 = scmp.ne.s32.totalorder %s105, %s121
      %p123 = scmp.eq.s32.totalorder %s24, 0
      %p124 = por %p122, %p123
      %p125 = scmp.le.s32.totalorder 1, %s18
      %p126 = scmp.lt.s32.totalorder %s18, 3
      %p127 = pnand %p125, %p126
      %p128 = pneg %p127
      // Predicated region
      $region9: #{spectrogram_encoder_forward.3} parent=5 // pred_check
        _
      $region10: #{spectrogram_encoder_forward.3} parent=5 // pred_check_branch
        %130 = sbr.rel (%p127) target = $region12
      $region11: #{spectrogram_encoder_forward.3} parent=5 // pred_region
        %s131 = ssub.s32 %s18, 1
        // Predicated region
        $region13: #{spectrogram_encoder_forward.3} parent=11 // pred_check
          %p132 = pneg %p39
        $region14: #{spectrogram_encoder_forward.3} parent=11 // pred_check_branch
          %134 = sbr.rel (%p132) target = $region16
        $region15: #{spectrogram_encoder_forward.3} parent=11 // pred_region
          _
        $region16: #{spectrogram_encoder_forward.3} parent=11 // pred_fallthru
          _
      $region12: #{spectrogram_encoder_forward.3} parent=5 // pred_fallthru
        _
      %p135 = scmp.lt.s32.totalorder %s18, 2
      // Predicated region
      $region17: #{spectrogram_encoder_forward.3} parent=5 // pred_check
        %p136 = pneg %p135
      $region18: #{spectrogram_encoder_forward.3} parent=5 // pred_check_branch
        %138 = sbr.rel (%p136) target = $region20
      $region19: #{spectrogram_encoder_forward.3} parent=5 // pred_region
        // Predicated region
        $region21: #{spectrogram_encoder_forward.3} parent=19 // pred_check
          %p139 = pneg %p59
        $region22: #{spectrogram_encoder_forward.3} parent=19 // pred_check_branch
          %141 = sbr.rel (%p139) target = $region24
        $region23: #{spectrogram_encoder_forward.3} parent=19 // pred_region
          %s142 = sand.u32 %s49, 1
          %s143 = scalar_lea.sflag [#allocation3], %s142
          %s144 = sand.u32 %s49, 1
          %s145 = smul.addr %s144, 8192
          %s146 = scalar_lea.vmem [#allocation2], %s145
          %s148 = ssub.s32 131072, 131072
          %149 = vsyncadd %s143, %s148
          %s150 = smul.addr %s18, 2048
          %s151 = smul.addr %s150, 64
          %s152 = scalar_lea.hbm %s1, %s151
          %s153 = sshll.u32 %s146, 4
          %s154 = int_to_ptr.vmem [resolvable:$true] %s153
          %159 = dma.hbm_to_vmem [thread:$0]  %s152, 131072, %s154, %s143, 64, 64, 4
        $region24: #{spectrogram_encoder_forward.3} parent=19 // pred_fallthru
          _
        // Predicated region
        $region25: #{spectrogram_encoder_forward.3} parent=19 // pred_check
          %p160 = pneg %p85
        $region26: #{spectrogram_encoder_forward.3} parent=19 // pred_check_branch
          %162 = sbr.rel (%p160) target = $region28
        $region27: #{spectrogram_encoder_forward.3} parent=19 // pred_region
          %s163 = sand.u32 %s75, 1
          %s164 = scalar_lea.sflag [#allocation6], %s163
          %s165 = sand.u32 %s75, 1
          %s166 = scalar_lea.vmem [#allocation5], %s165
          %s168 = ssub.s32 16, 16
          %169 = vsyncadd %s164, %s168
          %s170 = smul.addr %s18, 16
          %s171 = scalar_lea.hbm %s2, %s170
          %s173 = sshll.u32 %s166, 4
          %s174 = int_to_ptr.vmem [resolvable:$true] %s173
          %176 = dma.hbm_to_vmem [thread:$0]  %s171, 16, %s174, %s164
        $region28: #{spectrogram_encoder_forward.3} parent=19 // pred_fallthru
          _
      $region20: #{spectrogram_encoder_forward.3} parent=5 // pred_fallthru
        _
      %p177 = scmp.le.s32.totalorder 1, %s18
      %p178 = scmp.lt.s32.totalorder %s18, 3
      %p179 = pnand %p177, %p178
      %p180 = pneg %p179
      // Predicated region
      $region29: #{spectrogram_encoder_forward.3} parent=5 // pred_check
        _
      $region30: #{spectrogram_encoder_forward.3} parent=5 // pred_check_branch
        %182 = sbr.rel (%p179) target = $region32
      $region31: #{spectrogram_encoder_forward.3} parent=5 // pred_region
        %s183 = ssub.s32 %s18, 1
        %s184 = sand.u32 %s52, 1
        %s185 = scalar_lea.sflag [#allocation3], %s184
        %s186 = sand.u32 %s52, 1
        %s187 = smul.addr %s186, 8192
        %s188 = scalar_lea.vmem [#allocation2], %s187
        // Predicated region
        $region33: #{spectrogram_encoder_forward.3} parent=31 // pred_check
          %p189 = pneg %p65
        $region34: #{spectrogram_encoder_forward.3} parent=31 // pred_check_branch
          %191 = sbr.rel (%p189) target = $region36
        $region35: #{spectrogram_encoder_forward.3} parent=31 // pred_region
          %192 = dma.done %s185, 131072
        $region36: #{spectrogram_encoder_forward.3} parent=31 // pred_fallthru
          _
        %s193 = sand.u32 %s78, 1
        %s194 = scalar_lea.sflag [#allocation6], %s193
        %s195 = sand.u32 %s78, 1
        %s196 = scalar_lea.vmem [#allocation5], %s195
        // Predicated region
        $region37: #{spectrogram_encoder_forward.3} parent=31 // pred_check
          %p197 = pneg %p91
        $region38: #{spectrogram_encoder_forward.3} parent=31 // pred_check_branch
          %199 = sbr.rel (%p197) target = $region40
        $region39: #{spectrogram_encoder_forward.3} parent=31 // pred_region
          %200 = dma.done %s194, 16
        $region40: #{spectrogram_encoder_forward.3} parent=31 // pred_fallthru
          _
        %p201 = pneg %p39
        %p202 = pneg %p36
        %s203 = sand.u32 %s52, 1
        %s204 = scalar_lea.sflag [#allocation3], %s203
        %s205 = sand.u32 %s52, 1
        %s206 = smul.addr %s205, 8192
        %s207 = scalar_lea.vmem [#allocation2], %s206
        %p208 = pneg %p65
        %p209 = pneg %p62
        %s210 = sand.u32 %s78, 1
        %s211 = scalar_lea.sflag [#allocation6], %s210
        %s212 = sand.u32 %s78, 1
        %s213 = scalar_lea.vmem [#allocation5], %s212
        %p214 = pneg %p91
        %p215 = pneg %p88
        %p216 = pneg %p117
        %p217 = pneg %p114
        %s218 = sand.u32 %s104, 1
        %s219 = scalar_lea.sflag [#allocation4], %s218
        %s220 = sand.u32 %s104, 1
        %s221 = smul.addr %s220, 2
        %s222 = scalar_lea.vmem [#allocation7], %s221
        %v224 = vld [vmem:[%s0] sm:$0xff]
        %v225 = vld [vmem:[%s0 + $0x8] sm:$0xff]
        %v226 = vld [vmem:[%s0 + $0x10] sm:$0xff]
        %v227 = vld [vmem:[%s0 + $0x18] sm:$0xff]
        %v228 = vld [vmem:[%s0 + $0x20] sm:$0xff]
        %v229 = vld [vmem:[%s0 + $0x28] sm:$0xff]
        %v230 = vld [vmem:[%s0 + $0x30] sm:$0xff]
        %v231 = vld [vmem:[%s0 + $0x38] sm:$0xff]
        %v232 = vld [vmem:[%s0 + $0x40] sm:$0xff]
        %v233 = vld [vmem:[%s0 + $0x48] sm:$0xff]
        %v234 = vld [vmem:[%s0 + $0x50] sm:$0xff]
        %v235 = vld [vmem:[%s0 + $0x58] sm:$0xff]
        %v236 = vld [vmem:[%s0 + $0x60] sm:$0xff]
        %v237 = vld [vmem:[%s0 + $0x68] sm:$0xff]
        %v238 = vld [vmem:[%s0 + $0x70] sm:$0xff]
        %v239 = vld [vmem:[%s0 + $0x78] sm:$0xff]
        %v240 = vld [vmem:[%s188] sm:$0xf]
        %v241 = vld [vmem:[%s188 + $0x4] sm:$0xf]
        %v242 = vld [vmem:[%s188 + $0x8] sm:$0xf]
        %v243 = vld [vmem:[%s188 + $0xc] sm:$0xf]
        %v244 = vld [vmem:[%s188 + $0x10] sm:$0xf]
        %v245 = vld [vmem:[%s188 + $0x14] sm:$0xf]
        %v246 = vld [vmem:[%s188 + $0x18] sm:$0xf]
        %v247 = vld [vmem:[%s188 + $0x1c] sm:$0xf]
        %v248 = vld [vmem:[%s188 + $0x20] sm:$0xf]
        %v249 = vld [vmem:[%s188 + $0x24] sm:$0xf]
        %v250 = vld [vmem:[%s188 + $0x28] sm:$0xf]
        %v251 = vld [vmem:[%s188 + $0x2c] sm:$0xf]
        %v252 = vld [vmem:[%s188 + $0x30] sm:$0xf]
        %v253 = vld [vmem:[%s188 + $0x34] sm:$0xf]
        %v254 = vld [vmem:[%s188 + $0x38] sm:$0xf]
        %v255 = vld [vmem:[%s188 + $0x3c] sm:$0xf]
        %v256 = vld [vmem:[%s188 + $0x40] sm:$0xf]
        %v257 = vld [vmem:[%s188 + $0x44] sm:$0xf]
        %v258 = vld [vmem:[%s188 + $0x48] sm:$0xf]
        %v259 = vld [vmem:[%s188 + $0x4c] sm:$0xf]
        %v260 = vld [vmem:[%s188 + $0x50] sm:$0xf]
        %v261 = vld [vmem:[%s188 + $0x54] sm:$0xf]
        %v262 = vld [vmem:[%s188 + $0x58] sm:$0xf]
        %v263 = vld [vmem:[%s188 + $0x5c] sm:$0xf]
        %v264 = vld [vmem:[%s188 + $0x60] sm:$0xf]
        %v265 = vld [vmem:[%s188 + $0x64] sm:$0xf]
        %v266 = vld [vmem:[%s188 + $0x68] sm:$0xf]
        %v267 = vld [vmem:[%s188 + $0x6c] sm:$0xf]
        %v268 = vld [vmem:[%s188 + $0x70] sm:$0xf]
        %v269 = vld [vmem:[%s188 + $0x74] sm:$0xf]
        %v270 = vld [vmem:[%s188 + $0x78] sm:$0xf]
        %v271 = vld [vmem:[%s188 + $0x7c] sm:$0xf]
        %v272 = vld [vmem:[%s188 + $0x80] sm:$0xf]
        %v273 = vld [vmem:[%s188 + $0x84] sm:$0xf]
        %v274 = vld [vmem:[%s188 + $0x88] sm:$0xf]
        %v275 = vld [vmem:[%s188 + $0x8c] sm:$0xf]
        %v276 = vld [vmem:[%s188 + $0x90] sm:$0xf]
        %v277 = vld [vmem:[%s188 + $0x94] sm:$0xf]
        %v278 = vld [vmem:[%s188 + $0x98] sm:$0xf]
        %v279 = vld [vmem:[%s188 + $0x9c] sm:$0xf]
        %v280 = vld [vmem:[%s188 + $0xa0] sm:$0xf]
        %v281 = vld [vmem:[%s188 + $0xa4] sm:$0xf]
        %v282 = vld [vmem:[%s188 + $0xa8] sm:$0xf]
        %v283 = vld [vmem:[%s188 + $0xac] sm:$0xf]
        %v284 = vld [vmem:[%s188 + $0xb0] sm:$0xf]
        %v285 = vld [vmem:[%s188 + $0xb4] sm:$0xf]
        %v286 = vld [vmem:[%s188 + $0xb8] sm:$0xf]
        %v287 = vld [vmem:[%s188 + $0xbc] sm:$0xf]
        %v288 = vld [vmem:[%s188 + $0xc0] sm:$0xf]
        %v289 = vld [vmem:[%s188 + $0xc4] sm:$0xf]
        %v290 = vld [vmem:[%s188 + $0xc8] sm:$0xf]
        %v291 = vld [vmem:[%s188 + $0xcc] sm:$0xf]
        %v292 = vld [vmem:[%s188 + $0xd0] sm:$0xf]
        %v293 = vld [vmem:[%s188 + $0xd4] sm:$0xf]
        %v294 = vld [vmem:[%s188 + $0xd8] sm:$0xf]
        %v295 = vld [vmem:[%s188 + $0xdc] sm:$0xf]
        %v296 = vld [vmem:[%s188 + $0xe0] sm:$0xf]
        %v297 = vld [vmem:[%s188 + $0xe4] sm:$0xf]
        %v298 = vld [vmem:[%s188 + $0xe8] sm:$0xf]
        %v299 = vld [vmem:[%s188 + $0xec] sm:$0xf]
        %v300 = vld [vmem:[%s188 + $0xf0] sm:$0xf]
        %v301 = vld [vmem:[%s188 + $0xf4] sm:$0xf]
        %v302 = vld [vmem:[%s188 + $0xf8] sm:$0xf]
        %v303 = vld [vmem:[%s188 + $0xfc] sm:$0xf]
        %v304 = vld [vmem:[%s188 + $0x100] sm:$0xf]
        %v305 = vld [vmem:[%s188 + $0x104] sm:$0xf]
        %v306 = vld [vmem:[%s188 + $0x108] sm:$0xf]
        %v307 = vld [vmem:[%s188 + $0x10c] sm:$0xf]
        %v308 = vld [vmem:[%s188 + $0x110] sm:$0xf]
        %v309 = vld [vmem:[%s188 + $0x114] sm:$0xf]
        %v310 = vld [vmem:[%s188 + $0x118] sm:$0xf]
        %v311 = vld [vmem:[%s188 + $0x11c] sm:$0xf]
        %v312 = vld [vmem:[%s188 + $0x120] sm:$0xf]
        %v313 = vld [vmem:[%s188 + $0x124] sm:$0xf]
        %v314 = vld [vmem:[%s188 + $0x128] sm:$0xf]
        %v315 = vld [vmem:[%s188 + $0x12c] sm:$0xf]
        %v316 = vld [vmem:[%s188 + $0x130] sm:$0xf]
        %v317 = vld [vmem:[%s188 + $0x134] sm:$0xf]
        %v318 = vld [vmem:[%s188 + $0x138] sm:$0xf]
        %v319 = vld [vmem:[%s188 + $0x13c] sm:$0xf]
        %v320 = vld [vmem:[%s188 + $0x140] sm:$0xf]
        %v321 = vld [vmem:[%s188 + $0x144] sm:$0xf]
        %v322 = vld [vmem:[%s188 + $0x148] sm:$0xf]
        %v323 = vld [vmem:[%s188 + $0x14c] sm:$0xf]
        %v324 = vld [vmem:[%s188 + $0x150] sm:$0xf]
        %v325 = vld [vmem:[%s188 + $0x154] sm:$0xf]
        %v326 = vld [vmem:[%s188 + $0x158] sm:$0xf]
        %v327 = vld [vmem:[%s188 + $0x15c] sm:$0xf]
        %v328 = vld [vmem:[%s188 + $0x160] sm:$0xf]
        %v329 = vld [vmem:[%s188 + $0x164] sm:$0xf]
        %v330 = vld [vmem:[%s188 + $0x168] sm:$0xf]
        %v331 = vld [vmem:[%s188 + $0x16c] sm:$0xf]
        %v332 = vld [vmem:[%s188 + $0x170] sm:$0xf]
        %v333 = vld [vmem:[%s188 + $0x174] sm:$0xf]
        %v334 = vld [vmem:[%s188 + $0x178] sm:$0xf]
        %v335 = vld [vmem:[%s188 + $0x17c] sm:$0xf]
        %v336 = vld [vmem:[%s188 + $0x180] sm:$0xf]
        %v337 = vld [vmem:[%s188 + $0x184] sm:$0xf]
        %v338 = vld [vmem:[%s188 + $0x188] sm:$0xf]
        %v339 = vld [vmem:[%s188 + $0x18c] sm:$0xf]
        %v340 = vld [vmem:[%s188 + $0x190] sm:$0xf]
        %v341 = vld [vmem:[%s188 + $0x194] sm:$0xf]
        %v342 = vld [vmem:[%s188 + $0x198] sm:$0xf]
        %v343 = vld [vmem:[%s188 + $0x19c] sm:$0xf]
        %v344 = vld [vmem:[%s188 + $0x1a0] sm:$0xf]
        %v345 = vld [vmem:[%s188 + $0x1a4] sm:$0xf]
        %v346 = vld [vmem:[%s188 + $0x1a8] sm:$0xf]
        %v347 = vld [vmem:[%s188 + $0x1ac] sm:$0xf]
        %v348 = vld [vmem:[%s188 + $0x1b0] sm:$0xf]
        %v349 = vld [vmem:[%s188 + $0x1b4] sm:$0xf]
        %v350 = vld [vmem:[%s188 + $0x1b8] sm:$0xf]
        %v351 = vld [vmem:[%s188 + $0x1bc] sm:$0xf]
        %v352 = vld [vmem:[%s188 + $0x1c0] sm:$0xf]
        %v353 = vld [vmem:[%s188 + $0x1c4] sm:$0xf]
        %v354 = vld [vmem:[%s188 + $0x1c8] sm:$0xf]
        %v355 = vld [vmem:[%s188 + $0x1cc] sm:$0xf]
        %v356 = vld [vmem:[%s188 + $0x1d0] sm:$0xf]
        %v357 = vld [vmem:[%s188 + $0x1d4] sm:$0xf]
        %v358 = vld [vmem:[%s188 + $0x1d8] sm:$0xf]
        %v359 = vld [vmem:[%s188 + $0x1dc] sm:$0xf]
        %v360 = vld [vmem:[%s188 + $0x1e0] sm:$0xf]
        %v361 = vld [vmem:[%s188 + $0x1e4] sm:$0xf]
        %v362 = vld [vmem:[%s188 + $0x1e8] sm:$0xf]
        %v363 = vld [vmem:[%s188 + $0x1ec] sm:$0xf]
        %v364 = vld [vmem:[%s188 + $0x1f0] sm:$0xf]
        %v365 = vld [vmem:[%s188 + $0x1f4] sm:$0xf]
        %v366 = vld [vmem:[%s188 + $0x1f8] sm:$0xf]
        %v367 = vld [vmem:[%s188 + $0x1fc] sm:$0xf]
        %v368 = vld [vmem:[%s188 + $0x200] sm:$0xf]
        %v369 = vld [vmem:[%s188 + $0x204] sm:$0xf]
        %v370 = vld [vmem:[%s188 + $0x208] sm:$0xf]
        %v371 = vld [vmem:[%s188 + $0x20c] sm:$0xf]
        %v372 = vld [vmem:[%s188 + $0x210] sm:$0xf]
        %v373 = vld [vmem:[%s188 + $0x214] sm:$0xf]
        %v374 = vld [vmem:[%s188 + $0x218] sm:$0xf]
        %v375 = vld [vmem:[%s188 + $0x21c] sm:$0xf]
        %v376 = vld [vmem:[%s188 + $0x220] sm:$0xf]
        %v377 = vld [vmem:[%s188 + $0x224] sm:$0xf]
        %v378 = vld [vmem:[%s188 + $0x228] sm:$0xf]
        %v379 = vld [vmem:[%s188 + $0x22c] sm:$0xf]
        %v380 = vld [vmem:[%s188 + $0x230] sm:$0xf]
        %v381 = vld [vmem:[%s188 + $0x234] sm:$0xf]
        %v382 = vld [vmem:[%s188 + $0x238] sm:$0xf]
        %v383 = vld [vmem:[%s188 + $0x23c] sm:$0xf]
        %v384 = vld [vmem:[%s188 + $0x240] sm:$0xf]
        %v385 = vld [vmem:[%s188 + $0x244] sm:$0xf]
        %v386 = vld [vmem:[%s188 + $0x248] sm:$0xf]
        %v387 = vld [vmem:[%s188 + $0x24c] sm:$0xf]
        %v388 = vld [vmem:[%s188 + $0x250] sm:$0xf]
        %v389 = vld [vmem:[%s188 + $0x254] sm:$0xf]
        %v390 = vld [vmem:[%s188 + $0x258] sm:$0xf]
        %v391 = vld [vmem:[%s188 + $0x25c] sm:$0xf]
        %v392 = vld [vmem:[%s188 + $0x260] sm:$0xf]
        %v393 = vld [vmem:[%s188 + $0x264] sm:$0xf]
        %v394 = vld [vmem:[%s188 + $0x268] sm:$0xf]
        %v395 = vld [vmem:[%s188 + $0x26c] sm:$0xf]
        %v396 = vld [vmem:[%s188 + $0x270] sm:$0xf]
        %v397 = vld [vmem:[%s188 + $0x274] sm:$0xf]
        %v398 = vld [vmem:[%s188 + $0x278] sm:$0xf]
        %v399 = vld [vmem:[%s188 + $0x27c] sm:$0xf]
        %v400 = vld [vmem:[%s188 + $0x280] sm:$0xf]
        %v401 = vld [vmem:[%s188 + $0x284] sm:$0xf]
        %v402 = vld [vmem:[%s188 + $0x288] sm:$0xf]
        %v403 = vld [vmem:[%s188 + $0x28c] sm:$0xf]
        %v404 = vld [vmem:[%s188 + $0x290] sm:$0xf]
        %v405 = vld [vmem:[%s188 + $0x294] sm:$0xf]
        %v406 = vld [vmem:[%s188 + $0x298] sm:$0xf]
        %v407 = vld [vmem:[%s188 + $0x29c] sm:$0xf]
        %v408 = vld [vmem:[%s188 + $0x2a0] sm:$0xf]
        %v409 = vld [vmem:[%s188 + $0x2a4] sm:$0xf]
        %v410 = vld [vmem:[%s188 + $0x2a8] sm:$0xf]
        %v411 = vld [vmem:[%s188 + $0x2ac] sm:$0xf]
        %v412 = vld [vmem:[%s188 + $0x2b0] sm:$0xf]
        %v413 = vld [vmem:[%s188 + $0x2b4] sm:$0xf]
        %v414 = vld [vmem:[%s188 + $0x2b8] sm:$0xf]
        %v415 = vld [vmem:[%s188 + $0x2bc] sm:$0xf]
        %v416 = vld [vmem:[%s188 + $0x2c0] sm:$0xf]
        %v417 = vld [vmem:[%s188 + $0x2c4] sm:$0xf]
        %v418 = vld [vmem:[%s188 + $0x2c8] sm:$0xf]
        %v419 = vld [vmem:[%s188 + $0x2cc] sm:$0xf]
        %v420 = vld [vmem:[%s188 + $0x2d0] sm:$0xf]
        %v421 = vld [vmem:[%s188 + $0x2d4] sm:$0xf]
        %v422 = vld [vmem:[%s188 + $0x2d8] sm:$0xf]
        %v423 = vld [vmem:[%s188 + $0x2dc] sm:$0xf]
        %v424 = vld [vmem:[%s188 + $0x2e0] sm:$0xf]
        %v425 = vld [vmem:[%s188 + $0x2e4] sm:$0xf]
        %v426 = vld [vmem:[%s188 + $0x2e8] sm:$0xf]
        %v427 = vld [vmem:[%s188 + $0x2ec] sm:$0xf]
        %v428 = vld [vmem:[%s188 + $0x2f0] sm:$0xf]
        %v429 = vld [vmem:[%s188 + $0x2f4] sm:$0xf]
        %v430 = vld [vmem:[%s188 + $0x2f8] sm:$0xf]
        %v431 = vld [vmem:[%s188 + $0x2fc] sm:$0xf]
        %v432 = vld [vmem:[%s188 + $0x300] sm:$0xf]
        %v433 = vld [vmem:[%s188 + $0x304] sm:$0xf]
        %v434 = vld [vmem:[%s188 + $0x308] sm:$0xf]
        %v435 = vld [vmem:[%s188 + $0x30c] sm:$0xf]
        %v436 = vld [vmem:[%s188 + $0x310] sm:$0xf]
        %v437 = vld [vmem:[%s188 + $0x314] sm:$0xf]
        %v438 = vld [vmem:[%s188 + $0x318] sm:$0xf]
        %v439 = vld [vmem:[%s188 + $0x31c] sm:$0xf]
        %v440 = vld [vmem:[%s188 + $0x320] sm:$0xf]
        %v441 = vld [vmem:[%s188 + $0x324] sm:$0xf]
        %v442 = vld [vmem:[%s188 + $0x328] sm:$0xf]
        %v443 = vld [vmem:[%s188 + $0x32c] sm:$0xf]
        %v444 = vld [vmem:[%s188 + $0x330] sm:$0xf]
        %v445 = vld [vmem:[%s188 + $0x334] sm:$0xf]
        %v446 = vld [vmem:[%s188 + $0x338] sm:$0xf]
        %v447 = vld [vmem:[%s188 + $0x33c] sm:$0xf]
        %v448 = vld [vmem:[%s188 + $0x340] sm:$0xf]
        %v449 = vld [vmem:[%s188 + $0x344] sm:$0xf]
        %v450 = vld [vmem:[%s188 + $0x348] sm:$0xf]
        %v451 = vld [vmem:[%s188 + $0x34c] sm:$0xf]
        %v452 = vld [vmem:[%s188 + $0x350] sm:$0xf]
        %v453 = vld [vmem:[%s188 + $0x354] sm:$0xf]
        %v454 = vld [vmem:[%s188 + $0x358] sm:$0xf]
        %v455 = vld [vmem:[%s188 + $0x35c] sm:$0xf]
        %v456 = vld [vmem:[%s188 + $0x360] sm:$0xf]
        %v457 = vld [vmem:[%s188 + $0x364] sm:$0xf]
        %v458 = vld [vmem:[%s188 + $0x368] sm:$0xf]
        %v459 = vld [vmem:[%s188 + $0x36c] sm:$0xf]
        %v460 = vld [vmem:[%s188 + $0x370] sm:$0xf]
        %v461 = vld [vmem:[%s188 + $0x374] sm:$0xf]
        %v462 = vld [vmem:[%s188 + $0x378] sm:$0xf]
        %v463 = vld [vmem:[%s188 + $0x37c] sm:$0xf]
        %v464 = vld [vmem:[%s188 + $0x380] sm:$0xf]
        %v465 = vld [vmem:[%s188 + $0x384] sm:$0xf]
        %v466 = vld [vmem:[%s188 + $0x388] sm:$0xf]
        %v467 = vld [vmem:[%s188 + $0x38c] sm:$0xf]
        %v468 = vld [vmem:[%s188 + $0x390] sm:$0xf]
        %v469 = vld [vmem:[%s188 + $0x394] sm:$0xf]
        %v470 = vld [vmem:[%s188 + $0x398] sm:$0xf]
        %v471 = vld [vmem:[%s188 + $0x39c] sm:$0xf]
        %v472 = vld [vmem:[%s188 + $0x3a0] sm:$0xf]
        %v473 = vld [vmem:[%s188 + $0x3a4] sm:$0xf]
        %v474 = vld [vmem:[%s188 + $0x3a8] sm:$0xf]
        %v475 = vld [vmem:[%s188 + $0x3ac] sm:$0xf]
        %v476 = vld [vmem:[%s188 + $0x3b0] sm:$0xf]
        %v477 = vld [vmem:[%s188 + $0x3b4] sm:$0xf]
        %v478 = vld [vmem:[%s188 + $0x3b8] sm:$0xf]
        %v479 = vld [vmem:[%s188 + $0x3bc] sm:$0xf]
        %v480 = vld [vmem:[%s188 + $0x3c0] sm:$0xf]
        %v481 = vld [vmem:[%s188 + $0x3c4] sm:$0xf]
        %v482 = vld [vmem:[%s188 + $0x3c8] sm:$0xf]
        %v483 = vld [vmem:[%s188 + $0x3cc] sm:$0xf]
        %v484 = vld [vmem:[%s188 + $0x3d0] sm:$0xf]
        %v485 = vld [vmem:[%s188 + $0x3d4] sm:$0xf]
        %v486 = vld [vmem:[%s188 + $0x3d8] sm:$0xf]
        %v487 = vld [vmem:[%s188 + $0x3dc] sm:$0xf]
        %v488 = vld [vmem:[%s188 + $0x3e0] sm:$0xf]
        %v489 = vld [vmem:[%s188 + $0x3e4] sm:$0xf]
        %v490 = vld [vmem:[%s188 + $0x3e8] sm:$0xf]
        %v491 = vld [vmem:[%s188 + $0x3ec] sm:$0xf]
        %v492 = vld [vmem:[%s188 + $0x3f0] sm:$0xf]
        %v493 = vld [vmem:[%s188 + $0x3f4] sm:$0xf]
        %v494 = vld [vmem:[%s188 + $0x3f8] sm:$0xf]
        %v495 = vld [vmem:[%s188 + $0x3fc] sm:$0xf]
        %v496 = vld [vmem:[%s188 + $0x400] sm:$0xf]
        %v497 = vld [vmem:[%s188 + $0x404] sm:$0xf]
        %v498 = vld [vmem:[%s188 + $0x408] sm:$0xf]
        %v499 = vld [vmem:[%s188 + $0x40c] sm:$0xf]
        %v500 = vld [vmem:[%s188 + $0x410] sm:$0xf]
        %v501 = vld [vmem:[%s188 + $0x414] sm:$0xf]
        %v502 = vld [vmem:[%s188 + $0x418] sm:$0xf]
        %v503 = vld [vmem:[%s188 + $0x41c] sm:$0xf]
        %v504 = vld [vmem:[%s188 + $0x420] sm:$0xf]
        %v505 = vld [vmem:[%s188 + $0x424] sm:$0xf]
        %v506 = vld [vmem:[%s188 + $0x428] sm:$0xf]
        %v507 = vld [vmem:[%s188 + $0x42c] sm:$0xf]
        %v508 = vld [vmem:[%s188 + $0x430] sm:$0xf]
        %v509 = vld [vmem:[%s188 + $0x434] sm:$0xf]
        %v510 = vld [vmem:[%s188 + $0x438] sm:$0xf]
        %v511 = vld [vmem:[%s188 + $0x43c] sm:$0xf]
        %v512 = vld [vmem:[%s188 + $0x440] sm:$0xf]
        %v513 = vld [vmem:[%s188 + $0x444] sm:$0xf]
        %v514 = vld [vmem:[%s188 + $0x448] sm:$0xf]
        %v515 = vld [vmem:[%s188 + $0x44c] sm:$0xf]
        %v516 = vld [vmem:[%s188 + $0x450] sm:$0xf]
        %v517 = vld [vmem:[%s188 + $0x454] sm:$0xf]
        %v518 = vld [vmem:[%s188 + $0x458] sm:$0xf]
        %v519 = vld [vmem:[%s188 + $0x45c] sm:$0xf]
        %v520 = vld [vmem:[%s188 + $0x460] sm:$0xf]
        %v521 = vld [vmem:[%s188 + $0x464] sm:$0xf]
        %v522 = vld [vmem:[%s188 + $0x468] sm:$0xf]
        %v523 = vld [vmem:[%s188 + $0x46c] sm:$0xf]
        %v524 = vld [vmem:[%s188 + $0x470] sm:$0xf]
        %v525 = vld [vmem:[%s188 + $0x474] sm:$0xf]
        %v526 = vld [vmem:[%s188 + $0x478] sm:$0xf]
        %v527 = vld [vmem:[%s188 + $0x47c] sm:$0xf]
        %v528 = vld [vmem:[%s188 + $0x480] sm:$0xf]
        %v529 = vld [vmem:[%s188 + $0x484] sm:$0xf]
        %v530 = vld [vmem:[%s188 + $0x488] sm:$0xf]
        %v531 = vld [vmem:[%s188 + $0x48c] sm:$0xf]
        %v532 = vld [vmem:[%s188 + $0x490] sm:$0xf]
        %v533 = vld [vmem:[%s188 + $0x494] sm:$0xf]
        %v534 = vld [vmem:[%s188 + $0x498] sm:$0xf]
        %v535 = vld [vmem:[%s188 + $0x49c] sm:$0xf]
        %v536 = vld [vmem:[%s188 + $0x4a0] sm:$0xf]
        %v537 = vld [vmem:[%s188 + $0x4a4] sm:$0xf]
        %v538 = vld [vmem:[%s188 + $0x4a8] sm:$0xf]
        %v539 = vld [vmem:[%s188 + $0x4ac] sm:$0xf]
        %v540 = vld [vmem:[%s188 + $0x4b0] sm:$0xf]
        %v541 = vld [vmem:[%s188 + $0x4b4] sm:$0xf]
        %v542 = vld [vmem:[%s188 + $0x4b8] sm:$0xf]
        %v543 = vld [vmem:[%s188 + $0x4bc] sm:$0xf]
        %v544 = vld [vmem:[%s188 + $0x4c0] sm:$0xf]
        %v545 = vld [vmem:[%s188 + $0x4c4] sm:$0xf]
        %v546 = vld [vmem:[%s188 + $0x4c8] sm:$0xf]
        %v547 = vld [vmem:[%s188 + $0x4cc] sm:$0xf]
        %v548 = vld [vmem:[%s188 + $0x4d0] sm:$0xf]
        %v549 = vld [vmem:[%s188 + $0x4d4] sm:$0xf]
        %v550 = vld [vmem:[%s188 + $0x4d8] sm:$0xf]
        %v551 = vld [vmem:[%s188 + $0x4dc] sm:$0xf]
        %v552 = vld [vmem:[%s188 + $0x4e0] sm:$0xf]
        %v553 = vld [vmem:[%s188 + $0x4e4] sm:$0xf]
        %v554 = vld [vmem:[%s188 + $0x4e8] sm:$0xf]
        %v555 = vld [vmem:[%s188 + $0x4ec] sm:$0xf]
        %v556 = vld [vmem:[%s188 + $0x4f0] sm:$0xf]
        %v557 = vld [vmem:[%s188 + $0x4f4] sm:$0xf]
        %v558 = vld [vmem:[%s188 + $0x4f8] sm:$0xf]
        %v559 = vld [vmem:[%s188 + $0x4fc] sm:$0xf]
        %v560 = vld [vmem:[%s188 + $0x500] sm:$0xf]
        %v561 = vld [vmem:[%s188 + $0x504] sm:$0xf]
        %v562 = vld [vmem:[%s188 + $0x508] sm:$0xf]
        %v563 = vld [vmem:[%s188 + $0x50c] sm:$0xf]
        %v564 = vld [vmem:[%s188 + $0x510] sm:$0xf]
        %v565 = vld [vmem:[%s188 + $0x514] sm:$0xf]
        %v566 = vld [vmem:[%s188 + $0x518] sm:$0xf]
        %v567 = vld [vmem:[%s188 + $0x51c] sm:$0xf]
        %v568 = vld [vmem:[%s188 + $0x520] sm:$0xf]
        %v569 = vld [vmem:[%s188 + $0x524] sm:$0xf]
        %v570 = vld [vmem:[%s188 + $0x528] sm:$0xf]
        %v571 = vld [vmem:[%s188 + $0x52c] sm:$0xf]
        %v572 = vld [vmem:[%s188 + $0x530] sm:$0xf]
        %v573 = vld [vmem:[%s188 + $0x534] sm:$0xf]
        %v574 = vld [vmem:[%s188 + $0x538] sm:$0xf]
        %v575 = vld [vmem:[%s188 + $0x53c] sm:$0xf]
        %v576 = vld [vmem:[%s188 + $0x540] sm:$0xf]
        %v577 = vld [vmem:[%s188 + $0x544] sm:$0xf]
        %v578 = vld [vmem:[%s188 + $0x548] sm:$0xf]
        %v579 = vld [vmem:[%s188 + $0x54c] sm:$0xf]
        %v580 = vld [vmem:[%s188 + $0x550] sm:$0xf]
        %v581 = vld [vmem:[%s188 + $0x554] sm:$0xf]
        %v582 = vld [vmem:[%s188 + $0x558] sm:$0xf]
        %v583 = vld [vmem:[%s188 + $0x55c] sm:$0xf]
        %v584 = vld [vmem:[%s188 + $0x560] sm:$0xf]
        %v585 = vld [vmem:[%s188 + $0x564] sm:$0xf]
        %v586 = vld [vmem:[%s188 + $0x568] sm:$0xf]
        %v587 = vld [vmem:[%s188 + $0x56c] sm:$0xf]
        %v588 = vld [vmem:[%s188 + $0x570] sm:$0xf]
        %v589 = vld [vmem:[%s188 + $0x574] sm:$0xf]
        %v590 = vld [vmem:[%s188 + $0x578] sm:$0xf]
        %v591 = vld [vmem:[%s188 + $0x57c] sm:$0xf]
        %v592 = vld [vmem:[%s188 + $0x580] sm:$0xf]
        %v593 = vld [vmem:[%s188 + $0x584] sm:$0xf]
        %v594 = vld [vmem:[%s188 + $0x588] sm:$0xf]
        %v595 = vld [vmem:[%s188 + $0x58c] sm:$0xf]
        %v596 = vld [vmem:[%s188 + $0x590] sm:$0xf]
        %v597 = vld [vmem:[%s188 + $0x594] sm:$0xf]
        %v598 = vld [vmem:[%s188 + $0x598] sm:$0xf]
        %v599 = vld [vmem:[%s188 + $0x59c] sm:$0xf]
        %v600 = vld [vmem:[%s188 + $0x5a0] sm:$0xf]
        %v601 = vld [vmem:[%s188 + $0x5a4] sm:$0xf]
        %v602 = vld [vmem:[%s188 + $0x5a8] sm:$0xf]
        %v603 = vld [vmem:[%s188 + $0x5ac] sm:$0xf]
        %v604 = vld [vmem:[%s188 + $0x5b0] sm:$0xf]
        %v605 = vld [vmem:[%s188 + $0x5b4] sm:$0xf]
        %v606 = vld [vmem:[%s188 + $0x5b8] sm:$0xf]
        %v607 = vld [vmem:[%s188 + $0x5bc] sm:$0xf]
        %v608 = vld [vmem:[%s188 + $0x5c0] sm:$0xf]
        %v609 = vld [vmem:[%s188 + $0x5c4] sm:$0xf]
        %v610 = vld [vmem:[%s188 + $0x5c8] sm:$0xf]
        %v611 = vld [vmem:[%s188 + $0x5cc] sm:$0xf]
        %v612 = vld [vmem:[%s188 + $0x5d0] sm:$0xf]
        %v613 = vld [vmem:[%s188 + $0x5d4] sm:$0xf]
        %v614 = vld [vmem:[%s188 + $0x5d8] sm:$0xf]
        %v615 = vld [vmem:[%s188 + $0x5dc] sm:$0xf]
        %v616 = vld [vmem:[%s188 + $0x5e0] sm:$0xf]
        %v617 = vld [vmem:[%s188 + $0x5e4] sm:$0xf]
        %v618 = vld [vmem:[%s188 + $0x5e8] sm:$0xf]
        %v619 = vld [vmem:[%s188 + $0x5ec] sm:$0xf]
        %v620 = vld [vmem:[%s188 + $0x5f0] sm:$0xf]
        %v621 = vld [vmem:[%s188 + $0x5f4] sm:$0xf]
        %v622 = vld [vmem:[%s188 + $0x5f8] sm:$0xf]
        %v623 = vld [vmem:[%s188 + $0x5fc] sm:$0xf]
        %v624 = vld [vmem:[%s188 + $0x600] sm:$0xf]
        %v625 = vld [vmem:[%s188 + $0x604] sm:$0xf]
        %v626 = vld [vmem:[%s188 + $0x608] sm:$0xf]
        %v627 = vld [vmem:[%s188 + $0x60c] sm:$0xf]
        %v628 = vld [vmem:[%s188 + $0x610] sm:$0xf]
        %v629 = vld [vmem:[%s188 + $0x614] sm:$0xf]
        %v630 = vld [vmem:[%s188 + $0x618] sm:$0xf]
        %v631 = vld [vmem:[%s188 + $0x61c] sm:$0xf]
        %v632 = vld [vmem:[%s188 + $0x620] sm:$0xf]
        %v633 = vld [vmem:[%s188 + $0x624] sm:$0xf]
        %v634 = vld [vmem:[%s188 + $0x628] sm:$0xf]
        %v635 = vld [vmem:[%s188 + $0x62c] sm:$0xf]
        %v636 = vld [vmem:[%s188 + $0x630] sm:$0xf]
        %v637 = vld [vmem:[%s188 + $0x634] sm:$0xf]
        %v638 = vld [vmem:[%s188 + $0x638] sm:$0xf]
        %v639 = vld [vmem:[%s188 + $0x63c] sm:$0xf]
        %v640 = vld [vmem:[%s188 + $0x640] sm:$0xf]
        %v641 = vld [vmem:[%s188 + $0x644] sm:$0xf]
        %v642 = vld [vmem:[%s188 + $0x648] sm:$0xf]
        %v643 = vld [vmem:[%s188 + $0x64c] sm:$0xf]
        %v644 = vld [vmem:[%s188 + $0x650] sm:$0xf]
        %v645 = vld [vmem:[%s188 + $0x654] sm:$0xf]
        %v646 = vld [vmem:[%s188 + $0x658] sm:$0xf]
        %v647 = vld [vmem:[%s188 + $0x65c] sm:$0xf]
        %v648 = vld [vmem:[%s188 + $0x660] sm:$0xf]
        %v649 = vld [vmem:[%s188 + $0x664] sm:$0xf]
        %v650 = vld [vmem:[%s188 + $0x668] sm:$0xf]
        %v651 = vld [vmem:[%s188 + $0x66c] sm:$0xf]
        %v652 = vld [vmem:[%s188 + $0x670] sm:$0xf]
        %v653 = vld [vmem:[%s188 + $0x674] sm:$0xf]
        %v654 = vld [vmem:[%s188 + $0x678] sm:$0xf]
        %v655 = vld [vmem:[%s188 + $0x67c] sm:$0xf]
        %v656 = vld [vmem:[%s188 + $0x680] sm:$0xf]
        %v657 = vld [vmem:[%s188 + $0x684] sm:$0xf]
        %v658 = vld [vmem:[%s188 + $0x688] sm:$0xf]
        %v659 = vld [vmem:[%s188 + $0x68c] sm:$0xf]
        %v660 = vld [vmem:[%s188 + $0x690] sm:$0xf]
        %v661 = vld [vmem:[%s188 + $0x694] sm:$0xf]
        %v662 = vld [vmem:[%s188 + $0x698] sm:$0xf]
        %v663 = vld [vmem:[%s188 + $0x69c] sm:$0xf]
        %v664 = vld [vmem:[%s188 + $0x6a0] sm:$0xf]
        %v665 = vld [vmem:[%s188 + $0x6a4] sm:$0xf]
        %v666 = vld [vmem:[%s188 + $0x6a8] sm:$0xf]
        %v667 = vld [vmem:[%s188 + $0x6ac] sm:$0xf]
        %v668 = vld [vmem:[%s188 + $0x6b0] sm:$0xf]
        %v669 = vld [vmem:[%s188 + $0x6b4] sm:$0xf]
        %v670 = vld [vmem:[%s188 + $0x6b8] sm:$0xf]
        %v671 = vld [vmem:[%s188 + $0x6bc] sm:$0xf]
        %v672 = vld [vmem:[%s188 + $0x6c0] sm:$0xf]
        %v673 = vld [vmem:[%s188 + $0x6c4] sm:$0xf]
        %v674 = vld [vmem:[%s188 + $0x6c8] sm:$0xf]
        %v675 = vld [vmem:[%s188 + $0x6cc] sm:$0xf]
        %v676 = vld [vmem:[%s188 + $0x6d0] sm:$0xf]
        %v677 = vld [vmem:[%s188 + $0x6d4] sm:$0xf]
        %v678 = vld [vmem:[%s188 + $0x6d8] sm:$0xf]
        %v679 = vld [vmem:[%s188 + $0x6dc] sm:$0xf]
        %v680 = vld [vmem:[%s188 + $0x6e0] sm:$0xf]
        %v681 = vld [vmem:[%s188 + $0x6e4] sm:$0xf]
        %v682 = vld [vmem:[%s188 + $0x6e8] sm:$0xf]
        %v683 = vld [vmem:[%s188 + $0x6ec] sm:$0xf]
        %v684 = vld [vmem:[%s188 + $0x6f0] sm:$0xf]
        %v685 = vld [vmem:[%s188 + $0x6f4] sm:$0xf]
        %v686 = vld [vmem:[%s188 + $0x6f8] sm:$0xf]
        %v687 = vld [vmem:[%s188 + $0x6fc] sm:$0xf]
        %v688 = vld [vmem:[%s188 + $0x700] sm:$0xf]
        %v689 = vld [vmem:[%s188 + $0x704] sm:$0xf]
        %v690 = vld [vmem:[%s188 + $0x708] sm:$0xf]
        %v691 = vld [vmem:[%s188 + $0x70c] sm:$0xf]
        %v692 = vld [vmem:[%s188 + $0x710] sm:$0xf]
        %v693 = vld [vmem:[%s188 + $0x714] sm:$0xf]
        %v694 = vld [vmem:[%s188 + $0x718] sm:$0xf]
        %v695 = vld [vmem:[%s188 + $0x71c] sm:$0xf]
        %v696 = vld [vmem:[%s188 + $0x720] sm:$0xf]
        %v697 = vld [vmem:[%s188 + $0x724] sm:$0xf]
        %v698 = vld [vmem:[%s188 + $0x728] sm:$0xf]
        %v699 = vld [vmem:[%s188 + $0x72c] sm:$0xf]
        %v700 = vld [vmem:[%s188 + $0x730] sm:$0xf]
        %v701 = vld [vmem:[%s188 + $0x734] sm:$0xf]
        %v702 = vld [vmem:[%s188 + $0x738] sm:$0xf]
        %v703 = vld [vmem:[%s188 + $0x73c] sm:$0xf]
        %v704 = vld [vmem:[%s188 + $0x740] sm:$0xf]
        %v705 = vld [vmem:[%s188 + $0x744] sm:$0xf]
        %v706 = vld [vmem:[%s188 + $0x748] sm:$0xf]
        %v707 = vld [vmem:[%s188 + $0x74c] sm:$0xf]
        %v708 = vld [vmem:[%s188 + $0x750] sm:$0xf]
        %v709 = vld [vmem:[%s188 + $0x754] sm:$0xf]
        %v710 = vld [vmem:[%s188 + $0x758] sm:$0xf]
        %v711 = vld [vmem:[%s188 + $0x75c] sm:$0xf]
        %v712 = vld [vmem:[%s188 + $0x760] sm:$0xf]
        %v713 = vld [vmem:[%s188 + $0x764] sm:$0xf]
        %v714 = vld [vmem:[%s188 + $0x768] sm:$0xf]
        %v715 = vld [vmem:[%s188 + $0x76c] sm:$0xf]
        %v716 = vld [vmem:[%s188 + $0x770] sm:$0xf]
        %v717 = vld [vmem:[%s188 + $0x774] sm:$0xf]
        %v718 = vld [vmem:[%s188 + $0x778] sm:$0xf]
        %v719 = vld [vmem:[%s188 + $0x77c] sm:$0xf]
        %v720 = vld [vmem:[%s188 + $0x780] sm:$0xf]
        %v721 = vld [vmem:[%s188 + $0x784] sm:$0xf]
        %v722 = vld [vmem:[%s188 + $0x788] sm:$0xf]
        %v723 = vld [vmem:[%s188 + $0x78c] sm:$0xf]
        %v724 = vld [vmem:[%s188 + $0x790] sm:$0xf]
        %v725 = vld [vmem:[%s188 + $0x794] sm:$0xf]
        %v726 = vld [vmem:[%s188 + $0x798] sm:$0xf]
        %v727 = vld [vmem:[%s188 + $0x79c] sm:$0xf]
        %v728 = vld [vmem:[%s188 + $0x7a0] sm:$0xf]
        %v729 = vld [vmem:[%s188 + $0x7a4] sm:$0xf]
        %v730 = vld [vmem:[%s188 + $0x7a8] sm:$0xf]
        %v731 = vld [vmem:[%s188 + $0x7ac] sm:$0xf]
        %v732 = vld [vmem:[%s188 + $0x7b0] sm:$0xf]
        %v733 = vld [vmem:[%s188 + $0x7b4] sm:$0xf]
        %v734 = vld [vmem:[%s188 + $0x7b8] sm:$0xf]
        %v735 = vld [vmem:[%s188 + $0x7bc] sm:$0xf]
        %v736 = vld [vmem:[%s188 + $0x7c0] sm:$0xf]
        %v737 = vld [vmem:[%s188 + $0x7c4] sm:$0xf]
        %v738 = vld [vmem:[%s188 + $0x7c8] sm:$0xf]
        %v739 = vld [vmem:[%s188 + $0x7cc] sm:$0xf]
        %v740 = vld [vmem:[%s188 + $0x7d0] sm:$0xf]
        %v741 = vld [vmem:[%s188 + $0x7d4] sm:$0xf]
        %v742 = vld [vmem:[%s188 + $0x7d8] sm:$0xf]
        %v743 = vld [vmem:[%s188 + $0x7dc] sm:$0xf]
        %v744 = vld [vmem:[%s188 + $0x7e0] sm:$0xf]
        %v745 = vld [vmem:[%s188 + $0x7e4] sm:$0xf]
        %v746 = vld [vmem:[%s188 + $0x7e8] sm:$0xf]
        %v747 = vld [vmem:[%s188 + $0x7ec] sm:$0xf]
        %v748 = vld [vmem:[%s188 + $0x7f0] sm:$0xf]
        %v749 = vld [vmem:[%s188 + $0x7f4] sm:$0xf]
        %v750 = vld [vmem:[%s188 + $0x7f8] sm:$0xf]
        %v751 = vld [vmem:[%s188 + $0x7fc] sm:$0xf]
        %v752 = vld [vmem:[%s188 + $0x800] sm:$0xf]
        %v753 = vld [vmem:[%s188 + $0x804] sm:$0xf]
        %v754 = vld [vmem:[%s188 + $0x808] sm:$0xf]
        %v755 = vld [vmem:[%s188 + $0x80c] sm:$0xf]
        %v756 = vld [vmem:[%s188 + $0x810] sm:$0xf]
        %v757 = vld [vmem:[%s188 + $0x814] sm:$0xf]
        %v758 = vld [vmem:[%s188 + $0x818] sm:$0xf]
        %v759 = vld [vmem:[%s188 + $0x81c] sm:$0xf]
        %v760 = vld [vmem:[%s188 + $0x820] sm:$0xf]
        %v761 = vld [vmem:[%s188 + $0x824] sm:$0xf]
        %v762 = vld [vmem:[%s188 + $0x828] sm:$0xf]
        %v763 = vld [vmem:[%s188 + $0x82c] sm:$0xf]
        %v764 = vld [vmem:[%s188 + $0x830] sm:$0xf]
        %v765 = vld [vmem:[%s188 + $0x834] sm:$0xf]
        %v766 = vld [vmem:[%s188 + $0x838] sm:$0xf]
        %v767 = vld [vmem:[%s188 + $0x83c] sm:$0xf]
        %v768 = vld [vmem:[%s188 + $0x840] sm:$0xf]
        %v769 = vld [vmem:[%s188 + $0x844] sm:$0xf]
        %v770 = vld [vmem:[%s188 + $0x848] sm:$0xf]
        %v771 = vld [vmem:[%s188 + $0x84c] sm:$0xf]
        %v772 = vld [vmem:[%s188 + $0x850] sm:$0xf]
        %v773 = vld [vmem:[%s188 + $0x854] sm:$0xf]
        %v774 = vld [vmem:[%s188 + $0x858] sm:$0xf]
        %v775 = vld [vmem:[%s188 + $0x85c] sm:$0xf]
        %v776 = vld [vmem:[%s188 + $0x860] sm:$0xf]
        %v777 = vld [vmem:[%s188 + $0x864] sm:$0xf]
        %v778 = vld [vmem:[%s188 + $0x868] sm:$0xf]
        %v779 = vld [vmem:[%s188 + $0x86c] sm:$0xf]
        %v780 = vld [vmem:[%s188 + $0x870] sm:$0xf]
        %v781 = vld [vmem:[%s188 + $0x874] sm:$0xf]
        %v782 = vld [vmem:[%s188 + $0x878] sm:$0xf]
        %v783 = vld [vmem:[%s188 + $0x87c] sm:$0xf]
        %v784 = vld [vmem:[%s188 + $0x880] sm:$0xf]
        %v785 = vld [vmem:[%s188 + $0x884] sm:$0xf]
        %v786 = vld [vmem:[%s188 + $0x888] sm:$0xf]
        %v787 = vld [vmem:[%s188 + $0x88c] sm:$0xf]
        %v788 = vld [vmem:[%s188 + $0x890] sm:$0xf]
        %v789 = vld [vmem:[%s188 + $0x894] sm:$0xf]
        %v790 = vld [vmem:[%s188 + $0x898] sm:$0xf]
        %v791 = vld [vmem:[%s188 + $0x89c] sm:$0xf]
        %v792 = vld [vmem:[%s188 + $0x8a0] sm:$0xf]
        %v793 = vld [vmem:[%s188 + $0x8a4] sm:$0xf]
        %v794 = vld [vmem:[%s188 + $0x8a8] sm:$0xf]
        %v795 = vld [vmem:[%s188 + $0x8ac] sm:$0xf]
        %v796 = vld [vmem:[%s188 + $0x8b0] sm:$0xf]
        %v797 = vld [vmem:[%s188 + $0x8b4] sm:$0xf]
        %v798 = vld [vmem:[%s188 + $0x8b8] sm:$0xf]
        %v799 = vld [vmem:[%s188 + $0x8bc] sm:$0xf]
        %v800 = vld [vmem:[%s188 + $0x8c0] sm:$0xf]
        %v801 = vld [vmem:[%s188 + $0x8c4] sm:$0xf]
        %v802 = vld [vmem:[%s188 + $0x8c8] sm:$0xf]
        %v803 = vld [vmem:[%s188 + $0x8cc] sm:$0xf]
        %v804 = vld [vmem:[%s188 + $0x8d0] sm:$0xf]
        %v805 = vld [vmem:[%s188 + $0x8d4] sm:$0xf]
        %v806 = vld [vmem:[%s188 + $0x8d8] sm:$0xf]
        %v807 = vld [vmem:[%s188 + $0x8dc] sm:$0xf]
        %v808 = vld [vmem:[%s188 + $0x8e0] sm:$0xf]
        %v809 = vld [vmem:[%s188 + $0x8e4] sm:$0xf]
        %v810 = vld [vmem:[%s188 + $0x8e8] sm:$0xf]
        %v811 = vld [vmem:[%s188 + $0x8ec] sm:$0xf]
        %v812 = vld [vmem:[%s188 + $0x8f0] sm:$0xf]
        %v813 = vld [vmem:[%s188 + $0x8f4] sm:$0xf]
        %v814 = vld [vmem:[%s188 + $0x8f8] sm:$0xf]
        %v815 = vld [vmem:[%s188 + $0x8fc] sm:$0xf]
        %v816 = vld [vmem:[%s188 + $0x900] sm:$0xf]
        %v817 = vld [vmem:[%s188 + $0x904] sm:$0xf]
        %v818 = vld [vmem:[%s188 + $0x908] sm:$0xf]
        %v819 = vld [vmem:[%s188 + $0x90c] sm:$0xf]
        %v820 = vld [vmem:[%s188 + $0x910] sm:$0xf]
        %v821 = vld [vmem:[%s188 + $0x914] sm:$0xf]
        %v822 = vld [vmem:[%s188 + $0x918] sm:$0xf]
        %v823 = vld [vmem:[%s188 + $0x91c] sm:$0xf]
        %v824 = vld [vmem:[%s188 + $0x920] sm:$0xf]
        %v825 = vld [vmem:[%s188 + $0x924] sm:$0xf]
        %v826 = vld [vmem:[%s188 + $0x928] sm:$0xf]
        %v827 = vld [vmem:[%s188 + $0x92c] sm:$0xf]
        %v828 = vld [vmem:[%s188 + $0x930] sm:$0xf]
        %v829 = vld [vmem:[%s188 + $0x934] sm:$0xf]
        %v830 = vld [vmem:[%s188 + $0x938] sm:$0xf]
        %v831 = vld [vmem:[%s188 + $0x93c] sm:$0xf]
        %v832 = vld [vmem:[%s188 + $0x940] sm:$0xf]
        %v833 = vld [vmem:[%s188 + $0x944] sm:$0xf]
        %v834 = vld [vmem:[%s188 + $0x948] sm:$0xf]
        %v835 = vld [vmem:[%s188 + $0x94c] sm:$0xf]
        %v836 = vld [vmem:[%s188 + $0x950] sm:$0xf]
        %v837 = vld [vmem:[%s188 + $0x954] sm:$0xf]
        %v838 = vld [vmem:[%s188 + $0x958] sm:$0xf]
        %v839 = vld [vmem:[%s188 + $0x95c] sm:$0xf]
        %v840 = vld [vmem:[%s188 + $0x960] sm:$0xf]
        %v841 = vld [vmem:[%s188 + $0x964] sm:$0xf]
        %v842 = vld [vmem:[%s188 + $0x968] sm:$0xf]
        %v843 = vld [vmem:[%s188 + $0x96c] sm:$0xf]
        %v844 = vld [vmem:[%s188 + $0x970] sm:$0xf]
        %v845 = vld [vmem:[%s188 + $0x974] sm:$0xf]
        %v846 = vld [vmem:[%s188 + $0x978] sm:$0xf]
        %v847 = vld [vmem:[%s188 + $0x97c] sm:$0xf]
        %v848 = vld [vmem:[%s188 + $0x980] sm:$0xf]
        %v849 = vld [vmem:[%s188 + $0x984] sm:$0xf]
        %v850 = vld [vmem:[%s188 + $0x988] sm:$0xf]
        %v851 = vld [vmem:[%s188 + $0x98c] sm:$0xf]
        %v852 = vld [vmem:[%s188 + $0x990] sm:$0xf]
        %v853 = vld [vmem:[%s188 + $0x994] sm:$0xf]
        %v854 = vld [vmem:[%s188 + $0x998] sm:$0xf]
        %v855 = vld [vmem:[%s188 + $0x99c] sm:$0xf]
        %v856 = vld [vmem:[%s188 + $0x9a0] sm:$0xf]
        %v857 = vld [vmem:[%s188 + $0x9a4] sm:$0xf]
        %v858 = vld [vmem:[%s188 + $0x9a8] sm:$0xf]
        %v859 = vld [vmem:[%s188 + $0x9ac] sm:$0xf]
        %v860 = vld [vmem:[%s188 + $0x9b0] sm:$0xf]
        %v861 = vld [vmem:[%s188 + $0x9b4] sm:$0xf]
        %v862 = vld [vmem:[%s188 + $0x9b8] sm:$0xf]
        %v863 = vld [vmem:[%s188 + $0x9bc] sm:$0xf]
        %v864 = vld [vmem:[%s188 + $0x9c0] sm:$0xf]
        %v865 = vld [vmem:[%s188 + $0x9c4] sm:$0xf]
        %v866 = vld [vmem:[%s188 + $0x9c8] sm:$0xf]
        %v867 = vld [vmem:[%s188 + $0x9cc] sm:$0xf]
        %v868 = vld [vmem:[%s188 + $0x9d0] sm:$0xf]
        %v869 = vld [vmem:[%s188 + $0x9d4] sm:$0xf]
        %v870 = vld [vmem:[%s188 + $0x9d8] sm:$0xf]
        %v871 = vld [vmem:[%s188 + $0x9dc] sm:$0xf]
        %v872 = vld [vmem:[%s188 + $0x9e0] sm:$0xf]
        %v873 = vld [vmem:[%s188 + $0x9e4] sm:$0xf]
        %v874 = vld [vmem:[%s188 + $0x9e8] sm:$0xf]
        %v875 = vld [vmem:[%s188 + $0x9ec] sm:$0xf]
        %v876 = vld [vmem:[%s188 + $0x9f0] sm:$0xf]
        %v877 = vld [vmem:[%s188 + $0x9f4] sm:$0xf]
        %v878 = vld [vmem:[%s188 + $0x9f8] sm:$0xf]
        %v879 = vld [vmem:[%s188 + $0x9fc] sm:$0xf]
        %v880 = vld [vmem:[%s188 + $0xa00] sm:$0xf]
        %v881 = vld [vmem:[%s188 + $0xa04] sm:$0xf]
        %v882 = vld [vmem:[%s188 + $0xa08] sm:$0xf]
        %v883 = vld [vmem:[%s188 + $0xa0c] sm:$0xf]
        %v884 = vld [vmem:[%s188 + $0xa10] sm:$0xf]
        %v885 = vld [vmem:[%s188 + $0xa14] sm:$0xf]
        %v886 = vld [vmem:[%s188 + $0xa18] sm:$0xf]
        %v887 = vld [vmem:[%s188 + $0xa1c] sm:$0xf]
        %v888 = vld [vmem:[%s188 + $0xa20] sm:$0xf]
        %v889 = vld [vmem:[%s188 + $0xa24] sm:$0xf]
        %v890 = vld [vmem:[%s188 + $0xa28] sm:$0xf]
        %v891 = vld [vmem:[%s188 + $0xa2c] sm:$0xf]
        %v892 = vld [vmem:[%s188 + $0xa30] sm:$0xf]
        %v893 = vld [vmem:[%s188 + $0xa34] sm:$0xf]
        %v894 = vld [vmem:[%s188 + $0xa38] sm:$0xf]
        %v895 = vld [vmem:[%s188 + $0xa3c] sm:$0xf]
        %v896 = vld [vmem:[%s188 + $0xa40] sm:$0xf]
        %v897 = vld [vmem:[%s188 + $0xa44] sm:$0xf]
        %v898 = vld [vmem:[%s188 + $0xa48] sm:$0xf]
        %v899 = vld [vmem:[%s188 + $0xa4c] sm:$0xf]
        %v900 = vld [vmem:[%s188 + $0xa50] sm:$0xf]
        %v901 = vld [vmem:[%s188 + $0xa54] sm:$0xf]
        %v902 = vld [vmem:[%s188 + $0xa58] sm:$0xf]
        %v903 = vld [vmem:[%s188 + $0xa5c] sm:$0xf]
        %v904 = vld [vmem:[%s188 + $0xa60] sm:$0xf]
        %v905 = vld [vmem:[%s188 + $0xa64] sm:$0xf]
        %v906 = vld [vmem:[%s188 + $0xa68] sm:$0xf]
        %v907 = vld [vmem:[%s188 + $0xa6c] sm:$0xf]
        %v908 = vld [vmem:[%s188 + $0xa70] sm:$0xf]
        %v909 = vld [vmem:[%s188 + $0xa74] sm:$0xf]
        %v910 = vld [vmem:[%s188 + $0xa78] sm:$0xf]
        %v911 = vld [vmem:[%s188 + $0xa7c] sm:$0xf]
        %v912 = vld [vmem:[%s188 + $0xa80] sm:$0xf]
        %v913 = vld [vmem:[%s188 + $0xa84] sm:$0xf]
        %v914 = vld [vmem:[%s188 + $0xa88] sm:$0xf]
        %v915 = vld [vmem:[%s188 + $0xa8c] sm:$0xf]
        %v916 = vld [vmem:[%s188 + $0xa90] sm:$0xf]
        %v917 = vld [vmem:[%s188 + $0xa94] sm:$0xf]
        %v918 = vld [vmem:[%s188 + $0xa98] sm:$0xf]
        %v919 = vld [vmem:[%s188 + $0xa9c] sm:$0xf]
        %v920 = vld [vmem:[%s188 + $0xaa0] sm:$0xf]
        %v921 = vld [vmem:[%s188 + $0xaa4] sm:$0xf]
        %v922 = vld [vmem:[%s188 + $0xaa8] sm:$0xf]
        %v923 = vld [vmem:[%s188 + $0xaac] sm:$0xf]
        %v924 = vld [vmem:[%s188 + $0xab0] sm:$0xf]
        %v925 = vld [vmem:[%s188 + $0xab4] sm:$0xf]
        %v926 = vld [vmem:[%s188 + $0xab8] sm:$0xf]
        %v927 = vld [vmem:[%s188 + $0xabc] sm:$0xf]
        %v928 = vld [vmem:[%s188 + $0xac0] sm:$0xf]
        %v929 = vld [vmem:[%s188 + $0xac4] sm:$0xf]
        %v930 = vld [vmem:[%s188 + $0xac8] sm:$0xf]
        %v931 = vld [vmem:[%s188 + $0xacc] sm:$0xf]
        %v932 = vld [vmem:[%s188 + $0xad0] sm:$0xf]
        %v933 = vld [vmem:[%s188 + $0xad4] sm:$0xf]
        %v934 = vld [vmem:[%s188 + $0xad8] sm:$0xf]
        %v935 = vld [vmem:[%s188 + $0xadc] sm:$0xf]
        %v936 = vld [vmem:[%s188 + $0xae0] sm:$0xf]
        %v937 = vld [vmem:[%s188 + $0xae4] sm:$0xf]
        %v938 = vld [vmem:[%s188 + $0xae8] sm:$0xf]
        %v939 = vld [vmem:[%s188 + $0xaec] sm:$0xf]
        %v940 = vld [vmem:[%s188 + $0xaf0] sm:$0xf]
        %v941 = vld [vmem:[%s188 + $0xaf4] sm:$0xf]
        %v942 = vld [vmem:[%s188 + $0xaf8] sm:$0xf]
        %v943 = vld [vmem:[%s188 + $0xafc] sm:$0xf]
        %v944 = vld [vmem:[%s188 + $0xb00] sm:$0xf]
        %v945 = vld [vmem:[%s188 + $0xb04] sm:$0xf]
        %v946 = vld [vmem:[%s188 + $0xb08] sm:$0xf]
        %v947 = vld [vmem:[%s188 + $0xb0c] sm:$0xf]
        %v948 = vld [vmem:[%s188 + $0xb10] sm:$0xf]
        %v949 = vld [vmem:[%s188 + $0xb14] sm:$0xf]
        %v950 = vld [vmem:[%s188 + $0xb18] sm:$0xf]
        %v951 = vld [vmem:[%s188 + $0xb1c] sm:$0xf]
        %v952 = vld [vmem:[%s188 + $0xb20] sm:$0xf]
        %v953 = vld [vmem:[%s188 + $0xb24] sm:$0xf]
        %v954 = vld [vmem:[%s188 + $0xb28] sm:$0xf]
        %v955 = vld [vmem:[%s188 + $0xb2c] sm:$0xf]
        %v956 = vld [vmem:[%s188 + $0xb30] sm:$0xf]
        %v957 = vld [vmem:[%s188 + $0xb34] sm:$0xf]
        %v958 = vld [vmem:[%s188 + $0xb38] sm:$0xf]
        %v959 = vld [vmem:[%s188 + $0xb3c] sm:$0xf]
        %v960 = vld [vmem:[%s188 + $0xb40] sm:$0xf]
        %v961 = vld [vmem:[%s188 + $0xb44] sm:$0xf]
        %v962 = vld [vmem:[%s188 + $0xb48] sm:$0xf]
        %v963 = vld [vmem:[%s188 + $0xb4c] sm:$0xf]
        %v964 = vld [vmem:[%s188 + $0xb50] sm:$0xf]
        %v965 = vld [vmem:[%s188 + $0xb54] sm:$0xf]
        %v966 = vld [vmem:[%s188 + $0xb58] sm:$0xf]
        %v967 = vld [vmem:[%s188 + $0xb5c] sm:$0xf]
        %v968 = vld [vmem:[%s188 + $0xb60] sm:$0xf]
        %v969 = vld [vmem:[%s188 + $0xb64] sm:$0xf]
        %v970 = vld [vmem:[%s188 + $0xb68] sm:$0xf]
        %v971 = vld [vmem:[%s188 + $0xb6c] sm:$0xf]
        %v972 = vld [vmem:[%s188 + $0xb70] sm:$0xf]
        %v973 = vld [vmem:[%s188 + $0xb74] sm:$0xf]
        %v974 = vld [vmem:[%s188 + $0xb78] sm:$0xf]
        %v975 = vld [vmem:[%s188 + $0xb7c] sm:$0xf]
        %v976 = vld [vmem:[%s188 + $0xb80] sm:$0xf]
        %v977 = vld [vmem:[%s188 + $0xb84] sm:$0xf]
        %v978 = vld [vmem:[%s188 + $0xb88] sm:$0xf]
        %v979 = vld [vmem:[%s188 + $0xb8c] sm:$0xf]
        %v980 = vld [vmem:[%s188 + $0xb90] sm:$0xf]
        %v981 = vld [vmem:[%s188 + $0xb94] sm:$0xf]
        %v982 = vld [vmem:[%s188 + $0xb98] sm:$0xf]
        %v983 = vld [vmem:[%s188 + $0xb9c] sm:$0xf]
        %v984 = vld [vmem:[%s188 + $0xba0] sm:$0xf]
        %v985 = vld [vmem:[%s188 + $0xba4] sm:$0xf]
        %v986 = vld [vmem:[%s188 + $0xba8] sm:$0xf]
        %v987 = vld [vmem:[%s188 + $0xbac] sm:$0xf]
        %v988 = vld [vmem:[%s188 + $0xbb0] sm:$0xf]
        %v989 = vld [vmem:[%s188 + $0xbb4] sm:$0xf]
        %v990 = vld [vmem:[%s188 + $0xbb8] sm:$0xf]
        %v991 = vld [vmem:[%s188 + $0xbbc] sm:$0xf]
        %v992 = vld [vmem:[%s188 + $0xbc0] sm:$0xf]
        %v993 = vld [vmem:[%s188 + $0xbc4] sm:$0xf]
        %v994 = vld [vmem:[%s188 + $0xbc8] sm:$0xf]
        %v995 = vld [vmem:[%s188 + $0xbcc] sm:$0xf]
        %v996 = vld [vmem:[%s188 + $0xbd0] sm:$0xf]
        %v997 = vld [vmem:[%s188 + $0xbd4] sm:$0xf]
        %v998 = vld [vmem:[%s188 + $0xbd8] sm:$0xf]
        %v999 = vld [vmem:[%s188 + $0xbdc] sm:$0xf]
        %v1000 = vld [vmem:[%s188 + $0xbe0] sm:$0xf]
        %v1001 = vld [vmem:[%s188 + $0xbe4] sm:$0xf]
        %v1002 = vld [vmem:[%s188 + $0xbe8] sm:$0xf]
        %v1003 = vld [vmem:[%s188 + $0xbec] sm:$0xf]
        %v1004 = vld [vmem:[%s188 + $0xbf0] sm:$0xf]
        %v1005 = vld [vmem:[%s188 + $0xbf4] sm:$0xf]
        %v1006 = vld [vmem:[%s188 + $0xbf8] sm:$0xf]
        %v1007 = vld [vmem:[%s188 + $0xbfc] sm:$0xf]
        %v1008 = vld [vmem:[%s188 + $0xc00] sm:$0xf]
        %v1009 = vld [vmem:[%s188 + $0xc04] sm:$0xf]
        %v1010 = vld [vmem:[%s188 + $0xc08] sm:$0xf]
        %v1011 = vld [vmem:[%s188 + $0xc0c] sm:$0xf]
        %v1012 = vld [vmem:[%s188 + $0xc10] sm:$0xf]
        %v1013 = vld [vmem:[%s188 + $0xc14] sm:$0xf]
        %v1014 = vld [vmem:[%s188 + $0xc18] sm:$0xf]
        %v1015 = vld [vmem:[%s188 + $0xc1c] sm:$0xf]
        %v1016 = vld [vmem:[%s188 + $0xc20] sm:$0xf]
        %v1017 = vld [vmem:[%s188 + $0xc24] sm:$0xf]
        %v1018 = vld [vmem:[%s188 + $0xc28] sm:$0xf]
        %v1019 = vld [vmem:[%s188 + $0xc2c] sm:$0xf]
        %v1020 = vld [vmem:[%s188 + $0xc30] sm:$0xf]
        %v1021 = vld [vmem:[%s188 + $0xc34] sm:$0xf]
        %v1022 = vld [vmem:[%s188 + $0xc38] sm:$0xf]
        %v1023 = vld [vmem:[%s188 + $0xc3c] sm:$0xf]
        %v1024 = vld [vmem:[%s188 + $0xc40] sm:$0xf]
        %v1025 = vld [vmem:[%s188 + $0xc44] sm:$0xf]
        %v1026 = vld [vmem:[%s188 + $0xc48] sm:$0xf]
        %v1027 = vld [vmem:[%s188 + $0xc4c] sm:$0xf]
        %v1028 = vld [vmem:[%s188 + $0xc50] sm:$0xf]
        %v1029 = vld [vmem:[%s188 + $0xc54] sm:$0xf]
        %v1030 = vld [vmem:[%s188 + $0xc58] sm:$0xf]
        %v1031 = vld [vmem:[%s188 + $0xc5c] sm:$0xf]
        %v1032 = vld [vmem:[%s188 + $0xc60] sm:$0xf]
        %v1033 = vld [vmem:[%s188 + $0xc64] sm:$0xf]
        %v1034 = vld [vmem:[%s188 + $0xc68] sm:$0xf]
        %v1035 = vld [vmem:[%s188 + $0xc6c] sm:$0xf]
        %v1036 = vld [vmem:[%s188 + $0xc70] sm:$0xf]
        %v1037 = vld [vmem:[%s188 + $0xc74] sm:$0xf]
        %v1038 = vld [vmem:[%s188 + $0xc78] sm:$0xf]
        %v1039 = vld [vmem:[%s188 + $0xc7c] sm:$0xf]
        %v1040 = vld [vmem:[%s188 + $0xc80] sm:$0xf]
        %v1041 = vld [vmem:[%s188 + $0xc84] sm:$0xf]
        %v1042 = vld [vmem:[%s188 + $0xc88] sm:$0xf]
        %v1043 = vld [vmem:[%s188 + $0xc8c] sm:$0xf]
        %v1044 = vld [vmem:[%s188 + $0xc90] sm:$0xf]
        %v1045 = vld [vmem:[%s188 + $0xc94] sm:$0xf]
        %v1046 = vld [vmem:[%s188 + $0xc98] sm:$0xf]
        %v1047 = vld [vmem:[%s188 + $0xc9c] sm:$0xf]
        %v1048 = vld [vmem:[%s188 + $0xca0] sm:$0xf]
        %v1049 = vld [vmem:[%s188 + $0xca4] sm:$0xf]
        %v1050 = vld [vmem:[%s188 + $0xca8] sm:$0xf]
        %v1051 = vld [vmem:[%s188 + $0xcac] sm:$0xf]
        %v1052 = vld [vmem:[%s188 + $0xcb0] sm:$0xf]
        %v1053 = vld [vmem:[%s188 + $0xcb4] sm:$0xf]
        %v1054 = vld [vmem:[%s188 + $0xcb8] sm:$0xf]
        %v1055 = vld [vmem:[%s188 + $0xcbc] sm:$0xf]
        %v1056 = vld [vmem:[%s188 + $0xcc0] sm:$0xf]
        %v1057 = vld [vmem:[%s188 + $0xcc4] sm:$0xf]
        %v1058 = vld [vmem:[%s188 + $0xcc8] sm:$0xf]
        %v1059 = vld [vmem:[%s188 + $0xccc] sm:$0xf]
        %v1060 = vld [vmem:[%s188 + $0xcd0] sm:$0xf]
        %v1061 = vld [vmem:[%s188 + $0xcd4] sm:$0xf]
        %v1062 = vld [vmem:[%s188 + $0xcd8] sm:$0xf]
        %v1063 = vld [vmem:[%s188 + $0xcdc] sm:$0xf]
        %v1064 = vld [vmem:[%s188 + $0xce0] sm:$0xf]
        %v1065 = vld [vmem:[%s188 + $0xce4] sm:$0xf]
        %v1066 = vld [vmem:[%s188 + $0xce8] sm:$0xf]
        %v1067 = vld [vmem:[%s188 + $0xcec] sm:$0xf]
        %v1068 = vld [vmem:[%s188 + $0xcf0] sm:$0xf]
        %v1069 = vld [vmem:[%s188 + $0xcf4] sm:$0xf]
        %v1070 = vld [vmem:[%s188 + $0xcf8] sm:$0xf]
        %v1071 = vld [vmem:[%s188 + $0xcfc] sm:$0xf]
        %v1072 = vld [vmem:[%s188 + $0xd00] sm:$0xf]
        %v1073 = vld [vmem:[%s188 + $0xd04] sm:$0xf]
        %v1074 = vld [vmem:[%s188 + $0xd08] sm:$0xf]
        %v1075 = vld [vmem:[%s188 + $0xd0c] sm:$0xf]
        %v1076 = vld [vmem:[%s188 + $0xd10] sm:$0xf]
        %v1077 = vld [vmem:[%s188 + $0xd14] sm:$0xf]
        %v1078 = vld [vmem:[%s188 + $0xd18] sm:$0xf]
        %v1079 = vld [vmem:[%s188 + $0xd1c] sm:$0xf]
        %v1080 = vld [vmem:[%s188 + $0xd20] sm:$0xf]
        %v1081 = vld [vmem:[%s188 + $0xd24] sm:$0xf]
        %v1082 = vld [vmem:[%s188 + $0xd28] sm:$0xf]
        %v1083 = vld [vmem:[%s188 + $0xd2c] sm:$0xf]
        %v1084 = vld [vmem:[%s188 + $0xd30] sm:$0xf]
        %v1085 = vld [vmem:[%s188 + $0xd34] sm:$0xf]
        %v1086 = vld [vmem:[%s188 + $0xd38] sm:$0xf]
        %v1087 = vld [vmem:[%s188 + $0xd3c] sm:$0xf]
        %v1088 = vld [vmem:[%s188 + $0xd40] sm:$0xf]
        %v1089 = vld [vmem:[%s188 + $0xd44] sm:$0xf]
        %v1090 = vld [vmem:[%s188 + $0xd48] sm:$0xf]
        %v1091 = vld [vmem:[%s188 + $0xd4c] sm:$0xf]
        %v1092 = vld [vmem:[%s188 + $0xd50] sm:$0xf]
        %v1093 = vld [vmem:[%s188 + $0xd54] sm:$0xf]
        %v1094 = vld [vmem:[%s188 + $0xd58] sm:$0xf]
        %v1095 = vld [vmem:[%s188 + $0xd5c] sm:$0xf]
        %v1096 = vld [vmem:[%s188 + $0xd60] sm:$0xf]
        %v1097 = vld [vmem:[%s188 + $0xd64] sm:$0xf]
        %v1098 = vld [vmem:[%s188 + $0xd68] sm:$0xf]
        %v1099 = vld [vmem:[%s188 + $0xd6c] sm:$0xf]
        %v1100 = vld [vmem:[%s188 + $0xd70] sm:$0xf]
        %v1101 = vld [vmem:[%s188 + $0xd74] sm:$0xf]
        %v1102 = vld [vmem:[%s188 + $0xd78] sm:$0xf]
        %v1103 = vld [vmem:[%s188 + $0xd7c] sm:$0xf]
        %v1104 = vld [vmem:[%s188 + $0xd80] sm:$0xf]
        %v1105 = vld [vmem:[%s188 + $0xd84] sm:$0xf]
        %v1106 = vld [vmem:[%s188 + $0xd88] sm:$0xf]
        %v1107 = vld [vmem:[%s188 + $0xd8c] sm:$0xf]
        %v1108 = vld [vmem:[%s188 + $0xd90] sm:$0xf]
        %v1109 = vld [vmem:[%s188 + $0xd94] sm:$0xf]
        %v1110 = vld [vmem:[%s188 + $0xd98] sm:$0xf]
        %v1111 = vld [vmem:[%s188 + $0xd9c] sm:$0xf]
        %v1112 = vld [vmem:[%s188 + $0xda0] sm:$0xf]
        %v1113 = vld [vmem:[%s188 + $0xda4] sm:$0xf]
        %v1114 = vld [vmem:[%s188 + $0xda8] sm:$0xf]
        %v1115 = vld [vmem:[%s188 + $0xdac] sm:$0xf]
        %v1116 = vld [vmem:[%s188 + $0xdb0] sm:$0xf]
        %v1117 = vld [vmem:[%s188 + $0xdb4] sm:$0xf]
        %v1118 = vld [vmem:[%s188 + $0xdb8] sm:$0xf]
        %v1119 = vld [vmem:[%s188 + $0xdbc] sm:$0xf]
        %v1120 = vld [vmem:[%s188 + $0xdc0] sm:$0xf]
        %v1121 = vld [vmem:[%s188 + $0xdc4] sm:$0xf]
        %v1122 = vld [vmem:[%s188 + $0xdc8] sm:$0xf]
        %v1123 = vld [vmem:[%s188 + $0xdcc] sm:$0xf]
        %v1124 = vld [vmem:[%s188 + $0xdd0] sm:$0xf]
        %v1125 = vld [vmem:[%s188 + $0xdd4] sm:$0xf]
        %v1126 = vld [vmem:[%s188 + $0xdd8] sm:$0xf]
        %v1127 = vld [vmem:[%s188 + $0xddc] sm:$0xf]
        %v1128 = vld [vmem:[%s188 + $0xde0] sm:$0xf]
        %v1129 = vld [vmem:[%s188 + $0xde4] sm:$0xf]
        %v1130 = vld [vmem:[%s188 + $0xde8] sm:$0xf]
        %v1131 = vld [vmem:[%s188 + $0xdec] sm:$0xf]
        %v1132 = vld [vmem:[%s188 + $0xdf0] sm:$0xf]
        %v1133 = vld [vmem:[%s188 + $0xdf4] sm:$0xf]
        %v1134 = vld [vmem:[%s188 + $0xdf8] sm:$0xf]
        %v1135 = vld [vmem:[%s188 + $0xdfc] sm:$0xf]
        %v1136 = vld [vmem:[%s188 + $0xe00] sm:$0xf]
        %v1137 = vld [vmem:[%s188 + $0xe04] sm:$0xf]
        %v1138 = vld [vmem:[%s188 + $0xe08] sm:$0xf]
        %v1139 = vld [vmem:[%s188 + $0xe0c] sm:$0xf]
        %v1140 = vld [vmem:[%s188 + $0xe10] sm:$0xf]
        %v1141 = vld [vmem:[%s188 + $0xe14] sm:$0xf]
        %v1142 = vld [vmem:[%s188 + $0xe18] sm:$0xf]
        %v1143 = vld [vmem:[%s188 + $0xe1c] sm:$0xf]
        %v1144 = vld [vmem:[%s188 + $0xe20] sm:$0xf]
        %v1145 = vld [vmem:[%s188 + $0xe24] sm:$0xf]
        %v1146 = vld [vmem:[%s188 + $0xe28] sm:$0xf]
        %v1147 = vld [vmem:[%s188 + $0xe2c] sm:$0xf]
        %v1148 = vld [vmem:[%s188 + $0xe30] sm:$0xf]
        %v1149 = vld [vmem:[%s188 + $0xe34] sm:$0xf]
        %v1150 = vld [vmem:[%s188 + $0xe38] sm:$0xf]
        %v1151 = vld [vmem:[%s188 + $0xe3c] sm:$0xf]
        %v1152 = vld [vmem:[%s188 + $0xe40] sm:$0xf]
        %v1153 = vld [vmem:[%s188 + $0xe44] sm:$0xf]
        %v1154 = vld [vmem:[%s188 + $0xe48] sm:$0xf]
        %v1155 = vld [vmem:[%s188 + $0xe4c] sm:$0xf]
        %v1156 = vld [vmem:[%s188 + $0xe50] sm:$0xf]
        %v1157 = vld [vmem:[%s188 + $0xe54] sm:$0xf]
        %v1158 = vld [vmem:[%s188 + $0xe58] sm:$0xf]
        %v1159 = vld [vmem:[%s188 + $0xe5c] sm:$0xf]
        %v1160 = vld [vmem:[%s188 + $0xe60] sm:$0xf]
        %v1161 = vld [vmem:[%s188 + $0xe64] sm:$0xf]
        %v1162 = vld [vmem:[%s188 + $0xe68] sm:$0xf]
        %v1163 = vld [vmem:[%s188 + $0xe6c] sm:$0xf]
        %v1164 = vld [vmem:[%s188 + $0xe70] sm:$0xf]
        %v1165 = vld [vmem:[%s188 + $0xe74] sm:$0xf]
        %v1166 = vld [vmem:[%s188 + $0xe78] sm:$0xf]
        %v1167 = vld [vmem:[%s188 + $0xe7c] sm:$0xf]
        %v1168 = vld [vmem:[%s188 + $0xe80] sm:$0xf]
        %v1169 = vld [vmem:[%s188 + $0xe84] sm:$0xf]
        %v1170 = vld [vmem:[%s188 + $0xe88] sm:$0xf]
        %v1171 = vld [vmem:[%s188 + $0xe8c] sm:$0xf]
        %v1172 = vld [vmem:[%s188 + $0xe90] sm:$0xf]
        %v1173 = vld [vmem:[%s188 + $0xe94] sm:$0xf]
        %v1174 = vld [vmem:[%s188 + $0xe98] sm:$0xf]
        %v1175 = vld [vmem:[%s188 + $0xe9c] sm:$0xf]
        %v1176 = vld [vmem:[%s188 + $0xea0] sm:$0xf]
        %v1177 = vld [vmem:[%s188 + $0xea4] sm:$0xf]
        %v1178 = vld [vmem:[%s188 + $0xea8] sm:$0xf]
        %v1179 = vld [vmem:[%s188 + $0xeac] sm:$0xf]
        %v1180 = vld [vmem:[%s188 + $0xeb0] sm:$0xf]
        %v1181 = vld [vmem:[%s188 + $0xeb4] sm:$0xf]
        %v1182 = vld [vmem:[%s188 + $0xeb8] sm:$0xf]
        %v1183 = vld [vmem:[%s188 + $0xebc] sm:$0xf]
        %v1184 = vld [vmem:[%s188 + $0xec0] sm:$0xf]
        %v1185 = vld [vmem:[%s188 + $0xec4] sm:$0xf]
        %v1186 = vld [vmem:[%s188 + $0xec8] sm:$0xf]
        %v1187 = vld [vmem:[%s188 + $0xecc] sm:$0xf]
        %v1188 = vld [vmem:[%s188 + $0xed0] sm:$0xf]
        %v1189 = vld [vmem:[%s188 + $0xed4] sm:$0xf]
        %v1190 = vld [vmem:[%s188 + $0xed8] sm:$0xf]
        %v1191 = vld [vmem:[%s188 + $0xedc] sm:$0xf]
        %v1192 = vld [vmem:[%s188 + $0xee0] sm:$0xf]
        %v1193 = vld [vmem:[%s188 + $0xee4] sm:$0xf]
        %v1194 = vld [vmem:[%s188 + $0xee8] sm:$0xf]
        %v1195 = vld [vmem:[%s188 + $0xeec] sm:$0xf]
        %v1196 = vld [vmem:[%s188 + $0xef0] sm:$0xf]
        %v1197 = vld [vmem:[%s188 + $0xef4] sm:$0xf]
        %v1198 = vld [vmem:[%s188 + $0xef8] sm:$0xf]
        %v1199 = vld [vmem:[%s188 + $0xefc] sm:$0xf]
        %v1200 = vld [vmem:[%s188 + $0xf00] sm:$0xf]
        %v1201 = vld [vmem:[%s188 + $0xf04] sm:$0xf]
        %v1202 = vld [vmem:[%s188 + $0xf08] sm:$0xf]
        %v1203 = vld [vmem:[%s188 + $0xf0c] sm:$0xf]
        %v1204 = vld [vmem:[%s188 + $0xf10] sm:$0xf]
        %v1205 = vld [vmem:[%s188 + $0xf14] sm:$0xf]
        %v1206 = vld [vmem:[%s188 + $0xf18] sm:$0xf]
        %v1207 = vld [vmem:[%s188 + $0xf1c] sm:$0xf]
        %v1208 = vld [vmem:[%s188 + $0xf20] sm:$0xf]
        %v1209 = vld [vmem:[%s188 + $0xf24] sm:$0xf]
        %v1210 = vld [vmem:[%s188 + $0xf28] sm:$0xf]
        %v1211 = vld [vmem:[%s188 + $0xf2c] sm:$0xf]
        %v1212 = vld [vmem:[%s188 + $0xf30] sm:$0xf]
        %v1213 = vld [vmem:[%s188 + $0xf34] sm:$0xf]
        %v1214 = vld [vmem:[%s188 + $0xf38] sm:$0xf]
        %v1215 = vld [vmem:[%s188 + $0xf3c] sm:$0xf]
        %v1216 = vld [vmem:[%s188 + $0xf40] sm:$0xf]
        %v1217 = vld [vmem:[%s188 + $0xf44] sm:$0xf]
        %v1218 = vld [vmem:[%s188 + $0xf48] sm:$0xf]
        %v1219 = vld [vmem:[%s188 + $0xf4c] sm:$0xf]
        %v1220 = vld [vmem:[%s188 + $0xf50] sm:$0xf]
        %v1221 = vld [vmem:[%s188 + $0xf54] sm:$0xf]
        %v1222 = vld [vmem:[%s188 + $0xf58] sm:$0xf]
        %v1223 = vld [vmem:[%s188 + $0xf5c] sm:$0xf]
        %v1224 = vld [vmem:[%s188 + $0xf60] sm:$0xf]
        %v1225 = vld [vmem:[%s188 + $0xf64] sm:$0xf]
        %v1226 = vld [vmem:[%s188 + $0xf68] sm:$0xf]
        %v1227 = vld [vmem:[%s188 + $0xf6c] sm:$0xf]
        %v1228 = vld [vmem:[%s188 + $0xf70] sm:$0xf]
        %v1229 = vld [vmem:[%s188 + $0xf74] sm:$0xf]
        %v1230 = vld [vmem:[%s188 + $0xf78] sm:$0xf]
        %v1231 = vld [vmem:[%s188 + $0xf7c] sm:$0xf]
        %v1232 = vld [vmem:[%s188 + $0xf80] sm:$0xf]
        %v1233 = vld [vmem:[%s188 + $0xf84] sm:$0xf]
        %v1234 = vld [vmem:[%s188 + $0xf88] sm:$0xf]
        %v1235 = vld [vmem:[%s188 + $0xf8c] sm:$0xf]
        %v1236 = vld [vmem:[%s188 + $0xf90] sm:$0xf]
        %v1237 = vld [vmem:[%s188 + $0xf94] sm:$0xf]
        %v1238 = vld [vmem:[%s188 + $0xf98] sm:$0xf]
        %v1239 = vld [vmem:[%s188 + $0xf9c] sm:$0xf]
        %v1240 = vld [vmem:[%s188 + $0xfa0] sm:$0xf]
        %v1241 = vld [vmem:[%s188 + $0xfa4] sm:$0xf]
        %v1242 = vld [vmem:[%s188 + $0xfa8] sm:$0xf]
        %v1243 = vld [vmem:[%s188 + $0xfac] sm:$0xf]
        %v1244 = vld [vmem:[%s188 + $0xfb0] sm:$0xf]
        %v1245 = vld [vmem:[%s188 + $0xfb4] sm:$0xf]
        %v1246 = vld [vmem:[%s188 + $0xfb8] sm:$0xf]
        %v1247 = vld [vmem:[%s188 + $0xfbc] sm:$0xf]
        %v1248 = vld [vmem:[%s188 + $0xfc0] sm:$0xf]
        %v1249 = vld [vmem:[%s188 + $0xfc4] sm:$0xf]
        %v1250 = vld [vmem:[%s188 + $0xfc8] sm:$0xf]
        %v1251 = vld [vmem:[%s188 + $0xfcc] sm:$0xf]
        %v1252 = vld [vmem:[%s188 + $0xfd0] sm:$0xf]
        %v1253 = vld [vmem:[%s188 + $0xfd4] sm:$0xf]
        %v1254 = vld [vmem:[%s188 + $0xfd8] sm:$0xf]
        %v1255 = vld [vmem:[%s188 + $0xfdc] sm:$0xf]
        %v1256 = vld [vmem:[%s188 + $0xfe0] sm:$0xf]
        %v1257 = vld [vmem:[%s188 + $0xfe4] sm:$0xf]
        %v1258 = vld [vmem:[%s188 + $0xfe8] sm:$0xf]
        %v1259 = vld [vmem:[%s188 + $0xfec] sm:$0xf]
        %v1260 = vld [vmem:[%s188 + $0xff0] sm:$0xf]
        %v1261 = vld [vmem:[%s188 + $0xff4] sm:$0xf]
        %v1262 = vld [vmem:[%s188 + $0xff8] sm:$0xf]
        %v1263 = vld [vmem:[%s188 + $0xffc] sm:$0xf]
        %v1264 = vld [vmem:[%s188 + $0x1000] sm:$0xf]
        %v1265 = vld [vmem:[%s188 + $0x1004] sm:$0xf]
        %v1266 = vld [vmem:[%s188 + $0x1008] sm:$0xf]
        %v1267 = vld [vmem:[%s188 + $0x100c] sm:$0xf]
        %v1268 = vld [vmem:[%s188 + $0x1010] sm:$0xf]
        %v1269 = vld [vmem:[%s188 + $0x1014] sm:$0xf]
        %v1270 = vld [vmem:[%s188 + $0x1018] sm:$0xf]
        %v1271 = vld [vmem:[%s188 + $0x101c] sm:$0xf]
        %v1272 = vld [vmem:[%s188 + $0x1020] sm:$0xf]
        %v1273 = vld [vmem:[%s188 + $0x1024] sm:$0xf]
        %v1274 = vld [vmem:[%s188 + $0x1028] sm:$0xf]
        %v1275 = vld [vmem:[%s188 + $0x102c] sm:$0xf]
        %v1276 = vld [vmem:[%s188 + $0x1030] sm:$0xf]
        %v1277 = vld [vmem:[%s188 + $0x1034] sm:$0xf]
        %v1278 = vld [vmem:[%s188 + $0x1038] sm:$0xf]
        %v1279 = vld [vmem:[%s188 + $0x103c] sm:$0xf]
        %v1280 = vld [vmem:[%s188 + $0x1040] sm:$0xf]
        %v1281 = vld [vmem:[%s188 + $0x1044] sm:$0xf]
        %v1282 = vld [vmem:[%s188 + $0x1048] sm:$0xf]
        %v1283 = vld [vmem:[%s188 + $0x104c] sm:$0xf]
        %v1284 = vld [vmem:[%s188 + $0x1050] sm:$0xf]
        %v1285 = vld [vmem:[%s188 + $0x1054] sm:$0xf]
        %v1286 = vld [vmem:[%s188 + $0x1058] sm:$0xf]
        %v1287 = vld [vmem:[%s188 + $0x105c] sm:$0xf]
        %v1288 = vld [vmem:[%s188 + $0x1060] sm:$0xf]
        %v1289 = vld [vmem:[%s188 + $0x1064] sm:$0xf]
        %v1290 = vld [vmem:[%s188 + $0x1068] sm:$0xf]
        %v1291 = vld [vmem:[%s188 + $0x106c] sm:$0xf]
        %v1292 = vld [vmem:[%s188 + $0x1070] sm:$0xf]
        %v1293 = vld [vmem:[%s188 + $0x1074] sm:$0xf]
        %v1294 = vld [vmem:[%s188 + $0x1078] sm:$0xf]
        %v1295 = vld [vmem:[%s188 + $0x107c] sm:$0xf]
        %v1296 = vld [vmem:[%s188 + $0x1080] sm:$0xf]
        %v1297 = vld [vmem:[%s188 + $0x1084] sm:$0xf]
        %v1298 = vld [vmem:[%s188 + $0x1088] sm:$0xf]
        %v1299 = vld [vmem:[%s188 + $0x108c] sm:$0xf]
        %v1300 = vld [vmem:[%s188 + $0x1090] sm:$0xf]
        %v1301 = vld [vmem:[%s188 + $0x1094] sm:$0xf]
        %v1302 = vld [vmem:[%s188 + $0x1098] sm:$0xf]
        %v1303 = vld [vmem:[%s188 + $0x109c] sm:$0xf]
        %v1304 = vld [vmem:[%s188 + $0x10a0] sm:$0xf]
        %v1305 = vld [vmem:[%s188 + $0x10a4] sm:$0xf]
        %v1306 = vld [vmem:[%s188 + $0x10a8] sm:$0xf]
        %v1307 = vld [vmem:[%s188 + $0x10ac] sm:$0xf]
        %v1308 = vld [vmem:[%s188 + $0x10b0] sm:$0xf]
        %v1309 = vld [vmem:[%s188 + $0x10b4] sm:$0xf]
        %v1310 = vld [vmem:[%s188 + $0x10b8] sm:$0xf]
        %v1311 = vld [vmem:[%s188 + $0x10bc] sm:$0xf]
        %v1312 = vld [vmem:[%s188 + $0x10c0] sm:$0xf]
        %v1313 = vld [vmem:[%s188 + $0x10c4] sm:$0xf]
        %v1314 = vld [vmem:[%s188 + $0x10c8] sm:$0xf]
        %v1315 = vld [vmem:[%s188 + $0x10cc] sm:$0xf]
        %v1316 = vld [vmem:[%s188 + $0x10d0] sm:$0xf]
        %v1317 = vld [vmem:[%s188 + $0x10d4] sm:$0xf]
        %v1318 = vld [vmem:[%s188 + $0x10d8] sm:$0xf]
        %v1319 = vld [vmem:[%s188 + $0x10dc] sm:$0xf]
        %v1320 = vld [vmem:[%s188 + $0x10e0] sm:$0xf]
        %v1321 = vld [vmem:[%s188 + $0x10e4] sm:$0xf]
        %v1322 = vld [vmem:[%s188 + $0x10e8] sm:$0xf]
        %v1323 = vld [vmem:[%s188 + $0x10ec] sm:$0xf]
        %v1324 = vld [vmem:[%s188 + $0x10f0] sm:$0xf]
        %v1325 = vld [vmem:[%s188 + $0x10f4] sm:$0xf]
        %v1326 = vld [vmem:[%s188 + $0x10f8] sm:$0xf]
        %v1327 = vld [vmem:[%s188 + $0x10fc] sm:$0xf]
        %v1328 = vld [vmem:[%s188 + $0x1100] sm:$0xf]
        %v1329 = vld [vmem:[%s188 + $0x1104] sm:$0xf]
        %v1330 = vld [vmem:[%s188 + $0x1108] sm:$0xf]
        %v1331 = vld [vmem:[%s188 + $0x110c] sm:$0xf]
        %v1332 = vld [vmem:[%s188 + $0x1110] sm:$0xf]
        %v1333 = vld [vmem:[%s188 + $0x1114] sm:$0xf]
        %v1334 = vld [vmem:[%s188 + $0x1118] sm:$0xf]
        %v1335 = vld [vmem:[%s188 + $0x111c] sm:$0xf]
        %v1336 = vld [vmem:[%s188 + $0x1120] sm:$0xf]
        %v1337 = vld [vmem:[%s188 + $0x1124] sm:$0xf]
        %v1338 = vld [vmem:[%s188 + $0x1128] sm:$0xf]
        %v1339 = vld [vmem:[%s188 + $0x112c] sm:$0xf]
        %v1340 = vld [vmem:[%s188 + $0x1130] sm:$0xf]
        %v1341 = vld [vmem:[%s188 + $0x1134] sm:$0xf]
        %v1342 = vld [vmem:[%s188 + $0x1138] sm:$0xf]
        %v1343 = vld [vmem:[%s188 + $0x113c] sm:$0xf]
        %v1344 = vld [vmem:[%s188 + $0x1140] sm:$0xf]
        %v1345 = vld [vmem:[%s188 + $0x1144] sm:$0xf]
        %v1346 = vld [vmem:[%s188 + $0x1148] sm:$0xf]
        %v1347 = vld [vmem:[%s188 + $0x114c] sm:$0xf]
        %v1348 = vld [vmem:[%s188 + $0x1150] sm:$0xf]
        %v1349 = vld [vmem:[%s188 + $0x1154] sm:$0xf]
        %v1350 = vld [vmem:[%s188 + $0x1158] sm:$0xf]
        %v1351 = vld [vmem:[%s188 + $0x115c] sm:$0xf]
        %v1352 = vld [vmem:[%s188 + $0x1160] sm:$0xf]
        %v1353 = vld [vmem:[%s188 + $0x1164] sm:$0xf]
        %v1354 = vld [vmem:[%s188 + $0x1168] sm:$0xf]
        %v1355 = vld [vmem:[%s188 + $0x116c] sm:$0xf]
        %v1356 = vld [vmem:[%s188 + $0x1170] sm:$0xf]
        %v1357 = vld [vmem:[%s188 + $0x1174] sm:$0xf]
        %v1358 = vld [vmem:[%s188 + $0x1178] sm:$0xf]
        %v1359 = vld [vmem:[%s188 + $0x117c] sm:$0xf]
        %v1360 = vld [vmem:[%s188 + $0x1180] sm:$0xf]
        %v1361 = vld [vmem:[%s188 + $0x1184] sm:$0xf]
        %v1362 = vld [vmem:[%s188 + $0x1188] sm:$0xf]
        %v1363 = vld [vmem:[%s188 + $0x118c] sm:$0xf]
        %v1364 = vld [vmem:[%s188 + $0x1190] sm:$0xf]
        %v1365 = vld [vmem:[%s188 + $0x1194] sm:$0xf]
        %v1366 = vld [vmem:[%s188 + $0x1198] sm:$0xf]
        %v1367 = vld [vmem:[%s188 + $0x119c] sm:$0xf]
        %v1368 = vld [vmem:[%s188 + $0x11a0] sm:$0xf]
        %v1369 = vld [vmem:[%s188 + $0x11a4] sm:$0xf]
        %v1370 = vld [vmem:[%s188 + $0x11a8] sm:$0xf]
        %v1371 = vld [vmem:[%s188 + $0x11ac] sm:$0xf]
        %v1372 = vld [vmem:[%s188 + $0x11b0] sm:$0xf]
        %v1373 = vld [vmem:[%s188 + $0x11b4] sm:$0xf]
        %v1374 = vld [vmem:[%s188 + $0x11b8] sm:$0xf]
        %v1375 = vld [vmem:[%s188 + $0x11bc] sm:$0xf]
        %v1376 = vld [vmem:[%s188 + $0x11c0] sm:$0xf]
        %v1377 = vld [vmem:[%s188 + $0x11c4] sm:$0xf]
        %v1378 = vld [vmem:[%s188 + $0x11c8] sm:$0xf]
        %v1379 = vld [vmem:[%s188 + $0x11cc] sm:$0xf]
        %v1380 = vld [vmem:[%s188 + $0x11d0] sm:$0xf]
        %v1381 = vld [vmem:[%s188 + $0x11d4] sm:$0xf]
        %v1382 = vld [vmem:[%s188 + $0x11d8] sm:$0xf]
        %v1383 = vld [vmem:[%s188 + $0x11dc] sm:$0xf]
        %v1384 = vld [vmem:[%s188 + $0x11e0] sm:$0xf]
        %v1385 = vld [vmem:[%s188 + $0x11e4] sm:$0xf]
        %v1386 = vld [vmem:[%s188 + $0x11e8] sm:$0xf]
        %v1387 = vld [vmem:[%s188 + $0x11ec] sm:$0xf]
        %v1388 = vld [vmem:[%s188 + $0x11f0] sm:$0xf]
        %v1389 = vld [vmem:[%s188 + $0x11f4] sm:$0xf]
        %v1390 = vld [vmem:[%s188 + $0x11f8] sm:$0xf]
        %v1391 = vld [vmem:[%s188 + $0x11fc] sm:$0xf]
        %v1392 = vld [vmem:[%s188 + $0x1200] sm:$0xf]
        %v1393 = vld [vmem:[%s188 + $0x1204] sm:$0xf]
        %v1394 = vld [vmem:[%s188 + $0x1208] sm:$0xf]
        %v1395 = vld [vmem:[%s188 + $0x120c] sm:$0xf]
        %v1396 = vld [vmem:[%s188 + $0x1210] sm:$0xf]
        %v1397 = vld [vmem:[%s188 + $0x1214] sm:$0xf]
        %v1398 = vld [vmem:[%s188 + $0x1218] sm:$0xf]
        %v1399 = vld [vmem:[%s188 + $0x121c] sm:$0xf]
        %v1400 = vld [vmem:[%s188 + $0x1220] sm:$0xf]
        %v1401 = vld [vmem:[%s188 + $0x1224] sm:$0xf]
        %v1402 = vld [vmem:[%s188 + $0x1228] sm:$0xf]
        %v1403 = vld [vmem:[%s188 + $0x122c] sm:$0xf]
        %v1404 = vld [vmem:[%s188 + $0x1230] sm:$0xf]
        %v1405 = vld [vmem:[%s188 + $0x1234] sm:$0xf]
        %v1406 = vld [vmem:[%s188 + $0x1238] sm:$0xf]
        %v1407 = vld [vmem:[%s188 + $0x123c] sm:$0xf]
        %v1408 = vld [vmem:[%s188 + $0x1240] sm:$0xf]
        %v1409 = vld [vmem:[%s188 + $0x1244] sm:$0xf]
        %v1410 = vld [vmem:[%s188 + $0x1248] sm:$0xf]
        %v1411 = vld [vmem:[%s188 + $0x124c] sm:$0xf]
        %v1412 = vld [vmem:[%s188 + $0x1250] sm:$0xf]
        %v1413 = vld [vmem:[%s188 + $0x1254] sm:$0xf]
        %v1414 = vld [vmem:[%s188 + $0x1258] sm:$0xf]
        %v1415 = vld [vmem:[%s188 + $0x125c] sm:$0xf]
        %v1416 = vld [vmem:[%s188 + $0x1260] sm:$0xf]
        %v1417 = vld [vmem:[%s188 + $0x1264] sm:$0xf]
        %v1418 = vld [vmem:[%s188 + $0x1268] sm:$0xf]
        %v1419 = vld [vmem:[%s188 + $0x126c] sm:$0xf]
        %v1420 = vld [vmem:[%s188 + $0x1270] sm:$0xf]
        %v1421 = vld [vmem:[%s188 + $0x1274] sm:$0xf]
        %v1422 = vld [vmem:[%s188 + $0x1278] sm:$0xf]
        %v1423 = vld [vmem:[%s188 + $0x127c] sm:$0xf]
        %v1424 = vld [vmem:[%s188 + $0x1280] sm:$0xf]
        %v1425 = vld [vmem:[%s188 + $0x1284] sm:$0xf]
        %v1426 = vld [vmem:[%s188 + $0x1288] sm:$0xf]
        %v1427 = vld [vmem:[%s188 + $0x128c] sm:$0xf]
        %v1428 = vld [vmem:[%s188 + $0x1290] sm:$0xf]
        %v1429 = vld [vmem:[%s188 + $0x1294] sm:$0xf]
        %v1430 = vld [vmem:[%s188 + $0x1298] sm:$0xf]
        %v1431 = vld [vmem:[%s188 + $0x129c] sm:$0xf]
        %v1432 = vld [vmem:[%s188 + $0x12a0] sm:$0xf]
        %v1433 = vld [vmem:[%s188 + $0x12a4] sm:$0xf]
        %v1434 = vld [vmem:[%s188 + $0x12a8] sm:$0xf]
        %v1435 = vld [vmem:[%s188 + $0x12ac] sm:$0xf]
        %v1436 = vld [vmem:[%s188 + $0x12b0] sm:$0xf]
        %v1437 = vld [vmem:[%s188 + $0x12b4] sm:$0xf]
        %v1438 = vld [vmem:[%s188 + $0x12b8] sm:$0xf]
        %v1439 = vld [vmem:[%s188 + $0x12bc] sm:$0xf]
        %v1440 = vld [vmem:[%s188 + $0x12c0] sm:$0xf]
        %v1441 = vld [vmem:[%s188 + $0x12c4] sm:$0xf]
        %v1442 = vld [vmem:[%s188 + $0x12c8] sm:$0xf]
        %v1443 = vld [vmem:[%s188 + $0x12cc] sm:$0xf]
        %v1444 = vld [vmem:[%s188 + $0x12d0] sm:$0xf]
        %v1445 = vld [vmem:[%s188 + $0x12d4] sm:$0xf]
        %v1446 = vld [vmem:[%s188 + $0x12d8] sm:$0xf]
        %v1447 = vld [vmem:[%s188 + $0x12dc] sm:$0xf]
        %v1448 = vld [vmem:[%s188 + $0x12e0] sm:$0xf]
        %v1449 = vld [vmem:[%s188 + $0x12e4] sm:$0xf]
        %v1450 = vld [vmem:[%s188 + $0x12e8] sm:$0xf]
        %v1451 = vld [vmem:[%s188 + $0x12ec] sm:$0xf]
        %v1452 = vld [vmem:[%s188 + $0x12f0] sm:$0xf]
        %v1453 = vld [vmem:[%s188 + $0x12f4] sm:$0xf]
        %v1454 = vld [vmem:[%s188 + $0x12f8] sm:$0xf]
        %v1455 = vld [vmem:[%s188 + $0x12fc] sm:$0xf]
        %v1456 = vld [vmem:[%s188 + $0x1300] sm:$0xf]
        %v1457 = vld [vmem:[%s188 + $0x1304] sm:$0xf]
        %v1458 = vld [vmem:[%s188 + $0x1308] sm:$0xf]
        %v1459 = vld [vmem:[%s188 + $0x130c] sm:$0xf]
        %v1460 = vld [vmem:[%s188 + $0x1310] sm:$0xf]
        %v1461 = vld [vmem:[%s188 + $0x1314] sm:$0xf]
        %v1462 = vld [vmem:[%s188 + $0x1318] sm:$0xf]
        %v1463 = vld [vmem:[%s188 + $0x131c] sm:$0xf]
        %v1464 = vld [vmem:[%s188 + $0x1320] sm:$0xf]
        %v1465 = vld [vmem:[%s188 + $0x1324] sm:$0xf]
        %v1466 = vld [vmem:[%s188 + $0x1328] sm:$0xf]
        %v1467 = vld [vmem:[%s188 + $0x132c] sm:$0xf]
        %v1468 = vld [vmem:[%s188 + $0x1330] sm:$0xf]
        %v1469 = vld [vmem:[%s188 + $0x1334] sm:$0xf]
        %v1470 = vld [vmem:[%s188 + $0x1338] sm:$0xf]
        %v1471 = vld [vmem:[%s188 + $0x133c] sm:$0xf]
        %v1472 = vld [vmem:[%s188 + $0x1340] sm:$0xf]
        %v1473 = vld [vmem:[%s188 + $0x1344] sm:$0xf]
        %v1474 = vld [vmem:[%s188 + $0x1348] sm:$0xf]
        %v1475 = vld [vmem:[%s188 + $0x134c] sm:$0xf]
        %v1476 = vld [vmem:[%s188 + $0x1350] sm:$0xf]
        %v1477 = vld [vmem:[%s188 + $0x1354] sm:$0xf]
        %v1478 = vld [vmem:[%s188 + $0x1358] sm:$0xf]
        %v1479 = vld [vmem:[%s188 + $0x135c] sm:$0xf]
        %v1480 = vld [vmem:[%s188 + $0x1360] sm:$0xf]
        %v1481 = vld [vmem:[%s188 + $0x1364] sm:$0xf]
        %v1482 = vld [vmem:[%s188 + $0x1368] sm:$0xf]
        %v1483 = vld [vmem:[%s188 + $0x136c] sm:$0xf]
        %v1484 = vld [vmem:[%s188 + $0x1370] sm:$0xf]
        %v1485 = vld [vmem:[%s188 + $0x1374] sm:$0xf]
        %v1486 = vld [vmem:[%s188 + $0x1378] sm:$0xf]
        %v1487 = vld [vmem:[%s188 + $0x137c] sm:$0xf]
        %v1488 = vld [vmem:[%s188 + $0x1380] sm:$0xf]
        %v1489 = vld [vmem:[%s188 + $0x1384] sm:$0xf]
        %v1490 = vld [vmem:[%s188 + $0x1388] sm:$0xf]
        %v1491 = vld [vmem:[%s188 + $0x138c] sm:$0xf]
        %v1492 = vld [vmem:[%s188 + $0x1390] sm:$0xf]
        %v1493 = vld [vmem:[%s188 + $0x1394] sm:$0xf]
        %v1494 = vld [vmem:[%s188 + $0x1398] sm:$0xf]
        %v1495 = vld [vmem:[%s188 + $0x139c] sm:$0xf]
        %v1496 = vld [vmem:[%s188 + $0x13a0] sm:$0xf]
        %v1497 = vld [vmem:[%s188 + $0x13a4] sm:$0xf]
        %v1498 = vld [vmem:[%s188 + $0x13a8] sm:$0xf]
        %v1499 = vld [vmem:[%s188 + $0x13ac] sm:$0xf]
        %v1500 = vld [vmem:[%s188 + $0x13b0] sm:$0xf]
        %v1501 = vld [vmem:[%s188 + $0x13b4] sm:$0xf]
        %v1502 = vld [vmem:[%s188 + $0x13b8] sm:$0xf]
        %v1503 = vld [vmem:[%s188 + $0x13bc] sm:$0xf]
        %v1504 = vld [vmem:[%s188 + $0x13c0] sm:$0xf]
        %v1505 = vld [vmem:[%s188 + $0x13c4] sm:$0xf]
        %v1506 = vld [vmem:[%s188 + $0x13c8] sm:$0xf]
        %v1507 = vld [vmem:[%s188 + $0x13cc] sm:$0xf]
        %v1508 = vld [vmem:[%s188 + $0x13d0] sm:$0xf]
        %v1509 = vld [vmem:[%s188 + $0x13d4] sm:$0xf]
        %v1510 = vld [vmem:[%s188 + $0x13d8] sm:$0xf]
        %v1511 = vld [vmem:[%s188 + $0x13dc] sm:$0xf]
        %v1512 = vld [vmem:[%s188 + $0x13e0] sm:$0xf]
        %v1513 = vld [vmem:[%s188 + $0x13e4] sm:$0xf]
        %v1514 = vld [vmem:[%s188 + $0x13e8] sm:$0xf]
        %v1515 = vld [vmem:[%s188 + $0x13ec] sm:$0xf]
        %v1516 = vld [vmem:[%s188 + $0x13f0] sm:$0xf]
        %v1517 = vld [vmem:[%s188 + $0x13f4] sm:$0xf]
        %v1518 = vld [vmem:[%s188 + $0x13f8] sm:$0xf]
        %v1519 = vld [vmem:[%s188 + $0x13fc] sm:$0xf]
        %v1520 = vld [vmem:[%s188 + $0x1400] sm:$0xf]
        %v1521 = vld [vmem:[%s188 + $0x1404] sm:$0xf]
        %v1522 = vld [vmem:[%s188 + $0x1408] sm:$0xf]
        %v1523 = vld [vmem:[%s188 + $0x140c] sm:$0xf]
        %v1524 = vld [vmem:[%s188 + $0x1410] sm:$0xf]
        %v1525 = vld [vmem:[%s188 + $0x1414] sm:$0xf]
        %v1526 = vld [vmem:[%s188 + $0x1418] sm:$0xf]
        %v1527 = vld [vmem:[%s188 + $0x141c] sm:$0xf]
        %v1528 = vld [vmem:[%s188 + $0x1420] sm:$0xf]
        %v1529 = vld [vmem:[%s188 + $0x1424] sm:$0xf]
        %v1530 = vld [vmem:[%s188 + $0x1428] sm:$0xf]
        %v1531 = vld [vmem:[%s188 + $0x142c] sm:$0xf]
        %v1532 = vld [vmem:[%s188 + $0x1430] sm:$0xf]
        %v1533 = vld [vmem:[%s188 + $0x1434] sm:$0xf]
        %v1534 = vld [vmem:[%s188 + $0x1438] sm:$0xf]
        %v1535 = vld [vmem:[%s188 + $0x143c] sm:$0xf]
        %v1536 = vld [vmem:[%s188 + $0x1440] sm:$0xf]
        %v1537 = vld [vmem:[%s188 + $0x1444] sm:$0xf]
        %v1538 = vld [vmem:[%s188 + $0x1448] sm:$0xf]
        %v1539 = vld [vmem:[%s188 + $0x144c] sm:$0xf]
        %v1540 = vld [vmem:[%s188 + $0x1450] sm:$0xf]
        %v1541 = vld [vmem:[%s188 + $0x1454] sm:$0xf]
        %v1542 = vld [vmem:[%s188 + $0x1458] sm:$0xf]
        %v1543 = vld [vmem:[%s188 + $0x145c] sm:$0xf]
        %v1544 = vld [vmem:[%s188 + $0x1460] sm:$0xf]
        %v1545 = vld [vmem:[%s188 + $0x1464] sm:$0xf]
        %v1546 = vld [vmem:[%s188 + $0x1468] sm:$0xf]
        %v1547 = vld [vmem:[%s188 + $0x146c] sm:$0xf]
        %v1548 = vld [vmem:[%s188 + $0x1470] sm:$0xf]
        %v1549 = vld [vmem:[%s188 + $0x1474] sm:$0xf]
        %v1550 = vld [vmem:[%s188 + $0x1478] sm:$0xf]
        %v1551 = vld [vmem:[%s188 + $0x147c] sm:$0xf]
        %v1552 = vld [vmem:[%s188 + $0x1480] sm:$0xf]
        %v1553 = vld [vmem:[%s188 + $0x1484] sm:$0xf]
        %v1554 = vld [vmem:[%s188 + $0x1488] sm:$0xf]
        %v1555 = vld [vmem:[%s188 + $0x148c] sm:$0xf]
        %v1556 = vld [vmem:[%s188 + $0x1490] sm:$0xf]
        %v1557 = vld [vmem:[%s188 + $0x1494] sm:$0xf]
        %v1558 = vld [vmem:[%s188 + $0x1498] sm:$0xf]
        %v1559 = vld [vmem:[%s188 + $0x149c] sm:$0xf]
        %v1560 = vld [vmem:[%s188 + $0x14a0] sm:$0xf]
        %v1561 = vld [vmem:[%s188 + $0x14a4] sm:$0xf]
        %v1562 = vld [vmem:[%s188 + $0x14a8] sm:$0xf]
        %v1563 = vld [vmem:[%s188 + $0x14ac] sm:$0xf]
        %v1564 = vld [vmem:[%s188 + $0x14b0] sm:$0xf]
        %v1565 = vld [vmem:[%s188 + $0x14b4] sm:$0xf]
        %v1566 = vld [vmem:[%s188 + $0x14b8] sm:$0xf]
        %v1567 = vld [vmem:[%s188 + $0x14bc] sm:$0xf]
        %v1568 = vld [vmem:[%s188 + $0x14c0] sm:$0xf]
        %v1569 = vld [vmem:[%s188 + $0x14c4] sm:$0xf]
        %v1570 = vld [vmem:[%s188 + $0x14c8] sm:$0xf]
        %v1571 = vld [vmem:[%s188 + $0x14cc] sm:$0xf]
        %v1572 = vld [vmem:[%s188 + $0x14d0] sm:$0xf]
        %v1573 = vld [vmem:[%s188 + $0x14d4] sm:$0xf]
        %v1574 = vld [vmem:[%s188 + $0x14d8] sm:$0xf]
        %v1575 = vld [vmem:[%s188 + $0x14dc] sm:$0xf]
        %v1576 = vld [vmem:[%s188 + $0x14e0] sm:$0xf]
        %v1577 = vld [vmem:[%s188 + $0x14e4] sm:$0xf]
        %v1578 = vld [vmem:[%s188 + $0x14e8] sm:$0xf]
        %v1579 = vld [vmem:[%s188 + $0x14ec] sm:$0xf]
        %v1580 = vld [vmem:[%s188 + $0x14f0] sm:$0xf]
        %v1581 = vld [vmem:[%s188 + $0x14f4] sm:$0xf]
        %v1582 = vld [vmem:[%s188 + $0x14f8] sm:$0xf]
        %v1583 = vld [vmem:[%s188 + $0x14fc] sm:$0xf]
        %v1584 = vld [vmem:[%s188 + $0x1500] sm:$0xf]
        %v1585 = vld [vmem:[%s188 + $0x1504] sm:$0xf]
        %v1586 = vld [vmem:[%s188 + $0x1508] sm:$0xf]
        %v1587 = vld [vmem:[%s188 + $0x150c] sm:$0xf]
        %v1588 = vld [vmem:[%s188 + $0x1510] sm:$0xf]
        %v1589 = vld [vmem:[%s188 + $0x1514] sm:$0xf]
        %v1590 = vld [vmem:[%s188 + $0x1518] sm:$0xf]
        %v1591 = vld [vmem:[%s188 + $0x151c] sm:$0xf]
        %v1592 = vld [vmem:[%s188 + $0x1520] sm:$0xf]
        %v1593 = vld [vmem:[%s188 + $0x1524] sm:$0xf]
        %v1594 = vld [vmem:[%s188 + $0x1528] sm:$0xf]
        %v1595 = vld [vmem:[%s188 + $0x152c] sm:$0xf]
        %v1596 = vld [vmem:[%s188 + $0x1530] sm:$0xf]
        %v1597 = vld [vmem:[%s188 + $0x1534] sm:$0xf]
        %v1598 = vld [vmem:[%s188 + $0x1538] sm:$0xf]
        %v1599 = vld [vmem:[%s188 + $0x153c] sm:$0xf]
        %v1600 = vld [vmem:[%s188 + $0x1540] sm:$0xf]
        %v1601 = vld [vmem:[%s188 + $0x1544] sm:$0xf]
        %v1602 = vld [vmem:[%s188 + $0x1548] sm:$0xf]
        %v1603 = vld [vmem:[%s188 + $0x154c] sm:$0xf]
        %v1604 = vld [vmem:[%s188 + $0x1550] sm:$0xf]
        %v1605 = vld [vmem:[%s188 + $0x1554] sm:$0xf]
        %v1606 = vld [vmem:[%s188 + $0x1558] sm:$0xf]
        %v1607 = vld [vmem:[%s188 + $0x155c] sm:$0xf]
        %v1608 = vld [vmem:[%s188 + $0x1560] sm:$0xf]
        %v1609 = vld [vmem:[%s188 + $0x1564] sm:$0xf]
        %v1610 = vld [vmem:[%s188 + $0x1568] sm:$0xf]
        %v1611 = vld [vmem:[%s188 + $0x156c] sm:$0xf]
        %v1612 = vld [vmem:[%s188 + $0x1570] sm:$0xf]
        %v1613 = vld [vmem:[%s188 + $0x1574] sm:$0xf]
        %v1614 = vld [vmem:[%s188 + $0x1578] sm:$0xf]
        %v1615 = vld [vmem:[%s188 + $0x157c] sm:$0xf]
        %v1616 = vld [vmem:[%s188 + $0x1580] sm:$0xf]
        %v1617 = vld [vmem:[%s188 + $0x1584] sm:$0xf]
        %v1618 = vld [vmem:[%s188 + $0x1588] sm:$0xf]
        %v1619 = vld [vmem:[%s188 + $0x158c] sm:$0xf]
        %v1620 = vld [vmem:[%s188 + $0x1590] sm:$0xf]
        %v1621 = vld [vmem:[%s188 + $0x1594] sm:$0xf]
        %v1622 = vld [vmem:[%s188 + $0x1598] sm:$0xf]
        %v1623 = vld [vmem:[%s188 + $0x159c] sm:$0xf]
        %v1624 = vld [vmem:[%s188 + $0x15a0] sm:$0xf]
        %v1625 = vld [vmem:[%s188 + $0x15a4] sm:$0xf]
        %v1626 = vld [vmem:[%s188 + $0x15a8] sm:$0xf]
        %v1627 = vld [vmem:[%s188 + $0x15ac] sm:$0xf]
        %v1628 = vld [vmem:[%s188 + $0x15b0] sm:$0xf]
        %v1629 = vld [vmem:[%s188 + $0x15b4] sm:$0xf]
        %v1630 = vld [vmem:[%s188 + $0x15b8] sm:$0xf]
        %v1631 = vld [vmem:[%s188 + $0x15bc] sm:$0xf]
        %v1632 = vld [vmem:[%s188 + $0x15c0] sm:$0xf]
        %v1633 = vld [vmem:[%s188 + $0x15c4] sm:$0xf]
        %v1634 = vld [vmem:[%s188 + $0x15c8] sm:$0xf]
        %v1635 = vld [vmem:[%s188 + $0x15cc] sm:$0xf]
        %v1636 = vld [vmem:[%s188 + $0x15d0] sm:$0xf]
        %v1637 = vld [vmem:[%s188 + $0x15d4] sm:$0xf]
        %v1638 = vld [vmem:[%s188 + $0x15d8] sm:$0xf]
        %v1639 = vld [vmem:[%s188 + $0x15dc] sm:$0xf]
        %v1640 = vld [vmem:[%s188 + $0x15e0] sm:$0xf]
        %v1641 = vld [vmem:[%s188 + $0x15e4] sm:$0xf]
        %v1642 = vld [vmem:[%s188 + $0x15e8] sm:$0xf]
        %v1643 = vld [vmem:[%s188 + $0x15ec] sm:$0xf]
        %v1644 = vld [vmem:[%s188 + $0x15f0] sm:$0xf]
        %v1645 = vld [vmem:[%s188 + $0x15f4] sm:$0xf]
        %v1646 = vld [vmem:[%s188 + $0x15f8] sm:$0xf]
        %v1647 = vld [vmem:[%s188 + $0x15fc] sm:$0xf]
        %v1648 = vld [vmem:[%s188 + $0x1600] sm:$0xf]
        %v1649 = vld [vmem:[%s188 + $0x1604] sm:$0xf]
        %v1650 = vld [vmem:[%s188 + $0x1608] sm:$0xf]
        %v1651 = vld [vmem:[%s188 + $0x160c] sm:$0xf]
        %v1652 = vld [vmem:[%s188 + $0x1610] sm:$0xf]
        %v1653 = vld [vmem:[%s188 + $0x1614] sm:$0xf]
        %v1654 = vld [vmem:[%s188 + $0x1618] sm:$0xf]
        %v1655 = vld [vmem:[%s188 + $0x161c] sm:$0xf]
        %v1656 = vld [vmem:[%s188 + $0x1620] sm:$0xf]
        %v1657 = vld [vmem:[%s188 + $0x1624] sm:$0xf]
        %v1658 = vld [vmem:[%s188 + $0x1628] sm:$0xf]
        %v1659 = vld [vmem:[%s188 + $0x162c] sm:$0xf]
        %v1660 = vld [vmem:[%s188 + $0x1630] sm:$0xf]
        %v1661 = vld [vmem:[%s188 + $0x1634] sm:$0xf]
        %v1662 = vld [vmem:[%s188 + $0x1638] sm:$0xf]
        %v1663 = vld [vmem:[%s188 + $0x163c] sm:$0xf]
        %v1664 = vld [vmem:[%s188 + $0x1640] sm:$0xf]
        %v1665 = vld [vmem:[%s188 + $0x1644] sm:$0xf]
        %v1666 = vld [vmem:[%s188 + $0x1648] sm:$0xf]
        %v1667 = vld [vmem:[%s188 + $0x164c] sm:$0xf]
        %v1668 = vld [vmem:[%s188 + $0x1650] sm:$0xf]
        %v1669 = vld [vmem:[%s188 + $0x1654] sm:$0xf]
        %v1670 = vld [vmem:[%s188 + $0x1658] sm:$0xf]
        %v1671 = vld [vmem:[%s188 + $0x165c] sm:$0xf]
        %v1672 = vld [vmem:[%s188 + $0x1660] sm:$0xf]
        %v1673 = vld [vmem:[%s188 + $0x1664] sm:$0xf]
        %v1674 = vld [vmem:[%s188 + $0x1668] sm:$0xf]
        %v1675 = vld [vmem:[%s188 + $0x166c] sm:$0xf]
        %v1676 = vld [vmem:[%s188 + $0x1670] sm:$0xf]
        %v1677 = vld [vmem:[%s188 + $0x1674] sm:$0xf]
        %v1678 = vld [vmem:[%s188 + $0x1678] sm:$0xf]
        %v1679 = vld [vmem:[%s188 + $0x167c] sm:$0xf]
        %v1680 = vld [vmem:[%s188 + $0x1680] sm:$0xf]
        %v1681 = vld [vmem:[%s188 + $0x1684] sm:$0xf]
        %v1682 = vld [vmem:[%s188 + $0x1688] sm:$0xf]
        %v1683 = vld [vmem:[%s188 + $0x168c] sm:$0xf]
        %v1684 = vld [vmem:[%s188 + $0x1690] sm:$0xf]
        %v1685 = vld [vmem:[%s188 + $0x1694] sm:$0xf]
        %v1686 = vld [vmem:[%s188 + $0x1698] sm:$0xf]
        %v1687 = vld [vmem:[%s188 + $0x169c] sm:$0xf]
        %v1688 = vld [vmem:[%s188 + $0x16a0] sm:$0xf]
        %v1689 = vld [vmem:[%s188 + $0x16a4] sm:$0xf]
        %v1690 = vld [vmem:[%s188 + $0x16a8] sm:$0xf]
        %v1691 = vld [vmem:[%s188 + $0x16ac] sm:$0xf]
        %v1692 = vld [vmem:[%s188 + $0x16b0] sm:$0xf]
        %v1693 = vld [vmem:[%s188 + $0x16b4] sm:$0xf]
        %v1694 = vld [vmem:[%s188 + $0x16b8] sm:$0xf]
        %v1695 = vld [vmem:[%s188 + $0x16bc] sm:$0xf]
        %v1696 = vld [vmem:[%s188 + $0x16c0] sm:$0xf]
        %v1697 = vld [vmem:[%s188 + $0x16c4] sm:$0xf]
        %v1698 = vld [vmem:[%s188 + $0x16c8] sm:$0xf]
        %v1699 = vld [vmem:[%s188 + $0x16cc] sm:$0xf]
        %v1700 = vld [vmem:[%s188 + $0x16d0] sm:$0xf]
        %v1701 = vld [vmem:[%s188 + $0x16d4] sm:$0xf]
        %v1702 = vld [vmem:[%s188 + $0x16d8] sm:$0xf]
        %v1703 = vld [vmem:[%s188 + $0x16dc] sm:$0xf]
        %v1704 = vld [vmem:[%s188 + $0x16e0] sm:$0xf]
        %v1705 = vld [vmem:[%s188 + $0x16e4] sm:$0xf]
        %v1706 = vld [vmem:[%s188 + $0x16e8] sm:$0xf]
        %v1707 = vld [vmem:[%s188 + $0x16ec] sm:$0xf]
        %v1708 = vld [vmem:[%s188 + $0x16f0] sm:$0xf]
        %v1709 = vld [vmem:[%s188 + $0x16f4] sm:$0xf]
        %v1710 = vld [vmem:[%s188 + $0x16f8] sm:$0xf]
        %v1711 = vld [vmem:[%s188 + $0x16fc] sm:$0xf]
        %v1712 = vld [vmem:[%s188 + $0x1700] sm:$0xf]
        %v1713 = vld [vmem:[%s188 + $0x1704] sm:$0xf]
        %v1714 = vld [vmem:[%s188 + $0x1708] sm:$0xf]
        %v1715 = vld [vmem:[%s188 + $0x170c] sm:$0xf]
        %v1716 = vld [vmem:[%s188 + $0x1710] sm:$0xf]
        %v1717 = vld [vmem:[%s188 + $0x1714] sm:$0xf]
        %v1718 = vld [vmem:[%s188 + $0x1718] sm:$0xf]
        %v1719 = vld [vmem:[%s188 + $0x171c] sm:$0xf]
        %v1720 = vld [vmem:[%s188 + $0x1720] sm:$0xf]
        %v1721 = vld [vmem:[%s188 + $0x1724] sm:$0xf]
        %v1722 = vld [vmem:[%s188 + $0x1728] sm:$0xf]
        %v1723 = vld [vmem:[%s188 + $0x172c] sm:$0xf]
        %v1724 = vld [vmem:[%s188 + $0x1730] sm:$0xf]
        %v1725 = vld [vmem:[%s188 + $0x1734] sm:$0xf]
        %v1726 = vld [vmem:[%s188 + $0x1738] sm:$0xf]
        %v1727 = vld [vmem:[%s188 + $0x173c] sm:$0xf]
        %v1728 = vld [vmem:[%s188 + $0x1740] sm:$0xf]
        %v1729 = vld [vmem:[%s188 + $0x1744] sm:$0xf]
        %v1730 = vld [vmem:[%s188 + $0x1748] sm:$0xf]
        %v1731 = vld [vmem:[%s188 + $0x174c] sm:$0xf]
        %v1732 = vld [vmem:[%s188 + $0x1750] sm:$0xf]
        %v1733 = vld [vmem:[%s188 + $0x1754] sm:$0xf]
        %v1734 = vld [vmem:[%s188 + $0x1758] sm:$0xf]
        %v1735 = vld [vmem:[%s188 + $0x175c] sm:$0xf]
        %v1736 = vld [vmem:[%s188 + $0x1760] sm:$0xf]
        %v1737 = vld [vmem:[%s188 + $0x1764] sm:$0xf]
        %v1738 = vld [vmem:[%s188 + $0x1768] sm:$0xf]
        %v1739 = vld [vmem:[%s188 + $0x176c] sm:$0xf]
        %v1740 = vld [vmem:[%s188 + $0x1770] sm:$0xf]
        %v1741 = vld [vmem:[%s188 + $0x1774] sm:$0xf]
        %v1742 = vld [vmem:[%s188 + $0x1778] sm:$0xf]
        %v1743 = vld [vmem:[%s188 + $0x177c] sm:$0xf]
        %v1744 = vld [vmem:[%s188 + $0x1780] sm:$0xf]
        %v1745 = vld [vmem:[%s188 + $0x1784] sm:$0xf]
        %v1746 = vld [vmem:[%s188 + $0x1788] sm:$0xf]
        %v1747 = vld [vmem:[%s188 + $0x178c] sm:$0xf]
        %v1748 = vld [vmem:[%s188 + $0x1790] sm:$0xf]
        %v1749 = vld [vmem:[%s188 + $0x1794] sm:$0xf]
        %v1750 = vld [vmem:[%s188 + $0x1798] sm:$0xf]
        %v1751 = vld [vmem:[%s188 + $0x179c] sm:$0xf]
        %v1752 = vld [vmem:[%s188 + $0x17a0] sm:$0xf]
        %v1753 = vld [vmem:[%s188 + $0x17a4] sm:$0xf]
        %v1754 = vld [vmem:[%s188 + $0x17a8] sm:$0xf]
        %v1755 = vld [vmem:[%s188 + $0x17ac] sm:$0xf]
        %v1756 = vld [vmem:[%s188 + $0x17b0] sm:$0xf]
        %v1757 = vld [vmem:[%s188 + $0x17b4] sm:$0xf]
        %v1758 = vld [vmem:[%s188 + $0x17b8] sm:$0xf]
        %v1759 = vld [vmem:[%s188 + $0x17bc] sm:$0xf]
        %v1760 = vld [vmem:[%s188 + $0x17c0] sm:$0xf]
        %v1761 = vld [vmem:[%s188 + $0x17c4] sm:$0xf]
        %v1762 = vld [vmem:[%s188 + $0x17c8] sm:$0xf]
        %v1763 = vld [vmem:[%s188 + $0x17cc] sm:$0xf]
        %v1764 = vld [vmem:[%s188 + $0x17d0] sm:$0xf]
        %v1765 = vld [vmem:[%s188 + $0x17d4] sm:$0xf]
        %v1766 = vld [vmem:[%s188 + $0x17d8] sm:$0xf]
        %v1767 = vld [vmem:[%s188 + $0x17dc] sm:$0xf]
        %v1768 = vld [vmem:[%s188 + $0x17e0] sm:$0xf]
        %v1769 = vld [vmem:[%s188 + $0x17e4] sm:$0xf]
        %v1770 = vld [vmem:[%s188 + $0x17e8] sm:$0xf]
        %v1771 = vld [vmem:[%s188 + $0x17ec] sm:$0xf]
        %v1772 = vld [vmem:[%s188 + $0x17f0] sm:$0xf]
        %v1773 = vld [vmem:[%s188 + $0x17f4] sm:$0xf]
        %v1774 = vld [vmem:[%s188 + $0x17f8] sm:$0xf]
        %v1775 = vld [vmem:[%s188 + $0x17fc] sm:$0xf]
        %v1776 = vld [vmem:[%s188 + $0x1800] sm:$0xf]
        %v1777 = vld [vmem:[%s188 + $0x1804] sm:$0xf]
        %v1778 = vld [vmem:[%s188 + $0x1808] sm:$0xf]
        %v1779 = vld [vmem:[%s188 + $0x180c] sm:$0xf]
        %v1780 = vld [vmem:[%s188 + $0x1810] sm:$0xf]
        %v1781 = vld [vmem:[%s188 + $0x1814] sm:$0xf]
        %v1782 = vld [vmem:[%s188 + $0x1818] sm:$0xf]
        %v1783 = vld [vmem:[%s188 + $0x181c] sm:$0xf]
        %v1784 = vld [vmem:[%s188 + $0x1820] sm:$0xf]
        %v1785 = vld [vmem:[%s188 + $0x1824] sm:$0xf]
        %v1786 = vld [vmem:[%s188 + $0x1828] sm:$0xf]
        %v1787 = vld [vmem:[%s188 + $0x182c] sm:$0xf]
        %v1788 = vld [vmem:[%s188 + $0x1830] sm:$0xf]
        %v1789 = vld [vmem:[%s188 + $0x1834] sm:$0xf]
        %v1790 = vld [vmem:[%s188 + $0x1838] sm:$0xf]
        %v1791 = vld [vmem:[%s188 + $0x183c] sm:$0xf]
        %v1792 = vld [vmem:[%s188 + $0x1840] sm:$0xf]
        %v1793 = vld [vmem:[%s188 + $0x1844] sm:$0xf]
        %v1794 = vld [vmem:[%s188 + $0x1848] sm:$0xf]
        %v1795 = vld [vmem:[%s188 + $0x184c] sm:$0xf]
        %v1796 = vld [vmem:[%s188 + $0x1850] sm:$0xf]
        %v1797 = vld [vmem:[%s188 + $0x1854] sm:$0xf]
        %v1798 = vld [vmem:[%s188 + $0x1858] sm:$0xf]
        %v1799 = vld [vmem:[%s188 + $0x185c] sm:$0xf]
        %v1800 = vld [vmem:[%s188 + $0x1860] sm:$0xf]
        %v1801 = vld [vmem:[%s188 + $0x1864] sm:$0xf]
        %v1802 = vld [vmem:[%s188 + $0x1868] sm:$0xf]
        %v1803 = vld [vmem:[%s188 + $0x186c] sm:$0xf]
        %v1804 = vld [vmem:[%s188 + $0x1870] sm:$0xf]
        %v1805 = vld [vmem:[%s188 + $0x1874] sm:$0xf]
        %v1806 = vld [vmem:[%s188 + $0x1878] sm:$0xf]
        %v1807 = vld [vmem:[%s188 + $0x187c] sm:$0xf]
        %v1808 = vld [vmem:[%s188 + $0x1880] sm:$0xf]
        %v1809 = vld [vmem:[%s188 + $0x1884] sm:$0xf]
        %v1810 = vld [vmem:[%s188 + $0x1888] sm:$0xf]
        %v1811 = vld [vmem:[%s188 + $0x188c] sm:$0xf]
        %v1812 = vld [vmem:[%s188 + $0x1890] sm:$0xf]
        %v1813 = vld [vmem:[%s188 + $0x1894] sm:$0xf]
        %v1814 = vld [vmem:[%s188 + $0x1898] sm:$0xf]
        %v1815 = vld [vmem:[%s188 + $0x189c] sm:$0xf]
        %v1816 = vld [vmem:[%s188 + $0x18a0] sm:$0xf]
        %v1817 = vld [vmem:[%s188 + $0x18a4] sm:$0xf]
        %v1818 = vld [vmem:[%s188 + $0x18a8] sm:$0xf]
        %v1819 = vld [vmem:[%s188 + $0x18ac] sm:$0xf]
        %v1820 = vld [vmem:[%s188 + $0x18b0] sm:$0xf]
        %v1821 = vld [vmem:[%s188 + $0x18b4] sm:$0xf]
        %v1822 = vld [vmem:[%s188 + $0x18b8] sm:$0xf]
        %v1823 = vld [vmem:[%s188 + $0x18bc] sm:$0xf]
        %v1824 = vld [vmem:[%s188 + $0x18c0] sm:$0xf]
        %v1825 = vld [vmem:[%s188 + $0x18c4] sm:$0xf]
        %v1826 = vld [vmem:[%s188 + $0x18c8] sm:$0xf]
        %v1827 = vld [vmem:[%s188 + $0x18cc] sm:$0xf]
        %v1828 = vld [vmem:[%s188 + $0x18d0] sm:$0xf]
        %v1829 = vld [vmem:[%s188 + $0x18d4] sm:$0xf]
        %v1830 = vld [vmem:[%s188 + $0x18d8] sm:$0xf]
        %v1831 = vld [vmem:[%s188 + $0x18dc] sm:$0xf]
        %v1832 = vld [vmem:[%s188 + $0x18e0] sm:$0xf]
        %v1833 = vld [vmem:[%s188 + $0x18e4] sm:$0xf]
        %v1834 = vld [vmem:[%s188 + $0x18e8] sm:$0xf]
        %v1835 = vld [vmem:[%s188 + $0x18ec] sm:$0xf]
        %v1836 = vld [vmem:[%s188 + $0x18f0] sm:$0xf]
        %v1837 = vld [vmem:[%s188 + $0x18f4] sm:$0xf]
        %v1838 = vld [vmem:[%s188 + $0x18f8] sm:$0xf]
        %v1839 = vld [vmem:[%s188 + $0x18fc] sm:$0xf]
        %v1840 = vld [vmem:[%s188 + $0x1900] sm:$0xf]
        %v1841 = vld [vmem:[%s188 + $0x1904] sm:$0xf]
        %v1842 = vld [vmem:[%s188 + $0x1908] sm:$0xf]
        %v1843 = vld [vmem:[%s188 + $0x190c] sm:$0xf]
        %v1844 = vld [vmem:[%s188 + $0x1910] sm:$0xf]
        %v1845 = vld [vmem:[%s188 + $0x1914] sm:$0xf]
        %v1846 = vld [vmem:[%s188 + $0x1918] sm:$0xf]
        %v1847 = vld [vmem:[%s188 + $0x191c] sm:$0xf]
        %v1848 = vld [vmem:[%s188 + $0x1920] sm:$0xf]
        %v1849 = vld [vmem:[%s188 + $0x1924] sm:$0xf]
        %v1850 = vld [vmem:[%s188 + $0x1928] sm:$0xf]
        %v1851 = vld [vmem:[%s188 + $0x192c] sm:$0xf]
        %v1852 = vld [vmem:[%s188 + $0x1930] sm:$0xf]
        %v1853 = vld [vmem:[%s188 + $0x1934] sm:$0xf]
        %v1854 = vld [vmem:[%s188 + $0x1938] sm:$0xf]
        %v1855 = vld [vmem:[%s188 + $0x193c] sm:$0xf]
        %v1856 = vld [vmem:[%s188 + $0x1940] sm:$0xf]
        %v1857 = vld [vmem:[%s188 + $0x1944] sm:$0xf]
        %v1858 = vld [vmem:[%s188 + $0x1948] sm:$0xf]
        %v1859 = vld [vmem:[%s188 + $0x194c] sm:$0xf]
        %v1860 = vld [vmem:[%s188 + $0x1950] sm:$0xf]
        %v1861 = vld [vmem:[%s188 + $0x1954] sm:$0xf]
        %v1862 = vld [vmem:[%s188 + $0x1958] sm:$0xf]
        %v1863 = vld [vmem:[%s188 + $0x195c] sm:$0xf]
        %v1864 = vld [vmem:[%s188 + $0x1960] sm:$0xf]
        %v1865 = vld [vmem:[%s188 + $0x1964] sm:$0xf]
        %v1866 = vld [vmem:[%s188 + $0x1968] sm:$0xf]
        %v1867 = vld [vmem:[%s188 + $0x196c] sm:$0xf]
        %v1868 = vld [vmem:[%s188 + $0x1970] sm:$0xf]
        %v1869 = vld [vmem:[%s188 + $0x1974] sm:$0xf]
        %v1870 = vld [vmem:[%s188 + $0x1978] sm:$0xf]
        %v1871 = vld [vmem:[%s188 + $0x197c] sm:$0xf]
        %v1872 = vld [vmem:[%s188 + $0x1980] sm:$0xf]
        %v1873 = vld [vmem:[%s188 + $0x1984] sm:$0xf]
        %v1874 = vld [vmem:[%s188 + $0x1988] sm:$0xf]
        %v1875 = vld [vmem:[%s188 + $0x198c] sm:$0xf]
        %v1876 = vld [vmem:[%s188 + $0x1990] sm:$0xf]
        %v1877 = vld [vmem:[%s188 + $0x1994] sm:$0xf]
        %v1878 = vld [vmem:[%s188 + $0x1998] sm:$0xf]
        %v1879 = vld [vmem:[%s188 + $0x199c] sm:$0xf]
        %v1880 = vld [vmem:[%s188 + $0x19a0] sm:$0xf]
        %v1881 = vld [vmem:[%s188 + $0x19a4] sm:$0xf]
        %v1882 = vld [vmem:[%s188 + $0x19a8] sm:$0xf]
        %v1883 = vld [vmem:[%s188 + $0x19ac] sm:$0xf]
        %v1884 = vld [vmem:[%s188 + $0x19b0] sm:$0xf]
        %v1885 = vld [vmem:[%s188 + $0x19b4] sm:$0xf]
        %v1886 = vld [vmem:[%s188 + $0x19b8] sm:$0xf]
        %v1887 = vld [vmem:[%s188 + $0x19bc] sm:$0xf]
        %v1888 = vld [vmem:[%s188 + $0x19c0] sm:$0xf]
        %v1889 = vld [vmem:[%s188 + $0x19c4] sm:$0xf]
        %v1890 = vld [vmem:[%s188 + $0x19c8] sm:$0xf]
        %v1891 = vld [vmem:[%s188 + $0x19cc] sm:$0xf]
        %v1892 = vld [vmem:[%s188 + $0x19d0] sm:$0xf]
        %v1893 = vld [vmem:[%s188 + $0x19d4] sm:$0xf]
        %v1894 = vld [vmem:[%s188 + $0x19d8] sm:$0xf]
        %v1895 = vld [vmem:[%s188 + $0x19dc] sm:$0xf]
        %v1896 = vld [vmem:[%s188 + $0x19e0] sm:$0xf]
        %v1897 = vld [vmem:[%s188 + $0x19e4] sm:$0xf]
        %v1898 = vld [vmem:[%s188 + $0x19e8] sm:$0xf]
        %v1899 = vld [vmem:[%s188 + $0x19ec] sm:$0xf]
        %v1900 = vld [vmem:[%s188 + $0x19f0] sm:$0xf]
        %v1901 = vld [vmem:[%s188 + $0x19f4] sm:$0xf]
        %v1902 = vld [vmem:[%s188 + $0x19f8] sm:$0xf]
        %v1903 = vld [vmem:[%s188 + $0x19fc] sm:$0xf]
        %v1904 = vld [vmem:[%s188 + $0x1a00] sm:$0xf]
        %v1905 = vld [vmem:[%s188 + $0x1a04] sm:$0xf]
        %v1906 = vld [vmem:[%s188 + $0x1a08] sm:$0xf]
        %v1907 = vld [vmem:[%s188 + $0x1a0c] sm:$0xf]
        %v1908 = vld [vmem:[%s188 + $0x1a10] sm:$0xf]
        %v1909 = vld [vmem:[%s188 + $0x1a14] sm:$0xf]
        %v1910 = vld [vmem:[%s188 + $0x1a18] sm:$0xf]
        %v1911 = vld [vmem:[%s188 + $0x1a1c] sm:$0xf]
        %v1912 = vld [vmem:[%s188 + $0x1a20] sm:$0xf]
        %v1913 = vld [vmem:[%s188 + $0x1a24] sm:$0xf]
        %v1914 = vld [vmem:[%s188 + $0x1a28] sm:$0xf]
        %v1915 = vld [vmem:[%s188 + $0x1a2c] sm:$0xf]
        %v1916 = vld [vmem:[%s188 + $0x1a30] sm:$0xf]
        %v1917 = vld [vmem:[%s188 + $0x1a34] sm:$0xf]
        %v1918 = vld [vmem:[%s188 + $0x1a38] sm:$0xf]
        %v1919 = vld [vmem:[%s188 + $0x1a3c] sm:$0xf]
        %v1920 = vld [vmem:[%s188 + $0x1a40] sm:$0xf]
        %v1921 = vld [vmem:[%s188 + $0x1a44] sm:$0xf]
        %v1922 = vld [vmem:[%s188 + $0x1a48] sm:$0xf]
        %v1923 = vld [vmem:[%s188 + $0x1a4c] sm:$0xf]
        %v1924 = vld [vmem:[%s188 + $0x1a50] sm:$0xf]
        %v1925 = vld [vmem:[%s188 + $0x1a54] sm:$0xf]
        %v1926 = vld [vmem:[%s188 + $0x1a58] sm:$0xf]
        %v1927 = vld [vmem:[%s188 + $0x1a5c] sm:$0xf]
        %v1928 = vld [vmem:[%s188 + $0x1a60] sm:$0xf]
        %v1929 = vld [vmem:[%s188 + $0x1a64] sm:$0xf]
        %v1930 = vld [vmem:[%s188 + $0x1a68] sm:$0xf]
        %v1931 = vld [vmem:[%s188 + $0x1a6c] sm:$0xf]
        %v1932 = vld [vmem:[%s188 + $0x1a70] sm:$0xf]
        %v1933 = vld [vmem:[%s188 + $0x1a74] sm:$0xf]
        %v1934 = vld [vmem:[%s188 + $0x1a78] sm:$0xf]
        %v1935 = vld [vmem:[%s188 + $0x1a7c] sm:$0xf]
        %v1936 = vld [vmem:[%s188 + $0x1a80] sm:$0xf]
        %v1937 = vld [vmem:[%s188 + $0x1a84] sm:$0xf]
        %v1938 = vld [vmem:[%s188 + $0x1a88] sm:$0xf]
        %v1939 = vld [vmem:[%s188 + $0x1a8c] sm:$0xf]
        %v1940 = vld [vmem:[%s188 + $0x1a90] sm:$0xf]
        %v1941 = vld [vmem:[%s188 + $0x1a94] sm:$0xf]
        %v1942 = vld [vmem:[%s188 + $0x1a98] sm:$0xf]
        %v1943 = vld [vmem:[%s188 + $0x1a9c] sm:$0xf]
        %v1944 = vld [vmem:[%s188 + $0x1aa0] sm:$0xf]
        %v1945 = vld [vmem:[%s188 + $0x1aa4] sm:$0xf]
        %v1946 = vld [vmem:[%s188 + $0x1aa8] sm:$0xf]
        %v1947 = vld [vmem:[%s188 + $0x1aac] sm:$0xf]
        %v1948 = vld [vmem:[%s188 + $0x1ab0] sm:$0xf]
        %v1949 = vld [vmem:[%s188 + $0x1ab4] sm:$0xf]
        %v1950 = vld [vmem:[%s188 + $0x1ab8] sm:$0xf]
        %v1951 = vld [vmem:[%s188 + $0x1abc] sm:$0xf]
        %v1952 = vld [vmem:[%s188 + $0x1ac0] sm:$0xf]
        %v1953 = vld [vmem:[%s188 + $0x1ac4] sm:$0xf]
        %v1954 = vld [vmem:[%s188 + $0x1ac8] sm:$0xf]
        %v1955 = vld [vmem:[%s188 + $0x1acc] sm:$0xf]
        %v1956 = vld [vmem:[%s188 + $0x1ad0] sm:$0xf]
        %v1957 = vld [vmem:[%s188 + $0x1ad4] sm:$0xf]
        %v1958 = vld [vmem:[%s188 + $0x1ad8] sm:$0xf]
        %v1959 = vld [vmem:[%s188 + $0x1adc] sm:$0xf]
        %v1960 = vld [vmem:[%s188 + $0x1ae0] sm:$0xf]
        %v1961 = vld [vmem:[%s188 + $0x1ae4] sm:$0xf]
        %v1962 = vld [vmem:[%s188 + $0x1ae8] sm:$0xf]
        %v1963 = vld [vmem:[%s188 + $0x1aec] sm:$0xf]
        %v1964 = vld [vmem:[%s188 + $0x1af0] sm:$0xf]
        %v1965 = vld [vmem:[%s188 + $0x1af4] sm:$0xf]
        %v1966 = vld [vmem:[%s188 + $0x1af8] sm:$0xf]
        %v1967 = vld [vmem:[%s188 + $0x1afc] sm:$0xf]
        %v1968 = vld [vmem:[%s188 + $0x1b00] sm:$0xf]
        %v1969 = vld [vmem:[%s188 + $0x1b04] sm:$0xf]
        %v1970 = vld [vmem:[%s188 + $0x1b08] sm:$0xf]
        %v1971 = vld [vmem:[%s188 + $0x1b0c] sm:$0xf]
        %v1972 = vld [vmem:[%s188 + $0x1b10] sm:$0xf]
        %v1973 = vld [vmem:[%s188 + $0x1b14] sm:$0xf]
        %v1974 = vld [vmem:[%s188 + $0x1b18] sm:$0xf]
        %v1975 = vld [vmem:[%s188 + $0x1b1c] sm:$0xf]
        %v1976 = vld [vmem:[%s188 + $0x1b20] sm:$0xf]
        %v1977 = vld [vmem:[%s188 + $0x1b24] sm:$0xf]
        %v1978 = vld [vmem:[%s188 + $0x1b28] sm:$0xf]
        %v1979 = vld [vmem:[%s188 + $0x1b2c] sm:$0xf]
        %v1980 = vld [vmem:[%s188 + $0x1b30] sm:$0xf]
        %v1981 = vld [vmem:[%s188 + $0x1b34] sm:$0xf]
        %v1982 = vld [vmem:[%s188 + $0x1b38] sm:$0xf]
        %v1983 = vld [vmem:[%s188 + $0x1b3c] sm:$0xf]
        %v1984 = vld [vmem:[%s188 + $0x1b40] sm:$0xf]
        %v1985 = vld [vmem:[%s188 + $0x1b44] sm:$0xf]
        %v1986 = vld [vmem:[%s188 + $0x1b48] sm:$0xf]
        %v1987 = vld [vmem:[%s188 + $0x1b4c] sm:$0xf]
        %v1988 = vld [vmem:[%s188 + $0x1b50] sm:$0xf]
        %v1989 = vld [vmem:[%s188 + $0x1b54] sm:$0xf]
        %v1990 = vld [vmem:[%s188 + $0x1b58] sm:$0xf]
        %v1991 = vld [vmem:[%s188 + $0x1b5c] sm:$0xf]
        %v1992 = vld [vmem:[%s188 + $0x1b60] sm:$0xf]
        %v1993 = vld [vmem:[%s188 + $0x1b64] sm:$0xf]
        %v1994 = vld [vmem:[%s188 + $0x1b68] sm:$0xf]
        %v1995 = vld [vmem:[%s188 + $0x1b6c] sm:$0xf]
        %v1996 = vld [vmem:[%s188 + $0x1b70] sm:$0xf]
        %v1997 = vld [vmem:[%s188 + $0x1b74] sm:$0xf]
        %v1998 = vld [vmem:[%s188 + $0x1b78] sm:$0xf]
        %v1999 = vld [vmem:[%s188 + $0x1b7c] sm:$0xf]
        %v2000 = vld [vmem:[%s188 + $0x1b80] sm:$0xf]
        %v2001 = vld [vmem:[%s188 + $0x1b84] sm:$0xf]
        %v2002 = vld [vmem:[%s188 + $0x1b88] sm:$0xf]
        %v2003 = vld [vmem:[%s188 + $0x1b8c] sm:$0xf]
        %v2004 = vld [vmem:[%s188 + $0x1b90] sm:$0xf]
        %v2005 = vld [vmem:[%s188 + $0x1b94] sm:$0xf]
        %v2006 = vld [vmem:[%s188 + $0x1b98] sm:$0xf]
        %v2007 = vld [vmem:[%s188 + $0x1b9c] sm:$0xf]
        %v2008 = vld [vmem:[%s188 + $0x1ba0] sm:$0xf]
        %v2009 = vld [vmem:[%s188 + $0x1ba4] sm:$0xf]
        %v2010 = vld [vmem:[%s188 + $0x1ba8] sm:$0xf]
        %v2011 = vld [vmem:[%s188 + $0x1bac] sm:$0xf]
        %v2012 = vld [vmem:[%s188 + $0x1bb0] sm:$0xf]
        %v2013 = vld [vmem:[%s188 + $0x1bb4] sm:$0xf]
        %v2014 = vld [vmem:[%s188 + $0x1bb8] sm:$0xf]
        %v2015 = vld [vmem:[%s188 + $0x1bbc] sm:$0xf]
        %v2016 = vld [vmem:[%s188 + $0x1bc0] sm:$0xf]
        %v2017 = vld [vmem:[%s188 + $0x1bc4] sm:$0xf]
        %v2018 = vld [vmem:[%s188 + $0x1bc8] sm:$0xf]
        %v2019 = vld [vmem:[%s188 + $0x1bcc] sm:$0xf]
        %v2020 = vld [vmem:[%s188 + $0x1bd0] sm:$0xf]
        %v2021 = vld [vmem:[%s188 + $0x1bd4] sm:$0xf]
        %v2022 = vld [vmem:[%s188 + $0x1bd8] sm:$0xf]
        %v2023 = vld [vmem:[%s188 + $0x1bdc] sm:$0xf]
        %v2024 = vld [vmem:[%s188 + $0x1be0] sm:$0xf]
        %v2025 = vld [vmem:[%s188 + $0x1be4] sm:$0xf]
        %v2026 = vld [vmem:[%s188 + $0x1be8] sm:$0xf]
        %v2027 = vld [vmem:[%s188 + $0x1bec] sm:$0xf]
        %v2028 = vld [vmem:[%s188 + $0x1bf0] sm:$0xf]
        %v2029 = vld [vmem:[%s188 + $0x1bf4] sm:$0xf]
        %v2030 = vld [vmem:[%s188 + $0x1bf8] sm:$0xf]
        %v2031 = vld [vmem:[%s188 + $0x1bfc] sm:$0xf]
        %v2032 = vld [vmem:[%s188 + $0x1c00] sm:$0xf]
        %v2033 = vld [vmem:[%s188 + $0x1c04] sm:$0xf]
        %v2034 = vld [vmem:[%s188 + $0x1c08] sm:$0xf]
        %v2035 = vld [vmem:[%s188 + $0x1c0c] sm:$0xf]
        %v2036 = vld [vmem:[%s188 + $0x1c10] sm:$0xf]
        %v2037 = vld [vmem:[%s188 + $0x1c14] sm:$0xf]
        %v2038 = vld [vmem:[%s188 + $0x1c18] sm:$0xf]
        %v2039 = vld [vmem:[%s188 + $0x1c1c] sm:$0xf]
        %v2040 = vld [vmem:[%s188 + $0x1c20] sm:$0xf]
        %v2041 = vld [vmem:[%s188 + $0x1c24] sm:$0xf]
        %v2042 = vld [vmem:[%s188 + $0x1c28] sm:$0xf]
        %v2043 = vld [vmem:[%s188 + $0x1c2c] sm:$0xf]
        %v2044 = vld [vmem:[%s188 + $0x1c30] sm:$0xf]
        %v2045 = vld [vmem:[%s188 + $0x1c34] sm:$0xf]
        %v2046 = vld [vmem:[%s188 + $0x1c38] sm:$0xf]
        %v2047 = vld [vmem:[%s188 + $0x1c3c] sm:$0xf]
        %v2048 = vld [vmem:[%s188 + $0x1c40] sm:$0xf]
        %v2049 = vld [vmem:[%s188 + $0x1c44] sm:$0xf]
        %v2050 = vld [vmem:[%s188 + $0x1c48] sm:$0xf]
        %v2051 = vld [vmem:[%s188 + $0x1c4c] sm:$0xf]
        %v2052 = vld [vmem:[%s188 + $0x1c50] sm:$0xf]
        %v2053 = vld [vmem:[%s188 + $0x1c54] sm:$0xf]
        %v2054 = vld [vmem:[%s188 + $0x1c58] sm:$0xf]
        %v2055 = vld [vmem:[%s188 + $0x1c5c] sm:$0xf]
        %v2056 = vld [vmem:[%s188 + $0x1c60] sm:$0xf]
        %v2057 = vld [vmem:[%s188 + $0x1c64] sm:$0xf]
        %v2058 = vld [vmem:[%s188 + $0x1c68] sm:$0xf]
        %v2059 = vld [vmem:[%s188 + $0x1c6c] sm:$0xf]
        %v2060 = vld [vmem:[%s188 + $0x1c70] sm:$0xf]
        %v2061 = vld [vmem:[%s188 + $0x1c74] sm:$0xf]
        %v2062 = vld [vmem:[%s188 + $0x1c78] sm:$0xf]
        %v2063 = vld [vmem:[%s188 + $0x1c7c] sm:$0xf]
        %v2064 = vld [vmem:[%s188 + $0x1c80] sm:$0xf]
        %v2065 = vld [vmem:[%s188 + $0x1c84] sm:$0xf]
        %v2066 = vld [vmem:[%s188 + $0x1c88] sm:$0xf]
        %v2067 = vld [vmem:[%s188 + $0x1c8c] sm:$0xf]
        %v2068 = vld [vmem:[%s188 + $0x1c90] sm:$0xf]
        %v2069 = vld [vmem:[%s188 + $0x1c94] sm:$0xf]
        %v2070 = vld [vmem:[%s188 + $0x1c98] sm:$0xf]
        %v2071 = vld [vmem:[%s188 + $0x1c9c] sm:$0xf]
        %v2072 = vld [vmem:[%s188 + $0x1ca0] sm:$0xf]
        %v2073 = vld [vmem:[%s188 + $0x1ca4] sm:$0xf]
        %v2074 = vld [vmem:[%s188 + $0x1ca8] sm:$0xf]
        %v2075 = vld [vmem:[%s188 + $0x1cac] sm:$0xf]
        %v2076 = vld [vmem:[%s188 + $0x1cb0] sm:$0xf]
        %v2077 = vld [vmem:[%s188 + $0x1cb4] sm:$0xf]
        %v2078 = vld [vmem:[%s188 + $0x1cb8] sm:$0xf]
        %v2079 = vld [vmem:[%s188 + $0x1cbc] sm:$0xf]
        %v2080 = vld [vmem:[%s188 + $0x1cc0] sm:$0xf]
        %v2081 = vld [vmem:[%s188 + $0x1cc4] sm:$0xf]
        %v2082 = vld [vmem:[%s188 + $0x1cc8] sm:$0xf]
        %v2083 = vld [vmem:[%s188 + $0x1ccc] sm:$0xf]
        %v2084 = vld [vmem:[%s188 + $0x1cd0] sm:$0xf]
        %v2085 = vld [vmem:[%s188 + $0x1cd4] sm:$0xf]
        %v2086 = vld [vmem:[%s188 + $0x1cd8] sm:$0xf]
        %v2087 = vld [vmem:[%s188 + $0x1cdc] sm:$0xf]
        %v2088 = vld [vmem:[%s188 + $0x1ce0] sm:$0xf]
        %v2089 = vld [vmem:[%s188 + $0x1ce4] sm:$0xf]
        %v2090 = vld [vmem:[%s188 + $0x1ce8] sm:$0xf]
        %v2091 = vld [vmem:[%s188 + $0x1cec] sm:$0xf]
        %v2092 = vld [vmem:[%s188 + $0x1cf0] sm:$0xf]
        %v2093 = vld [vmem:[%s188 + $0x1cf4] sm:$0xf]
        %v2094 = vld [vmem:[%s188 + $0x1cf8] sm:$0xf]
        %v2095 = vld [vmem:[%s188 + $0x1cfc] sm:$0xf]
        %v2096 = vld [vmem:[%s188 + $0x1d00] sm:$0xf]
        %v2097 = vld [vmem:[%s188 + $0x1d04] sm:$0xf]
        %v2098 = vld [vmem:[%s188 + $0x1d08] sm:$0xf]
        %v2099 = vld [vmem:[%s188 + $0x1d0c] sm:$0xf]
        %v2100 = vld [vmem:[%s188 + $0x1d10] sm:$0xf]
        %v2101 = vld [vmem:[%s188 + $0x1d14] sm:$0xf]
        %v2102 = vld [vmem:[%s188 + $0x1d18] sm:$0xf]
        %v2103 = vld [vmem:[%s188 + $0x1d1c] sm:$0xf]
        %v2104 = vld [vmem:[%s188 + $0x1d20] sm:$0xf]
        %v2105 = vld [vmem:[%s188 + $0x1d24] sm:$0xf]
        %v2106 = vld [vmem:[%s188 + $0x1d28] sm:$0xf]
        %v2107 = vld [vmem:[%s188 + $0x1d2c] sm:$0xf]
        %v2108 = vld [vmem:[%s188 + $0x1d30] sm:$0xf]
        %v2109 = vld [vmem:[%s188 + $0x1d34] sm:$0xf]
        %v2110 = vld [vmem:[%s188 + $0x1d38] sm:$0xf]
        %v2111 = vld [vmem:[%s188 + $0x1d3c] sm:$0xf]
        %v2112 = vld [vmem:[%s188 + $0x1d40] sm:$0xf]
        %v2113 = vld [vmem:[%s188 + $0x1d44] sm:$0xf]
        %v2114 = vld [vmem:[%s188 + $0x1d48] sm:$0xf]
        %v2115 = vld [vmem:[%s188 + $0x1d4c] sm:$0xf]
        %v2116 = vld [vmem:[%s188 + $0x1d50] sm:$0xf]
        %v2117 = vld [vmem:[%s188 + $0x1d54] sm:$0xf]
        %v2118 = vld [vmem:[%s188 + $0x1d58] sm:$0xf]
        %v2119 = vld [vmem:[%s188 + $0x1d5c] sm:$0xf]
        %v2120 = vld [vmem:[%s188 + $0x1d60] sm:$0xf]
        %v2121 = vld [vmem:[%s188 + $0x1d64] sm:$0xf]
        %v2122 = vld [vmem:[%s188 + $0x1d68] sm:$0xf]
        %v2123 = vld [vmem:[%s188 + $0x1d6c] sm:$0xf]
        %v2124 = vld [vmem:[%s188 + $0x1d70] sm:$0xf]
        %v2125 = vld [vmem:[%s188 + $0x1d74] sm:$0xf]
        %v2126 = vld [vmem:[%s188 + $0x1d78] sm:$0xf]
        %v2127 = vld [vmem:[%s188 + $0x1d7c] sm:$0xf]
        %v2128 = vld [vmem:[%s188 + $0x1d80] sm:$0xf]
        %v2129 = vld [vmem:[%s188 + $0x1d84] sm:$0xf]
        %v2130 = vld [vmem:[%s188 + $0x1d88] sm:$0xf]
        %v2131 = vld [vmem:[%s188 + $0x1d8c] sm:$0xf]
        %v2132 = vld [vmem:[%s188 + $0x1d90] sm:$0xf]
        %v2133 = vld [vmem:[%s188 + $0x1d94] sm:$0xf]
        %v2134 = vld [vmem:[%s188 + $0x1d98] sm:$0xf]
        %v2135 = vld [vmem:[%s188 + $0x1d9c] sm:$0xf]
        %v2136 = vld [vmem:[%s188 + $0x1da0] sm:$0xf]
        %v2137 = vld [vmem:[%s188 + $0x1da4] sm:$0xf]
        %v2138 = vld [vmem:[%s188 + $0x1da8] sm:$0xf]
        %v2139 = vld [vmem:[%s188 + $0x1dac] sm:$0xf]
        %v2140 = vld [vmem:[%s188 + $0x1db0] sm:$0xf]
        %v2141 = vld [vmem:[%s188 + $0x1db4] sm:$0xf]
        %v2142 = vld [vmem:[%s188 + $0x1db8] sm:$0xf]
        %v2143 = vld [vmem:[%s188 + $0x1dbc] sm:$0xf]
        %v2144 = vld [vmem:[%s188 + $0x1dc0] sm:$0xf]
        %v2145 = vld [vmem:[%s188 + $0x1dc4] sm:$0xf]
        %v2146 = vld [vmem:[%s188 + $0x1dc8] sm:$0xf]
        %v2147 = vld [vmem:[%s188 + $0x1dcc] sm:$0xf]
        %v2148 = vld [vmem:[%s188 + $0x1dd0] sm:$0xf]
        %v2149 = vld [vmem:[%s188 + $0x1dd4] sm:$0xf]
        %v2150 = vld [vmem:[%s188 + $0x1dd8] sm:$0xf]
        %v2151 = vld [vmem:[%s188 + $0x1ddc] sm:$0xf]
        %v2152 = vld [vmem:[%s188 + $0x1de0] sm:$0xf]
        %v2153 = vld [vmem:[%s188 + $0x1de4] sm:$0xf]
        %v2154 = vld [vmem:[%s188 + $0x1de8] sm:$0xf]
        %v2155 = vld [vmem:[%s188 + $0x1dec] sm:$0xf]
        %v2156 = vld [vmem:[%s188 + $0x1df0] sm:$0xf]
        %v2157 = vld [vmem:[%s188 + $0x1df4] sm:$0xf]
        %v2158 = vld [vmem:[%s188 + $0x1df8] sm:$0xf]
        %v2159 = vld [vmem:[%s188 + $0x1dfc] sm:$0xf]
        %v2160 = vld [vmem:[%s188 + $0x1e00] sm:$0xf]
        %v2161 = vld [vmem:[%s188 + $0x1e04] sm:$0xf]
        %v2162 = vld [vmem:[%s188 + $0x1e08] sm:$0xf]
        %v2163 = vld [vmem:[%s188 + $0x1e0c] sm:$0xf]
        %v2164 = vld [vmem:[%s188 + $0x1e10] sm:$0xf]
        %v2165 = vld [vmem:[%s188 + $0x1e14] sm:$0xf]
        %v2166 = vld [vmem:[%s188 + $0x1e18] sm:$0xf]
        %v2167 = vld [vmem:[%s188 + $0x1e1c] sm:$0xf]
        %v2168 = vld [vmem:[%s188 + $0x1e20] sm:$0xf]
        %v2169 = vld [vmem:[%s188 + $0x1e24] sm:$0xf]
        %v2170 = vld [vmem:[%s188 + $0x1e28] sm:$0xf]
        %v2171 = vld [vmem:[%s188 + $0x1e2c] sm:$0xf]
        %v2172 = vld [vmem:[%s188 + $0x1e30] sm:$0xf]
        %v2173 = vld [vmem:[%s188 + $0x1e34] sm:$0xf]
        %v2174 = vld [vmem:[%s188 + $0x1e38] sm:$0xf]
        %v2175 = vld [vmem:[%s188 + $0x1e3c] sm:$0xf]
        %v2176 = vld [vmem:[%s188 + $0x1e40] sm:$0xf]
        %v2177 = vld [vmem:[%s188 + $0x1e44] sm:$0xf]
        %v2178 = vld [vmem:[%s188 + $0x1e48] sm:$0xf]
        %v2179 = vld [vmem:[%s188 + $0x1e4c] sm:$0xf]
        %v2180 = vld [vmem:[%s188 + $0x1e50] sm:$0xf]
        %v2181 = vld [vmem:[%s188 + $0x1e54] sm:$0xf]
        %v2182 = vld [vmem:[%s188 + $0x1e58] sm:$0xf]
        %v2183 = vld [vmem:[%s188 + $0x1e5c] sm:$0xf]
        %v2184 = vld [vmem:[%s188 + $0x1e60] sm:$0xf]
        %v2185 = vld [vmem:[%s188 + $0x1e64] sm:$0xf]
        %v2186 = vld [vmem:[%s188 + $0x1e68] sm:$0xf]
        %v2187 = vld [vmem:[%s188 + $0x1e6c] sm:$0xf]
        %v2188 = vld [vmem:[%s188 + $0x1e70] sm:$0xf]
        %v2189 = vld [vmem:[%s188 + $0x1e74] sm:$0xf]
        %v2190 = vld [vmem:[%s188 + $0x1e78] sm:$0xf]
        %v2191 = vld [vmem:[%s188 + $0x1e7c] sm:$0xf]
        %v2192 = vld [vmem:[%s188 + $0x1e80] sm:$0xf]
        %v2193 = vld [vmem:[%s188 + $0x1e84] sm:$0xf]
        %v2194 = vld [vmem:[%s188 + $0x1e88] sm:$0xf]
        %v2195 = vld [vmem:[%s188 + $0x1e8c] sm:$0xf]
        %v2196 = vld [vmem:[%s188 + $0x1e90] sm:$0xf]
        %v2197 = vld [vmem:[%s188 + $0x1e94] sm:$0xf]
        %v2198 = vld [vmem:[%s188 + $0x1e98] sm:$0xf]
        %v2199 = vld [vmem:[%s188 + $0x1e9c] sm:$0xf]
        %v2200 = vld [vmem:[%s188 + $0x1ea0] sm:$0xf]
        %v2201 = vld [vmem:[%s188 + $0x1ea4] sm:$0xf]
        %v2202 = vld [vmem:[%s188 + $0x1ea8] sm:$0xf]
        %v2203 = vld [vmem:[%s188 + $0x1eac] sm:$0xf]
        %v2204 = vld [vmem:[%s188 + $0x1eb0] sm:$0xf]
        %v2205 = vld [vmem:[%s188 + $0x1eb4] sm:$0xf]
        %v2206 = vld [vmem:[%s188 + $0x1eb8] sm:$0xf]
        %v2207 = vld [vmem:[%s188 + $0x1ebc] sm:$0xf]
        %v2208 = vld [vmem:[%s188 + $0x1ec0] sm:$0xf]
        %v2209 = vld [vmem:[%s188 + $0x1ec4] sm:$0xf]
        %v2210 = vld [vmem:[%s188 + $0x1ec8] sm:$0xf]
        %v2211 = vld [vmem:[%s188 + $0x1ecc] sm:$0xf]
        %v2212 = vld [vmem:[%s188 + $0x1ed0] sm:$0xf]
        %v2213 = vld [vmem:[%s188 + $0x1ed4] sm:$0xf]
        %v2214 = vld [vmem:[%s188 + $0x1ed8] sm:$0xf]
        %v2215 = vld [vmem:[%s188 + $0x1edc] sm:$0xf]
        %v2216 = vld [vmem:[%s188 + $0x1ee0] sm:$0xf]
        %v2217 = vld [vmem:[%s188 + $0x1ee4] sm:$0xf]
        %v2218 = vld [vmem:[%s188 + $0x1ee8] sm:$0xf]
        %v2219 = vld [vmem:[%s188 + $0x1eec] sm:$0xf]
        %v2220 = vld [vmem:[%s188 + $0x1ef0] sm:$0xf]
        %v2221 = vld [vmem:[%s188 + $0x1ef4] sm:$0xf]
        %v2222 = vld [vmem:[%s188 + $0x1ef8] sm:$0xf]
        %v2223 = vld [vmem:[%s188 + $0x1efc] sm:$0xf]
        %v2224 = vld [vmem:[%s188 + $0x1f00] sm:$0xf]
        %v2225 = vld [vmem:[%s188 + $0x1f04] sm:$0xf]
        %v2226 = vld [vmem:[%s188 + $0x1f08] sm:$0xf]
        %v2227 = vld [vmem:[%s188 + $0x1f0c] sm:$0xf]
        %v2228 = vld [vmem:[%s188 + $0x1f10] sm:$0xf]
        %v2229 = vld [vmem:[%s188 + $0x1f14] sm:$0xf]
        %v2230 = vld [vmem:[%s188 + $0x1f18] sm:$0xf]
        %v2231 = vld [vmem:[%s188 + $0x1f1c] sm:$0xf]
        %v2232 = vld [vmem:[%s188 + $0x1f20] sm:$0xf]
        %v2233 = vld [vmem:[%s188 + $0x1f24] sm:$0xf]
        %v2234 = vld [vmem:[%s188 + $0x1f28] sm:$0xf]
        %v2235 = vld [vmem:[%s188 + $0x1f2c] sm:$0xf]
        %v2236 = vld [vmem:[%s188 + $0x1f30] sm:$0xf]
        %v2237 = vld [vmem:[%s188 + $0x1f34] sm:$0xf]
        %v2238 = vld [vmem:[%s188 + $0x1f38] sm:$0xf]
        %v2239 = vld [vmem:[%s188 + $0x1f3c] sm:$0xf]
        %v2240 = vld [vmem:[%s188 + $0x1f40] sm:$0xf]
        %v2241 = vld [vmem:[%s188 + $0x1f44] sm:$0xf]
        %v2242 = vld [vmem:[%s188 + $0x1f48] sm:$0xf]
        %v2243 = vld [vmem:[%s188 + $0x1f4c] sm:$0xf]
        %v2244 = vld [vmem:[%s188 + $0x1f50] sm:$0xf]
        %v2245 = vld [vmem:[%s188 + $0x1f54] sm:$0xf]
        %v2246 = vld [vmem:[%s188 + $0x1f58] sm:$0xf]
        %v2247 = vld [vmem:[%s188 + $0x1f5c] sm:$0xf]
        %v2248 = vld [vmem:[%s188 + $0x1f60] sm:$0xf]
        %v2249 = vld [vmem:[%s188 + $0x1f64] sm:$0xf]
        %v2250 = vld [vmem:[%s188 + $0x1f68] sm:$0xf]
        %v2251 = vld [vmem:[%s188 + $0x1f6c] sm:$0xf]
        %v2252 = vld [vmem:[%s188 + $0x1f70] sm:$0xf]
        %v2253 = vld [vmem:[%s188 + $0x1f74] sm:$0xf]
        %v2254 = vld [vmem:[%s188 + $0x1f78] sm:$0xf]
        %v2255 = vld [vmem:[%s188 + $0x1f7c] sm:$0xf]
        %v2256 = vld [vmem:[%s188 + $0x1f80] sm:$0xf]
        %v2257 = vld [vmem:[%s188 + $0x1f84] sm:$0xf]
        %v2258 = vld [vmem:[%s188 + $0x1f88] sm:$0xf]
        %v2259 = vld [vmem:[%s188 + $0x1f8c] sm:$0xf]
        %v2260 = vld [vmem:[%s188 + $0x1f90] sm:$0xf]
        %v2261 = vld [vmem:[%s188 + $0x1f94] sm:$0xf]
        %v2262 = vld [vmem:[%s188 + $0x1f98] sm:$0xf]
        %v2263 = vld [vmem:[%s188 + $0x1f9c] sm:$0xf]
        %v2264 = vld [vmem:[%s188 + $0x1fa0] sm:$0xf]
        %v2265 = vld [vmem:[%s188 + $0x1fa4] sm:$0xf]
        %v2266 = vld [vmem:[%s188 + $0x1fa8] sm:$0xf]
        %v2267 = vld [vmem:[%s188 + $0x1fac] sm:$0xf]
        %v2268 = vld [vmem:[%s188 + $0x1fb0] sm:$0xf]
        %v2269 = vld [vmem:[%s188 + $0x1fb4] sm:$0xf]
        %v2270 = vld [vmem:[%s188 + $0x1fb8] sm:$0xf]
        %v2271 = vld [vmem:[%s188 + $0x1fbc] sm:$0xf]
        %v2272 = vld [vmem:[%s188 + $0x1fc0] sm:$0xf]
        %v2273 = vld [vmem:[%s188 + $0x1fc4] sm:$0xf]
        %v2274 = vld [vmem:[%s188 + $0x1fc8] sm:$0xf]
        %v2275 = vld [vmem:[%s188 + $0x1fcc] sm:$0xf]
        %v2276 = vld [vmem:[%s188 + $0x1fd0] sm:$0xf]
        %v2277 = vld [vmem:[%s188 + $0x1fd4] sm:$0xf]
        %v2278 = vld [vmem:[%s188 + $0x1fd8] sm:$0xf]
        %v2279 = vld [vmem:[%s188 + $0x1fdc] sm:$0xf]
        %v2280 = vld [vmem:[%s188 + $0x1fe0] sm:$0xf]
        %v2281 = vld [vmem:[%s188 + $0x1fe4] sm:$0xf]
        %v2282 = vld [vmem:[%s188 + $0x1fe8] sm:$0xf]
        %v2283 = vld [vmem:[%s188 + $0x1fec] sm:$0xf]
        %v2284 = vld [vmem:[%s188 + $0x1ff0] sm:$0xf]
        %v2285 = vld [vmem:[%s188 + $0x1ff4] sm:$0xf]
        %v2286 = vld [vmem:[%s188 + $0x1ff8] sm:$0xf]
        %v2287 = vld [vmem:[%s188 + $0x1ffc] sm:$0xf]
        %v2288 = vld [vmem:[%s196] sm:$0x1]
        %v2290 = vlaneseq
        %v2291 = vshrl.u32 %v2290, 7
        %v2292 = vsub.s32 0, %v2291
        %v2293 = vrot.slane %v2288, %v2292
        %v2311 = vcombine.high %v224, %v224
        %v2313 = vunpack.c.l.s4 1966171168
        %v2314 = vunpack.c.0.s8 %v2313
        %v2315 = vlaneseq
        %v2316 = vshrl.u32 %v2315, 7
        %v2317 = vsub.s32 %v2314, %v2316
        %v2318 = vrot.slane %v224, %v2317
        %v2320 = vunpack.c.l.s4 1966171168
        %v2321 = vunpack.c.0.s8 %v2320
        %v2322 = vlaneseq
        %v2323 = vshrl.u32 %v2322, 7
        %v2324 = vsub.s32 %v2321, %v2323
        %v2325 = vrot.slane %v2311, %v2324
        %v2326 = vcombine.high %v2318, %v2318
        %v2327 = vcombine.high %v2325, %v2325
        %v2329 = vunpack.c.l.s4 1966171168
        %v2330 = vunpack.c.0.s8 %v2329
        %v2331 = vlaneseq
        %v2332 = vshrl.u32 %v2331, 7
        %v2333 = vsub.s32 %v2330, %v2332
        %v2334 = vrot.slane %v2318, %v2333
        %v2336 = vunpack.c.l.s4 1966171168
        %v2337 = vunpack.c.0.s8 %v2336
        %v2338 = vlaneseq
        %v2339 = vshrl.u32 %v2338, 7
        %v2340 = vsub.s32 %v2337, %v2339
        %v2341 = vrot.slane %v2325, %v2340
        %v2343 = vunpack.c.l.s4 1966171168
        %v2344 = vunpack.c.0.s8 %v2343
        %v2345 = vlaneseq
        %v2346 = vshrl.u32 %v2345, 7
        %v2347 = vsub.s32 %v2344, %v2346
        %v2348 = vrot.slane %v2326, %v2347
        %v2350 = vunpack.c.l.s4 1966171168
        %v2351 = vunpack.c.0.s8 %v2350
        %v2352 = vlaneseq
        %v2353 = vshrl.u32 %v2352, 7
        %v2354 = vsub.s32 %v2351, %v2353
        %v2355 = vrot.slane %v2327, %v2354
        %v2356 = vcombine.high %v2334, %v2334
        %v2357 = vcombine.high %v2341, %v2341
        %v2358 = vcombine.high %v2348, %v2348
        %v2359 = vcombine.high %v2355, %v2355
        %v2360 = vcombine.high %v225, %v225
        %v2362 = vunpack.c.l.s4 1966171168
        %v2363 = vunpack.c.0.s8 %v2362
        %v2364 = vlaneseq
        %v2365 = vshrl.u32 %v2364, 7
        %v2366 = vsub.s32 %v2363, %v2365
        %v2367 = vrot.slane %v225, %v2366
        %v2369 = vunpack.c.l.s4 1966171168
        %v2370 = vunpack.c.0.s8 %v2369
        %v2371 = vlaneseq
        %v2372 = vshrl.u32 %v2371, 7
        %v2373 = vsub.s32 %v2370, %v2372
        %v2374 = vrot.slane %v2360, %v2373
        %v2375 = vcombine.high %v2367, %v2367
        %v2376 = vcombine.high %v2374, %v2374
        %v2378 = vunpack.c.l.s4 1966171168
        %v2379 = vunpack.c.0.s8 %v2378
        %v2380 = vlaneseq
        %v2381 = vshrl.u32 %v2380, 7
        %v2382 = vsub.s32 %v2379, %v2381
        %v2383 = vrot.slane %v2367, %v2382
        %v2385 = vunpack.c.l.s4 1966171168
        %v2386 = vunpack.c.0.s8 %v2385
        %v2387 = vlaneseq
        %v2388 = vshrl.u32 %v2387, 7
        %v2389 = vsub.s32 %v2386, %v2388
        %v2390 = vrot.slane %v2374, %v2389
        %v2392 = vunpack.c.l.s4 1966171168
        %v2393 = vunpack.c.0.s8 %v2392
        %v2394 = vlaneseq
        %v2395 = vshrl.u32 %v2394, 7
        %v2396 = vsub.s32 %v2393, %v2395
        %v2397 = vrot.slane %v2375, %v2396
        %v2399 = vunpack.c.l.s4 1966171168
        %v2400 = vunpack.c.0.s8 %v2399
        %v2401 = vlaneseq
        %v2402 = vshrl.u32 %v2401, 7
        %v2403 = vsub.s32 %v2400, %v2402
        %v2404 = vrot.slane %v2376, %v2403
        %v2405 = vcombine.high %v2383, %v2383
        %v2406 = vcombine.high %v2390, %v2390
        %v2407 = vcombine.high %v2397, %v2397
        %v2408 = vcombine.high %v2404, %v2404
        %v2409 = vcombine.high %v226, %v226
        %v2411 = vunpack.c.l.s4 1966171168
        %v2412 = vunpack.c.0.s8 %v2411
        %v2413 = vlaneseq
        %v2414 = vshrl.u32 %v2413, 7
        %v2415 = vsub.s32 %v2412, %v2414
        %v2416 = vrot.slane %v226, %v2415
        %v2418 = vunpack.c.l.s4 1966171168
        %v2419 = vunpack.c.0.s8 %v2418
        %v2420 = vlaneseq
        %v2421 = vshrl.u32 %v2420, 7
        %v2422 = vsub.s32 %v2419, %v2421
        %v2423 = vrot.slane %v2409, %v2422
        %v2424 = vcombine.high %v2416, %v2416
        %v2425 = vcombine.high %v2423, %v2423
        %v2427 = vunpack.c.l.s4 1966171168
        %v2428 = vunpack.c.0.s8 %v2427
        %v2429 = vlaneseq
        %v2430 = vshrl.u32 %v2429, 7
        %v2431 = vsub.s32 %v2428, %v2430
        %v2432 = vrot.slane %v2416, %v2431
        %v2434 = vunpack.c.l.s4 1966171168
        %v2435 = vunpack.c.0.s8 %v2434
        %v2436 = vlaneseq
        %v2437 = vshrl.u32 %v2436, 7
        %v2438 = vsub.s32 %v2435, %v2437
        %v2439 = vrot.slane %v2423, %v2438
        %v2441 = vunpack.c.l.s4 1966171168
        %v2442 = vunpack.c.0.s8 %v2441
        %v2443 = vlaneseq
        %v2444 = vshrl.u32 %v2443, 7
        %v2445 = vsub.s32 %v2442, %v2444
        %v2446 = vrot.slane %v2424, %v2445
        %v2448 = vunpack.c.l.s4 1966171168
        %v2449 = vunpack.c.0.s8 %v2448
        %v2450 = vlaneseq
        %v2451 = vshrl.u32 %v2450, 7
        %v2452 = vsub.s32 %v2449, %v2451
        %v2453 = vrot.slane %v2425, %v2452
        %v2454 = vcombine.high %v2432, %v2432
        %v2455 = vcombine.high %v2439, %v2439
        %v2456 = vcombine.high %v2446, %v2446
        %v2457 = vcombine.high %v2453, %v2453
        %v2458 = vcombine.high %v227, %v227
        %v2460 = vunpack.c.l.s4 1966171168
        %v2461 = vunpack.c.0.s8 %v2460
        %v2462 = vlaneseq
        %v2463 = vshrl.u32 %v2462, 7
        %v2464 = vsub.s32 %v2461, %v2463
        %v2465 = vrot.slane %v227, %v2464
        %v2467 = vunpack.c.l.s4 1966171168
        %v2468 = vunpack.c.0.s8 %v2467
        %v2469 = vlaneseq
        %v2470 = vshrl.u32 %v2469, 7
        %v2471 = vsub.s32 %v2468, %v2470
        %v2472 = vrot.slane %v2458, %v2471
        %v2473 = vcombine.high %v2465, %v2465
        %v2474 = vcombine.high %v2472, %v2472
        %v2476 = vunpack.c.l.s4 1966171168
        %v2477 = vunpack.c.0.s8 %v2476
        %v2478 = vlaneseq
        %v2479 = vshrl.u32 %v2478, 7
        %v2480 = vsub.s32 %v2477, %v2479
        %v2481 = vrot.slane %v2465, %v2480
        %v2483 = vunpack.c.l.s4 1966171168
        %v2484 = vunpack.c.0.s8 %v2483
        %v2485 = vlaneseq
        %v2486 = vshrl.u32 %v2485, 7
        %v2487 = vsub.s32 %v2484, %v2486
        %v2488 = vrot.slane %v2472, %v2487
        %v2490 = vunpack.c.l.s4 1966171168
        %v2491 = vunpack.c.0.s8 %v2490
        %v2492 = vlaneseq
        %v2493 = vshrl.u32 %v2492, 7
        %v2494 = vsub.s32 %v2491, %v2493
        %v2495 = vrot.slane %v2473, %v2494
        %v2497 = vunpack.c.l.s4 1966171168
        %v2498 = vunpack.c.0.s8 %v2497
        %v2499 = vlaneseq
        %v2500 = vshrl.u32 %v2499, 7
        %v2501 = vsub.s32 %v2498, %v2500
        %v2502 = vrot.slane %v2474, %v2501
        %v2503 = vcombine.high %v2481, %v2481
        %v2504 = vcombine.high %v2488, %v2488
        %v2505 = vcombine.high %v2495, %v2495
        %v2506 = vcombine.high %v2502, %v2502
        %v2507 = vcombine.high %v228, %v228
        %v2509 = vunpack.c.l.s4 1966171168
        %v2510 = vunpack.c.0.s8 %v2509
        %v2511 = vlaneseq
        %v2512 = vshrl.u32 %v2511, 7
        %v2513 = vsub.s32 %v2510, %v2512
        %v2514 = vrot.slane %v228, %v2513
        %v2516 = vunpack.c.l.s4 1966171168
        %v2517 = vunpack.c.0.s8 %v2516
        %v2518 = vlaneseq
        %v2519 = vshrl.u32 %v2518, 7
        %v2520 = vsub.s32 %v2517, %v2519
        %v2521 = vrot.slane %v2507, %v2520
        %v2522 = vcombine.high %v2514, %v2514
        %v2523 = vcombine.high %v2521, %v2521
        %v2525 = vunpack.c.l.s4 1966171168
        %v2526 = vunpack.c.0.s8 %v2525
        %v2527 = vlaneseq
        %v2528 = vshrl.u32 %v2527, 7
        %v2529 = vsub.s32 %v2526, %v2528
        %v2530 = vrot.slane %v2514, %v2529
        %v2532 = vunpack.c.l.s4 1966171168
        %v2533 = vunpack.c.0.s8 %v2532
        %v2534 = vlaneseq
        %v2535 = vshrl.u32 %v2534, 7
        %v2536 = vsub.s32 %v2533, %v2535
        %v2537 = vrot.slane %v2521, %v2536
        %v2539 = vunpack.c.l.s4 1966171168
        %v2540 = vunpack.c.0.s8 %v2539
        %v2541 = vlaneseq
        %v2542 = vshrl.u32 %v2541, 7
        %v2543 = vsub.s32 %v2540, %v2542
        %v2544 = vrot.slane %v2522, %v2543
        %v2546 = vunpack.c.l.s4 1966171168
        %v2547 = vunpack.c.0.s8 %v2546
        %v2548 = vlaneseq
        %v2549 = vshrl.u32 %v2548, 7
        %v2550 = vsub.s32 %v2547, %v2549
        %v2551 = vrot.slane %v2523, %v2550
        %v2552 = vcombine.high %v2530, %v2530
        %v2553 = vcombine.high %v2537, %v2537
        %v2554 = vcombine.high %v2544, %v2544
        %v2555 = vcombine.high %v2551, %v2551
        %v2556 = vcombine.high %v229, %v229
        %v2558 = vunpack.c.l.s4 1966171168
        %v2559 = vunpack.c.0.s8 %v2558
        %v2560 = vlaneseq
        %v2561 = vshrl.u32 %v2560, 7
        %v2562 = vsub.s32 %v2559, %v2561
        %v2563 = vrot.slane %v229, %v2562
        %v2565 = vunpack.c.l.s4 1966171168
        %v2566 = vunpack.c.0.s8 %v2565
        %v2567 = vlaneseq
        %v2568 = vshrl.u32 %v2567, 7
        %v2569 = vsub.s32 %v2566, %v2568
        %v2570 = vrot.slane %v2556, %v2569
        %v2571 = vcombine.high %v2563, %v2563
        %v2572 = vcombine.high %v2570, %v2570
        %v2574 = vunpack.c.l.s4 1966171168
        %v2575 = vunpack.c.0.s8 %v2574
        %v2576 = vlaneseq
        %v2577 = vshrl.u32 %v2576, 7
        %v2578 = vsub.s32 %v2575, %v2577
        %v2579 = vrot.slane %v2563, %v2578
        %v2581 = vunpack.c.l.s4 1966171168
        %v2582 = vunpack.c.0.s8 %v2581
        %v2583 = vlaneseq
        %v2584 = vshrl.u32 %v2583, 7
        %v2585 = vsub.s32 %v2582, %v2584
        %v2586 = vrot.slane %v2570, %v2585
        %v2588 = vunpack.c.l.s4 1966171168
        %v2589 = vunpack.c.0.s8 %v2588
        %v2590 = vlaneseq
        %v2591 = vshrl.u32 %v2590, 7
        %v2592 = vsub.s32 %v2589, %v2591
        %v2593 = vrot.slane %v2571, %v2592
        %v2595 = vunpack.c.l.s4 1966171168
        %v2596 = vunpack.c.0.s8 %v2595
        %v2597 = vlaneseq
        %v2598 = vshrl.u32 %v2597, 7
        %v2599 = vsub.s32 %v2596, %v2598
        %v2600 = vrot.slane %v2572, %v2599
        %v2601 = vcombine.high %v2579, %v2579
        %v2602 = vcombine.high %v2586, %v2586
        %v2603 = vcombine.high %v2593, %v2593
        %v2604 = vcombine.high %v2600, %v2600
        %v2605 = vcombine.high %v230, %v230
        %v2607 = vunpack.c.l.s4 1966171168
        %v2608 = vunpack.c.0.s8 %v2607
        %v2609 = vlaneseq
        %v2610 = vshrl.u32 %v2609, 7
        %v2611 = vsub.s32 %v2608, %v2610
        %v2612 = vrot.slane %v230, %v2611
        %v2614 = vunpack.c.l.s4 1966171168
        %v2615 = vunpack.c.0.s8 %v2614
        %v2616 = vlaneseq
        %v2617 = vshrl.u32 %v2616, 7
        %v2618 = vsub.s32 %v2615, %v2617
        %v2619 = vrot.slane %v2605, %v2618
        %v2620 = vcombine.high %v2612, %v2612
        %v2621 = vcombine.high %v2619, %v2619
        %v2623 = vunpack.c.l.s4 1966171168
        %v2624 = vunpack.c.0.s8 %v2623
        %v2625 = vlaneseq
        %v2626 = vshrl.u32 %v2625, 7
        %v2627 = vsub.s32 %v2624, %v2626
        %v2628 = vrot.slane %v2612, %v2627
        %v2630 = vunpack.c.l.s4 1966171168
        %v2631 = vunpack.c.0.s8 %v2630
        %v2632 = vlaneseq
        %v2633 = vshrl.u32 %v2632, 7
        %v2634 = vsub.s32 %v2631, %v2633
        %v2635 = vrot.slane %v2619, %v2634
        %v2637 = vunpack.c.l.s4 1966171168
        %v2638 = vunpack.c.0.s8 %v2637
        %v2639 = vlaneseq
        %v2640 = vshrl.u32 %v2639, 7
        %v2641 = vsub.s32 %v2638, %v2640
        %v2642 = vrot.slane %v2620, %v2641
        %v2644 = vunpack.c.l.s4 1966171168
        %v2645 = vunpack.c.0.s8 %v2644
        %v2646 = vlaneseq
        %v2647 = vshrl.u32 %v2646, 7
        %v2648 = vsub.s32 %v2645, %v2647
        %v2649 = vrot.slane %v2621, %v2648
        %v2650 = vcombine.high %v2628, %v2628
        %v2651 = vcombine.high %v2635, %v2635
        %v2652 = vcombine.high %v2642, %v2642
        %v2653 = vcombine.high %v2649, %v2649
        %v2654 = vcombine.high %v231, %v231
        %v2656 = vunpack.c.l.s4 1966171168
        %v2657 = vunpack.c.0.s8 %v2656
        %v2658 = vlaneseq
        %v2659 = vshrl.u32 %v2658, 7
        %v2660 = vsub.s32 %v2657, %v2659
        %v2661 = vrot.slane %v231, %v2660
        %v2663 = vunpack.c.l.s4 1966171168
        %v2664 = vunpack.c.0.s8 %v2663
        %v2665 = vlaneseq
        %v2666 = vshrl.u32 %v2665, 7
        %v2667 = vsub.s32 %v2664, %v2666
        %v2668 = vrot.slane %v2654, %v2667
        %v2669 = vcombine.high %v2661, %v2661
        %v2670 = vcombine.high %v2668, %v2668
        %v2672 = vunpack.c.l.s4 1966171168
        %v2673 = vunpack.c.0.s8 %v2672
        %v2674 = vlaneseq
        %v2675 = vshrl.u32 %v2674, 7
        %v2676 = vsub.s32 %v2673, %v2675
        %v2677 = vrot.slane %v2661, %v2676
        %v2679 = vunpack.c.l.s4 1966171168
        %v2680 = vunpack.c.0.s8 %v2679
        %v2681 = vlaneseq
        %v2682 = vshrl.u32 %v2681, 7
        %v2683 = vsub.s32 %v2680, %v2682
        %v2684 = vrot.slane %v2668, %v2683
        %v2686 = vunpack.c.l.s4 1966171168
        %v2687 = vunpack.c.0.s8 %v2686
        %v2688 = vlaneseq
        %v2689 = vshrl.u32 %v2688, 7
        %v2690 = vsub.s32 %v2687, %v2689
        %v2691 = vrot.slane %v2669, %v2690
        %v2693 = vunpack.c.l.s4 1966171168
        %v2694 = vunpack.c.0.s8 %v2693
        %v2695 = vlaneseq
        %v2696 = vshrl.u32 %v2695, 7
        %v2697 = vsub.s32 %v2694, %v2696
        %v2698 = vrot.slane %v2670, %v2697
        %v2699 = vcombine.high %v2677, %v2677
        %v2700 = vcombine.high %v2684, %v2684
        %v2701 = vcombine.high %v2691, %v2691
        %v2702 = vcombine.high %v2698, %v2698
        %v2703 = vcombine.high %v232, %v232
        %v2705 = vunpack.c.l.s4 1966171168
        %v2706 = vunpack.c.0.s8 %v2705
        %v2707 = vlaneseq
        %v2708 = vshrl.u32 %v2707, 7
        %v2709 = vsub.s32 %v2706, %v2708
        %v2710 = vrot.slane %v232, %v2709
        %v2712 = vunpack.c.l.s4 1966171168
        %v2713 = vunpack.c.0.s8 %v2712
        %v2714 = vlaneseq
        %v2715 = vshrl.u32 %v2714, 7
        %v2716 = vsub.s32 %v2713, %v2715
        %v2717 = vrot.slane %v2703, %v2716
        %v2718 = vcombine.high %v2710, %v2710
        %v2719 = vcombine.high %v2717, %v2717
        %v2721 = vunpack.c.l.s4 1966171168
        %v2722 = vunpack.c.0.s8 %v2721
        %v2723 = vlaneseq
        %v2724 = vshrl.u32 %v2723, 7
        %v2725 = vsub.s32 %v2722, %v2724
        %v2726 = vrot.slane %v2710, %v2725
        %v2728 = vunpack.c.l.s4 1966171168
        %v2729 = vunpack.c.0.s8 %v2728
        %v2730 = vlaneseq
        %v2731 = vshrl.u32 %v2730, 7
        %v2732 = vsub.s32 %v2729, %v2731
        %v2733 = vrot.slane %v2717, %v2732
        %v2735 = vunpack.c.l.s4 1966171168
        %v2736 = vunpack.c.0.s8 %v2735
        %v2737 = vlaneseq
        %v2738 = vshrl.u32 %v2737, 7
        %v2739 = vsub.s32 %v2736, %v2738
        %v2740 = vrot.slane %v2718, %v2739
        %v2742 = vunpack.c.l.s4 1966171168
        %v2743 = vunpack.c.0.s8 %v2742
        %v2744 = vlaneseq
        %v2745 = vshrl.u32 %v2744, 7
        %v2746 = vsub.s32 %v2743, %v2745
        %v2747 = vrot.slane %v2719, %v2746
        %v2748 = vcombine.high %v2726, %v2726
        %v2749 = vcombine.high %v2733, %v2733
        %v2750 = vcombine.high %v2740, %v2740
        %v2751 = vcombine.high %v2747, %v2747
        %v2752 = vcombine.high %v233, %v233
        %v2754 = vunpack.c.l.s4 1966171168
        %v2755 = vunpack.c.0.s8 %v2754
        %v2756 = vlaneseq
        %v2757 = vshrl.u32 %v2756, 7
        %v2758 = vsub.s32 %v2755, %v2757
        %v2759 = vrot.slane %v233, %v2758
        %v2761 = vunpack.c.l.s4 1966171168
        %v2762 = vunpack.c.0.s8 %v2761
        %v2763 = vlaneseq
        %v2764 = vshrl.u32 %v2763, 7
        %v2765 = vsub.s32 %v2762, %v2764
        %v2766 = vrot.slane %v2752, %v2765
        %v2767 = vcombine.high %v2759, %v2759
        %v2768 = vcombine.high %v2766, %v2766
        %v2770 = vunpack.c.l.s4 1966171168
        %v2771 = vunpack.c.0.s8 %v2770
        %v2772 = vlaneseq
        %v2773 = vshrl.u32 %v2772, 7
        %v2774 = vsub.s32 %v2771, %v2773
        %v2775 = vrot.slane %v2759, %v2774
        %v2777 = vunpack.c.l.s4 1966171168
        %v2778 = vunpack.c.0.s8 %v2777
        %v2779 = vlaneseq
        %v2780 = vshrl.u32 %v2779, 7
        %v2781 = vsub.s32 %v2778, %v2780
        %v2782 = vrot.slane %v2766, %v2781
        %v2784 = vunpack.c.l.s4 1966171168
        %v2785 = vunpack.c.0.s8 %v2784
        %v2786 = vlaneseq
        %v2787 = vshrl.u32 %v2786, 7
        %v2788 = vsub.s32 %v2785, %v2787
        %v2789 = vrot.slane %v2767, %v2788
        %v2791 = vunpack.c.l.s4 1966171168
        %v2792 = vunpack.c.0.s8 %v2791
        %v2793 = vlaneseq
        %v2794 = vshrl.u32 %v2793, 7
        %v2795 = vsub.s32 %v2792, %v2794
        %v2796 = vrot.slane %v2768, %v2795
        %v2797 = vcombine.high %v2775, %v2775
        %v2798 = vcombine.high %v2782, %v2782
        %v2799 = vcombine.high %v2789, %v2789
        %v2800 = vcombine.high %v2796, %v2796
        %v2801 = vcombine.high %v234, %v234
        %v2803 = vunpack.c.l.s4 1966171168
        %v2804 = vunpack.c.0.s8 %v2803
        %v2805 = vlaneseq
        %v2806 = vshrl.u32 %v2805, 7
        %v2807 = vsub.s32 %v2804, %v2806
        %v2808 = vrot.slane %v234, %v2807
        %v2810 = vunpack.c.l.s4 1966171168
        %v2811 = vunpack.c.0.s8 %v2810
        %v2812 = vlaneseq
        %v2813 = vshrl.u32 %v2812, 7
        %v2814 = vsub.s32 %v2811, %v2813
        %v2815 = vrot.slane %v2801, %v2814
        %v2816 = vcombine.high %v2808, %v2808
        %v2817 = vcombine.high %v2815, %v2815
        %v2819 = vunpack.c.l.s4 1966171168
        %v2820 = vunpack.c.0.s8 %v2819
        %v2821 = vlaneseq
        %v2822 = vshrl.u32 %v2821, 7
        %v2823 = vsub.s32 %v2820, %v2822
        %v2824 = vrot.slane %v2808, %v2823
        %v2826 = vunpack.c.l.s4 1966171168
        %v2827 = vunpack.c.0.s8 %v2826
        %v2828 = vlaneseq
        %v2829 = vshrl.u32 %v2828, 7
        %v2830 = vsub.s32 %v2827, %v2829
        %v2831 = vrot.slane %v2815, %v2830
        %v2833 = vunpack.c.l.s4 1966171168
        %v2834 = vunpack.c.0.s8 %v2833
        %v2835 = vlaneseq
        %v2836 = vshrl.u32 %v2835, 7
        %v2837 = vsub.s32 %v2834, %v2836
        %v2838 = vrot.slane %v2816, %v2837
        %v2840 = vunpack.c.l.s4 1966171168
        %v2841 = vunpack.c.0.s8 %v2840
        %v2842 = vlaneseq
        %v2843 = vshrl.u32 %v2842, 7
        %v2844 = vsub.s32 %v2841, %v2843
        %v2845 = vrot.slane %v2817, %v2844
        %v2846 = vcombine.high %v2824, %v2824
        %v2847 = vcombine.high %v2831, %v2831
        %v2848 = vcombine.high %v2838, %v2838
        %v2849 = vcombine.high %v2845, %v2845
        %v2850 = vcombine.high %v235, %v235
        %v2852 = vunpack.c.l.s4 1966171168
        %v2853 = vunpack.c.0.s8 %v2852
        %v2854 = vlaneseq
        %v2855 = vshrl.u32 %v2854, 7
        %v2856 = vsub.s32 %v2853, %v2855
        %v2857 = vrot.slane %v235, %v2856
        %v2859 = vunpack.c.l.s4 1966171168
        %v2860 = vunpack.c.0.s8 %v2859
        %v2861 = vlaneseq
        %v2862 = vshrl.u32 %v2861, 7
        %v2863 = vsub.s32 %v2860, %v2862
        %v2864 = vrot.slane %v2850, %v2863
        %v2865 = vcombine.high %v2857, %v2857
        %v2866 = vcombine.high %v2864, %v2864
        %v2868 = vunpack.c.l.s4 1966171168
        %v2869 = vunpack.c.0.s8 %v2868
        %v2870 = vlaneseq
        %v2871 = vshrl.u32 %v2870, 7
        %v2872 = vsub.s32 %v2869, %v2871
        %v2873 = vrot.slane %v2857, %v2872
        %v2875 = vunpack.c.l.s4 1966171168
        %v2876 = vunpack.c.0.s8 %v2875
        %v2877 = vlaneseq
        %v2878 = vshrl.u32 %v2877, 7
        %v2879 = vsub.s32 %v2876, %v2878
        %v2880 = vrot.slane %v2864, %v2879
        %v2882 = vunpack.c.l.s4 1966171168
        %v2883 = vunpack.c.0.s8 %v2882
        %v2884 = vlaneseq
        %v2885 = vshrl.u32 %v2884, 7
        %v2886 = vsub.s32 %v2883, %v2885
        %v2887 = vrot.slane %v2865, %v2886
        %v2889 = vunpack.c.l.s4 1966171168
        %v2890 = vunpack.c.0.s8 %v2889
        %v2891 = vlaneseq
        %v2892 = vshrl.u32 %v2891, 7
        %v2893 = vsub.s32 %v2890, %v2892
        %v2894 = vrot.slane %v2866, %v2893
        %v2895 = vcombine.high %v2873, %v2873
        %v2896 = vcombine.high %v2880, %v2880
        %v2897 = vcombine.high %v2887, %v2887
        %v2898 = vcombine.high %v2894, %v2894
        %v2899 = vcombine.high %v236, %v236
        %v2901 = vunpack.c.l.s4 1966171168
        %v2902 = vunpack.c.0.s8 %v2901
        %v2903 = vlaneseq
        %v2904 = vshrl.u32 %v2903, 7
        %v2905 = vsub.s32 %v2902, %v2904
        %v2906 = vrot.slane %v236, %v2905
        %v2908 = vunpack.c.l.s4 1966171168
        %v2909 = vunpack.c.0.s8 %v2908
        %v2910 = vlaneseq
        %v2911 = vshrl.u32 %v2910, 7
        %v2912 = vsub.s32 %v2909, %v2911
        %v2913 = vrot.slane %v2899, %v2912
        %v2914 = vcombine.high %v2906, %v2906
        %v2915 = vcombine.high %v2913, %v2913
        %v2917 = vunpack.c.l.s4 1966171168
        %v2918 = vunpack.c.0.s8 %v2917
        %v2919 = vlaneseq
        %v2920 = vshrl.u32 %v2919, 7
        %v2921 = vsub.s32 %v2918, %v2920
        %v2922 = vrot.slane %v2906, %v2921
        %v2924 = vunpack.c.l.s4 1966171168
        %v2925 = vunpack.c.0.s8 %v2924
        %v2926 = vlaneseq
        %v2927 = vshrl.u32 %v2926, 7
        %v2928 = vsub.s32 %v2925, %v2927
        %v2929 = vrot.slane %v2913, %v2928
        %v2931 = vunpack.c.l.s4 1966171168
        %v2932 = vunpack.c.0.s8 %v2931
        %v2933 = vlaneseq
        %v2934 = vshrl.u32 %v2933, 7
        %v2935 = vsub.s32 %v2932, %v2934
        %v2936 = vrot.slane %v2914, %v2935
        %v2938 = vunpack.c.l.s4 1966171168
        %v2939 = vunpack.c.0.s8 %v2938
        %v2940 = vlaneseq
        %v2941 = vshrl.u32 %v2940, 7
        %v2942 = vsub.s32 %v2939, %v2941
        %v2943 = vrot.slane %v2915, %v2942
        %v2944 = vcombine.high %v2922, %v2922
        %v2945 = vcombine.high %v2929, %v2929
        %v2946 = vcombine.high %v2936, %v2936
        %v2947 = vcombine.high %v2943, %v2943
        %v2948 = vcombine.high %v237, %v237
        %v2950 = vunpack.c.l.s4 1966171168
        %v2951 = vunpack.c.0.s8 %v2950
        %v2952 = vlaneseq
        %v2953 = vshrl.u32 %v2952, 7
        %v2954 = vsub.s32 %v2951, %v2953
        %v2955 = vrot.slane %v237, %v2954
        %v2957 = vunpack.c.l.s4 1966171168
        %v2958 = vunpack.c.0.s8 %v2957
        %v2959 = vlaneseq
        %v2960 = vshrl.u32 %v2959, 7
        %v2961 = vsub.s32 %v2958, %v2960
        %v2962 = vrot.slane %v2948, %v2961
        %v2963 = vcombine.high %v2955, %v2955
        %v2964 = vcombine.high %v2962, %v2962
        %v2966 = vunpack.c.l.s4 1966171168
        %v2967 = vunpack.c.0.s8 %v2966
        %v2968 = vlaneseq
        %v2969 = vshrl.u32 %v2968, 7
        %v2970 = vsub.s32 %v2967, %v2969
        %v2971 = vrot.slane %v2955, %v2970
        %v2973 = vunpack.c.l.s4 1966171168
        %v2974 = vunpack.c.0.s8 %v2973
        %v2975 = vlaneseq
        %v2976 = vshrl.u32 %v2975, 7
        %v2977 = vsub.s32 %v2974, %v2976
        %v2978 = vrot.slane %v2962, %v2977
        %v2980 = vunpack.c.l.s4 1966171168
        %v2981 = vunpack.c.0.s8 %v2980
        %v2982 = vlaneseq
        %v2983 = vshrl.u32 %v2982, 7
        %v2984 = vsub.s32 %v2981, %v2983
        %v2985 = vrot.slane %v2963, %v2984
        %v2987 = vunpack.c.l.s4 1966171168
        %v2988 = vunpack.c.0.s8 %v2987
        %v2989 = vlaneseq
        %v2990 = vshrl.u32 %v2989, 7
        %v2991 = vsub.s32 %v2988, %v2990
        %v2992 = vrot.slane %v2964, %v2991
        %v2993 = vcombine.high %v2971, %v2971
        %v2994 = vcombine.high %v2978, %v2978
        %v2995 = vcombine.high %v2985, %v2985
        %v2996 = vcombine.high %v2992, %v2992
        %v2997 = vcombine.high %v238, %v238
        %v2999 = vunpack.c.l.s4 1966171168
        %v3000 = vunpack.c.0.s8 %v2999
        %v3001 = vlaneseq
        %v3002 = vshrl.u32 %v3001, 7
        %v3003 = vsub.s32 %v3000, %v3002
        %v3004 = vrot.slane %v238, %v3003
        %v3006 = vunpack.c.l.s4 1966171168
        %v3007 = vunpack.c.0.s8 %v3006
        %v3008 = vlaneseq
        %v3009 = vshrl.u32 %v3008, 7
        %v3010 = vsub.s32 %v3007, %v3009
        %v3011 = vrot.slane %v2997, %v3010
        %v3012 = vcombine.high %v3004, %v3004
        %v3013 = vcombine.high %v3011, %v3011
        %v3015 = vunpack.c.l.s4 1966171168
        %v3016 = vunpack.c.0.s8 %v3015
        %v3017 = vlaneseq
        %v3018 = vshrl.u32 %v3017, 7
        %v3019 = vsub.s32 %v3016, %v3018
        %v3020 = vrot.slane %v3004, %v3019
        %v3022 = vunpack.c.l.s4 1966171168
        %v3023 = vunpack.c.0.s8 %v3022
        %v3024 = vlaneseq
        %v3025 = vshrl.u32 %v3024, 7
        %v3026 = vsub.s32 %v3023, %v3025
        %v3027 = vrot.slane %v3011, %v3026
        %v3029 = vunpack.c.l.s4 1966171168
        %v3030 = vunpack.c.0.s8 %v3029
        %v3031 = vlaneseq
        %v3032 = vshrl.u32 %v3031, 7
        %v3033 = vsub.s32 %v3030, %v3032
        %v3034 = vrot.slane %v3012, %v3033
        %v3036 = vunpack.c.l.s4 1966171168
        %v3037 = vunpack.c.0.s8 %v3036
        %v3038 = vlaneseq
        %v3039 = vshrl.u32 %v3038, 7
        %v3040 = vsub.s32 %v3037, %v3039
        %v3041 = vrot.slane %v3013, %v3040
        %v3042 = vcombine.high %v3020, %v3020
        %v3043 = vcombine.high %v3027, %v3027
        %v3044 = vcombine.high %v3034, %v3034
        %v3045 = vcombine.high %v3041, %v3041
        %v3046 = vcombine.high %v239, %v239
        %v3048 = vunpack.c.l.s4 1966171168
        %v3049 = vunpack.c.0.s8 %v3048
        %v3050 = vlaneseq
        %v3051 = vshrl.u32 %v3050, 7
        %v3052 = vsub.s32 %v3049, %v3051
        %v3053 = vrot.slane %v239, %v3052
        %v3055 = vunpack.c.l.s4 1966171168
        %v3056 = vunpack.c.0.s8 %v3055
        %v3057 = vlaneseq
        %v3058 = vshrl.u32 %v3057, 7
        %v3059 = vsub.s32 %v3056, %v3058
        %v3060 = vrot.slane %v3046, %v3059
        %v3061 = vcombine.high %v3053, %v3053
        %v3062 = vcombine.high %v3060, %v3060
        %v3064 = vunpack.c.l.s4 1966171168
        %v3065 = vunpack.c.0.s8 %v3064
        %v3066 = vlaneseq
        %v3067 = vshrl.u32 %v3066, 7
        %v3068 = vsub.s32 %v3065, %v3067
        %v3069 = vrot.slane %v3053, %v3068
        %v3071 = vunpack.c.l.s4 1966171168
        %v3072 = vunpack.c.0.s8 %v3071
        %v3073 = vlaneseq
        %v3074 = vshrl.u32 %v3073, 7
        %v3075 = vsub.s32 %v3072, %v3074
        %v3076 = vrot.slane %v3060, %v3075
        %v3078 = vunpack.c.l.s4 1966171168
        %v3079 = vunpack.c.0.s8 %v3078
        %v3080 = vlaneseq
        %v3081 = vshrl.u32 %v3080, 7
        %v3082 = vsub.s32 %v3079, %v3081
        %v3083 = vrot.slane %v3061, %v3082
        %v3085 = vunpack.c.l.s4 1966171168
        %v3086 = vunpack.c.0.s8 %v3085
        %v3087 = vlaneseq
        %v3088 = vshrl.u32 %v3087, 7
        %v3089 = vsub.s32 %v3086, %v3088
        %v3090 = vrot.slane %v3062, %v3089
        %v3091 = vcombine.high %v3069, %v3069
        %v3092 = vcombine.high %v3076, %v3076
        %v3093 = vcombine.high %v3083, %v3083
        %v3094 = vcombine.high %v3090, %v3090
        %v5271 = vunpack.c.l.b16 %v240
        %v5272 = vunpack.c.l.b16 %v241
        %v5273 = vunpack.c.l.b16 %v242
        %v5274 = vunpack.c.l.b16 %v243
        %v5275 = vunpack.c.l.b16 %v244
        %v5276 = vunpack.c.l.b16 %v245
        %v5277 = vunpack.c.l.b16 %v246
        %v5278 = vunpack.c.l.b16 %v247
        %v5279 = vunpack.c.l.b16 %v248
        %v5280 = vunpack.c.l.b16 %v249
        %v5281 = vunpack.c.l.b16 %v250
        %v5282 = vunpack.c.l.b16 %v251
        %v5283 = vunpack.c.l.b16 %v252
        %v5284 = vunpack.c.l.b16 %v253
        %v5285 = vunpack.c.l.b16 %v254
        %v5286 = vunpack.c.l.b16 %v255
        %v5287 = vunpack.c.l.b16 %v256
        %v5288 = vunpack.c.l.b16 %v257
        %v5289 = vunpack.c.l.b16 %v258
        %v5290 = vunpack.c.l.b16 %v259
        %v5291 = vunpack.c.l.b16 %v260
        %v5292 = vunpack.c.l.b16 %v261
        %v5293 = vunpack.c.l.b16 %v262
        %v5294 = vunpack.c.l.b16 %v263
        %v5295 = vunpack.c.l.b16 %v264
        %v5296 = vunpack.c.l.b16 %v265
        %v5297 = vunpack.c.l.b16 %v266
        %v5298 = vunpack.c.l.b16 %v267
        %v5299 = vunpack.c.l.b16 %v268
        %v5300 = vunpack.c.l.b16 %v269
        %v5301 = vunpack.c.l.b16 %v270
        %v5302 = vunpack.c.l.b16 %v271
        %v5303 = vunpack.c.l.b16 %v272
        %v5304 = vunpack.c.l.b16 %v273
        %v5305 = vunpack.c.l.b16 %v274
        %v5306 = vunpack.c.l.b16 %v275
        %v5307 = vunpack.c.l.b16 %v276
        %v5308 = vunpack.c.l.b16 %v277
        %v5309 = vunpack.c.l.b16 %v278
        %v5310 = vunpack.c.l.b16 %v279
        %v5311 = vunpack.c.l.b16 %v280
        %v5312 = vunpack.c.l.b16 %v281
        %v5313 = vunpack.c.l.b16 %v282
        %v5314 = vunpack.c.l.b16 %v283
        %v5315 = vunpack.c.l.b16 %v284
        %v5316 = vunpack.c.l.b16 %v285
        %v5317 = vunpack.c.l.b16 %v286
        %v5318 = vunpack.c.l.b16 %v287
        %v5319 = vunpack.c.l.b16 %v288
        %v5320 = vunpack.c.l.b16 %v289
        %v5321 = vunpack.c.l.b16 %v290
        %v5322 = vunpack.c.l.b16 %v291
        %v5323 = vunpack.c.l.b16 %v292
        %v5324 = vunpack.c.l.b16 %v293
        %v5325 = vunpack.c.l.b16 %v294
        %v5326 = vunpack.c.l.b16 %v295
        %v5327 = vunpack.c.l.b16 %v296
        %v5328 = vunpack.c.l.b16 %v297
        %v5329 = vunpack.c.l.b16 %v298
        %v5330 = vunpack.c.l.b16 %v299
        %v5331 = vunpack.c.l.b16 %v300
        %v5332 = vunpack.c.l.b16 %v301
        %v5333 = vunpack.c.l.b16 %v302
        %v5334 = vunpack.c.l.b16 %v303
        %v5335 = vunpack.c.l.b16 %v304
        %v5336 = vunpack.c.l.b16 %v305
        %v5337 = vunpack.c.l.b16 %v306
        %v5338 = vunpack.c.l.b16 %v307
        %v5339 = vunpack.c.l.b16 %v308
        %v5340 = vunpack.c.l.b16 %v309
        %v5341 = vunpack.c.l.b16 %v310
        %v5342 = vunpack.c.l.b16 %v311
        %v5343 = vunpack.c.l.b16 %v312
        %v5344 = vunpack.c.l.b16 %v313
        %v5345 = vunpack.c.l.b16 %v314
        %v5346 = vunpack.c.l.b16 %v315
        %v5347 = vunpack.c.l.b16 %v316
        %v5348 = vunpack.c.l.b16 %v317
        %v5349 = vunpack.c.l.b16 %v318
        %v5350 = vunpack.c.l.b16 %v319
        %v5351 = vunpack.c.l.b16 %v320
        %v5352 = vunpack.c.l.b16 %v321
        %v5353 = vunpack.c.l.b16 %v322
        %v5354 = vunpack.c.l.b16 %v323
        %v5355 = vunpack.c.l.b16 %v324
        %v5356 = vunpack.c.l.b16 %v325
        %v5357 = vunpack.c.l.b16 %v326
        %v5358 = vunpack.c.l.b16 %v327
        %v5359 = vunpack.c.l.b16 %v328
        %v5360 = vunpack.c.l.b16 %v329
        %v5361 = vunpack.c.l.b16 %v330
        %v5362 = vunpack.c.l.b16 %v331
        %v5363 = vunpack.c.l.b16 %v332
        %v5364 = vunpack.c.l.b16 %v333
        %v5365 = vunpack.c.l.b16 %v334
        %v5366 = vunpack.c.l.b16 %v335
        %v5367 = vunpack.c.l.b16 %v336
        %v5368 = vunpack.c.l.b16 %v337
        %v5369 = vunpack.c.l.b16 %v338
        %v5370 = vunpack.c.l.b16 %v339
        %v5371 = vunpack.c.l.b16 %v340
        %v5372 = vunpack.c.l.b16 %v341
        %v5373 = vunpack.c.l.b16 %v342
        %v5374 = vunpack.c.l.b16 %v343
        %v5375 = vunpack.c.l.b16 %v344
        %v5376 = vunpack.c.l.b16 %v345
        %v5377 = vunpack.c.l.b16 %v346
        %v5378 = vunpack.c.l.b16 %v347
        %v5379 = vunpack.c.l.b16 %v348
        %v5380 = vunpack.c.l.b16 %v349
        %v5381 = vunpack.c.l.b16 %v350
        %v5382 = vunpack.c.l.b16 %v351
        %v5383 = vunpack.c.l.b16 %v352
        %v5384 = vunpack.c.l.b16 %v353
        %v5385 = vunpack.c.l.b16 %v354
        %v5386 = vunpack.c.l.b16 %v355
        %v5387 = vunpack.c.l.b16 %v356
        %v5388 = vunpack.c.l.b16 %v357
        %v5389 = vunpack.c.l.b16 %v358
        %v5390 = vunpack.c.l.b16 %v359
        %v5391 = vunpack.c.l.b16 %v360
        %v5392 = vunpack.c.l.b16 %v361
        %v5393 = vunpack.c.l.b16 %v362
        %v5394 = vunpack.c.l.b16 %v363
        %v5395 = vunpack.c.l.b16 %v364
        %v5396 = vunpack.c.l.b16 %v365
        %v5397 = vunpack.c.l.b16 %v366
        %v5398 = vunpack.c.l.b16 %v367
        %v5399 = vunpack.c.l.b16 %v368
        %v5400 = vunpack.c.l.b16 %v369
        %v5401 = vunpack.c.l.b16 %v370
        %v5402 = vunpack.c.l.b16 %v371
        %v5403 = vunpack.c.l.b16 %v372
        %v5404 = vunpack.c.l.b16 %v373
        %v5405 = vunpack.c.l.b16 %v374
        %v5406 = vunpack.c.l.b16 %v375
        %v5407 = vunpack.c.l.b16 %v376
        %v5408 = vunpack.c.l.b16 %v377
        %v5409 = vunpack.c.l.b16 %v378
        %v5410 = vunpack.c.l.b16 %v379
        %v5411 = vunpack.c.l.b16 %v380
        %v5412 = vunpack.c.l.b16 %v381
        %v5413 = vunpack.c.l.b16 %v382
        %v5414 = vunpack.c.l.b16 %v383
        %v5415 = vunpack.c.l.b16 %v384
        %v5416 = vunpack.c.l.b16 %v385
        %v5417 = vunpack.c.l.b16 %v386
        %v5418 = vunpack.c.l.b16 %v387
        %v5419 = vunpack.c.l.b16 %v388
        %v5420 = vunpack.c.l.b16 %v389
        %v5421 = vunpack.c.l.b16 %v390
        %v5422 = vunpack.c.l.b16 %v391
        %v5423 = vunpack.c.l.b16 %v392
        %v5424 = vunpack.c.l.b16 %v393
        %v5425 = vunpack.c.l.b16 %v394
        %v5426 = vunpack.c.l.b16 %v395
        %v5427 = vunpack.c.l.b16 %v396
        %v5428 = vunpack.c.l.b16 %v397
        %v5429 = vunpack.c.l.b16 %v398
        %v5430 = vunpack.c.l.b16 %v399
        %v5431 = vunpack.c.l.b16 %v400
        %v5432 = vunpack.c.l.b16 %v401
        %v5433 = vunpack.c.l.b16 %v402
        %v5434 = vunpack.c.l.b16 %v403
        %v5435 = vunpack.c.l.b16 %v404
        %v5436 = vunpack.c.l.b16 %v405
        %v5437 = vunpack.c.l.b16 %v406
        %v5438 = vunpack.c.l.b16 %v407
        %v5439 = vunpack.c.l.b16 %v408
        %v5440 = vunpack.c.l.b16 %v409
        %v5441 = vunpack.c.l.b16 %v410
        %v5442 = vunpack.c.l.b16 %v411
        %v5443 = vunpack.c.l.b16 %v412
        %v5444 = vunpack.c.l.b16 %v413
        %v5445 = vunpack.c.l.b16 %v414
        %v5446 = vunpack.c.l.b16 %v415
        %v5447 = vunpack.c.l.b16 %v416
        %v5448 = vunpack.c.l.b16 %v417
        %v5449 = vunpack.c.l.b16 %v418
        %v5450 = vunpack.c.l.b16 %v419
        %v5451 = vunpack.c.l.b16 %v420
        %v5452 = vunpack.c.l.b16 %v421
        %v5453 = vunpack.c.l.b16 %v422
        %v5454 = vunpack.c.l.b16 %v423
        %v5455 = vunpack.c.l.b16 %v424
        %v5456 = vunpack.c.l.b16 %v425
        %v5457 = vunpack.c.l.b16 %v426
        %v5458 = vunpack.c.l.b16 %v427
        %v5459 = vunpack.c.l.b16 %v428
        %v5460 = vunpack.c.l.b16 %v429
        %v5461 = vunpack.c.l.b16 %v430
        %v5462 = vunpack.c.l.b16 %v431
        %v5463 = vunpack.c.l.b16 %v432
        %v5464 = vunpack.c.l.b16 %v433
        %v5465 = vunpack.c.l.b16 %v434
        %v5466 = vunpack.c.l.b16 %v435
        %v5467 = vunpack.c.l.b16 %v436
        %v5468 = vunpack.c.l.b16 %v437
        %v5469 = vunpack.c.l.b16 %v438
        %v5470 = vunpack.c.l.b16 %v439
        %v5471 = vunpack.c.l.b16 %v440
        %v5472 = vunpack.c.l.b16 %v441
        %v5473 = vunpack.c.l.b16 %v442
        %v5474 = vunpack.c.l.b16 %v443
        %v5475 = vunpack.c.l.b16 %v444
        %v5476 = vunpack.c.l.b16 %v445
        %v5477 = vunpack.c.l.b16 %v446
        %v5478 = vunpack.c.l.b16 %v447
        %v5479 = vunpack.c.l.b16 %v448
        %v5480 = vunpack.c.l.b16 %v449
        %v5481 = vunpack.c.l.b16 %v450
        %v5482 = vunpack.c.l.b16 %v451
        %v5483 = vunpack.c.l.b16 %v452
        %v5484 = vunpack.c.l.b16 %v453
        %v5485 = vunpack.c.l.b16 %v454
        %v5486 = vunpack.c.l.b16 %v455
        %v5487 = vunpack.c.l.b16 %v456
        %v5488 = vunpack.c.l.b16 %v457
        %v5489 = vunpack.c.l.b16 %v458
        %v5490 = vunpack.c.l.b16 %v459
        %v5491 = vunpack.c.l.b16 %v460
        %v5492 = vunpack.c.l.b16 %v461
        %v5493 = vunpack.c.l.b16 %v462
        %v5494 = vunpack.c.l.b16 %v463
        %v5495 = vunpack.c.l.b16 %v464
        %v5496 = vunpack.c.l.b16 %v465
        %v5497 = vunpack.c.l.b16 %v466
        %v5498 = vunpack.c.l.b16 %v467
        %v5499 = vunpack.c.l.b16 %v468
        %v5500 = vunpack.c.l.b16 %v469
        %v5501 = vunpack.c.l.b16 %v470
        %v5502 = vunpack.c.l.b16 %v471
        %v5503 = vunpack.c.l.b16 %v472
        %v5504 = vunpack.c.l.b16 %v473
        %v5505 = vunpack.c.l.b16 %v474
        %v5506 = vunpack.c.l.b16 %v475
        %v5507 = vunpack.c.l.b16 %v476
        %v5508 = vunpack.c.l.b16 %v477
        %v5509 = vunpack.c.l.b16 %v478
        %v5510 = vunpack.c.l.b16 %v479
        %v5511 = vunpack.c.l.b16 %v480
        %v5512 = vunpack.c.l.b16 %v481
        %v5513 = vunpack.c.l.b16 %v482
        %v5514 = vunpack.c.l.b16 %v483
        %v5515 = vunpack.c.l.b16 %v484
        %v5516 = vunpack.c.l.b16 %v485
        %v5517 = vunpack.c.l.b16 %v486
        %v5518 = vunpack.c.l.b16 %v487
        %v5519 = vunpack.c.l.b16 %v488
        %v5520 = vunpack.c.l.b16 %v489
        %v5521 = vunpack.c.l.b16 %v490
        %v5522 = vunpack.c.l.b16 %v491
        %v5523 = vunpack.c.l.b16 %v492
        %v5524 = vunpack.c.l.b16 %v493
        %v5525 = vunpack.c.l.b16 %v494
        %v5526 = vunpack.c.l.b16 %v495
        %v5527 = vunpack.c.l.b16 %v496
        %v5528 = vunpack.c.l.b16 %v497
        %v5529 = vunpack.c.l.b16 %v498
        %v5530 = vunpack.c.l.b16 %v499
        %v5531 = vunpack.c.l.b16 %v500
        %v5532 = vunpack.c.l.b16 %v501
        %v5533 = vunpack.c.l.b16 %v502
        %v5534 = vunpack.c.l.b16 %v503
        %v5535 = vunpack.c.l.b16 %v504
        %v5536 = vunpack.c.l.b16 %v505
        %v5537 = vunpack.c.l.b16 %v506
        %v5538 = vunpack.c.l.b16 %v507
        %v5539 = vunpack.c.l.b16 %v508
        %v5540 = vunpack.c.l.b16 %v509
        %v5541 = vunpack.c.l.b16 %v510
        %v5542 = vunpack.c.l.b16 %v511
        %v5543 = vunpack.c.l.b16 %v512
        %v5544 = vunpack.c.l.b16 %v513
        %v5545 = vunpack.c.l.b16 %v514
        %v5546 = vunpack.c.l.b16 %v515
        %v5547 = vunpack.c.l.b16 %v516
        %v5548 = vunpack.c.l.b16 %v517
        %v5549 = vunpack.c.l.b16 %v518
        %v5550 = vunpack.c.l.b16 %v519
        %v5551 = vunpack.c.l.b16 %v520
        %v5552 = vunpack.c.l.b16 %v521
        %v5553 = vunpack.c.l.b16 %v522
        %v5554 = vunpack.c.l.b16 %v523
        %v5555 = vunpack.c.l.b16 %v524
        %v5556 = vunpack.c.l.b16 %v525
        %v5557 = vunpack.c.l.b16 %v526
        %v5558 = vunpack.c.l.b16 %v527
        %v5559 = vunpack.c.l.b16 %v528
        %v5560 = vunpack.c.l.b16 %v529
        %v5561 = vunpack.c.l.b16 %v530
        %v5562 = vunpack.c.l.b16 %v531
        %v5563 = vunpack.c.l.b16 %v532
        %v5564 = vunpack.c.l.b16 %v533
        %v5565 = vunpack.c.l.b16 %v534
        %v5566 = vunpack.c.l.b16 %v535
        %v5567 = vunpack.c.l.b16 %v536
        %v5568 = vunpack.c.l.b16 %v537
        %v5569 = vunpack.c.l.b16 %v538
        %v5570 = vunpack.c.l.b16 %v539
        %v5571 = vunpack.c.l.b16 %v540
        %v5572 = vunpack.c.l.b16 %v541
        %v5573 = vunpack.c.l.b16 %v542
        %v5574 = vunpack.c.l.b16 %v543
        %v5575 = vunpack.c.l.b16 %v544
        %v5576 = vunpack.c.l.b16 %v545
        %v5577 = vunpack.c.l.b16 %v546
        %v5578 = vunpack.c.l.b16 %v547
        %v5579 = vunpack.c.l.b16 %v548
        %v5580 = vunpack.c.l.b16 %v549
        %v5581 = vunpack.c.l.b16 %v550
        %v5582 = vunpack.c.l.b16 %v551
        %v5583 = vunpack.c.l.b16 %v552
        %v5584 = vunpack.c.l.b16 %v553
        %v5585 = vunpack.c.l.b16 %v554
        %v5586 = vunpack.c.l.b16 %v555
        %v5587 = vunpack.c.l.b16 %v556
        %v5588 = vunpack.c.l.b16 %v557
        %v5589 = vunpack.c.l.b16 %v558
        %v5590 = vunpack.c.l.b16 %v559
        %v5591 = vunpack.c.l.b16 %v560
        %v5592 = vunpack.c.l.b16 %v561
        %v5593 = vunpack.c.l.b16 %v562
        %v5594 = vunpack.c.l.b16 %v563
        %v5595 = vunpack.c.l.b16 %v564
        %v5596 = vunpack.c.l.b16 %v565
        %v5597 = vunpack.c.l.b16 %v566
        %v5598 = vunpack.c.l.b16 %v567
        %v5599 = vunpack.c.l.b16 %v568
        %v5600 = vunpack.c.l.b16 %v569
        %v5601 = vunpack.c.l.b16 %v570
        %v5602 = vunpack.c.l.b16 %v571
        %v5603 = vunpack.c.l.b16 %v572
        %v5604 = vunpack.c.l.b16 %v573
        %v5605 = vunpack.c.l.b16 %v574
        %v5606 = vunpack.c.l.b16 %v575
        %v5607 = vunpack.c.l.b16 %v576
        %v5608 = vunpack.c.l.b16 %v577
        %v5609 = vunpack.c.l.b16 %v578
        %v5610 = vunpack.c.l.b16 %v579
        %v5611 = vunpack.c.l.b16 %v580
        %v5612 = vunpack.c.l.b16 %v581
        %v5613 = vunpack.c.l.b16 %v582
        %v5614 = vunpack.c.l.b16 %v583
        %v5615 = vunpack.c.l.b16 %v584
        %v5616 = vunpack.c.l.b16 %v585
        %v5617 = vunpack.c.l.b16 %v586
        %v5618 = vunpack.c.l.b16 %v587
        %v5619 = vunpack.c.l.b16 %v588
        %v5620 = vunpack.c.l.b16 %v589
        %v5621 = vunpack.c.l.b16 %v590
        %v5622 = vunpack.c.l.b16 %v591
        %v5623 = vunpack.c.l.b16 %v592
        %v5624 = vunpack.c.l.b16 %v593
        %v5625 = vunpack.c.l.b16 %v594
        %v5626 = vunpack.c.l.b16 %v595
        %v5627 = vunpack.c.l.b16 %v596
        %v5628 = vunpack.c.l.b16 %v597
        %v5629 = vunpack.c.l.b16 %v598
        %v5630 = vunpack.c.l.b16 %v599
        %v5631 = vunpack.c.l.b16 %v600
        %v5632 = vunpack.c.l.b16 %v601
        %v5633 = vunpack.c.l.b16 %v602
        %v5634 = vunpack.c.l.b16 %v603
        %v5635 = vunpack.c.l.b16 %v604
        %v5636 = vunpack.c.l.b16 %v605
        %v5637 = vunpack.c.l.b16 %v606
        %v5638 = vunpack.c.l.b16 %v607
        %v5639 = vunpack.c.l.b16 %v608
        %v5640 = vunpack.c.l.b16 %v609
        %v5641 = vunpack.c.l.b16 %v610
        %v5642 = vunpack.c.l.b16 %v611
        %v5643 = vunpack.c.l.b16 %v612
        %v5644 = vunpack.c.l.b16 %v613
        %v5645 = vunpack.c.l.b16 %v614
        %v5646 = vunpack.c.l.b16 %v615
        %v5647 = vunpack.c.l.b16 %v616
        %v5648 = vunpack.c.l.b16 %v617
        %v5649 = vunpack.c.l.b16 %v618
        %v5650 = vunpack.c.l.b16 %v619
        %v5651 = vunpack.c.l.b16 %v620
        %v5652 = vunpack.c.l.b16 %v621
        %v5653 = vunpack.c.l.b16 %v622
        %v5654 = vunpack.c.l.b16 %v623
        %v5655 = vunpack.c.l.b16 %v624
        %v5656 = vunpack.c.l.b16 %v625
        %v5657 = vunpack.c.l.b16 %v626
        %v5658 = vunpack.c.l.b16 %v627
        %v5659 = vunpack.c.l.b16 %v628
        %v5660 = vunpack.c.l.b16 %v629
        %v5661 = vunpack.c.l.b16 %v630
        %v5662 = vunpack.c.l.b16 %v631
        %v5663 = vunpack.c.l.b16 %v632
        %v5664 = vunpack.c.l.b16 %v633
        %v5665 = vunpack.c.l.b16 %v634
        %v5666 = vunpack.c.l.b16 %v635
        %v5667 = vunpack.c.l.b16 %v636
        %v5668 = vunpack.c.l.b16 %v637
        %v5669 = vunpack.c.l.b16 %v638
        %v5670 = vunpack.c.l.b16 %v639
        %v5671 = vunpack.c.l.b16 %v640
        %v5672 = vunpack.c.l.b16 %v641
        %v5673 = vunpack.c.l.b16 %v642
        %v5674 = vunpack.c.l.b16 %v643
        %v5675 = vunpack.c.l.b16 %v644
        %v5676 = vunpack.c.l.b16 %v645
        %v5677 = vunpack.c.l.b16 %v646
        %v5678 = vunpack.c.l.b16 %v647
        %v5679 = vunpack.c.l.b16 %v648
        %v5680 = vunpack.c.l.b16 %v649
        %v5681 = vunpack.c.l.b16 %v650
        %v5682 = vunpack.c.l.b16 %v651
        %v5683 = vunpack.c.l.b16 %v652
        %v5684 = vunpack.c.l.b16 %v653
        %v5685 = vunpack.c.l.b16 %v654
        %v5686 = vunpack.c.l.b16 %v655
        %v5687 = vunpack.c.l.b16 %v656
        %v5688 = vunpack.c.l.b16 %v657
        %v5689 = vunpack.c.l.b16 %v658
        %v5690 = vunpack.c.l.b16 %v659
        %v5691 = vunpack.c.l.b16 %v660
        %v5692 = vunpack.c.l.b16 %v661
        %v5693 = vunpack.c.l.b16 %v662
        %v5694 = vunpack.c.l.b16 %v663
        %v5695 = vunpack.c.l.b16 %v664
        %v5696 = vunpack.c.l.b16 %v665
        %v5697 = vunpack.c.l.b16 %v666
        %v5698 = vunpack.c.l.b16 %v667
        %v5699 = vunpack.c.l.b16 %v668
        %v5700 = vunpack.c.l.b16 %v669
        %v5701 = vunpack.c.l.b16 %v670
        %v5702 = vunpack.c.l.b16 %v671
        %v5703 = vunpack.c.l.b16 %v672
        %v5704 = vunpack.c.l.b16 %v673
        %v5705 = vunpack.c.l.b16 %v674
        %v5706 = vunpack.c.l.b16 %v675
        %v5707 = vunpack.c.l.b16 %v676
        %v5708 = vunpack.c.l.b16 %v677
        %v5709 = vunpack.c.l.b16 %v678
        %v5710 = vunpack.c.l.b16 %v679
        %v5711 = vunpack.c.l.b16 %v680
        %v5712 = vunpack.c.l.b16 %v681
        %v5713 = vunpack.c.l.b16 %v682
        %v5714 = vunpack.c.l.b16 %v683
        %v5715 = vunpack.c.l.b16 %v684
        %v5716 = vunpack.c.l.b16 %v685
        %v5717 = vunpack.c.l.b16 %v686
        %v5718 = vunpack.c.l.b16 %v687
        %v5719 = vunpack.c.l.b16 %v688
        %v5720 = vunpack.c.l.b16 %v689
        %v5721 = vunpack.c.l.b16 %v690
        %v5722 = vunpack.c.l.b16 %v691
        %v5723 = vunpack.c.l.b16 %v692
        %v5724 = vunpack.c.l.b16 %v693
        %v5725 = vunpack.c.l.b16 %v694
        %v5726 = vunpack.c.l.b16 %v695
        %v5727 = vunpack.c.l.b16 %v696
        %v5728 = vunpack.c.l.b16 %v697
        %v5729 = vunpack.c.l.b16 %v698
        %v5730 = vunpack.c.l.b16 %v699
        %v5731 = vunpack.c.l.b16 %v700
        %v5732 = vunpack.c.l.b16 %v701
        %v5733 = vunpack.c.l.b16 %v702
        %v5734 = vunpack.c.l.b16 %v703
        %v5735 = vunpack.c.l.b16 %v704
        %v5736 = vunpack.c.l.b16 %v705
        %v5737 = vunpack.c.l.b16 %v706
        %v5738 = vunpack.c.l.b16 %v707
        %v5739 = vunpack.c.l.b16 %v708
        %v5740 = vunpack.c.l.b16 %v709
        %v5741 = vunpack.c.l.b16 %v710
        %v5742 = vunpack.c.l.b16 %v711
        %v5743 = vunpack.c.l.b16 %v712
        %v5744 = vunpack.c.l.b16 %v713
        %v5745 = vunpack.c.l.b16 %v714
        %v5746 = vunpack.c.l.b16 %v715
        %v5747 = vunpack.c.l.b16 %v716
        %v5748 = vunpack.c.l.b16 %v717
        %v5749 = vunpack.c.l.b16 %v718
        %v5750 = vunpack.c.l.b16 %v719
        %v5751 = vunpack.c.l.b16 %v720
        %v5752 = vunpack.c.l.b16 %v721
        %v5753 = vunpack.c.l.b16 %v722
        %v5754 = vunpack.c.l.b16 %v723
        %v5755 = vunpack.c.l.b16 %v724
        %v5756 = vunpack.c.l.b16 %v725
        %v5757 = vunpack.c.l.b16 %v726
        %v5758 = vunpack.c.l.b16 %v727
        %v5759 = vunpack.c.l.b16 %v728
        %v5760 = vunpack.c.l.b16 %v729
        %v5761 = vunpack.c.l.b16 %v730
        %v5762 = vunpack.c.l.b16 %v731
        %v5763 = vunpack.c.l.b16 %v732
        %v5764 = vunpack.c.l.b16 %v733
        %v5765 = vunpack.c.l.b16 %v734
        %v5766 = vunpack.c.l.b16 %v735
        %v5767 = vunpack.c.l.b16 %v736
        %v5768 = vunpack.c.l.b16 %v737
        %v5769 = vunpack.c.l.b16 %v738
        %v5770 = vunpack.c.l.b16 %v739
        %v5771 = vunpack.c.l.b16 %v740
        %v5772 = vunpack.c.l.b16 %v741
        %v5773 = vunpack.c.l.b16 %v742
        %v5774 = vunpack.c.l.b16 %v743
        %v5775 = vunpack.c.l.b16 %v744
        %v5776 = vunpack.c.l.b16 %v745
        %v5777 = vunpack.c.l.b16 %v746
        %v5778 = vunpack.c.l.b16 %v747
        %v5779 = vunpack.c.l.b16 %v748
        %v5780 = vunpack.c.l.b16 %v749
        %v5781 = vunpack.c.l.b16 %v750
        %v5782 = vunpack.c.l.b16 %v751
        %v5783 = vunpack.c.l.b16 %v752
        %v5784 = vunpack.c.l.b16 %v753
        %v5785 = vunpack.c.l.b16 %v754
        %v5786 = vunpack.c.l.b16 %v755
        %v5787 = vunpack.c.l.b16 %v756
        %v5788 = vunpack.c.l.b16 %v757
        %v5789 = vunpack.c.l.b16 %v758
        %v5790 = vunpack.c.l.b16 %v759
        %v5791 = vunpack.c.l.b16 %v760
        %v5792 = vunpack.c.l.b16 %v761
        %v5793 = vunpack.c.l.b16 %v762
        %v5794 = vunpack.c.l.b16 %v763
        %v5795 = vunpack.c.l.b16 %v764
        %v5796 = vunpack.c.l.b16 %v765
        %v5797 = vunpack.c.l.b16 %v766
        %v5798 = vunpack.c.l.b16 %v767
        %v5799 = vunpack.c.l.b16 %v768
        %v5800 = vunpack.c.l.b16 %v769
        %v5801 = vunpack.c.l.b16 %v770
        %v5802 = vunpack.c.l.b16 %v771
        %v5803 = vunpack.c.l.b16 %v772
        %v5804 = vunpack.c.l.b16 %v773
        %v5805 = vunpack.c.l.b16 %v774
        %v5806 = vunpack.c.l.b16 %v775
        %v5807 = vunpack.c.l.b16 %v776
        %v5808 = vunpack.c.l.b16 %v777
        %v5809 = vunpack.c.l.b16 %v778
        %v5810 = vunpack.c.l.b16 %v779
        %v5811 = vunpack.c.l.b16 %v780
        %v5812 = vunpack.c.l.b16 %v781
        %v5813 = vunpack.c.l.b16 %v782
        %v5814 = vunpack.c.l.b16 %v783
        %v5815 = vunpack.c.l.b16 %v784
        %v5816 = vunpack.c.l.b16 %v785
        %v5817 = vunpack.c.l.b16 %v786
        %v5818 = vunpack.c.l.b16 %v787
        %v5819 = vunpack.c.l.b16 %v788
        %v5820 = vunpack.c.l.b16 %v789
        %v5821 = vunpack.c.l.b16 %v790
        %v5822 = vunpack.c.l.b16 %v791
        %v5823 = vunpack.c.l.b16 %v792
        %v5824 = vunpack.c.l.b16 %v793
        %v5825 = vunpack.c.l.b16 %v794
        %v5826 = vunpack.c.l.b16 %v795
        %v5827 = vunpack.c.l.b16 %v796
        %v5828 = vunpack.c.l.b16 %v797
        %v5829 = vunpack.c.l.b16 %v798
        %v5830 = vunpack.c.l.b16 %v799
        %v5831 = vunpack.c.l.b16 %v800
        %v5832 = vunpack.c.l.b16 %v801
        %v5833 = vunpack.c.l.b16 %v802
        %v5834 = vunpack.c.l.b16 %v803
        %v5835 = vunpack.c.l.b16 %v804
        %v5836 = vunpack.c.l.b16 %v805
        %v5837 = vunpack.c.l.b16 %v806
        %v5838 = vunpack.c.l.b16 %v807
        %v5839 = vunpack.c.l.b16 %v808
        %v5840 = vunpack.c.l.b16 %v809
        %v5841 = vunpack.c.l.b16 %v810
        %v5842 = vunpack.c.l.b16 %v811
        %v5843 = vunpack.c.l.b16 %v812
        %v5844 = vunpack.c.l.b16 %v813
        %v5845 = vunpack.c.l.b16 %v814
        %v5846 = vunpack.c.l.b16 %v815
        %v5847 = vunpack.c.l.b16 %v816
        %v5848 = vunpack.c.l.b16 %v817
        %v5849 = vunpack.c.l.b16 %v818
        %v5850 = vunpack.c.l.b16 %v819
        %v5851 = vunpack.c.l.b16 %v820
        %v5852 = vunpack.c.l.b16 %v821
        %v5853 = vunpack.c.l.b16 %v822
        %v5854 = vunpack.c.l.b16 %v823
        %v5855 = vunpack.c.l.b16 %v824
        %v5856 = vunpack.c.l.b16 %v825
        %v5857 = vunpack.c.l.b16 %v826
        %v5858 = vunpack.c.l.b16 %v827
        %v5859 = vunpack.c.l.b16 %v828
        %v5860 = vunpack.c.l.b16 %v829
        %v5861 = vunpack.c.l.b16 %v830
        %v5862 = vunpack.c.l.b16 %v831
        %v5863 = vunpack.c.l.b16 %v832
        %v5864 = vunpack.c.l.b16 %v833
        %v5865 = vunpack.c.l.b16 %v834
        %v5866 = vunpack.c.l.b16 %v835
        %v5867 = vunpack.c.l.b16 %v836
        %v5868 = vunpack.c.l.b16 %v837
        %v5869 = vunpack.c.l.b16 %v838
        %v5870 = vunpack.c.l.b16 %v839
        %v5871 = vunpack.c.l.b16 %v840
        %v5872 = vunpack.c.l.b16 %v841
        %v5873 = vunpack.c.l.b16 %v842
        %v5874 = vunpack.c.l.b16 %v843
        %v5875 = vunpack.c.l.b16 %v844
        %v5876 = vunpack.c.l.b16 %v845
        %v5877 = vunpack.c.l.b16 %v846
        %v5878 = vunpack.c.l.b16 %v847
        %v5879 = vunpack.c.l.b16 %v848
        %v5880 = vunpack.c.l.b16 %v849
        %v5881 = vunpack.c.l.b16 %v850
        %v5882 = vunpack.c.l.b16 %v851
        %v5883 = vunpack.c.l.b16 %v852
        %v5884 = vunpack.c.l.b16 %v853
        %v5885 = vunpack.c.l.b16 %v854
        %v5886 = vunpack.c.l.b16 %v855
        %v5887 = vunpack.c.l.b16 %v856
        %v5888 = vunpack.c.l.b16 %v857
        %v5889 = vunpack.c.l.b16 %v858
        %v5890 = vunpack.c.l.b16 %v859
        %v5891 = vunpack.c.l.b16 %v860
        %v5892 = vunpack.c.l.b16 %v861
        %v5893 = vunpack.c.l.b16 %v862
        %v5894 = vunpack.c.l.b16 %v863
        %v5895 = vunpack.c.l.b16 %v864
        %v5896 = vunpack.c.l.b16 %v865
        %v5897 = vunpack.c.l.b16 %v866
        %v5898 = vunpack.c.l.b16 %v867
        %v5899 = vunpack.c.l.b16 %v868
        %v5900 = vunpack.c.l.b16 %v869
        %v5901 = vunpack.c.l.b16 %v870
        %v5902 = vunpack.c.l.b16 %v871
        %v5903 = vunpack.c.l.b16 %v872
        %v5904 = vunpack.c.l.b16 %v873
        %v5905 = vunpack.c.l.b16 %v874
        %v5906 = vunpack.c.l.b16 %v875
        %v5907 = vunpack.c.l.b16 %v876
        %v5908 = vunpack.c.l.b16 %v877
        %v5909 = vunpack.c.l.b16 %v878
        %v5910 = vunpack.c.l.b16 %v879
        %v5911 = vunpack.c.l.b16 %v880
        %v5912 = vunpack.c.l.b16 %v881
        %v5913 = vunpack.c.l.b16 %v882
        %v5914 = vunpack.c.l.b16 %v883
        %v5915 = vunpack.c.l.b16 %v884
        %v5916 = vunpack.c.l.b16 %v885
        %v5917 = vunpack.c.l.b16 %v886
        %v5918 = vunpack.c.l.b16 %v887
        %v5919 = vunpack.c.l.b16 %v888
        %v5920 = vunpack.c.l.b16 %v889
        %v5921 = vunpack.c.l.b16 %v890
        %v5922 = vunpack.c.l.b16 %v891
        %v5923 = vunpack.c.l.b16 %v892
        %v5924 = vunpack.c.l.b16 %v893
        %v5925 = vunpack.c.l.b16 %v894
        %v5926 = vunpack.c.l.b16 %v895
        %v5927 = vunpack.c.l.b16 %v896
        %v5928 = vunpack.c.l.b16 %v897
        %v5929 = vunpack.c.l.b16 %v898
        %v5930 = vunpack.c.l.b16 %v899
        %v5931 = vunpack.c.l.b16 %v900
        %v5932 = vunpack.c.l.b16 %v901
        %v5933 = vunpack.c.l.b16 %v902
        %v5934 = vunpack.c.l.b16 %v903
        %v5935 = vunpack.c.l.b16 %v904
        %v5936 = vunpack.c.l.b16 %v905
        %v5937 = vunpack.c.l.b16 %v906
        %v5938 = vunpack.c.l.b16 %v907
        %v5939 = vunpack.c.l.b16 %v908
        %v5940 = vunpack.c.l.b16 %v909
        %v5941 = vunpack.c.l.b16 %v910
        %v5942 = vunpack.c.l.b16 %v911
        %v5943 = vunpack.c.l.b16 %v912
        %v5944 = vunpack.c.l.b16 %v913
        %v5945 = vunpack.c.l.b16 %v914
        %v5946 = vunpack.c.l.b16 %v915
        %v5947 = vunpack.c.l.b16 %v916
        %v5948 = vunpack.c.l.b16 %v917
        %v5949 = vunpack.c.l.b16 %v918
        %v5950 = vunpack.c.l.b16 %v919
        %v5951 = vunpack.c.l.b16 %v920
        %v5952 = vunpack.c.l.b16 %v921
        %v5953 = vunpack.c.l.b16 %v922
        %v5954 = vunpack.c.l.b16 %v923
        %v5955 = vunpack.c.l.b16 %v924
        %v5956 = vunpack.c.l.b16 %v925
        %v5957 = vunpack.c.l.b16 %v926
        %v5958 = vunpack.c.l.b16 %v927
        %v5959 = vunpack.c.l.b16 %v928
        %v5960 = vunpack.c.l.b16 %v929
        %v5961 = vunpack.c.l.b16 %v930
        %v5962 = vunpack.c.l.b16 %v931
        %v5963 = vunpack.c.l.b16 %v932
        %v5964 = vunpack.c.l.b16 %v933
        %v5965 = vunpack.c.l.b16 %v934
        %v5966 = vunpack.c.l.b16 %v935
        %v5967 = vunpack.c.l.b16 %v936
        %v5968 = vunpack.c.l.b16 %v937
        %v5969 = vunpack.c.l.b16 %v938
        %v5970 = vunpack.c.l.b16 %v939
        %v5971 = vunpack.c.l.b16 %v940
        %v5972 = vunpack.c.l.b16 %v941
        %v5973 = vunpack.c.l.b16 %v942
        %v5974 = vunpack.c.l.b16 %v943
        %v5975 = vunpack.c.l.b16 %v944
        %v5976 = vunpack.c.l.b16 %v945
        %v5977 = vunpack.c.l.b16 %v946
        %v5978 = vunpack.c.l.b16 %v947
        %v5979 = vunpack.c.l.b16 %v948
        %v5980 = vunpack.c.l.b16 %v949
        %v5981 = vunpack.c.l.b16 %v950
        %v5982 = vunpack.c.l.b16 %v951
        %v5983 = vunpack.c.l.b16 %v952
        %v5984 = vunpack.c.l.b16 %v953
        %v5985 = vunpack.c.l.b16 %v954
        %v5986 = vunpack.c.l.b16 %v955
        %v5987 = vunpack.c.l.b16 %v956
        %v5988 = vunpack.c.l.b16 %v957
        %v5989 = vunpack.c.l.b16 %v958
        %v5990 = vunpack.c.l.b16 %v959
        %v5991 = vunpack.c.l.b16 %v960
        %v5992 = vunpack.c.l.b16 %v961
        %v5993 = vunpack.c.l.b16 %v962
        %v5994 = vunpack.c.l.b16 %v963
        %v5995 = vunpack.c.l.b16 %v964
        %v5996 = vunpack.c.l.b16 %v965
        %v5997 = vunpack.c.l.b16 %v966
        %v5998 = vunpack.c.l.b16 %v967
        %v5999 = vunpack.c.l.b16 %v968
        %v6000 = vunpack.c.l.b16 %v969
        %v6001 = vunpack.c.l.b16 %v970
        %v6002 = vunpack.c.l.b16 %v971
        %v6003 = vunpack.c.l.b16 %v972
        %v6004 = vunpack.c.l.b16 %v973
        %v6005 = vunpack.c.l.b16 %v974
        %v6006 = vunpack.c.l.b16 %v975
        %v6007 = vunpack.c.l.b16 %v976
        %v6008 = vunpack.c.l.b16 %v977
        %v6009 = vunpack.c.l.b16 %v978
        %v6010 = vunpack.c.l.b16 %v979
        %v6011 = vunpack.c.l.b16 %v980
        %v6012 = vunpack.c.l.b16 %v981
        %v6013 = vunpack.c.l.b16 %v982
        %v6014 = vunpack.c.l.b16 %v983
        %v6015 = vunpack.c.l.b16 %v984
        %v6016 = vunpack.c.l.b16 %v985
        %v6017 = vunpack.c.l.b16 %v986
        %v6018 = vunpack.c.l.b16 %v987
        %v6019 = vunpack.c.l.b16 %v988
        %v6020 = vunpack.c.l.b16 %v989
        %v6021 = vunpack.c.l.b16 %v990
        %v6022 = vunpack.c.l.b16 %v991
        %v6023 = vunpack.c.l.b16 %v992
        %v6024 = vunpack.c.l.b16 %v993
        %v6025 = vunpack.c.l.b16 %v994
        %v6026 = vunpack.c.l.b16 %v995
        %v6027 = vunpack.c.l.b16 %v996
        %v6028 = vunpack.c.l.b16 %v997
        %v6029 = vunpack.c.l.b16 %v998
        %v6030 = vunpack.c.l.b16 %v999
        %v6031 = vunpack.c.l.b16 %v1000
        %v6032 = vunpack.c.l.b16 %v1001
        %v6033 = vunpack.c.l.b16 %v1002
        %v6034 = vunpack.c.l.b16 %v1003
        %v6035 = vunpack.c.l.b16 %v1004
        %v6036 = vunpack.c.l.b16 %v1005
        %v6037 = vunpack.c.l.b16 %v1006
        %v6038 = vunpack.c.l.b16 %v1007
        %v6039 = vunpack.c.l.b16 %v1008
        %v6040 = vunpack.c.l.b16 %v1009
        %v6041 = vunpack.c.l.b16 %v1010
        %v6042 = vunpack.c.l.b16 %v1011
        %v6043 = vunpack.c.l.b16 %v1012
        %v6044 = vunpack.c.l.b16 %v1013
        %v6045 = vunpack.c.l.b16 %v1014
        %v6046 = vunpack.c.l.b16 %v1015
        %v6047 = vunpack.c.l.b16 %v1016
        %v6048 = vunpack.c.l.b16 %v1017
        %v6049 = vunpack.c.l.b16 %v1018
        %v6050 = vunpack.c.l.b16 %v1019
        %v6051 = vunpack.c.l.b16 %v1020
        %v6052 = vunpack.c.l.b16 %v1021
        %v6053 = vunpack.c.l.b16 %v1022
        %v6054 = vunpack.c.l.b16 %v1023
        %v6055 = vunpack.c.l.b16 %v1024
        %v6056 = vunpack.c.l.b16 %v1025
        %v6057 = vunpack.c.l.b16 %v1026
        %v6058 = vunpack.c.l.b16 %v1027
        %v6059 = vunpack.c.l.b16 %v1028
        %v6060 = vunpack.c.l.b16 %v1029
        %v6061 = vunpack.c.l.b16 %v1030
        %v6062 = vunpack.c.l.b16 %v1031
        %v6063 = vunpack.c.l.b16 %v1032
        %v6064 = vunpack.c.l.b16 %v1033
        %v6065 = vunpack.c.l.b16 %v1034
        %v6066 = vunpack.c.l.b16 %v1035
        %v6067 = vunpack.c.l.b16 %v1036
        %v6068 = vunpack.c.l.b16 %v1037
        %v6069 = vunpack.c.l.b16 %v1038
        %v6070 = vunpack.c.l.b16 %v1039
        %v6071 = vunpack.c.l.b16 %v1040
        %v6072 = vunpack.c.l.b16 %v1041
        %v6073 = vunpack.c.l.b16 %v1042
        %v6074 = vunpack.c.l.b16 %v1043
        %v6075 = vunpack.c.l.b16 %v1044
        %v6076 = vunpack.c.l.b16 %v1045
        %v6077 = vunpack.c.l.b16 %v1046
        %v6078 = vunpack.c.l.b16 %v1047
        %v6079 = vunpack.c.l.b16 %v1048
        %v6080 = vunpack.c.l.b16 %v1049
        %v6081 = vunpack.c.l.b16 %v1050
        %v6082 = vunpack.c.l.b16 %v1051
        %v6083 = vunpack.c.l.b16 %v1052
        %v6084 = vunpack.c.l.b16 %v1053
        %v6085 = vunpack.c.l.b16 %v1054
        %v6086 = vunpack.c.l.b16 %v1055
        %v6087 = vunpack.c.l.b16 %v1056
        %v6088 = vunpack.c.l.b16 %v1057
        %v6089 = vunpack.c.l.b16 %v1058
        %v6090 = vunpack.c.l.b16 %v1059
        %v6091 = vunpack.c.l.b16 %v1060
        %v6092 = vunpack.c.l.b16 %v1061
        %v6093 = vunpack.c.l.b16 %v1062
        %v6094 = vunpack.c.l.b16 %v1063
        %v6095 = vunpack.c.l.b16 %v1064
        %v6096 = vunpack.c.l.b16 %v1065
        %v6097 = vunpack.c.l.b16 %v1066
        %v6098 = vunpack.c.l.b16 %v1067
        %v6099 = vunpack.c.l.b16 %v1068
        %v6100 = vunpack.c.l.b16 %v1069
        %v6101 = vunpack.c.l.b16 %v1070
        %v6102 = vunpack.c.l.b16 %v1071
        %v6103 = vunpack.c.l.b16 %v1072
        %v6104 = vunpack.c.l.b16 %v1073
        %v6105 = vunpack.c.l.b16 %v1074
        %v6106 = vunpack.c.l.b16 %v1075
        %v6107 = vunpack.c.l.b16 %v1076
        %v6108 = vunpack.c.l.b16 %v1077
        %v6109 = vunpack.c.l.b16 %v1078
        %v6110 = vunpack.c.l.b16 %v1079
        %v6111 = vunpack.c.l.b16 %v1080
        %v6112 = vunpack.c.l.b16 %v1081
        %v6113 = vunpack.c.l.b16 %v1082
        %v6114 = vunpack.c.l.b16 %v1083
        %v6115 = vunpack.c.l.b16 %v1084
        %v6116 = vunpack.c.l.b16 %v1085
        %v6117 = vunpack.c.l.b16 %v1086
        %v6118 = vunpack.c.l.b16 %v1087
        %v6119 = vunpack.c.l.b16 %v1088
        %v6120 = vunpack.c.l.b16 %v1089
        %v6121 = vunpack.c.l.b16 %v1090
        %v6122 = vunpack.c.l.b16 %v1091
        %v6123 = vunpack.c.l.b16 %v1092
        %v6124 = vunpack.c.l.b16 %v1093
        %v6125 = vunpack.c.l.b16 %v1094
        %v6126 = vunpack.c.l.b16 %v1095
        %v6127 = vunpack.c.l.b16 %v1096
        %v6128 = vunpack.c.l.b16 %v1097
        %v6129 = vunpack.c.l.b16 %v1098
        %v6130 = vunpack.c.l.b16 %v1099
        %v6131 = vunpack.c.l.b16 %v1100
        %v6132 = vunpack.c.l.b16 %v1101
        %v6133 = vunpack.c.l.b16 %v1102
        %v6134 = vunpack.c.l.b16 %v1103
        %v6135 = vunpack.c.l.b16 %v1104
        %v6136 = vunpack.c.l.b16 %v1105
        %v6137 = vunpack.c.l.b16 %v1106
        %v6138 = vunpack.c.l.b16 %v1107
        %v6139 = vunpack.c.l.b16 %v1108
        %v6140 = vunpack.c.l.b16 %v1109
        %v6141 = vunpack.c.l.b16 %v1110
        %v6142 = vunpack.c.l.b16 %v1111
        %v6143 = vunpack.c.l.b16 %v1112
        %v6144 = vunpack.c.l.b16 %v1113
        %v6145 = vunpack.c.l.b16 %v1114
        %v6146 = vunpack.c.l.b16 %v1115
        %v6147 = vunpack.c.l.b16 %v1116
        %v6148 = vunpack.c.l.b16 %v1117
        %v6149 = vunpack.c.l.b16 %v1118
        %v6150 = vunpack.c.l.b16 %v1119
        %v6151 = vunpack.c.l.b16 %v1120
        %v6152 = vunpack.c.l.b16 %v1121
        %v6153 = vunpack.c.l.b16 %v1122
        %v6154 = vunpack.c.l.b16 %v1123
        %v6155 = vunpack.c.l.b16 %v1124
        %v6156 = vunpack.c.l.b16 %v1125
        %v6157 = vunpack.c.l.b16 %v1126
        %v6158 = vunpack.c.l.b16 %v1127
        %v6159 = vunpack.c.l.b16 %v1128
        %v6160 = vunpack.c.l.b16 %v1129
        %v6161 = vunpack.c.l.b16 %v1130
        %v6162 = vunpack.c.l.b16 %v1131
        %v6163 = vunpack.c.l.b16 %v1132
        %v6164 = vunpack.c.l.b16 %v1133
        %v6165 = vunpack.c.l.b16 %v1134
        %v6166 = vunpack.c.l.b16 %v1135
        %v6167 = vunpack.c.l.b16 %v1136
        %v6168 = vunpack.c.l.b16 %v1137
        %v6169 = vunpack.c.l.b16 %v1138
        %v6170 = vunpack.c.l.b16 %v1139
        %v6171 = vunpack.c.l.b16 %v1140
        %v6172 = vunpack.c.l.b16 %v1141
        %v6173 = vunpack.c.l.b16 %v1142
        %v6174 = vunpack.c.l.b16 %v1143
        %v6175 = vunpack.c.l.b16 %v1144
        %v6176 = vunpack.c.l.b16 %v1145
        %v6177 = vunpack.c.l.b16 %v1146
        %v6178 = vunpack.c.l.b16 %v1147
        %v6179 = vunpack.c.l.b16 %v1148
        %v6180 = vunpack.c.l.b16 %v1149
        %v6181 = vunpack.c.l.b16 %v1150
        %v6182 = vunpack.c.l.b16 %v1151
        %v6183 = vunpack.c.l.b16 %v1152
        %v6184 = vunpack.c.l.b16 %v1153
        %v6185 = vunpack.c.l.b16 %v1154
        %v6186 = vunpack.c.l.b16 %v1155
        %v6187 = vunpack.c.l.b16 %v1156
        %v6188 = vunpack.c.l.b16 %v1157
        %v6189 = vunpack.c.l.b16 %v1158
        %v6190 = vunpack.c.l.b16 %v1159
        %v6191 = vunpack.c.l.b16 %v1160
        %v6192 = vunpack.c.l.b16 %v1161
        %v6193 = vunpack.c.l.b16 %v1162
        %v6194 = vunpack.c.l.b16 %v1163
        %v6195 = vunpack.c.l.b16 %v1164
        %v6196 = vunpack.c.l.b16 %v1165
        %v6197 = vunpack.c.l.b16 %v1166
        %v6198 = vunpack.c.l.b16 %v1167
        %v6199 = vunpack.c.l.b16 %v1168
        %v6200 = vunpack.c.l.b16 %v1169
        %v6201 = vunpack.c.l.b16 %v1170
        %v6202 = vunpack.c.l.b16 %v1171
        %v6203 = vunpack.c.l.b16 %v1172
        %v6204 = vunpack.c.l.b16 %v1173
        %v6205 = vunpack.c.l.b16 %v1174
        %v6206 = vunpack.c.l.b16 %v1175
        %v6207 = vunpack.c.l.b16 %v1176
        %v6208 = vunpack.c.l.b16 %v1177
        %v6209 = vunpack.c.l.b16 %v1178
        %v6210 = vunpack.c.l.b16 %v1179
        %v6211 = vunpack.c.l.b16 %v1180
        %v6212 = vunpack.c.l.b16 %v1181
        %v6213 = vunpack.c.l.b16 %v1182
        %v6214 = vunpack.c.l.b16 %v1183
        %v6215 = vunpack.c.l.b16 %v1184
        %v6216 = vunpack.c.l.b16 %v1185
        %v6217 = vunpack.c.l.b16 %v1186
        %v6218 = vunpack.c.l.b16 %v1187
        %v6219 = vunpack.c.l.b16 %v1188
        %v6220 = vunpack.c.l.b16 %v1189
        %v6221 = vunpack.c.l.b16 %v1190
        %v6222 = vunpack.c.l.b16 %v1191
        %v6223 = vunpack.c.l.b16 %v1192
        %v6224 = vunpack.c.l.b16 %v1193
        %v6225 = vunpack.c.l.b16 %v1194
        %v6226 = vunpack.c.l.b16 %v1195
        %v6227 = vunpack.c.l.b16 %v1196
        %v6228 = vunpack.c.l.b16 %v1197
        %v6229 = vunpack.c.l.b16 %v1198
        %v6230 = vunpack.c.l.b16 %v1199
        %v6231 = vunpack.c.l.b16 %v1200
        %v6232 = vunpack.c.l.b16 %v1201
        %v6233 = vunpack.c.l.b16 %v1202
        %v6234 = vunpack.c.l.b16 %v1203
        %v6235 = vunpack.c.l.b16 %v1204
        %v6236 = vunpack.c.l.b16 %v1205
        %v6237 = vunpack.c.l.b16 %v1206
        %v6238 = vunpack.c.l.b16 %v1207
        %v6239 = vunpack.c.l.b16 %v1208
        %v6240 = vunpack.c.l.b16 %v1209
        %v6241 = vunpack.c.l.b16 %v1210
        %v6242 = vunpack.c.l.b16 %v1211
        %v6243 = vunpack.c.l.b16 %v1212
        %v6244 = vunpack.c.l.b16 %v1213
        %v6245 = vunpack.c.l.b16 %v1214
        %v6246 = vunpack.c.l.b16 %v1215
        %v6247 = vunpack.c.l.b16 %v1216
        %v6248 = vunpack.c.l.b16 %v1217
        %v6249 = vunpack.c.l.b16 %v1218
        %v6250 = vunpack.c.l.b16 %v1219
        %v6251 = vunpack.c.l.b16 %v1220
        %v6252 = vunpack.c.l.b16 %v1221
        %v6253 = vunpack.c.l.b16 %v1222
        %v6254 = vunpack.c.l.b16 %v1223
        %v6255 = vunpack.c.l.b16 %v1224
        %v6256 = vunpack.c.l.b16 %v1225
        %v6257 = vunpack.c.l.b16 %v1226
        %v6258 = vunpack.c.l.b16 %v1227
        %v6259 = vunpack.c.l.b16 %v1228
        %v6260 = vunpack.c.l.b16 %v1229
        %v6261 = vunpack.c.l.b16 %v1230
        %v6262 = vunpack.c.l.b16 %v1231
        %v6263 = vunpack.c.l.b16 %v1232
        %v6264 = vunpack.c.l.b16 %v1233
        %v6265 = vunpack.c.l.b16 %v1234
        %v6266 = vunpack.c.l.b16 %v1235
        %v6267 = vunpack.c.l.b16 %v1236
        %v6268 = vunpack.c.l.b16 %v1237
        %v6269 = vunpack.c.l.b16 %v1238
        %v6270 = vunpack.c.l.b16 %v1239
        %v6271 = vunpack.c.l.b16 %v1240
        %v6272 = vunpack.c.l.b16 %v1241
        %v6273 = vunpack.c.l.b16 %v1242
        %v6274 = vunpack.c.l.b16 %v1243
        %v6275 = vunpack.c.l.b16 %v1244
        %v6276 = vunpack.c.l.b16 %v1245
        %v6277 = vunpack.c.l.b16 %v1246
        %v6278 = vunpack.c.l.b16 %v1247
        %v6279 = vunpack.c.l.b16 %v1248
        %v6280 = vunpack.c.l.b16 %v1249
        %v6281 = vunpack.c.l.b16 %v1250
        %v6282 = vunpack.c.l.b16 %v1251
        %v6283 = vunpack.c.l.b16 %v1252
        %v6284 = vunpack.c.l.b16 %v1253
        %v6285 = vunpack.c.l.b16 %v1254
        %v6286 = vunpack.c.l.b16 %v1255
        %v6287 = vunpack.c.l.b16 %v1256
        %v6288 = vunpack.c.l.b16 %v1257
        %v6289 = vunpack.c.l.b16 %v1258
        %v6290 = vunpack.c.l.b16 %v1259
        %v6291 = vunpack.c.l.b16 %v1260
        %v6292 = vunpack.c.l.b16 %v1261
        %v6293 = vunpack.c.l.b16 %v1262
        %v6294 = vunpack.c.l.b16 %v1263
        %v6295 = vunpack.c.l.b16 %v1264
        %v6296 = vunpack.c.l.b16 %v1265
        %v6297 = vunpack.c.l.b16 %v1266
        %v6298 = vunpack.c.l.b16 %v1267
        %v6299 = vunpack.c.l.b16 %v1268
        %v6300 = vunpack.c.l.b16 %v1269
        %v6301 = vunpack.c.l.b16 %v1270
        %v6302 = vunpack.c.l.b16 %v1271
        %v6303 = vunpack.c.l.b16 %v1272
        %v6304 = vunpack.c.l.b16 %v1273
        %v6305 = vunpack.c.l.b16 %v1274
        %v6306 = vunpack.c.l.b16 %v1275
        %v6307 = vunpack.c.l.b16 %v1276
        %v6308 = vunpack.c.l.b16 %v1277
        %v6309 = vunpack.c.l.b16 %v1278
        %v6310 = vunpack.c.l.b16 %v1279
        %v6311 = vunpack.c.l.b16 %v1280
        %v6312 = vunpack.c.l.b16 %v1281
        %v6313 = vunpack.c.l.b16 %v1282
        %v6314 = vunpack.c.l.b16 %v1283
        %v6315 = vunpack.c.l.b16 %v1284
        %v6316 = vunpack.c.l.b16 %v1285
        %v6317 = vunpack.c.l.b16 %v1286
        %v6318 = vunpack.c.l.b16 %v1287
        %v6319 = vunpack.c.l.b16 %v1288
        %v6320 = vunpack.c.l.b16 %v1289
        %v6321 = vunpack.c.l.b16 %v1290
        %v6322 = vunpack.c.l.b16 %v1291
        %v6323 = vunpack.c.l.b16 %v1292
        %v6324 = vunpack.c.l.b16 %v1293
        %v6325 = vunpack.c.l.b16 %v1294
        %v6326 = vunpack.c.l.b16 %v1295
        %v6327 = vunpack.c.l.b16 %v1296
        %v6328 = vunpack.c.l.b16 %v1297
        %v6329 = vunpack.c.l.b16 %v1298
        %v6330 = vunpack.c.l.b16 %v1299
        %v6331 = vunpack.c.l.b16 %v1300
        %v6332 = vunpack.c.l.b16 %v1301
        %v6333 = vunpack.c.l.b16 %v1302
        %v6334 = vunpack.c.l.b16 %v1303
        %v6335 = vunpack.c.l.b16 %v1304
        %v6336 = vunpack.c.l.b16 %v1305
        %v6337 = vunpack.c.l.b16 %v1306
        %v6338 = vunpack.c.l.b16 %v1307
        %v6339 = vunpack.c.l.b16 %v1308
        %v6340 = vunpack.c.l.b16 %v1309
        %v6341 = vunpack.c.l.b16 %v1310
        %v6342 = vunpack.c.l.b16 %v1311
        %v6343 = vunpack.c.l.b16 %v1312
        %v6344 = vunpack.c.l.b16 %v1313
        %v6345 = vunpack.c.l.b16 %v1314
        %v6346 = vunpack.c.l.b16 %v1315
        %v6347 = vunpack.c.l.b16 %v1316
        %v6348 = vunpack.c.l.b16 %v1317
        %v6349 = vunpack.c.l.b16 %v1318
        %v6350 = vunpack.c.l.b16 %v1319
        %v6351 = vunpack.c.l.b16 %v1320
        %v6352 = vunpack.c.l.b16 %v1321
        %v6353 = vunpack.c.l.b16 %v1322
        %v6354 = vunpack.c.l.b16 %v1323
        %v6355 = vunpack.c.l.b16 %v1324
        %v6356 = vunpack.c.l.b16 %v1325
        %v6357 = vunpack.c.l.b16 %v1326
        %v6358 = vunpack.c.l.b16 %v1327
        %v6359 = vunpack.c.l.b16 %v1328
        %v6360 = vunpack.c.l.b16 %v1329
        %v6361 = vunpack.c.l.b16 %v1330
        %v6362 = vunpack.c.l.b16 %v1331
        %v6363 = vunpack.c.l.b16 %v1332
        %v6364 = vunpack.c.l.b16 %v1333
        %v6365 = vunpack.c.l.b16 %v1334
        %v6366 = vunpack.c.l.b16 %v1335
        %v6367 = vunpack.c.l.b16 %v1336
        %v6368 = vunpack.c.l.b16 %v1337
        %v6369 = vunpack.c.l.b16 %v1338
        %v6370 = vunpack.c.l.b16 %v1339
        %v6371 = vunpack.c.l.b16 %v1340
        %v6372 = vunpack.c.l.b16 %v1341
        %v6373 = vunpack.c.l.b16 %v1342
        %v6374 = vunpack.c.l.b16 %v1343
        %v6375 = vunpack.c.l.b16 %v1344
        %v6376 = vunpack.c.l.b16 %v1345
        %v6377 = vunpack.c.l.b16 %v1346
        %v6378 = vunpack.c.l.b16 %v1347
        %v6379 = vunpack.c.l.b16 %v1348
        %v6380 = vunpack.c.l.b16 %v1349
        %v6381 = vunpack.c.l.b16 %v1350
        %v6382 = vunpack.c.l.b16 %v1351
        %v6383 = vunpack.c.l.b16 %v1352
        %v6384 = vunpack.c.l.b16 %v1353
        %v6385 = vunpack.c.l.b16 %v1354
        %v6386 = vunpack.c.l.b16 %v1355
        %v6387 = vunpack.c.l.b16 %v1356
        %v6388 = vunpack.c.l.b16 %v1357
        %v6389 = vunpack.c.l.b16 %v1358
        %v6390 = vunpack.c.l.b16 %v1359
        %v6391 = vunpack.c.l.b16 %v1360
        %v6392 = vunpack.c.l.b16 %v1361
        %v6393 = vunpack.c.l.b16 %v1362
        %v6394 = vunpack.c.l.b16 %v1363
        %v6395 = vunpack.c.l.b16 %v1364
        %v6396 = vunpack.c.l.b16 %v1365
        %v6397 = vunpack.c.l.b16 %v1366
        %v6398 = vunpack.c.l.b16 %v1367
        %v6399 = vunpack.c.l.b16 %v1368
        %v6400 = vunpack.c.l.b16 %v1369
        %v6401 = vunpack.c.l.b16 %v1370
        %v6402 = vunpack.c.l.b16 %v1371
        %v6403 = vunpack.c.l.b16 %v1372
        %v6404 = vunpack.c.l.b16 %v1373
        %v6405 = vunpack.c.l.b16 %v1374
        %v6406 = vunpack.c.l.b16 %v1375
        %v6407 = vunpack.c.l.b16 %v1376
        %v6408 = vunpack.c.l.b16 %v1377
        %v6409 = vunpack.c.l.b16 %v1378
        %v6410 = vunpack.c.l.b16 %v1379
        %v6411 = vunpack.c.l.b16 %v1380
        %v6412 = vunpack.c.l.b16 %v1381
        %v6413 = vunpack.c.l.b16 %v1382
        %v6414 = vunpack.c.l.b16 %v1383
        %v6415 = vunpack.c.l.b16 %v1384
        %v6416 = vunpack.c.l.b16 %v1385
        %v6417 = vunpack.c.l.b16 %v1386
        %v6418 = vunpack.c.l.b16 %v1387
        %v6419 = vunpack.c.l.b16 %v1388
        %v6420 = vunpack.c.l.b16 %v1389
        %v6421 = vunpack.c.l.b16 %v1390
        %v6422 = vunpack.c.l.b16 %v1391
        %v6423 = vunpack.c.l.b16 %v1392
        %v6424 = vunpack.c.l.b16 %v1393
        %v6425 = vunpack.c.l.b16 %v1394
        %v6426 = vunpack.c.l.b16 %v1395
        %v6427 = vunpack.c.l.b16 %v1396
        %v6428 = vunpack.c.l.b16 %v1397
        %v6429 = vunpack.c.l.b16 %v1398
        %v6430 = vunpack.c.l.b16 %v1399
        %v6431 = vunpack.c.l.b16 %v1400
        %v6432 = vunpack.c.l.b16 %v1401
        %v6433 = vunpack.c.l.b16 %v1402
        %v6434 = vunpack.c.l.b16 %v1403
        %v6435 = vunpack.c.l.b16 %v1404
        %v6436 = vunpack.c.l.b16 %v1405
        %v6437 = vunpack.c.l.b16 %v1406
        %v6438 = vunpack.c.l.b16 %v1407
        %v6439 = vunpack.c.l.b16 %v1408
        %v6440 = vunpack.c.l.b16 %v1409
        %v6441 = vunpack.c.l.b16 %v1410
        %v6442 = vunpack.c.l.b16 %v1411
        %v6443 = vunpack.c.l.b16 %v1412
        %v6444 = vunpack.c.l.b16 %v1413
        %v6445 = vunpack.c.l.b16 %v1414
        %v6446 = vunpack.c.l.b16 %v1415
        %v6447 = vunpack.c.l.b16 %v1416
        %v6448 = vunpack.c.l.b16 %v1417
        %v6449 = vunpack.c.l.b16 %v1418
        %v6450 = vunpack.c.l.b16 %v1419
        %v6451 = vunpack.c.l.b16 %v1420
        %v6452 = vunpack.c.l.b16 %v1421
        %v6453 = vunpack.c.l.b16 %v1422
        %v6454 = vunpack.c.l.b16 %v1423
        %v6455 = vunpack.c.l.b16 %v1424
        %v6456 = vunpack.c.l.b16 %v1425
        %v6457 = vunpack.c.l.b16 %v1426
        %v6458 = vunpack.c.l.b16 %v1427
        %v6459 = vunpack.c.l.b16 %v1428
        %v6460 = vunpack.c.l.b16 %v1429
        %v6461 = vunpack.c.l.b16 %v1430
        %v6462 = vunpack.c.l.b16 %v1431
        %v6463 = vunpack.c.l.b16 %v1432
        %v6464 = vunpack.c.l.b16 %v1433
        %v6465 = vunpack.c.l.b16 %v1434
        %v6466 = vunpack.c.l.b16 %v1435
        %v6467 = vunpack.c.l.b16 %v1436
        %v6468 = vunpack.c.l.b16 %v1437
        %v6469 = vunpack.c.l.b16 %v1438
        %v6470 = vunpack.c.l.b16 %v1439
        %v6471 = vunpack.c.l.b16 %v1440
        %v6472 = vunpack.c.l.b16 %v1441
        %v6473 = vunpack.c.l.b16 %v1442
        %v6474 = vunpack.c.l.b16 %v1443
        %v6475 = vunpack.c.l.b16 %v1444
        %v6476 = vunpack.c.l.b16 %v1445
        %v6477 = vunpack.c.l.b16 %v1446
        %v6478 = vunpack.c.l.b16 %v1447
        %v6479 = vunpack.c.l.b16 %v1448
        %v6480 = vunpack.c.l.b16 %v1449
        %v6481 = vunpack.c.l.b16 %v1450
        %v6482 = vunpack.c.l.b16 %v1451
        %v6483 = vunpack.c.l.b16 %v1452
        %v6484 = vunpack.c.l.b16 %v1453
        %v6485 = vunpack.c.l.b16 %v1454
        %v6486 = vunpack.c.l.b16 %v1455
        %v6487 = vunpack.c.l.b16 %v1456
        %v6488 = vunpack.c.l.b16 %v1457
        %v6489 = vunpack.c.l.b16 %v1458
        %v6490 = vunpack.c.l.b16 %v1459
        %v6491 = vunpack.c.l.b16 %v1460
        %v6492 = vunpack.c.l.b16 %v1461
        %v6493 = vunpack.c.l.b16 %v1462
        %v6494 = vunpack.c.l.b16 %v1463
        %v6495 = vunpack.c.l.b16 %v1464
        %v6496 = vunpack.c.l.b16 %v1465
        %v6497 = vunpack.c.l.b16 %v1466
        %v6498 = vunpack.c.l.b16 %v1467
        %v6499 = vunpack.c.l.b16 %v1468
        %v6500 = vunpack.c.l.b16 %v1469
        %v6501 = vunpack.c.l.b16 %v1470
        %v6502 = vunpack.c.l.b16 %v1471
        %v6503 = vunpack.c.l.b16 %v1472
        %v6504 = vunpack.c.l.b16 %v1473
        %v6505 = vunpack.c.l.b16 %v1474
        %v6506 = vunpack.c.l.b16 %v1475
        %v6507 = vunpack.c.l.b16 %v1476
        %v6508 = vunpack.c.l.b16 %v1477
        %v6509 = vunpack.c.l.b16 %v1478
        %v6510 = vunpack.c.l.b16 %v1479
        %v6511 = vunpack.c.l.b16 %v1480
        %v6512 = vunpack.c.l.b16 %v1481
        %v6513 = vunpack.c.l.b16 %v1482
        %v6514 = vunpack.c.l.b16 %v1483
        %v6515 = vunpack.c.l.b16 %v1484
        %v6516 = vunpack.c.l.b16 %v1485
        %v6517 = vunpack.c.l.b16 %v1486
        %v6518 = vunpack.c.l.b16 %v1487
        %v6519 = vunpack.c.l.b16 %v1488
        %v6520 = vunpack.c.l.b16 %v1489
        %v6521 = vunpack.c.l.b16 %v1490
        %v6522 = vunpack.c.l.b16 %v1491
        %v6523 = vunpack.c.l.b16 %v1492
        %v6524 = vunpack.c.l.b16 %v1493
        %v6525 = vunpack.c.l.b16 %v1494
        %v6526 = vunpack.c.l.b16 %v1495
        %v6527 = vunpack.c.l.b16 %v1496
        %v6528 = vunpack.c.l.b16 %v1497
        %v6529 = vunpack.c.l.b16 %v1498
        %v6530 = vunpack.c.l.b16 %v1499
        %v6531 = vunpack.c.l.b16 %v1500
        %v6532 = vunpack.c.l.b16 %v1501
        %v6533 = vunpack.c.l.b16 %v1502
        %v6534 = vunpack.c.l.b16 %v1503
        %v6535 = vunpack.c.l.b16 %v1504
        %v6536 = vunpack.c.l.b16 %v1505
        %v6537 = vunpack.c.l.b16 %v1506
        %v6538 = vunpack.c.l.b16 %v1507
        %v6539 = vunpack.c.l.b16 %v1508
        %v6540 = vunpack.c.l.b16 %v1509
        %v6541 = vunpack.c.l.b16 %v1510
        %v6542 = vunpack.c.l.b16 %v1511
        %v6543 = vunpack.c.l.b16 %v1512
        %v6544 = vunpack.c.l.b16 %v1513
        %v6545 = vunpack.c.l.b16 %v1514
        %v6546 = vunpack.c.l.b16 %v1515
        %v6547 = vunpack.c.l.b16 %v1516
        %v6548 = vunpack.c.l.b16 %v1517
        %v6549 = vunpack.c.l.b16 %v1518
        %v6550 = vunpack.c.l.b16 %v1519
        %v6551 = vunpack.c.l.b16 %v1520
        %v6552 = vunpack.c.l.b16 %v1521
        %v6553 = vunpack.c.l.b16 %v1522
        %v6554 = vunpack.c.l.b16 %v1523
        %v6555 = vunpack.c.l.b16 %v1524
        %v6556 = vunpack.c.l.b16 %v1525
        %v6557 = vunpack.c.l.b16 %v1526
        %v6558 = vunpack.c.l.b16 %v1527
        %v6559 = vunpack.c.l.b16 %v1528
        %v6560 = vunpack.c.l.b16 %v1529
        %v6561 = vunpack.c.l.b16 %v1530
        %v6562 = vunpack.c.l.b16 %v1531
        %v6563 = vunpack.c.l.b16 %v1532
        %v6564 = vunpack.c.l.b16 %v1533
        %v6565 = vunpack.c.l.b16 %v1534
        %v6566 = vunpack.c.l.b16 %v1535
        %v6567 = vunpack.c.l.b16 %v1536
        %v6568 = vunpack.c.l.b16 %v1537
        %v6569 = vunpack.c.l.b16 %v1538
        %v6570 = vunpack.c.l.b16 %v1539
        %v6571 = vunpack.c.l.b16 %v1540
        %v6572 = vunpack.c.l.b16 %v1541
        %v6573 = vunpack.c.l.b16 %v1542
        %v6574 = vunpack.c.l.b16 %v1543
        %v6575 = vunpack.c.l.b16 %v1544
        %v6576 = vunpack.c.l.b16 %v1545
        %v6577 = vunpack.c.l.b16 %v1546
        %v6578 = vunpack.c.l.b16 %v1547
        %v6579 = vunpack.c.l.b16 %v1548
        %v6580 = vunpack.c.l.b16 %v1549
        %v6581 = vunpack.c.l.b16 %v1550
        %v6582 = vunpack.c.l.b16 %v1551
        %v6583 = vunpack.c.l.b16 %v1552
        %v6584 = vunpack.c.l.b16 %v1553
        %v6585 = vunpack.c.l.b16 %v1554
        %v6586 = vunpack.c.l.b16 %v1555
        %v6587 = vunpack.c.l.b16 %v1556
        %v6588 = vunpack.c.l.b16 %v1557
        %v6589 = vunpack.c.l.b16 %v1558
        %v6590 = vunpack.c.l.b16 %v1559
        %v6591 = vunpack.c.l.b16 %v1560
        %v6592 = vunpack.c.l.b16 %v1561
        %v6593 = vunpack.c.l.b16 %v1562
        %v6594 = vunpack.c.l.b16 %v1563
        %v6595 = vunpack.c.l.b16 %v1564
        %v6596 = vunpack.c.l.b16 %v1565
        %v6597 = vunpack.c.l.b16 %v1566
        %v6598 = vunpack.c.l.b16 %v1567
        %v6599 = vunpack.c.l.b16 %v1568
        %v6600 = vunpack.c.l.b16 %v1569
        %v6601 = vunpack.c.l.b16 %v1570
        %v6602 = vunpack.c.l.b16 %v1571
        %v6603 = vunpack.c.l.b16 %v1572
        %v6604 = vunpack.c.l.b16 %v1573
        %v6605 = vunpack.c.l.b16 %v1574
        %v6606 = vunpack.c.l.b16 %v1575
        %v6607 = vunpack.c.l.b16 %v1576
        %v6608 = vunpack.c.l.b16 %v1577
        %v6609 = vunpack.c.l.b16 %v1578
        %v6610 = vunpack.c.l.b16 %v1579
        %v6611 = vunpack.c.l.b16 %v1580
        %v6612 = vunpack.c.l.b16 %v1581
        %v6613 = vunpack.c.l.b16 %v1582
        %v6614 = vunpack.c.l.b16 %v1583
        %v6615 = vunpack.c.l.b16 %v1584
        %v6616 = vunpack.c.l.b16 %v1585
        %v6617 = vunpack.c.l.b16 %v1586
        %v6618 = vunpack.c.l.b16 %v1587
        %v6619 = vunpack.c.l.b16 %v1588
        %v6620 = vunpack.c.l.b16 %v1589
        %v6621 = vunpack.c.l.b16 %v1590
        %v6622 = vunpack.c.l.b16 %v1591
        %v6623 = vunpack.c.l.b16 %v1592
        %v6624 = vunpack.c.l.b16 %v1593
        %v6625 = vunpack.c.l.b16 %v1594
        %v6626 = vunpack.c.l.b16 %v1595
        %v6627 = vunpack.c.l.b16 %v1596
        %v6628 = vunpack.c.l.b16 %v1597
        %v6629 = vunpack.c.l.b16 %v1598
        %v6630 = vunpack.c.l.b16 %v1599
        %v6631 = vunpack.c.l.b16 %v1600
        %v6632 = vunpack.c.l.b16 %v1601
        %v6633 = vunpack.c.l.b16 %v1602
        %v6634 = vunpack.c.l.b16 %v1603
        %v6635 = vunpack.c.l.b16 %v1604
        %v6636 = vunpack.c.l.b16 %v1605
        %v6637 = vunpack.c.l.b16 %v1606
        %v6638 = vunpack.c.l.b16 %v1607
        %v6639 = vunpack.c.l.b16 %v1608
        %v6640 = vunpack.c.l.b16 %v1609
        %v6641 = vunpack.c.l.b16 %v1610
        %v6642 = vunpack.c.l.b16 %v1611
        %v6643 = vunpack.c.l.b16 %v1612
        %v6644 = vunpack.c.l.b16 %v1613
        %v6645 = vunpack.c.l.b16 %v1614
        %v6646 = vunpack.c.l.b16 %v1615
        %v6647 = vunpack.c.l.b16 %v1616
        %v6648 = vunpack.c.l.b16 %v1617
        %v6649 = vunpack.c.l.b16 %v1618
        %v6650 = vunpack.c.l.b16 %v1619
        %v6651 = vunpack.c.l.b16 %v1620
        %v6652 = vunpack.c.l.b16 %v1621
        %v6653 = vunpack.c.l.b16 %v1622
        %v6654 = vunpack.c.l.b16 %v1623
        %v6655 = vunpack.c.l.b16 %v1624
        %v6656 = vunpack.c.l.b16 %v1625
        %v6657 = vunpack.c.l.b16 %v1626
        %v6658 = vunpack.c.l.b16 %v1627
        %v6659 = vunpack.c.l.b16 %v1628
        %v6660 = vunpack.c.l.b16 %v1629
        %v6661 = vunpack.c.l.b16 %v1630
        %v6662 = vunpack.c.l.b16 %v1631
        %v6663 = vunpack.c.l.b16 %v1632
        %v6664 = vunpack.c.l.b16 %v1633
        %v6665 = vunpack.c.l.b16 %v1634
        %v6666 = vunpack.c.l.b16 %v1635
        %v6667 = vunpack.c.l.b16 %v1636
        %v6668 = vunpack.c.l.b16 %v1637
        %v6669 = vunpack.c.l.b16 %v1638
        %v6670 = vunpack.c.l.b16 %v1639
        %v6671 = vunpack.c.l.b16 %v1640
        %v6672 = vunpack.c.l.b16 %v1641
        %v6673 = vunpack.c.l.b16 %v1642
        %v6674 = vunpack.c.l.b16 %v1643
        %v6675 = vunpack.c.l.b16 %v1644
        %v6676 = vunpack.c.l.b16 %v1645
        %v6677 = vunpack.c.l.b16 %v1646
        %v6678 = vunpack.c.l.b16 %v1647
        %v6679 = vunpack.c.l.b16 %v1648
        %v6680 = vunpack.c.l.b16 %v1649
        %v6681 = vunpack.c.l.b16 %v1650
        %v6682 = vunpack.c.l.b16 %v1651
        %v6683 = vunpack.c.l.b16 %v1652
        %v6684 = vunpack.c.l.b16 %v1653
        %v6685 = vunpack.c.l.b16 %v1654
        %v6686 = vunpack.c.l.b16 %v1655
        %v6687 = vunpack.c.l.b16 %v1656
        %v6688 = vunpack.c.l.b16 %v1657
        %v6689 = vunpack.c.l.b16 %v1658
        %v6690 = vunpack.c.l.b16 %v1659
        %v6691 = vunpack.c.l.b16 %v1660
        %v6692 = vunpack.c.l.b16 %v1661
        %v6693 = vunpack.c.l.b16 %v1662
        %v6694 = vunpack.c.l.b16 %v1663
        %v6695 = vunpack.c.l.b16 %v1664
        %v6696 = vunpack.c.l.b16 %v1665
        %v6697 = vunpack.c.l.b16 %v1666
        %v6698 = vunpack.c.l.b16 %v1667
        %v6699 = vunpack.c.l.b16 %v1668
        %v6700 = vunpack.c.l.b16 %v1669
        %v6701 = vunpack.c.l.b16 %v1670
        %v6702 = vunpack.c.l.b16 %v1671
        %v6703 = vunpack.c.l.b16 %v1672
        %v6704 = vunpack.c.l.b16 %v1673
        %v6705 = vunpack.c.l.b16 %v1674
        %v6706 = vunpack.c.l.b16 %v1675
        %v6707 = vunpack.c.l.b16 %v1676
        %v6708 = vunpack.c.l.b16 %v1677
        %v6709 = vunpack.c.l.b16 %v1678
        %v6710 = vunpack.c.l.b16 %v1679
        %v6711 = vunpack.c.l.b16 %v1680
        %v6712 = vunpack.c.l.b16 %v1681
        %v6713 = vunpack.c.l.b16 %v1682
        %v6714 = vunpack.c.l.b16 %v1683
        %v6715 = vunpack.c.l.b16 %v1684
        %v6716 = vunpack.c.l.b16 %v1685
        %v6717 = vunpack.c.l.b16 %v1686
        %v6718 = vunpack.c.l.b16 %v1687
        %v6719 = vunpack.c.l.b16 %v1688
        %v6720 = vunpack.c.l.b16 %v1689
        %v6721 = vunpack.c.l.b16 %v1690
        %v6722 = vunpack.c.l.b16 %v1691
        %v6723 = vunpack.c.l.b16 %v1692
        %v6724 = vunpack.c.l.b16 %v1693
        %v6725 = vunpack.c.l.b16 %v1694
        %v6726 = vunpack.c.l.b16 %v1695
        %v6727 = vunpack.c.l.b16 %v1696
        %v6728 = vunpack.c.l.b16 %v1697
        %v6729 = vunpack.c.l.b16 %v1698
        %v6730 = vunpack.c.l.b16 %v1699
        %v6731 = vunpack.c.l.b16 %v1700
        %v6732 = vunpack.c.l.b16 %v1701
        %v6733 = vunpack.c.l.b16 %v1702
        %v6734 = vunpack.c.l.b16 %v1703
        %v6735 = vunpack.c.l.b16 %v1704
        %v6736 = vunpack.c.l.b16 %v1705
        %v6737 = vunpack.c.l.b16 %v1706
        %v6738 = vunpack.c.l.b16 %v1707
        %v6739 = vunpack.c.l.b16 %v1708
        %v6740 = vunpack.c.l.b16 %v1709
        %v6741 = vunpack.c.l.b16 %v1710
        %v6742 = vunpack.c.l.b16 %v1711
        %v6743 = vunpack.c.l.b16 %v1712
        %v6744 = vunpack.c.l.b16 %v1713
        %v6745 = vunpack.c.l.b16 %v1714
        %v6746 = vunpack.c.l.b16 %v1715
        %v6747 = vunpack.c.l.b16 %v1716
        %v6748 = vunpack.c.l.b16 %v1717
        %v6749 = vunpack.c.l.b16 %v1718
        %v6750 = vunpack.c.l.b16 %v1719
        %v6751 = vunpack.c.l.b16 %v1720
        %v6752 = vunpack.c.l.b16 %v1721
        %v6753 = vunpack.c.l.b16 %v1722
        %v6754 = vunpack.c.l.b16 %v1723
        %v6755 = vunpack.c.l.b16 %v1724
        %v6756 = vunpack.c.l.b16 %v1725
        %v6757 = vunpack.c.l.b16 %v1726
        %v6758 = vunpack.c.l.b16 %v1727
        %v6759 = vunpack.c.l.b16 %v1728
        %v6760 = vunpack.c.l.b16 %v1729
        %v6761 = vunpack.c.l.b16 %v1730
        %v6762 = vunpack.c.l.b16 %v1731
        %v6763 = vunpack.c.l.b16 %v1732
        %v6764 = vunpack.c.l.b16 %v1733
        %v6765 = vunpack.c.l.b16 %v1734
        %v6766 = vunpack.c.l.b16 %v1735
        %v6767 = vunpack.c.l.b16 %v1736
        %v6768 = vunpack.c.l.b16 %v1737
        %v6769 = vunpack.c.l.b16 %v1738
        %v6770 = vunpack.c.l.b16 %v1739
        %v6771 = vunpack.c.l.b16 %v1740
        %v6772 = vunpack.c.l.b16 %v1741
        %v6773 = vunpack.c.l.b16 %v1742
        %v6774 = vunpack.c.l.b16 %v1743
        %v6775 = vunpack.c.l.b16 %v1744
        %v6776 = vunpack.c.l.b16 %v1745
        %v6777 = vunpack.c.l.b16 %v1746
        %v6778 = vunpack.c.l.b16 %v1747
        %v6779 = vunpack.c.l.b16 %v1748
        %v6780 = vunpack.c.l.b16 %v1749
        %v6781 = vunpack.c.l.b16 %v1750
        %v6782 = vunpack.c.l.b16 %v1751
        %v6783 = vunpack.c.l.b16 %v1752
        %v6784 = vunpack.c.l.b16 %v1753
        %v6785 = vunpack.c.l.b16 %v1754
        %v6786 = vunpack.c.l.b16 %v1755
        %v6787 = vunpack.c.l.b16 %v1756
        %v6788 = vunpack.c.l.b16 %v1757
        %v6789 = vunpack.c.l.b16 %v1758
        %v6790 = vunpack.c.l.b16 %v1759
        %v6791 = vunpack.c.l.b16 %v1760
        %v6792 = vunpack.c.l.b16 %v1761
        %v6793 = vunpack.c.l.b16 %v1762
        %v6794 = vunpack.c.l.b16 %v1763
        %v6795 = vunpack.c.l.b16 %v1764
        %v6796 = vunpack.c.l.b16 %v1765
        %v6797 = vunpack.c.l.b16 %v1766
        %v6798 = vunpack.c.l.b16 %v1767
        %v6799 = vunpack.c.l.b16 %v1768
        %v6800 = vunpack.c.l.b16 %v1769
        %v6801 = vunpack.c.l.b16 %v1770
        %v6802 = vunpack.c.l.b16 %v1771
        %v6803 = vunpack.c.l.b16 %v1772
        %v6804 = vunpack.c.l.b16 %v1773
        %v6805 = vunpack.c.l.b16 %v1774
        %v6806 = vunpack.c.l.b16 %v1775
        %v6807 = vunpack.c.l.b16 %v1776
        %v6808 = vunpack.c.l.b16 %v1777
        %v6809 = vunpack.c.l.b16 %v1778
        %v6810 = vunpack.c.l.b16 %v1779
        %v6811 = vunpack.c.l.b16 %v1780
        %v6812 = vunpack.c.l.b16 %v1781
        %v6813 = vunpack.c.l.b16 %v1782
        %v6814 = vunpack.c.l.b16 %v1783
        %v6815 = vunpack.c.l.b16 %v1784
        %v6816 = vunpack.c.l.b16 %v1785
        %v6817 = vunpack.c.l.b16 %v1786
        %v6818 = vunpack.c.l.b16 %v1787
        %v6819 = vunpack.c.l.b16 %v1788
        %v6820 = vunpack.c.l.b16 %v1789
        %v6821 = vunpack.c.l.b16 %v1790
        %v6822 = vunpack.c.l.b16 %v1791
        %v6823 = vunpack.c.l.b16 %v1792
        %v6824 = vunpack.c.l.b16 %v1793
        %v6825 = vunpack.c.l.b16 %v1794
        %v6826 = vunpack.c.l.b16 %v1795
        %v6827 = vunpack.c.l.b16 %v1796
        %v6828 = vunpack.c.l.b16 %v1797
        %v6829 = vunpack.c.l.b16 %v1798
        %v6830 = vunpack.c.l.b16 %v1799
        %v6831 = vunpack.c.l.b16 %v1800
        %v6832 = vunpack.c.l.b16 %v1801
        %v6833 = vunpack.c.l.b16 %v1802
        %v6834 = vunpack.c.l.b16 %v1803
        %v6835 = vunpack.c.l.b16 %v1804
        %v6836 = vunpack.c.l.b16 %v1805
        %v6837 = vunpack.c.l.b16 %v1806
        %v6838 = vunpack.c.l.b16 %v1807
        %v6839 = vunpack.c.l.b16 %v1808
        %v6840 = vunpack.c.l.b16 %v1809
        %v6841 = vunpack.c.l.b16 %v1810
        %v6842 = vunpack.c.l.b16 %v1811
        %v6843 = vunpack.c.l.b16 %v1812
        %v6844 = vunpack.c.l.b16 %v1813
        %v6845 = vunpack.c.l.b16 %v1814
        %v6846 = vunpack.c.l.b16 %v1815
        %v6847 = vunpack.c.l.b16 %v1816
        %v6848 = vunpack.c.l.b16 %v1817
        %v6849 = vunpack.c.l.b16 %v1818
        %v6850 = vunpack.c.l.b16 %v1819
        %v6851 = vunpack.c.l.b16 %v1820
        %v6852 = vunpack.c.l.b16 %v1821
        %v6853 = vunpack.c.l.b16 %v1822
        %v6854 = vunpack.c.l.b16 %v1823
        %v6855 = vunpack.c.l.b16 %v1824
        %v6856 = vunpack.c.l.b16 %v1825
        %v6857 = vunpack.c.l.b16 %v1826
        %v6858 = vunpack.c.l.b16 %v1827
        %v6859 = vunpack.c.l.b16 %v1828
        %v6860 = vunpack.c.l.b16 %v1829
        %v6861 = vunpack.c.l.b16 %v1830
        %v6862 = vunpack.c.l.b16 %v1831
        %v6863 = vunpack.c.l.b16 %v1832
        %v6864 = vunpack.c.l.b16 %v1833
        %v6865 = vunpack.c.l.b16 %v1834
        %v6866 = vunpack.c.l.b16 %v1835
        %v6867 = vunpack.c.l.b16 %v1836
        %v6868 = vunpack.c.l.b16 %v1837
        %v6869 = vunpack.c.l.b16 %v1838
        %v6870 = vunpack.c.l.b16 %v1839
        %v6871 = vunpack.c.l.b16 %v1840
        %v6872 = vunpack.c.l.b16 %v1841
        %v6873 = vunpack.c.l.b16 %v1842
        %v6874 = vunpack.c.l.b16 %v1843
        %v6875 = vunpack.c.l.b16 %v1844
        %v6876 = vunpack.c.l.b16 %v1845
        %v6877 = vunpack.c.l.b16 %v1846
        %v6878 = vunpack.c.l.b16 %v1847
        %v6879 = vunpack.c.l.b16 %v1848
        %v6880 = vunpack.c.l.b16 %v1849
        %v6881 = vunpack.c.l.b16 %v1850
        %v6882 = vunpack.c.l.b16 %v1851
        %v6883 = vunpack.c.l.b16 %v1852
        %v6884 = vunpack.c.l.b16 %v1853
        %v6885 = vunpack.c.l.b16 %v1854
        %v6886 = vunpack.c.l.b16 %v1855
        %v6887 = vunpack.c.l.b16 %v1856
        %v6888 = vunpack.c.l.b16 %v1857
        %v6889 = vunpack.c.l.b16 %v1858
        %v6890 = vunpack.c.l.b16 %v1859
        %v6891 = vunpack.c.l.b16 %v1860
        %v6892 = vunpack.c.l.b16 %v1861
        %v6893 = vunpack.c.l.b16 %v1862
        %v6894 = vunpack.c.l.b16 %v1863
        %v6895 = vunpack.c.l.b16 %v1864
        %v6896 = vunpack.c.l.b16 %v1865
        %v6897 = vunpack.c.l.b16 %v1866
        %v6898 = vunpack.c.l.b16 %v1867
        %v6899 = vunpack.c.l.b16 %v1868
        %v6900 = vunpack.c.l.b16 %v1869
        %v6901 = vunpack.c.l.b16 %v1870
        %v6902 = vunpack.c.l.b16 %v1871
        %v6903 = vunpack.c.l.b16 %v1872
        %v6904 = vunpack.c.l.b16 %v1873
        %v6905 = vunpack.c.l.b16 %v1874
        %v6906 = vunpack.c.l.b16 %v1875
        %v6907 = vunpack.c.l.b16 %v1876
        %v6908 = vunpack.c.l.b16 %v1877
        %v6909 = vunpack.c.l.b16 %v1878
        %v6910 = vunpack.c.l.b16 %v1879
        %v6911 = vunpack.c.l.b16 %v1880
        %v6912 = vunpack.c.l.b16 %v1881
        %v6913 = vunpack.c.l.b16 %v1882
        %v6914 = vunpack.c.l.b16 %v1883
        %v6915 = vunpack.c.l.b16 %v1884
        %v6916 = vunpack.c.l.b16 %v1885
        %v6917 = vunpack.c.l.b16 %v1886
        %v6918 = vunpack.c.l.b16 %v1887
        %v6919 = vunpack.c.l.b16 %v1888
        %v6920 = vunpack.c.l.b16 %v1889
        %v6921 = vunpack.c.l.b16 %v1890
        %v6922 = vunpack.c.l.b16 %v1891
        %v6923 = vunpack.c.l.b16 %v1892
        %v6924 = vunpack.c.l.b16 %v1893
        %v6925 = vunpack.c.l.b16 %v1894
        %v6926 = vunpack.c.l.b16 %v1895
        %v6927 = vunpack.c.l.b16 %v1896
        %v6928 = vunpack.c.l.b16 %v1897
        %v6929 = vunpack.c.l.b16 %v1898
        %v6930 = vunpack.c.l.b16 %v1899
        %v6931 = vunpack.c.l.b16 %v1900
        %v6932 = vunpack.c.l.b16 %v1901
        %v6933 = vunpack.c.l.b16 %v1902
        %v6934 = vunpack.c.l.b16 %v1903
        %v6935 = vunpack.c.l.b16 %v1904
        %v6936 = vunpack.c.l.b16 %v1905
        %v6937 = vunpack.c.l.b16 %v1906
        %v6938 = vunpack.c.l.b16 %v1907
        %v6939 = vunpack.c.l.b16 %v1908
        %v6940 = vunpack.c.l.b16 %v1909
        %v6941 = vunpack.c.l.b16 %v1910
        %v6942 = vunpack.c.l.b16 %v1911
        %v6943 = vunpack.c.l.b16 %v1912
        %v6944 = vunpack.c.l.b16 %v1913
        %v6945 = vunpack.c.l.b16 %v1914
        %v6946 = vunpack.c.l.b16 %v1915
        %v6947 = vunpack.c.l.b16 %v1916
        %v6948 = vunpack.c.l.b16 %v1917
        %v6949 = vunpack.c.l.b16 %v1918
        %v6950 = vunpack.c.l.b16 %v1919
        %v6951 = vunpack.c.l.b16 %v1920
        %v6952 = vunpack.c.l.b16 %v1921
        %v6953 = vunpack.c.l.b16 %v1922
        %v6954 = vunpack.c.l.b16 %v1923
        %v6955 = vunpack.c.l.b16 %v1924
        %v6956 = vunpack.c.l.b16 %v1925
        %v6957 = vunpack.c.l.b16 %v1926
        %v6958 = vunpack.c.l.b16 %v1927
        %v6959 = vunpack.c.l.b16 %v1928
        %v6960 = vunpack.c.l.b16 %v1929
        %v6961 = vunpack.c.l.b16 %v1930
        %v6962 = vunpack.c.l.b16 %v1931
        %v6963 = vunpack.c.l.b16 %v1932
        %v6964 = vunpack.c.l.b16 %v1933
        %v6965 = vunpack.c.l.b16 %v1934
        %v6966 = vunpack.c.l.b16 %v1935
        %v6967 = vunpack.c.l.b16 %v1936
        %v6968 = vunpack.c.l.b16 %v1937
        %v6969 = vunpack.c.l.b16 %v1938
        %v6970 = vunpack.c.l.b16 %v1939
        %v6971 = vunpack.c.l.b16 %v1940
        %v6972 = vunpack.c.l.b16 %v1941
        %v6973 = vunpack.c.l.b16 %v1942
        %v6974 = vunpack.c.l.b16 %v1943
        %v6975 = vunpack.c.l.b16 %v1944
        %v6976 = vunpack.c.l.b16 %v1945
        %v6977 = vunpack.c.l.b16 %v1946
        %v6978 = vunpack.c.l.b16 %v1947
        %v6979 = vunpack.c.l.b16 %v1948
        %v6980 = vunpack.c.l.b16 %v1949
        %v6981 = vunpack.c.l.b16 %v1950
        %v6982 = vunpack.c.l.b16 %v1951
        %v6983 = vunpack.c.l.b16 %v1952
        %v6984 = vunpack.c.l.b16 %v1953
        %v6985 = vunpack.c.l.b16 %v1954
        %v6986 = vunpack.c.l.b16 %v1955
        %v6987 = vunpack.c.l.b16 %v1956
        %v6988 = vunpack.c.l.b16 %v1957
        %v6989 = vunpack.c.l.b16 %v1958
        %v6990 = vunpack.c.l.b16 %v1959
        %v6991 = vunpack.c.l.b16 %v1960
        %v6992 = vunpack.c.l.b16 %v1961
        %v6993 = vunpack.c.l.b16 %v1962
        %v6994 = vunpack.c.l.b16 %v1963
        %v6995 = vunpack.c.l.b16 %v1964
        %v6996 = vunpack.c.l.b16 %v1965
        %v6997 = vunpack.c.l.b16 %v1966
        %v6998 = vunpack.c.l.b16 %v1967
        %v6999 = vunpack.c.l.b16 %v1968
        %v7000 = vunpack.c.l.b16 %v1969
        %v7001 = vunpack.c.l.b16 %v1970
        %v7002 = vunpack.c.l.b16 %v1971
        %v7003 = vunpack.c.l.b16 %v1972
        %v7004 = vunpack.c.l.b16 %v1973
        %v7005 = vunpack.c.l.b16 %v1974
        %v7006 = vunpack.c.l.b16 %v1975
        %v7007 = vunpack.c.l.b16 %v1976
        %v7008 = vunpack.c.l.b16 %v1977
        %v7009 = vunpack.c.l.b16 %v1978
        %v7010 = vunpack.c.l.b16 %v1979
        %v7011 = vunpack.c.l.b16 %v1980
        %v7012 = vunpack.c.l.b16 %v1981
        %v7013 = vunpack.c.l.b16 %v1982
        %v7014 = vunpack.c.l.b16 %v1983
        %v7015 = vunpack.c.l.b16 %v1984
        %v7016 = vunpack.c.l.b16 %v1985
        %v7017 = vunpack.c.l.b16 %v1986
        %v7018 = vunpack.c.l.b16 %v1987
        %v7019 = vunpack.c.l.b16 %v1988
        %v7020 = vunpack.c.l.b16 %v1989
        %v7021 = vunpack.c.l.b16 %v1990
        %v7022 = vunpack.c.l.b16 %v1991
        %v7023 = vunpack.c.l.b16 %v1992
        %v7024 = vunpack.c.l.b16 %v1993
        %v7025 = vunpack.c.l.b16 %v1994
        %v7026 = vunpack.c.l.b16 %v1995
        %v7027 = vunpack.c.l.b16 %v1996
        %v7028 = vunpack.c.l.b16 %v1997
        %v7029 = vunpack.c.l.b16 %v1998
        %v7030 = vunpack.c.l.b16 %v1999
        %v7031 = vunpack.c.l.b16 %v2000
        %v7032 = vunpack.c.l.b16 %v2001
        %v7033 = vunpack.c.l.b16 %v2002
        %v7034 = vunpack.c.l.b16 %v2003
        %v7035 = vunpack.c.l.b16 %v2004
        %v7036 = vunpack.c.l.b16 %v2005
        %v7037 = vunpack.c.l.b16 %v2006
        %v7038 = vunpack.c.l.b16 %v2007
        %v7039 = vunpack.c.l.b16 %v2008
        %v7040 = vunpack.c.l.b16 %v2009
        %v7041 = vunpack.c.l.b16 %v2010
        %v7042 = vunpack.c.l.b16 %v2011
        %v7043 = vunpack.c.l.b16 %v2012
        %v7044 = vunpack.c.l.b16 %v2013
        %v7045 = vunpack.c.l.b16 %v2014
        %v7046 = vunpack.c.l.b16 %v2015
        %v7047 = vunpack.c.l.b16 %v2016
        %v7048 = vunpack.c.l.b16 %v2017
        %v7049 = vunpack.c.l.b16 %v2018
        %v7050 = vunpack.c.l.b16 %v2019
        %v7051 = vunpack.c.l.b16 %v2020
        %v7052 = vunpack.c.l.b16 %v2021
        %v7053 = vunpack.c.l.b16 %v2022
        %v7054 = vunpack.c.l.b16 %v2023
        %v7055 = vunpack.c.l.b16 %v2024
        %v7056 = vunpack.c.l.b16 %v2025
        %v7057 = vunpack.c.l.b16 %v2026
        %v7058 = vunpack.c.l.b16 %v2027
        %v7059 = vunpack.c.l.b16 %v2028
        %v7060 = vunpack.c.l.b16 %v2029
        %v7061 = vunpack.c.l.b16 %v2030
        %v7062 = vunpack.c.l.b16 %v2031
        %v7063 = vunpack.c.l.b16 %v2032
        %v7064 = vunpack.c.l.b16 %v2033
        %v7065 = vunpack.c.l.b16 %v2034
        %v7066 = vunpack.c.l.b16 %v2035
        %v7067 = vunpack.c.l.b16 %v2036
        %v7068 = vunpack.c.l.b16 %v2037
        %v7069 = vunpack.c.l.b16 %v2038
        %v7070 = vunpack.c.l.b16 %v2039
        %v7071 = vunpack.c.l.b16 %v2040
        %v7072 = vunpack.c.l.b16 %v2041
        %v7073 = vunpack.c.l.b16 %v2042
        %v7074 = vunpack.c.l.b16 %v2043
        %v7075 = vunpack.c.l.b16 %v2044
        %v7076 = vunpack.c.l.b16 %v2045
        %v7077 = vunpack.c.l.b16 %v2046
        %v7078 = vunpack.c.l.b16 %v2047
        %v7079 = vunpack.c.l.b16 %v2048
        %v7080 = vunpack.c.l.b16 %v2049
        %v7081 = vunpack.c.l.b16 %v2050
        %v7082 = vunpack.c.l.b16 %v2051
        %v7083 = vunpack.c.l.b16 %v2052
        %v7084 = vunpack.c.l.b16 %v2053
        %v7085 = vunpack.c.l.b16 %v2054
        %v7086 = vunpack.c.l.b16 %v2055
        %v7087 = vunpack.c.l.b16 %v2056
        %v7088 = vunpack.c.l.b16 %v2057
        %v7089 = vunpack.c.l.b16 %v2058
        %v7090 = vunpack.c.l.b16 %v2059
        %v7091 = vunpack.c.l.b16 %v2060
        %v7092 = vunpack.c.l.b16 %v2061
        %v7093 = vunpack.c.l.b16 %v2062
        %v7094 = vunpack.c.l.b16 %v2063
        %v7095 = vunpack.c.l.b16 %v2064
        %v7096 = vunpack.c.l.b16 %v2065
        %v7097 = vunpack.c.l.b16 %v2066
        %v7098 = vunpack.c.l.b16 %v2067
        %v7099 = vunpack.c.l.b16 %v2068
        %v7100 = vunpack.c.l.b16 %v2069
        %v7101 = vunpack.c.l.b16 %v2070
        %v7102 = vunpack.c.l.b16 %v2071
        %v7103 = vunpack.c.l.b16 %v2072
        %v7104 = vunpack.c.l.b16 %v2073
        %v7105 = vunpack.c.l.b16 %v2074
        %v7106 = vunpack.c.l.b16 %v2075
        %v7107 = vunpack.c.l.b16 %v2076
        %v7108 = vunpack.c.l.b16 %v2077
        %v7109 = vunpack.c.l.b16 %v2078
        %v7110 = vunpack.c.l.b16 %v2079
        %v7111 = vunpack.c.l.b16 %v2080
        %v7112 = vunpack.c.l.b16 %v2081
        %v7113 = vunpack.c.l.b16 %v2082
        %v7114 = vunpack.c.l.b16 %v2083
        %v7115 = vunpack.c.l.b16 %v2084
        %v7116 = vunpack.c.l.b16 %v2085
        %v7117 = vunpack.c.l.b16 %v2086
        %v7118 = vunpack.c.l.b16 %v2087
        %v7119 = vunpack.c.l.b16 %v2088
        %v7120 = vunpack.c.l.b16 %v2089
        %v7121 = vunpack.c.l.b16 %v2090
        %v7122 = vunpack.c.l.b16 %v2091
        %v7123 = vunpack.c.l.b16 %v2092
        %v7124 = vunpack.c.l.b16 %v2093
        %v7125 = vunpack.c.l.b16 %v2094
        %v7126 = vunpack.c.l.b16 %v2095
        %v7127 = vunpack.c.l.b16 %v2096
        %v7128 = vunpack.c.l.b16 %v2097
        %v7129 = vunpack.c.l.b16 %v2098
        %v7130 = vunpack.c.l.b16 %v2099
        %v7131 = vunpack.c.l.b16 %v2100
        %v7132 = vunpack.c.l.b16 %v2101
        %v7133 = vunpack.c.l.b16 %v2102
        %v7134 = vunpack.c.l.b16 %v2103
        %v7135 = vunpack.c.l.b16 %v2104
        %v7136 = vunpack.c.l.b16 %v2105
        %v7137 = vunpack.c.l.b16 %v2106
        %v7138 = vunpack.c.l.b16 %v2107
        %v7139 = vunpack.c.l.b16 %v2108
        %v7140 = vunpack.c.l.b16 %v2109
        %v7141 = vunpack.c.l.b16 %v2110
        %v7142 = vunpack.c.l.b16 %v2111
        %v7143 = vunpack.c.l.b16 %v2112
        %v7144 = vunpack.c.l.b16 %v2113
        %v7145 = vunpack.c.l.b16 %v2114
        %v7146 = vunpack.c.l.b16 %v2115
        %v7147 = vunpack.c.l.b16 %v2116
        %v7148 = vunpack.c.l.b16 %v2117
        %v7149 = vunpack.c.l.b16 %v2118
        %v7150 = vunpack.c.l.b16 %v2119
        %v7151 = vunpack.c.l.b16 %v2120
        %v7152 = vunpack.c.l.b16 %v2121
        %v7153 = vunpack.c.l.b16 %v2122
        %v7154 = vunpack.c.l.b16 %v2123
        %v7155 = vunpack.c.l.b16 %v2124
        %v7156 = vunpack.c.l.b16 %v2125
        %v7157 = vunpack.c.l.b16 %v2126
        %v7158 = vunpack.c.l.b16 %v2127
        %v7159 = vunpack.c.l.b16 %v2128
        %v7160 = vunpack.c.l.b16 %v2129
        %v7161 = vunpack.c.l.b16 %v2130
        %v7162 = vunpack.c.l.b16 %v2131
        %v7163 = vunpack.c.l.b16 %v2132
        %v7164 = vunpack.c.l.b16 %v2133
        %v7165 = vunpack.c.l.b16 %v2134
        %v7166 = vunpack.c.l.b16 %v2135
        %v7167 = vunpack.c.l.b16 %v2136
        %v7168 = vunpack.c.l.b16 %v2137
        %v7169 = vunpack.c.l.b16 %v2138
        %v7170 = vunpack.c.l.b16 %v2139
        %v7171 = vunpack.c.l.b16 %v2140
        %v7172 = vunpack.c.l.b16 %v2141
        %v7173 = vunpack.c.l.b16 %v2142
        %v7174 = vunpack.c.l.b16 %v2143
        %v7175 = vunpack.c.l.b16 %v2144
        %v7176 = vunpack.c.l.b16 %v2145
        %v7177 = vunpack.c.l.b16 %v2146
        %v7178 = vunpack.c.l.b16 %v2147
        %v7179 = vunpack.c.l.b16 %v2148
        %v7180 = vunpack.c.l.b16 %v2149
        %v7181 = vunpack.c.l.b16 %v2150
        %v7182 = vunpack.c.l.b16 %v2151
        %v7183 = vunpack.c.l.b16 %v2152
        %v7184 = vunpack.c.l.b16 %v2153
        %v7185 = vunpack.c.l.b16 %v2154
        %v7186 = vunpack.c.l.b16 %v2155
        %v7187 = vunpack.c.l.b16 %v2156
        %v7188 = vunpack.c.l.b16 %v2157
        %v7189 = vunpack.c.l.b16 %v2158
        %v7190 = vunpack.c.l.b16 %v2159
        %v7191 = vunpack.c.l.b16 %v2160
        %v7192 = vunpack.c.l.b16 %v2161
        %v7193 = vunpack.c.l.b16 %v2162
        %v7194 = vunpack.c.l.b16 %v2163
        %v7195 = vunpack.c.l.b16 %v2164
        %v7196 = vunpack.c.l.b16 %v2165
        %v7197 = vunpack.c.l.b16 %v2166
        %v7198 = vunpack.c.l.b16 %v2167
        %v7199 = vunpack.c.l.b16 %v2168
        %v7200 = vunpack.c.l.b16 %v2169
        %v7201 = vunpack.c.l.b16 %v2170
        %v7202 = vunpack.c.l.b16 %v2171
        %v7203 = vunpack.c.l.b16 %v2172
        %v7204 = vunpack.c.l.b16 %v2173
        %v7205 = vunpack.c.l.b16 %v2174
        %v7206 = vunpack.c.l.b16 %v2175
        %v7207 = vunpack.c.l.b16 %v2176
        %v7208 = vunpack.c.l.b16 %v2177
        %v7209 = vunpack.c.l.b16 %v2178
        %v7210 = vunpack.c.l.b16 %v2179
        %v7211 = vunpack.c.l.b16 %v2180
        %v7212 = vunpack.c.l.b16 %v2181
        %v7213 = vunpack.c.l.b16 %v2182
        %v7214 = vunpack.c.l.b16 %v2183
        %v7215 = vunpack.c.l.b16 %v2184
        %v7216 = vunpack.c.l.b16 %v2185
        %v7217 = vunpack.c.l.b16 %v2186
        %v7218 = vunpack.c.l.b16 %v2187
        %v7219 = vunpack.c.l.b16 %v2188
        %v7220 = vunpack.c.l.b16 %v2189
        %v7221 = vunpack.c.l.b16 %v2190
        %v7222 = vunpack.c.l.b16 %v2191
        %v7223 = vunpack.c.l.b16 %v2192
        %v7224 = vunpack.c.l.b16 %v2193
        %v7225 = vunpack.c.l.b16 %v2194
        %v7226 = vunpack.c.l.b16 %v2195
        %v7227 = vunpack.c.l.b16 %v2196
        %v7228 = vunpack.c.l.b16 %v2197
        %v7229 = vunpack.c.l.b16 %v2198
        %v7230 = vunpack.c.l.b16 %v2199
        %v7231 = vunpack.c.l.b16 %v2200
        %v7232 = vunpack.c.l.b16 %v2201
        %v7233 = vunpack.c.l.b16 %v2202
        %v7234 = vunpack.c.l.b16 %v2203
        %v7235 = vunpack.c.l.b16 %v2204
        %v7236 = vunpack.c.l.b16 %v2205
        %v7237 = vunpack.c.l.b16 %v2206
        %v7238 = vunpack.c.l.b16 %v2207
        %v7239 = vunpack.c.l.b16 %v2208
        %v7240 = vunpack.c.l.b16 %v2209
        %v7241 = vunpack.c.l.b16 %v2210
        %v7242 = vunpack.c.l.b16 %v2211
        %v7243 = vunpack.c.l.b16 %v2212
        %v7244 = vunpack.c.l.b16 %v2213
        %v7245 = vunpack.c.l.b16 %v2214
        %v7246 = vunpack.c.l.b16 %v2215
        %v7247 = vunpack.c.l.b16 %v2216
        %v7248 = vunpack.c.l.b16 %v2217
        %v7249 = vunpack.c.l.b16 %v2218
        %v7250 = vunpack.c.l.b16 %v2219
        %v7251 = vunpack.c.l.b16 %v2220
        %v7252 = vunpack.c.l.b16 %v2221
        %v7253 = vunpack.c.l.b16 %v2222
        %v7254 = vunpack.c.l.b16 %v2223
        %v7255 = vunpack.c.l.b16 %v2224
        %v7256 = vunpack.c.l.b16 %v2225
        %v7257 = vunpack.c.l.b16 %v2226
        %v7258 = vunpack.c.l.b16 %v2227
        %v7259 = vunpack.c.l.b16 %v2228
        %v7260 = vunpack.c.l.b16 %v2229
        %v7261 = vunpack.c.l.b16 %v2230
        %v7262 = vunpack.c.l.b16 %v2231
        %v7263 = vunpack.c.l.b16 %v2232
        %v7264 = vunpack.c.l.b16 %v2233
        %v7265 = vunpack.c.l.b16 %v2234
        %v7266 = vunpack.c.l.b16 %v2235
        %v7267 = vunpack.c.l.b16 %v2236
        %v7268 = vunpack.c.l.b16 %v2237
        %v7269 = vunpack.c.l.b16 %v2238
        %v7270 = vunpack.c.l.b16 %v2239
        %v7271 = vunpack.c.l.b16 %v2240
        %v7272 = vunpack.c.l.b16 %v2241
        %v7273 = vunpack.c.l.b16 %v2242
        %v7274 = vunpack.c.l.b16 %v2243
        %v7275 = vunpack.c.l.b16 %v2244
        %v7276 = vunpack.c.l.b16 %v2245
        %v7277 = vunpack.c.l.b16 %v2246
        %v7278 = vunpack.c.l.b16 %v2247
        %v7279 = vunpack.c.l.b16 %v2248
        %v7280 = vunpack.c.l.b16 %v2249
        %v7281 = vunpack.c.l.b16 %v2250
        %v7282 = vunpack.c.l.b16 %v2251
        %v7283 = vunpack.c.l.b16 %v2252
        %v7284 = vunpack.c.l.b16 %v2253
        %v7285 = vunpack.c.l.b16 %v2254
        %v7286 = vunpack.c.l.b16 %v2255
        %v7287 = vunpack.c.l.b16 %v2256
        %v7288 = vunpack.c.l.b16 %v2257
        %v7289 = vunpack.c.l.b16 %v2258
        %v7290 = vunpack.c.l.b16 %v2259
        %v7291 = vunpack.c.l.b16 %v2260
        %v7292 = vunpack.c.l.b16 %v2261
        %v7293 = vunpack.c.l.b16 %v2262
        %v7294 = vunpack.c.l.b16 %v2263
        %v7295 = vunpack.c.l.b16 %v2264
        %v7296 = vunpack.c.l.b16 %v2265
        %v7297 = vunpack.c.l.b16 %v2266
        %v7298 = vunpack.c.l.b16 %v2267
        %v7299 = vunpack.c.l.b16 %v2268
        %v7300 = vunpack.c.l.b16 %v2269
        %v7301 = vunpack.c.l.b16 %v2270
        %v7302 = vunpack.c.l.b16 %v2271
        %v7303 = vunpack.c.l.b16 %v2272
        %v7304 = vunpack.c.l.b16 %v2273
        %v7305 = vunpack.c.l.b16 %v2274
        %v7306 = vunpack.c.l.b16 %v2275
        %v7307 = vunpack.c.l.b16 %v2276
        %v7308 = vunpack.c.l.b16 %v2277
        %v7309 = vunpack.c.l.b16 %v2278
        %v7310 = vunpack.c.l.b16 %v2279
        %v7311 = vunpack.c.l.b16 %v2280
        %v7312 = vunpack.c.l.b16 %v2281
        %v7313 = vunpack.c.l.b16 %v2282
        %v7314 = vunpack.c.l.b16 %v2283
        %v7315 = vunpack.c.l.b16 %v2284
        %v7316 = vunpack.c.l.b16 %v2285
        %v7317 = vunpack.c.l.b16 %v2286
        %v7318 = vunpack.c.l.b16 %v2287
        %v7319 = vpack.c.b16 %v5272, %v5271
        %v7320 = vpack.c.b16 %v5274, %v5273
        %v7321 = vpack.c.b16 %v5276, %v5275
        %v7322 = vpack.c.b16 %v5278, %v5277
        %v7323 = vpack.c.b16 %v5280, %v5279
        %v7324 = vpack.c.b16 %v5282, %v5281
        %v7325 = vpack.c.b16 %v5284, %v5283
        %v7326 = vpack.c.b16 %v5286, %v5285
        %v7327 = vpack.c.b16 %v5288, %v5287
        %v7328 = vpack.c.b16 %v5290, %v5289
        %v7329 = vpack.c.b16 %v5292, %v5291
        %v7330 = vpack.c.b16 %v5294, %v5293
        %v7331 = vpack.c.b16 %v5296, %v5295
        %v7332 = vpack.c.b16 %v5298, %v5297
        %v7333 = vpack.c.b16 %v5300, %v5299
        %v7334 = vpack.c.b16 %v5302, %v5301
        %v7335 = vpack.c.b16 %v5304, %v5303
        %v7336 = vpack.c.b16 %v5306, %v5305
        %v7337 = vpack.c.b16 %v5308, %v5307
        %v7338 = vpack.c.b16 %v5310, %v5309
        %v7339 = vpack.c.b16 %v5312, %v5311
        %v7340 = vpack.c.b16 %v5314, %v5313
        %v7341 = vpack.c.b16 %v5316, %v5315
        %v7342 = vpack.c.b16 %v5318, %v5317
        %v7343 = vpack.c.b16 %v5320, %v5319
        %v7344 = vpack.c.b16 %v5322, %v5321
        %v7345 = vpack.c.b16 %v5324, %v5323
        %v7346 = vpack.c.b16 %v5326, %v5325
        %v7347 = vpack.c.b16 %v5328, %v5327
        %v7348 = vpack.c.b16 %v5330, %v5329
        %v7349 = vpack.c.b16 %v5332, %v5331
        %v7350 = vpack.c.b16 %v5334, %v5333
        %v7351 = vpack.c.b16 %v5336, %v5335
        %v7352 = vpack.c.b16 %v5338, %v5337
        %v7353 = vpack.c.b16 %v5340, %v5339
        %v7354 = vpack.c.b16 %v5342, %v5341
        %v7355 = vpack.c.b16 %v5344, %v5343
        %v7356 = vpack.c.b16 %v5346, %v5345
        %v7357 = vpack.c.b16 %v5348, %v5347
        %v7358 = vpack.c.b16 %v5350, %v5349
        %v7359 = vpack.c.b16 %v5352, %v5351
        %v7360 = vpack.c.b16 %v5354, %v5353
        %v7361 = vpack.c.b16 %v5356, %v5355
        %v7362 = vpack.c.b16 %v5358, %v5357
        %v7363 = vpack.c.b16 %v5360, %v5359
        %v7364 = vpack.c.b16 %v5362, %v5361
        %v7365 = vpack.c.b16 %v5364, %v5363
        %v7366 = vpack.c.b16 %v5366, %v5365
        %v7367 = vpack.c.b16 %v5368, %v5367
        %v7368 = vpack.c.b16 %v5370, %v5369
        %v7369 = vpack.c.b16 %v5372, %v5371
        %v7370 = vpack.c.b16 %v5374, %v5373
        %v7371 = vpack.c.b16 %v5376, %v5375
        %v7372 = vpack.c.b16 %v5378, %v5377
        %v7373 = vpack.c.b16 %v5380, %v5379
        %v7374 = vpack.c.b16 %v5382, %v5381
        %v7375 = vpack.c.b16 %v5384, %v5383
        %v7376 = vpack.c.b16 %v5386, %v5385
        %v7377 = vpack.c.b16 %v5388, %v5387
        %v7378 = vpack.c.b16 %v5390, %v5389
        %v7379 = vpack.c.b16 %v5392, %v5391
        %v7380 = vpack.c.b16 %v5394, %v5393
        %v7381 = vpack.c.b16 %v5396, %v5395
        %v7382 = vpack.c.b16 %v5398, %v5397
        %v7383 = vpack.c.b16 %v5400, %v5399
        %v7384 = vpack.c.b16 %v5402, %v5401
        %v7385 = vpack.c.b16 %v5404, %v5403
        %v7386 = vpack.c.b16 %v5406, %v5405
        %v7387 = vpack.c.b16 %v5408, %v5407
        %v7388 = vpack.c.b16 %v5410, %v5409
        %v7389 = vpack.c.b16 %v5412, %v5411
        %v7390 = vpack.c.b16 %v5414, %v5413
        %v7391 = vpack.c.b16 %v5416, %v5415
        %v7392 = vpack.c.b16 %v5418, %v5417
        %v7393 = vpack.c.b16 %v5420, %v5419
        %v7394 = vpack.c.b16 %v5422, %v5421
        %v7395 = vpack.c.b16 %v5424, %v5423
        %v7396 = vpack.c.b16 %v5426, %v5425
        %v7397 = vpack.c.b16 %v5428, %v5427
        %v7398 = vpack.c.b16 %v5430, %v5429
        %v7399 = vpack.c.b16 %v5432, %v5431
        %v7400 = vpack.c.b16 %v5434, %v5433
        %v7401 = vpack.c.b16 %v5436, %v5435
        %v7402 = vpack.c.b16 %v5438, %v5437
        %v7403 = vpack.c.b16 %v5440, %v5439
        %v7404 = vpack.c.b16 %v5442, %v5441
        %v7405 = vpack.c.b16 %v5444, %v5443
        %v7406 = vpack.c.b16 %v5446, %v5445
        %v7407 = vpack.c.b16 %v5448, %v5447
        %v7408 = vpack.c.b16 %v5450, %v5449
        %v7409 = vpack.c.b16 %v5452, %v5451
        %v7410 = vpack.c.b16 %v5454, %v5453
        %v7411 = vpack.c.b16 %v5456, %v5455
        %v7412 = vpack.c.b16 %v5458, %v5457
        %v7413 = vpack.c.b16 %v5460, %v5459
        %v7414 = vpack.c.b16 %v5462, %v5461
        %v7415 = vpack.c.b16 %v5464, %v5463
        %v7416 = vpack.c.b16 %v5466, %v5465
        %v7417 = vpack.c.b16 %v5468, %v5467
        %v7418 = vpack.c.b16 %v5470, %v5469
        %v7419 = vpack.c.b16 %v5472, %v5471
        %v7420 = vpack.c.b16 %v5474, %v5473
        %v7421 = vpack.c.b16 %v5476, %v5475
        %v7422 = vpack.c.b16 %v5478, %v5477
        %v7423 = vpack.c.b16 %v5480, %v5479
        %v7424 = vpack.c.b16 %v5482, %v5481
        %v7425 = vpack.c.b16 %v5484, %v5483
        %v7426 = vpack.c.b16 %v5486, %v5485
        %v7427 = vpack.c.b16 %v5488, %v5487
        %v7428 = vpack.c.b16 %v5490, %v5489
        %v7429 = vpack.c.b16 %v5492, %v5491
        %v7430 = vpack.c.b16 %v5494, %v5493
        %v7431 = vpack.c.b16 %v5496, %v5495
        %v7432 = vpack.c.b16 %v5498, %v5497
        %v7433 = vpack.c.b16 %v5500, %v5499
        %v7434 = vpack.c.b16 %v5502, %v5501
        %v7435 = vpack.c.b16 %v5504, %v5503
        %v7436 = vpack.c.b16 %v5506, %v5505
        %v7437 = vpack.c.b16 %v5508, %v5507
        %v7438 = vpack.c.b16 %v5510, %v5509
        %v7439 = vpack.c.b16 %v5512, %v5511
        %v7440 = vpack.c.b16 %v5514, %v5513
        %v7441 = vpack.c.b16 %v5516, %v5515
        %v7442 = vpack.c.b16 %v5518, %v5517
        %v7443 = vpack.c.b16 %v5520, %v5519
        %v7444 = vpack.c.b16 %v5522, %v5521
        %v7445 = vpack.c.b16 %v5524, %v5523
        %v7446 = vpack.c.b16 %v5526, %v5525
        %v7447 = vpack.c.b16 %v5528, %v5527
        %v7448 = vpack.c.b16 %v5530, %v5529
        %v7449 = vpack.c.b16 %v5532, %v5531
        %v7450 = vpack.c.b16 %v5534, %v5533
        %v7451 = vpack.c.b16 %v5536, %v5535
        %v7452 = vpack.c.b16 %v5538, %v5537
        %v7453 = vpack.c.b16 %v5540, %v5539
        %v7454 = vpack.c.b16 %v5542, %v5541
        %v7455 = vpack.c.b16 %v5544, %v5543
        %v7456 = vpack.c.b16 %v5546, %v5545
        %v7457 = vpack.c.b16 %v5548, %v5547
        %v7458 = vpack.c.b16 %v5550, %v5549
        %v7459 = vpack.c.b16 %v5552, %v5551
        %v7460 = vpack.c.b16 %v5554, %v5553
        %v7461 = vpack.c.b16 %v5556, %v5555
        %v7462 = vpack.c.b16 %v5558, %v5557
        %v7463 = vpack.c.b16 %v5560, %v5559
        %v7464 = vpack.c.b16 %v5562, %v5561
        %v7465 = vpack.c.b16 %v5564, %v5563
        %v7466 = vpack.c.b16 %v5566, %v5565
        %v7467 = vpack.c.b16 %v5568, %v5567
        %v7468 = vpack.c.b16 %v5570, %v5569
        %v7469 = vpack.c.b16 %v5572, %v5571
        %v7470 = vpack.c.b16 %v5574, %v5573
        %v7471 = vpack.c.b16 %v5576, %v5575
        %v7472 = vpack.c.b16 %v5578, %v5577
        %v7473 = vpack.c.b16 %v5580, %v5579
        %v7474 = vpack.c.b16 %v5582, %v5581
        %v7475 = vpack.c.b16 %v5584, %v5583
        %v7476 = vpack.c.b16 %v5586, %v5585
        %v7477 = vpack.c.b16 %v5588, %v5587
        %v7478 = vpack.c.b16 %v5590, %v5589
        %v7479 = vpack.c.b16 %v5592, %v5591
        %v7480 = vpack.c.b16 %v5594, %v5593
        %v7481 = vpack.c.b16 %v5596, %v5595
        %v7482 = vpack.c.b16 %v5598, %v5597
        %v7483 = vpack.c.b16 %v5600, %v5599
        %v7484 = vpack.c.b16 %v5602, %v5601
        %v7485 = vpack.c.b16 %v5604, %v5603
        %v7486 = vpack.c.b16 %v5606, %v5605
        %v7487 = vpack.c.b16 %v5608, %v5607
        %v7488 = vpack.c.b16 %v5610, %v5609
        %v7489 = vpack.c.b16 %v5612, %v5611
        %v7490 = vpack.c.b16 %v5614, %v5613
        %v7491 = vpack.c.b16 %v5616, %v5615
        %v7492 = vpack.c.b16 %v5618, %v5617
        %v7493 = vpack.c.b16 %v5620, %v5619
        %v7494 = vpack.c.b16 %v5622, %v5621
        %v7495 = vpack.c.b16 %v5624, %v5623
        %v7496 = vpack.c.b16 %v5626, %v5625
        %v7497 = vpack.c.b16 %v5628, %v5627
        %v7498 = vpack.c.b16 %v5630, %v5629
        %v7499 = vpack.c.b16 %v5632, %v5631
        %v7500 = vpack.c.b16 %v5634, %v5633
        %v7501 = vpack.c.b16 %v5636, %v5635
        %v7502 = vpack.c.b16 %v5638, %v5637
        %v7503 = vpack.c.b16 %v5640, %v5639
        %v7504 = vpack.c.b16 %v5642, %v5641
        %v7505 = vpack.c.b16 %v5644, %v5643
        %v7506 = vpack.c.b16 %v5646, %v5645
        %v7507 = vpack.c.b16 %v5648, %v5647
        %v7508 = vpack.c.b16 %v5650, %v5649
        %v7509 = vpack.c.b16 %v5652, %v5651
        %v7510 = vpack.c.b16 %v5654, %v5653
        %v7511 = vpack.c.b16 %v5656, %v5655
        %v7512 = vpack.c.b16 %v5658, %v5657
        %v7513 = vpack.c.b16 %v5660, %v5659
        %v7514 = vpack.c.b16 %v5662, %v5661
        %v7515 = vpack.c.b16 %v5664, %v5663
        %v7516 = vpack.c.b16 %v5666, %v5665
        %v7517 = vpack.c.b16 %v5668, %v5667
        %v7518 = vpack.c.b16 %v5670, %v5669
        %v7519 = vpack.c.b16 %v5672, %v5671
        %v7520 = vpack.c.b16 %v5674, %v5673
        %v7521 = vpack.c.b16 %v5676, %v5675
        %v7522 = vpack.c.b16 %v5678, %v5677
        %v7523 = vpack.c.b16 %v5680, %v5679
        %v7524 = vpack.c.b16 %v5682, %v5681
        %v7525 = vpack.c.b16 %v5684, %v5683
        %v7526 = vpack.c.b16 %v5686, %v5685
        %v7527 = vpack.c.b16 %v5688, %v5687
        %v7528 = vpack.c.b16 %v5690, %v5689
        %v7529 = vpack.c.b16 %v5692, %v5691
        %v7530 = vpack.c.b16 %v5694, %v5693
        %v7531 = vpack.c.b16 %v5696, %v5695
        %v7532 = vpack.c.b16 %v5698, %v5697
        %v7533 = vpack.c.b16 %v5700, %v5699
        %v7534 = vpack.c.b16 %v5702, %v5701
        %v7535 = vpack.c.b16 %v5704, %v5703
        %v7536 = vpack.c.b16 %v5706, %v5705
        %v7537 = vpack.c.b16 %v5708, %v5707
        %v7538 = vpack.c.b16 %v5710, %v5709
        %v7539 = vpack.c.b16 %v5712, %v5711
        %v7540 = vpack.c.b16 %v5714, %v5713
        %v7541 = vpack.c.b16 %v5716, %v5715
        %v7542 = vpack.c.b16 %v5718, %v5717
        %v7543 = vpack.c.b16 %v5720, %v5719
        %v7544 = vpack.c.b16 %v5722, %v5721
        %v7545 = vpack.c.b16 %v5724, %v5723
        %v7546 = vpack.c.b16 %v5726, %v5725
        %v7547 = vpack.c.b16 %v5728, %v5727
        %v7548 = vpack.c.b16 %v5730, %v5729
        %v7549 = vpack.c.b16 %v5732, %v5731
        %v7550 = vpack.c.b16 %v5734, %v5733
        %v7551 = vpack.c.b16 %v5736, %v5735
        %v7552 = vpack.c.b16 %v5738, %v5737
        %v7553 = vpack.c.b16 %v5740, %v5739
        %v7554 = vpack.c.b16 %v5742, %v5741
        %v7555 = vpack.c.b16 %v5744, %v5743
        %v7556 = vpack.c.b16 %v5746, %v5745
        %v7557 = vpack.c.b16 %v5748, %v5747
        %v7558 = vpack.c.b16 %v5750, %v5749
        %v7559 = vpack.c.b16 %v5752, %v5751
        %v7560 = vpack.c.b16 %v5754, %v5753
        %v7561 = vpack.c.b16 %v5756, %v5755
        %v7562 = vpack.c.b16 %v5758, %v5757
        %v7563 = vpack.c.b16 %v5760, %v5759
        %v7564 = vpack.c.b16 %v5762, %v5761
        %v7565 = vpack.c.b16 %v5764, %v5763
        %v7566 = vpack.c.b16 %v5766, %v5765
        %v7567 = vpack.c.b16 %v5768, %v5767
        %v7568 = vpack.c.b16 %v5770, %v5769
        %v7569 = vpack.c.b16 %v5772, %v5771
        %v7570 = vpack.c.b16 %v5774, %v5773
        %v7571 = vpack.c.b16 %v5776, %v5775
        %v7572 = vpack.c.b16 %v5778, %v5777
        %v7573 = vpack.c.b16 %v5780, %v5779
        %v7574 = vpack.c.b16 %v5782, %v5781
        %v7575 = vpack.c.b16 %v5784, %v5783
        %v7576 = vpack.c.b16 %v5786, %v5785
        %v7577 = vpack.c.b16 %v5788, %v5787
        %v7578 = vpack.c.b16 %v5790, %v5789
        %v7579 = vpack.c.b16 %v5792, %v5791
        %v7580 = vpack.c.b16 %v5794, %v5793
        %v7581 = vpack.c.b16 %v5796, %v5795
        %v7582 = vpack.c.b16 %v5798, %v5797
        %v7583 = vpack.c.b16 %v5800, %v5799
        %v7584 = vpack.c.b16 %v5802, %v5801
        %v7585 = vpack.c.b16 %v5804, %v5803
        %v7586 = vpack.c.b16 %v5806, %v5805
        %v7587 = vpack.c.b16 %v5808, %v5807
        %v7588 = vpack.c.b16 %v5810, %v5809
        %v7589 = vpack.c.b16 %v5812, %v5811
        %v7590 = vpack.c.b16 %v5814, %v5813
        %v7591 = vpack.c.b16 %v5816, %v5815
        %v7592 = vpack.c.b16 %v5818, %v5817
        %v7593 = vpack.c.b16 %v5820, %v5819
        %v7594 = vpack.c.b16 %v5822, %v5821
        %v7595 = vpack.c.b16 %v5824, %v5823
        %v7596 = vpack.c.b16 %v5826, %v5825
        %v7597 = vpack.c.b16 %v5828, %v5827
        %v7598 = vpack.c.b16 %v5830, %v5829
        %v7599 = vpack.c.b16 %v5832, %v5831
        %v7600 = vpack.c.b16 %v5834, %v5833
        %v7601 = vpack.c.b16 %v5836, %v5835
        %v7602 = vpack.c.b16 %v5838, %v5837
        %v7603 = vpack.c.b16 %v5840, %v5839
        %v7604 = vpack.c.b16 %v5842, %v5841
        %v7605 = vpack.c.b16 %v5844, %v5843
        %v7606 = vpack.c.b16 %v5846, %v5845
        %v7607 = vpack.c.b16 %v5848, %v5847
        %v7608 = vpack.c.b16 %v5850, %v5849
        %v7609 = vpack.c.b16 %v5852, %v5851
        %v7610 = vpack.c.b16 %v5854, %v5853
        %v7611 = vpack.c.b16 %v5856, %v5855
        %v7612 = vpack.c.b16 %v5858, %v5857
        %v7613 = vpack.c.b16 %v5860, %v5859
        %v7614 = vpack.c.b16 %v5862, %v5861
        %v7615 = vpack.c.b16 %v5864, %v5863
        %v7616 = vpack.c.b16 %v5866, %v5865
        %v7617 = vpack.c.b16 %v5868, %v5867
        %v7618 = vpack.c.b16 %v5870, %v5869
        %v7619 = vpack.c.b16 %v5872, %v5871
        %v7620 = vpack.c.b16 %v5874, %v5873
        %v7621 = vpack.c.b16 %v5876, %v5875
        %v7622 = vpack.c.b16 %v5878, %v5877
        %v7623 = vpack.c.b16 %v5880, %v5879
        %v7624 = vpack.c.b16 %v5882, %v5881
        %v7625 = vpack.c.b16 %v5884, %v5883
        %v7626 = vpack.c.b16 %v5886, %v5885
        %v7627 = vpack.c.b16 %v5888, %v5887
        %v7628 = vpack.c.b16 %v5890, %v5889
        %v7629 = vpack.c.b16 %v5892, %v5891
        %v7630 = vpack.c.b16 %v5894, %v5893
        %v7631 = vpack.c.b16 %v5896, %v5895
        %v7632 = vpack.c.b16 %v5898, %v5897
        %v7633 = vpack.c.b16 %v5900, %v5899
        %v7634 = vpack.c.b16 %v5902, %v5901
        %v7635 = vpack.c.b16 %v5904, %v5903
        %v7636 = vpack.c.b16 %v5906, %v5905
        %v7637 = vpack.c.b16 %v5908, %v5907
        %v7638 = vpack.c.b16 %v5910, %v5909
        %v7639 = vpack.c.b16 %v5912, %v5911
        %v7640 = vpack.c.b16 %v5914, %v5913
        %v7641 = vpack.c.b16 %v5916, %v5915
        %v7642 = vpack.c.b16 %v5918, %v5917
        %v7643 = vpack.c.b16 %v5920, %v5919
        %v7644 = vpack.c.b16 %v5922, %v5921
        %v7645 = vpack.c.b16 %v5924, %v5923
        %v7646 = vpack.c.b16 %v5926, %v5925
        %v7647 = vpack.c.b16 %v5928, %v5927
        %v7648 = vpack.c.b16 %v5930, %v5929
        %v7649 = vpack.c.b16 %v5932, %v5931
        %v7650 = vpack.c.b16 %v5934, %v5933
        %v7651 = vpack.c.b16 %v5936, %v5935
        %v7652 = vpack.c.b16 %v5938, %v5937
        %v7653 = vpack.c.b16 %v5940, %v5939
        %v7654 = vpack.c.b16 %v5942, %v5941
        %v7655 = vpack.c.b16 %v5944, %v5943
        %v7656 = vpack.c.b16 %v5946, %v5945
        %v7657 = vpack.c.b16 %v5948, %v5947
        %v7658 = vpack.c.b16 %v5950, %v5949
        %v7659 = vpack.c.b16 %v5952, %v5951
        %v7660 = vpack.c.b16 %v5954, %v5953
        %v7661 = vpack.c.b16 %v5956, %v5955
        %v7662 = vpack.c.b16 %v5958, %v5957
        %v7663 = vpack.c.b16 %v5960, %v5959
        %v7664 = vpack.c.b16 %v5962, %v5961
        %v7665 = vpack.c.b16 %v5964, %v5963
        %v7666 = vpack.c.b16 %v5966, %v5965
        %v7667 = vpack.c.b16 %v5968, %v5967
        %v7668 = vpack.c.b16 %v5970, %v5969
        %v7669 = vpack.c.b16 %v5972, %v5971
        %v7670 = vpack.c.b16 %v5974, %v5973
        %v7671 = vpack.c.b16 %v5976, %v5975
        %v7672 = vpack.c.b16 %v5978, %v5977
        %v7673 = vpack.c.b16 %v5980, %v5979
        %v7674 = vpack.c.b16 %v5982, %v5981
        %v7675 = vpack.c.b16 %v5984, %v5983
        %v7676 = vpack.c.b16 %v5986, %v5985
        %v7677 = vpack.c.b16 %v5988, %v5987
        %v7678 = vpack.c.b16 %v5990, %v5989
        %v7679 = vpack.c.b16 %v5992, %v5991
        %v7680 = vpack.c.b16 %v5994, %v5993
        %v7681 = vpack.c.b16 %v5996, %v5995
        %v7682 = vpack.c.b16 %v5998, %v5997
        %v7683 = vpack.c.b16 %v6000, %v5999
        %v7684 = vpack.c.b16 %v6002, %v6001
        %v7685 = vpack.c.b16 %v6004, %v6003
        %v7686 = vpack.c.b16 %v6006, %v6005
        %v7687 = vpack.c.b16 %v6008, %v6007
        %v7688 = vpack.c.b16 %v6010, %v6009
        %v7689 = vpack.c.b16 %v6012, %v6011
        %v7690 = vpack.c.b16 %v6014, %v6013
        %v7691 = vpack.c.b16 %v6016, %v6015
        %v7692 = vpack.c.b16 %v6018, %v6017
        %v7693 = vpack.c.b16 %v6020, %v6019
        %v7694 = vpack.c.b16 %v6022, %v6021
        %v7695 = vpack.c.b16 %v6024, %v6023
        %v7696 = vpack.c.b16 %v6026, %v6025
        %v7697 = vpack.c.b16 %v6028, %v6027
        %v7698 = vpack.c.b16 %v6030, %v6029
        %v7699 = vpack.c.b16 %v6032, %v6031
        %v7700 = vpack.c.b16 %v6034, %v6033
        %v7701 = vpack.c.b16 %v6036, %v6035
        %v7702 = vpack.c.b16 %v6038, %v6037
        %v7703 = vpack.c.b16 %v6040, %v6039
        %v7704 = vpack.c.b16 %v6042, %v6041
        %v7705 = vpack.c.b16 %v6044, %v6043
        %v7706 = vpack.c.b16 %v6046, %v6045
        %v7707 = vpack.c.b16 %v6048, %v6047
        %v7708 = vpack.c.b16 %v6050, %v6049
        %v7709 = vpack.c.b16 %v6052, %v6051
        %v7710 = vpack.c.b16 %v6054, %v6053
        %v7711 = vpack.c.b16 %v6056, %v6055
        %v7712 = vpack.c.b16 %v6058, %v6057
        %v7713 = vpack.c.b16 %v6060, %v6059
        %v7714 = vpack.c.b16 %v6062, %v6061
        %v7715 = vpack.c.b16 %v6064, %v6063
        %v7716 = vpack.c.b16 %v6066, %v6065
        %v7717 = vpack.c.b16 %v6068, %v6067
        %v7718 = vpack.c.b16 %v6070, %v6069
        %v7719 = vpack.c.b16 %v6072, %v6071
        %v7720 = vpack.c.b16 %v6074, %v6073
        %v7721 = vpack.c.b16 %v6076, %v6075
        %v7722 = vpack.c.b16 %v6078, %v6077
        %v7723 = vpack.c.b16 %v6080, %v6079
        %v7724 = vpack.c.b16 %v6082, %v6081
        %v7725 = vpack.c.b16 %v6084, %v6083
        %v7726 = vpack.c.b16 %v6086, %v6085
        %v7727 = vpack.c.b16 %v6088, %v6087
        %v7728 = vpack.c.b16 %v6090, %v6089
        %v7729 = vpack.c.b16 %v6092, %v6091
        %v7730 = vpack.c.b16 %v6094, %v6093
        %v7731 = vpack.c.b16 %v6096, %v6095
        %v7732 = vpack.c.b16 %v6098, %v6097
        %v7733 = vpack.c.b16 %v6100, %v6099
        %v7734 = vpack.c.b16 %v6102, %v6101
        %v7735 = vpack.c.b16 %v6104, %v6103
        %v7736 = vpack.c.b16 %v6106, %v6105
        %v7737 = vpack.c.b16 %v6108, %v6107
        %v7738 = vpack.c.b16 %v6110, %v6109
        %v7739 = vpack.c.b16 %v6112, %v6111
        %v7740 = vpack.c.b16 %v6114, %v6113
        %v7741 = vpack.c.b16 %v6116, %v6115
        %v7742 = vpack.c.b16 %v6118, %v6117
        %v7743 = vpack.c.b16 %v6120, %v6119
        %v7744 = vpack.c.b16 %v6122, %v6121
        %v7745 = vpack.c.b16 %v6124, %v6123
        %v7746 = vpack.c.b16 %v6126, %v6125
        %v7747 = vpack.c.b16 %v6128, %v6127
        %v7748 = vpack.c.b16 %v6130, %v6129
        %v7749 = vpack.c.b16 %v6132, %v6131
        %v7750 = vpack.c.b16 %v6134, %v6133
        %v7751 = vpack.c.b16 %v6136, %v6135
        %v7752 = vpack.c.b16 %v6138, %v6137
        %v7753 = vpack.c.b16 %v6140, %v6139
        %v7754 = vpack.c.b16 %v6142, %v6141
        %v7755 = vpack.c.b16 %v6144, %v6143
        %v7756 = vpack.c.b16 %v6146, %v6145
        %v7757 = vpack.c.b16 %v6148, %v6147
        %v7758 = vpack.c.b16 %v6150, %v6149
        %v7759 = vpack.c.b16 %v6152, %v6151
        %v7760 = vpack.c.b16 %v6154, %v6153
        %v7761 = vpack.c.b16 %v6156, %v6155
        %v7762 = vpack.c.b16 %v6158, %v6157
        %v7763 = vpack.c.b16 %v6160, %v6159
        %v7764 = vpack.c.b16 %v6162, %v6161
        %v7765 = vpack.c.b16 %v6164, %v6163
        %v7766 = vpack.c.b16 %v6166, %v6165
        %v7767 = vpack.c.b16 %v6168, %v6167
        %v7768 = vpack.c.b16 %v6170, %v6169
        %v7769 = vpack.c.b16 %v6172, %v6171
        %v7770 = vpack.c.b16 %v6174, %v6173
        %v7771 = vpack.c.b16 %v6176, %v6175
        %v7772 = vpack.c.b16 %v6178, %v6177
        %v7773 = vpack.c.b16 %v6180, %v6179
        %v7774 = vpack.c.b16 %v6182, %v6181
        %v7775 = vpack.c.b16 %v6184, %v6183
        %v7776 = vpack.c.b16 %v6186, %v6185
        %v7777 = vpack.c.b16 %v6188, %v6187
        %v7778 = vpack.c.b16 %v6190, %v6189
        %v7779 = vpack.c.b16 %v6192, %v6191
        %v7780 = vpack.c.b16 %v6194, %v6193
        %v7781 = vpack.c.b16 %v6196, %v6195
        %v7782 = vpack.c.b16 %v6198, %v6197
        %v7783 = vpack.c.b16 %v6200, %v6199
        %v7784 = vpack.c.b16 %v6202, %v6201
        %v7785 = vpack.c.b16 %v6204, %v6203
        %v7786 = vpack.c.b16 %v6206, %v6205
        %v7787 = vpack.c.b16 %v6208, %v6207
        %v7788 = vpack.c.b16 %v6210, %v6209
        %v7789 = vpack.c.b16 %v6212, %v6211
        %v7790 = vpack.c.b16 %v6214, %v6213
        %v7791 = vpack.c.b16 %v6216, %v6215
        %v7792 = vpack.c.b16 %v6218, %v6217
        %v7793 = vpack.c.b16 %v6220, %v6219
        %v7794 = vpack.c.b16 %v6222, %v6221
        %v7795 = vpack.c.b16 %v6224, %v6223
        %v7796 = vpack.c.b16 %v6226, %v6225
        %v7797 = vpack.c.b16 %v6228, %v6227
        %v7798 = vpack.c.b16 %v6230, %v6229
        %v7799 = vpack.c.b16 %v6232, %v6231
        %v7800 = vpack.c.b16 %v6234, %v6233
        %v7801 = vpack.c.b16 %v6236, %v6235
        %v7802 = vpack.c.b16 %v6238, %v6237
        %v7803 = vpack.c.b16 %v6240, %v6239
        %v7804 = vpack.c.b16 %v6242, %v6241
        %v7805 = vpack.c.b16 %v6244, %v6243
        %v7806 = vpack.c.b16 %v6246, %v6245
        %v7807 = vpack.c.b16 %v6248, %v6247
        %v7808 = vpack.c.b16 %v6250, %v6249
        %v7809 = vpack.c.b16 %v6252, %v6251
        %v7810 = vpack.c.b16 %v6254, %v6253
        %v7811 = vpack.c.b16 %v6256, %v6255
        %v7812 = vpack.c.b16 %v6258, %v6257
        %v7813 = vpack.c.b16 %v6260, %v6259
        %v7814 = vpack.c.b16 %v6262, %v6261
        %v7815 = vpack.c.b16 %v6264, %v6263
        %v7816 = vpack.c.b16 %v6266, %v6265
        %v7817 = vpack.c.b16 %v6268, %v6267
        %v7818 = vpack.c.b16 %v6270, %v6269
        %v7819 = vpack.c.b16 %v6272, %v6271
        %v7820 = vpack.c.b16 %v6274, %v6273
        %v7821 = vpack.c.b16 %v6276, %v6275
        %v7822 = vpack.c.b16 %v6278, %v6277
        %v7823 = vpack.c.b16 %v6280, %v6279
        %v7824 = vpack.c.b16 %v6282, %v6281
        %v7825 = vpack.c.b16 %v6284, %v6283
        %v7826 = vpack.c.b16 %v6286, %v6285
        %v7827 = vpack.c.b16 %v6288, %v6287
        %v7828 = vpack.c.b16 %v6290, %v6289
        %v7829 = vpack.c.b16 %v6292, %v6291
        %v7830 = vpack.c.b16 %v6294, %v6293
        %v7831 = vpack.c.b16 %v6296, %v6295
        %v7832 = vpack.c.b16 %v6298, %v6297
        %v7833 = vpack.c.b16 %v6300, %v6299
        %v7834 = vpack.c.b16 %v6302, %v6301
        %v7835 = vpack.c.b16 %v6304, %v6303
        %v7836 = vpack.c.b16 %v6306, %v6305
        %v7837 = vpack.c.b16 %v6308, %v6307
        %v7838 = vpack.c.b16 %v6310, %v6309
        %v7839 = vpack.c.b16 %v6312, %v6311
        %v7840 = vpack.c.b16 %v6314, %v6313
        %v7841 = vpack.c.b16 %v6316, %v6315
        %v7842 = vpack.c.b16 %v6318, %v6317
        %v7843 = vpack.c.b16 %v6320, %v6319
        %v7844 = vpack.c.b16 %v6322, %v6321
        %v7845 = vpack.c.b16 %v6324, %v6323
        %v7846 = vpack.c.b16 %v6326, %v6325
        %v7847 = vpack.c.b16 %v6328, %v6327
        %v7848 = vpack.c.b16 %v6330, %v6329
        %v7849 = vpack.c.b16 %v6332, %v6331
        %v7850 = vpack.c.b16 %v6334, %v6333
        %v7851 = vpack.c.b16 %v6336, %v6335
        %v7852 = vpack.c.b16 %v6338, %v6337
        %v7853 = vpack.c.b16 %v6340, %v6339
        %v7854 = vpack.c.b16 %v6342, %v6341
        %v7855 = vpack.c.b16 %v6344, %v6343
        %v7856 = vpack.c.b16 %v6346, %v6345
        %v7857 = vpack.c.b16 %v6348, %v6347
        %v7858 = vpack.c.b16 %v6350, %v6349
        %v7859 = vpack.c.b16 %v6352, %v6351
        %v7860 = vpack.c.b16 %v6354, %v6353
        %v7861 = vpack.c.b16 %v6356, %v6355
        %v7862 = vpack.c.b16 %v6358, %v6357
        %v7863 = vpack.c.b16 %v6360, %v6359
        %v7864 = vpack.c.b16 %v6362, %v6361
        %v7865 = vpack.c.b16 %v6364, %v6363
        %v7866 = vpack.c.b16 %v6366, %v6365
        %v7867 = vpack.c.b16 %v6368, %v6367
        %v7868 = vpack.c.b16 %v6370, %v6369
        %v7869 = vpack.c.b16 %v6372, %v6371
        %v7870 = vpack.c.b16 %v6374, %v6373
        %v7871 = vpack.c.b16 %v6376, %v6375
        %v7872 = vpack.c.b16 %v6378, %v6377
        %v7873 = vpack.c.b16 %v6380, %v6379
        %v7874 = vpack.c.b16 %v6382, %v6381
        %v7875 = vpack.c.b16 %v6384, %v6383
        %v7876 = vpack.c.b16 %v6386, %v6385
        %v7877 = vpack.c.b16 %v6388, %v6387
        %v7878 = vpack.c.b16 %v6390, %v6389
        %v7879 = vpack.c.b16 %v6392, %v6391
        %v7880 = vpack.c.b16 %v6394, %v6393
        %v7881 = vpack.c.b16 %v6396, %v6395
        %v7882 = vpack.c.b16 %v6398, %v6397
        %v7883 = vpack.c.b16 %v6400, %v6399
        %v7884 = vpack.c.b16 %v6402, %v6401
        %v7885 = vpack.c.b16 %v6404, %v6403
        %v7886 = vpack.c.b16 %v6406, %v6405
        %v7887 = vpack.c.b16 %v6408, %v6407
        %v7888 = vpack.c.b16 %v6410, %v6409
        %v7889 = vpack.c.b16 %v6412, %v6411
        %v7890 = vpack.c.b16 %v6414, %v6413
        %v7891 = vpack.c.b16 %v6416, %v6415
        %v7892 = vpack.c.b16 %v6418, %v6417
        %v7893 = vpack.c.b16 %v6420, %v6419
        %v7894 = vpack.c.b16 %v6422, %v6421
        %v7895 = vpack.c.b16 %v6424, %v6423
        %v7896 = vpack.c.b16 %v6426, %v6425
        %v7897 = vpack.c.b16 %v6428, %v6427
        %v7898 = vpack.c.b16 %v6430, %v6429
        %v7899 = vpack.c.b16 %v6432, %v6431
        %v7900 = vpack.c.b16 %v6434, %v6433
        %v7901 = vpack.c.b16 %v6436, %v6435
        %v7902 = vpack.c.b16 %v6438, %v6437
        %v7903 = vpack.c.b16 %v6440, %v6439
        %v7904 = vpack.c.b16 %v6442, %v6441
        %v7905 = vpack.c.b16 %v6444, %v6443
        %v7906 = vpack.c.b16 %v6446, %v6445
        %v7907 = vpack.c.b16 %v6448, %v6447
        %v7908 = vpack.c.b16 %v6450, %v6449
        %v7909 = vpack.c.b16 %v6452, %v6451
        %v7910 = vpack.c.b16 %v6454, %v6453
        %v7911 = vpack.c.b16 %v6456, %v6455
        %v7912 = vpack.c.b16 %v6458, %v6457
        %v7913 = vpack.c.b16 %v6460, %v6459
        %v7914 = vpack.c.b16 %v6462, %v6461
        %v7915 = vpack.c.b16 %v6464, %v6463
        %v7916 = vpack.c.b16 %v6466, %v6465
        %v7917 = vpack.c.b16 %v6468, %v6467
        %v7918 = vpack.c.b16 %v6470, %v6469
        %v7919 = vpack.c.b16 %v6472, %v6471
        %v7920 = vpack.c.b16 %v6474, %v6473
        %v7921 = vpack.c.b16 %v6476, %v6475
        %v7922 = vpack.c.b16 %v6478, %v6477
        %v7923 = vpack.c.b16 %v6480, %v6479
        %v7924 = vpack.c.b16 %v6482, %v6481
        %v7925 = vpack.c.b16 %v6484, %v6483
        %v7926 = vpack.c.b16 %v6486, %v6485
        %v7927 = vpack.c.b16 %v6488, %v6487
        %v7928 = vpack.c.b16 %v6490, %v6489
        %v7929 = vpack.c.b16 %v6492, %v6491
        %v7930 = vpack.c.b16 %v6494, %v6493
        %v7931 = vpack.c.b16 %v6496, %v6495
        %v7932 = vpack.c.b16 %v6498, %v6497
        %v7933 = vpack.c.b16 %v6500, %v6499
        %v7934 = vpack.c.b16 %v6502, %v6501
        %v7935 = vpack.c.b16 %v6504, %v6503
        %v7936 = vpack.c.b16 %v6506, %v6505
        %v7937 = vpack.c.b16 %v6508, %v6507
        %v7938 = vpack.c.b16 %v6510, %v6509
        %v7939 = vpack.c.b16 %v6512, %v6511
        %v7940 = vpack.c.b16 %v6514, %v6513
        %v7941 = vpack.c.b16 %v6516, %v6515
        %v7942 = vpack.c.b16 %v6518, %v6517
        %v7943 = vpack.c.b16 %v6520, %v6519
        %v7944 = vpack.c.b16 %v6522, %v6521
        %v7945 = vpack.c.b16 %v6524, %v6523
        %v7946 = vpack.c.b16 %v6526, %v6525
        %v7947 = vpack.c.b16 %v6528, %v6527
        %v7948 = vpack.c.b16 %v6530, %v6529
        %v7949 = vpack.c.b16 %v6532, %v6531
        %v7950 = vpack.c.b16 %v6534, %v6533
        %v7951 = vpack.c.b16 %v6536, %v6535
        %v7952 = vpack.c.b16 %v6538, %v6537
        %v7953 = vpack.c.b16 %v6540, %v6539
        %v7954 = vpack.c.b16 %v6542, %v6541
        %v7955 = vpack.c.b16 %v6544, %v6543
        %v7956 = vpack.c.b16 %v6546, %v6545
        %v7957 = vpack.c.b16 %v6548, %v6547
        %v7958 = vpack.c.b16 %v6550, %v6549
        %v7959 = vpack.c.b16 %v6552, %v6551
        %v7960 = vpack.c.b16 %v6554, %v6553
        %v7961 = vpack.c.b16 %v6556, %v6555
        %v7962 = vpack.c.b16 %v6558, %v6557
        %v7963 = vpack.c.b16 %v6560, %v6559
        %v7964 = vpack.c.b16 %v6562, %v6561
        %v7965 = vpack.c.b16 %v6564, %v6563
        %v7966 = vpack.c.b16 %v6566, %v6565
        %v7967 = vpack.c.b16 %v6568, %v6567
        %v7968 = vpack.c.b16 %v6570, %v6569
        %v7969 = vpack.c.b16 %v6572, %v6571
        %v7970 = vpack.c.b16 %v6574, %v6573
        %v7971 = vpack.c.b16 %v6576, %v6575
        %v7972 = vpack.c.b16 %v6578, %v6577
        %v7973 = vpack.c.b16 %v6580, %v6579
        %v7974 = vpack.c.b16 %v6582, %v6581
        %v7975 = vpack.c.b16 %v6584, %v6583
        %v7976 = vpack.c.b16 %v6586, %v6585
        %v7977 = vpack.c.b16 %v6588, %v6587
        %v7978 = vpack.c.b16 %v6590, %v6589
        %v7979 = vpack.c.b16 %v6592, %v6591
        %v7980 = vpack.c.b16 %v6594, %v6593
        %v7981 = vpack.c.b16 %v6596, %v6595
        %v7982 = vpack.c.b16 %v6598, %v6597
        %v7983 = vpack.c.b16 %v6600, %v6599
        %v7984 = vpack.c.b16 %v6602, %v6601
        %v7985 = vpack.c.b16 %v6604, %v6603
        %v7986 = vpack.c.b16 %v6606, %v6605
        %v7987 = vpack.c.b16 %v6608, %v6607
        %v7988 = vpack.c.b16 %v6610, %v6609
        %v7989 = vpack.c.b16 %v6612, %v6611
        %v7990 = vpack.c.b16 %v6614, %v6613
        %v7991 = vpack.c.b16 %v6616, %v6615
        %v7992 = vpack.c.b16 %v6618, %v6617
        %v7993 = vpack.c.b16 %v6620, %v6619
        %v7994 = vpack.c.b16 %v6622, %v6621
        %v7995 = vpack.c.b16 %v6624, %v6623
        %v7996 = vpack.c.b16 %v6626, %v6625
        %v7997 = vpack.c.b16 %v6628, %v6627
        %v7998 = vpack.c.b16 %v6630, %v6629
        %v7999 = vpack.c.b16 %v6632, %v6631
        %v8000 = vpack.c.b16 %v6634, %v6633
        %v8001 = vpack.c.b16 %v6636, %v6635
        %v8002 = vpack.c.b16 %v6638, %v6637
        %v8003 = vpack.c.b16 %v6640, %v6639
        %v8004 = vpack.c.b16 %v6642, %v6641
        %v8005 = vpack.c.b16 %v6644, %v6643
        %v8006 = vpack.c.b16 %v6646, %v6645
        %v8007 = vpack.c.b16 %v6648, %v6647
        %v8008 = vpack.c.b16 %v6650, %v6649
        %v8009 = vpack.c.b16 %v6652, %v6651
        %v8010 = vpack.c.b16 %v6654, %v6653
        %v8011 = vpack.c.b16 %v6656, %v6655
        %v8012 = vpack.c.b16 %v6658, %v6657
        %v8013 = vpack.c.b16 %v6660, %v6659
        %v8014 = vpack.c.b16 %v6662, %v6661
        %v8015 = vpack.c.b16 %v6664, %v6663
        %v8016 = vpack.c.b16 %v6666, %v6665
        %v8017 = vpack.c.b16 %v6668, %v6667
        %v8018 = vpack.c.b16 %v6670, %v6669
        %v8019 = vpack.c.b16 %v6672, %v6671
        %v8020 = vpack.c.b16 %v6674, %v6673
        %v8021 = vpack.c.b16 %v6676, %v6675
        %v8022 = vpack.c.b16 %v6678, %v6677
        %v8023 = vpack.c.b16 %v6680, %v6679
        %v8024 = vpack.c.b16 %v6682, %v6681
        %v8025 = vpack.c.b16 %v6684, %v6683
        %v8026 = vpack.c.b16 %v6686, %v6685
        %v8027 = vpack.c.b16 %v6688, %v6687
        %v8028 = vpack.c.b16 %v6690, %v6689
        %v8029 = vpack.c.b16 %v6692, %v6691
        %v8030 = vpack.c.b16 %v6694, %v6693
        %v8031 = vpack.c.b16 %v6696, %v6695
        %v8032 = vpack.c.b16 %v6698, %v6697
        %v8033 = vpack.c.b16 %v6700, %v6699
        %v8034 = vpack.c.b16 %v6702, %v6701
        %v8035 = vpack.c.b16 %v6704, %v6703
        %v8036 = vpack.c.b16 %v6706, %v6705
        %v8037 = vpack.c.b16 %v6708, %v6707
        %v8038 = vpack.c.b16 %v6710, %v6709
        %v8039 = vpack.c.b16 %v6712, %v6711
        %v8040 = vpack.c.b16 %v6714, %v6713
        %v8041 = vpack.c.b16 %v6716, %v6715
        %v8042 = vpack.c.b16 %v6718, %v6717
        %v8043 = vpack.c.b16 %v6720, %v6719
        %v8044 = vpack.c.b16 %v6722, %v6721
        %v8045 = vpack.c.b16 %v6724, %v6723
        %v8046 = vpack.c.b16 %v6726, %v6725
        %v8047 = vpack.c.b16 %v6728, %v6727
        %v8048 = vpack.c.b16 %v6730, %v6729
        %v8049 = vpack.c.b16 %v6732, %v6731
        %v8050 = vpack.c.b16 %v6734, %v6733
        %v8051 = vpack.c.b16 %v6736, %v6735
        %v8052 = vpack.c.b16 %v6738, %v6737
        %v8053 = vpack.c.b16 %v6740, %v6739
        %v8054 = vpack.c.b16 %v6742, %v6741
        %v8055 = vpack.c.b16 %v6744, %v6743
        %v8056 = vpack.c.b16 %v6746, %v6745
        %v8057 = vpack.c.b16 %v6748, %v6747
        %v8058 = vpack.c.b16 %v6750, %v6749
        %v8059 = vpack.c.b16 %v6752, %v6751
        %v8060 = vpack.c.b16 %v6754, %v6753
        %v8061 = vpack.c.b16 %v6756, %v6755
        %v8062 = vpack.c.b16 %v6758, %v6757
        %v8063 = vpack.c.b16 %v6760, %v6759
        %v8064 = vpack.c.b16 %v6762, %v6761
        %v8065 = vpack.c.b16 %v6764, %v6763
        %v8066 = vpack.c.b16 %v6766, %v6765
        %v8067 = vpack.c.b16 %v6768, %v6767
        %v8068 = vpack.c.b16 %v6770, %v6769
        %v8069 = vpack.c.b16 %v6772, %v6771
        %v8070 = vpack.c.b16 %v6774, %v6773
        %v8071 = vpack.c.b16 %v6776, %v6775
        %v8072 = vpack.c.b16 %v6778, %v6777
        %v8073 = vpack.c.b16 %v6780, %v6779
        %v8074 = vpack.c.b16 %v6782, %v6781
        %v8075 = vpack.c.b16 %v6784, %v6783
        %v8076 = vpack.c.b16 %v6786, %v6785
        %v8077 = vpack.c.b16 %v6788, %v6787
        %v8078 = vpack.c.b16 %v6790, %v6789
        %v8079 = vpack.c.b16 %v6792, %v6791
        %v8080 = vpack.c.b16 %v6794, %v6793
        %v8081 = vpack.c.b16 %v6796, %v6795
        %v8082 = vpack.c.b16 %v6798, %v6797
        %v8083 = vpack.c.b16 %v6800, %v6799
        %v8084 = vpack.c.b16 %v6802, %v6801
        %v8085 = vpack.c.b16 %v6804, %v6803
        %v8086 = vpack.c.b16 %v6806, %v6805
        %v8087 = vpack.c.b16 %v6808, %v6807
        %v8088 = vpack.c.b16 %v6810, %v6809
        %v8089 = vpack.c.b16 %v6812, %v6811
        %v8090 = vpack.c.b16 %v6814, %v6813
        %v8091 = vpack.c.b16 %v6816, %v6815
        %v8092 = vpack.c.b16 %v6818, %v6817
        %v8093 = vpack.c.b16 %v6820, %v6819
        %v8094 = vpack.c.b16 %v6822, %v6821
        %v8095 = vpack.c.b16 %v6824, %v6823
        %v8096 = vpack.c.b16 %v6826, %v6825
        %v8097 = vpack.c.b16 %v6828, %v6827
        %v8098 = vpack.c.b16 %v6830, %v6829
        %v8099 = vpack.c.b16 %v6832, %v6831
        %v8100 = vpack.c.b16 %v6834, %v6833
        %v8101 = vpack.c.b16 %v6836, %v6835
        %v8102 = vpack.c.b16 %v6838, %v6837
        %v8103 = vpack.c.b16 %v6840, %v6839
        %v8104 = vpack.c.b16 %v6842, %v6841
        %v8105 = vpack.c.b16 %v6844, %v6843
        %v8106 = vpack.c.b16 %v6846, %v6845
        %v8107 = vpack.c.b16 %v6848, %v6847
        %v8108 = vpack.c.b16 %v6850, %v6849
        %v8109 = vpack.c.b16 %v6852, %v6851
        %v8110 = vpack.c.b16 %v6854, %v6853
        %v8111 = vpack.c.b16 %v6856, %v6855
        %v8112 = vpack.c.b16 %v6858, %v6857
        %v8113 = vpack.c.b16 %v6860, %v6859
        %v8114 = vpack.c.b16 %v6862, %v6861
        %v8115 = vpack.c.b16 %v6864, %v6863
        %v8116 = vpack.c.b16 %v6866, %v6865
        %v8117 = vpack.c.b16 %v6868, %v6867
        %v8118 = vpack.c.b16 %v6870, %v6869
        %v8119 = vpack.c.b16 %v6872, %v6871
        %v8120 = vpack.c.b16 %v6874, %v6873
        %v8121 = vpack.c.b16 %v6876, %v6875
        %v8122 = vpack.c.b16 %v6878, %v6877
        %v8123 = vpack.c.b16 %v6880, %v6879
        %v8124 = vpack.c.b16 %v6882, %v6881
        %v8125 = vpack.c.b16 %v6884, %v6883
        %v8126 = vpack.c.b16 %v6886, %v6885
        %v8127 = vpack.c.b16 %v6888, %v6887
        %v8128 = vpack.c.b16 %v6890, %v6889
        %v8129 = vpack.c.b16 %v6892, %v6891
        %v8130 = vpack.c.b16 %v6894, %v6893
        %v8131 = vpack.c.b16 %v6896, %v6895
        %v8132 = vpack.c.b16 %v6898, %v6897
        %v8133 = vpack.c.b16 %v6900, %v6899
        %v8134 = vpack.c.b16 %v6902, %v6901
        %v8135 = vpack.c.b16 %v6904, %v6903
        %v8136 = vpack.c.b16 %v6906, %v6905
        %v8137 = vpack.c.b16 %v6908, %v6907
        %v8138 = vpack.c.b16 %v6910, %v6909
        %v8139 = vpack.c.b16 %v6912, %v6911
        %v8140 = vpack.c.b16 %v6914, %v6913
        %v8141 = vpack.c.b16 %v6916, %v6915
        %v8142 = vpack.c.b16 %v6918, %v6917
        %v8143 = vpack.c.b16 %v6920, %v6919
        %v8144 = vpack.c.b16 %v6922, %v6921
        %v8145 = vpack.c.b16 %v6924, %v6923
        %v8146 = vpack.c.b16 %v6926, %v6925
        %v8147 = vpack.c.b16 %v6928, %v6927
        %v8148 = vpack.c.b16 %v6930, %v6929
        %v8149 = vpack.c.b16 %v6932, %v6931
        %v8150 = vpack.c.b16 %v6934, %v6933
        %v8151 = vpack.c.b16 %v6936, %v6935
        %v8152 = vpack.c.b16 %v6938, %v6937
        %v8153 = vpack.c.b16 %v6940, %v6939
        %v8154 = vpack.c.b16 %v6942, %v6941
        %v8155 = vpack.c.b16 %v6944, %v6943
        %v8156 = vpack.c.b16 %v6946, %v6945
        %v8157 = vpack.c.b16 %v6948, %v6947
        %v8158 = vpack.c.b16 %v6950, %v6949
        %v8159 = vpack.c.b16 %v6952, %v6951
        %v8160 = vpack.c.b16 %v6954, %v6953
        %v8161 = vpack.c.b16 %v6956, %v6955
        %v8162 = vpack.c.b16 %v6958, %v6957
        %v8163 = vpack.c.b16 %v6960, %v6959
        %v8164 = vpack.c.b16 %v6962, %v6961
        %v8165 = vpack.c.b16 %v6964, %v6963
        %v8166 = vpack.c.b16 %v6966, %v6965
        %v8167 = vpack.c.b16 %v6968, %v6967
        %v8168 = vpack.c.b16 %v6970, %v6969
        %v8169 = vpack.c.b16 %v6972, %v6971
        %v8170 = vpack.c.b16 %v6974, %v6973
        %v8171 = vpack.c.b16 %v6976, %v6975
        %v8172 = vpack.c.b16 %v6978, %v6977
        %v8173 = vpack.c.b16 %v6980, %v6979
        %v8174 = vpack.c.b16 %v6982, %v6981
        %v8175 = vpack.c.b16 %v6984, %v6983
        %v8176 = vpack.c.b16 %v6986, %v6985
        %v8177 = vpack.c.b16 %v6988, %v6987
        %v8178 = vpack.c.b16 %v6990, %v6989
        %v8179 = vpack.c.b16 %v6992, %v6991
        %v8180 = vpack.c.b16 %v6994, %v6993
        %v8181 = vpack.c.b16 %v6996, %v6995
        %v8182 = vpack.c.b16 %v6998, %v6997
        %v8183 = vpack.c.b16 %v7000, %v6999
        %v8184 = vpack.c.b16 %v7002, %v7001
        %v8185 = vpack.c.b16 %v7004, %v7003
        %v8186 = vpack.c.b16 %v7006, %v7005
        %v8187 = vpack.c.b16 %v7008, %v7007
        %v8188 = vpack.c.b16 %v7010, %v7009
        %v8189 = vpack.c.b16 %v7012, %v7011
        %v8190 = vpack.c.b16 %v7014, %v7013
        %v8191 = vpack.c.b16 %v7016, %v7015
        %v8192 = vpack.c.b16 %v7018, %v7017
        %v8193 = vpack.c.b16 %v7020, %v7019
        %v8194 = vpack.c.b16 %v7022, %v7021
        %v8195 = vpack.c.b16 %v7024, %v7023
        %v8196 = vpack.c.b16 %v7026, %v7025
        %v8197 = vpack.c.b16 %v7028, %v7027
        %v8198 = vpack.c.b16 %v7030, %v7029
        %v8199 = vpack.c.b16 %v7032, %v7031
        %v8200 = vpack.c.b16 %v7034, %v7033
        %v8201 = vpack.c.b16 %v7036, %v7035
        %v8202 = vpack.c.b16 %v7038, %v7037
        %v8203 = vpack.c.b16 %v7040, %v7039
        %v8204 = vpack.c.b16 %v7042, %v7041
        %v8205 = vpack.c.b16 %v7044, %v7043
        %v8206 = vpack.c.b16 %v7046, %v7045
        %v8207 = vpack.c.b16 %v7048, %v7047
        %v8208 = vpack.c.b16 %v7050, %v7049
        %v8209 = vpack.c.b16 %v7052, %v7051
        %v8210 = vpack.c.b16 %v7054, %v7053
        %v8211 = vpack.c.b16 %v7056, %v7055
        %v8212 = vpack.c.b16 %v7058, %v7057
        %v8213 = vpack.c.b16 %v7060, %v7059
        %v8214 = vpack.c.b16 %v7062, %v7061
        %v8215 = vpack.c.b16 %v7064, %v7063
        %v8216 = vpack.c.b16 %v7066, %v7065
        %v8217 = vpack.c.b16 %v7068, %v7067
        %v8218 = vpack.c.b16 %v7070, %v7069
        %v8219 = vpack.c.b16 %v7072, %v7071
        %v8220 = vpack.c.b16 %v7074, %v7073
        %v8221 = vpack.c.b16 %v7076, %v7075
        %v8222 = vpack.c.b16 %v7078, %v7077
        %v8223 = vpack.c.b16 %v7080, %v7079
        %v8224 = vpack.c.b16 %v7082, %v7081
        %v8225 = vpack.c.b16 %v7084, %v7083
        %v8226 = vpack.c.b16 %v7086, %v7085
        %v8227 = vpack.c.b16 %v7088, %v7087
        %v8228 = vpack.c.b16 %v7090, %v7089
        %v8229 = vpack.c.b16 %v7092, %v7091
        %v8230 = vpack.c.b16 %v7094, %v7093
        %v8231 = vpack.c.b16 %v7096, %v7095
        %v8232 = vpack.c.b16 %v7098, %v7097
        %v8233 = vpack.c.b16 %v7100, %v7099
        %v8234 = vpack.c.b16 %v7102, %v7101
        %v8235 = vpack.c.b16 %v7104, %v7103
        %v8236 = vpack.c.b16 %v7106, %v7105
        %v8237 = vpack.c.b16 %v7108, %v7107
        %v8238 = vpack.c.b16 %v7110, %v7109
        %v8239 = vpack.c.b16 %v7112, %v7111
        %v8240 = vpack.c.b16 %v7114, %v7113
        %v8241 = vpack.c.b16 %v7116, %v7115
        %v8242 = vpack.c.b16 %v7118, %v7117
        %v8243 = vpack.c.b16 %v7120, %v7119
        %v8244 = vpack.c.b16 %v7122, %v7121
        %v8245 = vpack.c.b16 %v7124, %v7123
        %v8246 = vpack.c.b16 %v7126, %v7125
        %v8247 = vpack.c.b16 %v7128, %v7127
        %v8248 = vpack.c.b16 %v7130, %v7129
        %v8249 = vpack.c.b16 %v7132, %v7131
        %v8250 = vpack.c.b16 %v7134, %v7133
        %v8251 = vpack.c.b16 %v7136, %v7135
        %v8252 = vpack.c.b16 %v7138, %v7137
        %v8253 = vpack.c.b16 %v7140, %v7139
        %v8254 = vpack.c.b16 %v7142, %v7141
        %v8255 = vpack.c.b16 %v7144, %v7143
        %v8256 = vpack.c.b16 %v7146, %v7145
        %v8257 = vpack.c.b16 %v7148, %v7147
        %v8258 = vpack.c.b16 %v7150, %v7149
        %v8259 = vpack.c.b16 %v7152, %v7151
        %v8260 = vpack.c.b16 %v7154, %v7153
        %v8261 = vpack.c.b16 %v7156, %v7155
        %v8262 = vpack.c.b16 %v7158, %v7157
        %v8263 = vpack.c.b16 %v7160, %v7159
        %v8264 = vpack.c.b16 %v7162, %v7161
        %v8265 = vpack.c.b16 %v7164, %v7163
        %v8266 = vpack.c.b16 %v7166, %v7165
        %v8267 = vpack.c.b16 %v7168, %v7167
        %v8268 = vpack.c.b16 %v7170, %v7169
        %v8269 = vpack.c.b16 %v7172, %v7171
        %v8270 = vpack.c.b16 %v7174, %v7173
        %v8271 = vpack.c.b16 %v7176, %v7175
        %v8272 = vpack.c.b16 %v7178, %v7177
        %v8273 = vpack.c.b16 %v7180, %v7179
        %v8274 = vpack.c.b16 %v7182, %v7181
        %v8275 = vpack.c.b16 %v7184, %v7183
        %v8276 = vpack.c.b16 %v7186, %v7185
        %v8277 = vpack.c.b16 %v7188, %v7187
        %v8278 = vpack.c.b16 %v7190, %v7189
        %v8279 = vpack.c.b16 %v7192, %v7191
        %v8280 = vpack.c.b16 %v7194, %v7193
        %v8281 = vpack.c.b16 %v7196, %v7195
        %v8282 = vpack.c.b16 %v7198, %v7197
        %v8283 = vpack.c.b16 %v7200, %v7199
        %v8284 = vpack.c.b16 %v7202, %v7201
        %v8285 = vpack.c.b16 %v7204, %v7203
        %v8286 = vpack.c.b16 %v7206, %v7205
        %v8287 = vpack.c.b16 %v7208, %v7207
        %v8288 = vpack.c.b16 %v7210, %v7209
        %v8289 = vpack.c.b16 %v7212, %v7211
        %v8290 = vpack.c.b16 %v7214, %v7213
        %v8291 = vpack.c.b16 %v7216, %v7215
        %v8292 = vpack.c.b16 %v7218, %v7217
        %v8293 = vpack.c.b16 %v7220, %v7219
        %v8294 = vpack.c.b16 %v7222, %v7221
        %v8295 = vpack.c.b16 %v7224, %v7223
        %v8296 = vpack.c.b16 %v7226, %v7225
        %v8297 = vpack.c.b16 %v7228, %v7227
        %v8298 = vpack.c.b16 %v7230, %v7229
        %v8299 = vpack.c.b16 %v7232, %v7231
        %v8300 = vpack.c.b16 %v7234, %v7233
        %v8301 = vpack.c.b16 %v7236, %v7235
        %v8302 = vpack.c.b16 %v7238, %v7237
        %v8303 = vpack.c.b16 %v7240, %v7239
        %v8304 = vpack.c.b16 %v7242, %v7241
        %v8305 = vpack.c.b16 %v7244, %v7243
        %v8306 = vpack.c.b16 %v7246, %v7245
        %v8307 = vpack.c.b16 %v7248, %v7247
        %v8308 = vpack.c.b16 %v7250, %v7249
        %v8309 = vpack.c.b16 %v7252, %v7251
        %v8310 = vpack.c.b16 %v7254, %v7253
        %v8311 = vpack.c.b16 %v7256, %v7255
        %v8312 = vpack.c.b16 %v7258, %v7257
        %v8313 = vpack.c.b16 %v7260, %v7259
        %v8314 = vpack.c.b16 %v7262, %v7261
        %v8315 = vpack.c.b16 %v7264, %v7263
        %v8316 = vpack.c.b16 %v7266, %v7265
        %v8317 = vpack.c.b16 %v7268, %v7267
        %v8318 = vpack.c.b16 %v7270, %v7269
        %v8319 = vpack.c.b16 %v7272, %v7271
        %v8320 = vpack.c.b16 %v7274, %v7273
        %v8321 = vpack.c.b16 %v7276, %v7275
        %v8322 = vpack.c.b16 %v7278, %v7277
        %v8323 = vpack.c.b16 %v7280, %v7279
        %v8324 = vpack.c.b16 %v7282, %v7281
        %v8325 = vpack.c.b16 %v7284, %v7283
        %v8326 = vpack.c.b16 %v7286, %v7285
        %v8327 = vpack.c.b16 %v7288, %v7287
        %v8328 = vpack.c.b16 %v7290, %v7289
        %v8329 = vpack.c.b16 %v7292, %v7291
        %v8330 = vpack.c.b16 %v7294, %v7293
        %v8331 = vpack.c.b16 %v7296, %v7295
        %v8332 = vpack.c.b16 %v7298, %v7297
        %v8333 = vpack.c.b16 %v7300, %v7299
        %v8334 = vpack.c.b16 %v7302, %v7301
        %v8335 = vpack.c.b16 %v7304, %v7303
        %v8336 = vpack.c.b16 %v7306, %v7305
        %v8337 = vpack.c.b16 %v7308, %v7307
        %v8338 = vpack.c.b16 %v7310, %v7309
        %v8339 = vpack.c.b16 %v7312, %v7311
        %v8340 = vpack.c.b16 %v7314, %v7313
        %v8341 = vpack.c.b16 %v7316, %v7315
        %v8342 = vpack.c.b16 %v7318, %v7317
        %9367 = vmatprep.subr.bf16.mxu0 0
        %9368 = vmatpush1.bf16.msra.mxu0 %v7326
        %9369 = vmatprep.subr.bf16.mxu0 0
        %9370 = vmatpush1.bf16.msra.mxu0 %v7325
        %9371 = vmatprep.subr.bf16.mxu0 0
        %9372 = vmatpush1.bf16.msra.mxu0 %v7324
        %9373 = vmatprep.subr.bf16.mxu0 0
        %9374 = vmatpush1.bf16.msra.mxu0 %v7323
        %9375 = vmatprep.subr.bf16.mxu0 0
        %9376 = vmatpush1.bf16.msra.mxu0 %v7322
        %9377 = vmatprep.subr.bf16.mxu0 0
        %9378 = vmatpush1.bf16.msra.mxu0 %v7321
        %9379 = vmatprep.subr.bf16.mxu0 0
        %9380 = vmatpush1.bf16.msra.mxu0 %v7320
        %9381 = vmatprep.subr.bf16.mxu0 0
        %9382 = vmatpush1.bf16.msra.mxu0 %v7319
        %9383 = vmatprep.subr.bf16.mxu0 0
        %9384 = vmatpush2.bf16.msra.mxu0 %v7334
        %9385 = vmatprep.subr.bf16.mxu0 0
        %9386 = vmatpush2.bf16.msra.mxu0 %v7333
        %9387 = vmatprep.subr.bf16.mxu0 0
        %9388 = vmatpush2.bf16.msra.mxu0 %v7332
        %9389 = vmatprep.subr.bf16.mxu0 0
        %9390 = vmatpush2.bf16.msra.mxu0 %v7331
        %9391 = vmatprep.subr.bf16.mxu0 0
        %9392 = vmatpush2.bf16.msra.mxu0 %v7330
        %9393 = vmatprep.subr.bf16.mxu0 0
        %9394 = vmatpush2.bf16.msra.mxu0 %v7329
        %9395 = vmatprep.subr.bf16.mxu0 0
        %9396 = vmatpush2.bf16.msra.mxu0 %v7328
        %9397 = vmatprep.subr.bf16.mxu0 0
        %9398 = vmatpush2.bf16.msra.mxu0 %v7327
        %9399 = vmatprep.mubr.bf16.mxu0 %v2348
        %9400 = vmatmul.mubr.bf16.gmra.mxu0 %v2334
        %v9401 = vpop.f32.mrf.mxu0
        %v9402 = vadd.f32 %v2293, %v9401
        %v9403 = vpop.f32.mrf.mxu0
        %v9404 = vpop.f32.mrf.mxu0
        %v9405 = vpop.f32.mrf.mxu0
        %9406 = vdwg.mxu0
        %9407 = vmatprep.subr.bf16.mxu0 0
        %9408 = vmatpush1.bf16.msra.mxu0 %v7342
        %9409 = vmatprep.subr.bf16.mxu0 0
        %9410 = vmatpush1.bf16.msra.mxu0 %v7341
        %9411 = vmatprep.subr.bf16.mxu0 0
        %9412 = vmatpush1.bf16.msra.mxu0 %v7340
        %9413 = vmatprep.subr.bf16.mxu0 0
        %9414 = vmatpush1.bf16.msra.mxu0 %v7339
        %9415 = vmatprep.subr.bf16.mxu0 0
        %9416 = vmatpush1.bf16.msra.mxu0 %v7338
        %9417 = vmatprep.subr.bf16.mxu0 0
        %9418 = vmatpush1.bf16.msra.mxu0 %v7337
        %9419 = vmatprep.subr.bf16.mxu0 0
        %9420 = vmatpush1.bf16.msra.mxu0 %v7336
        %9421 = vmatprep.subr.bf16.mxu0 0
        %9422 = vmatpush1.bf16.msra.mxu0 %v7335
        %9423 = vmatprep.subr.bf16.mxu0 0
        %9424 = vmatpush2.bf16.msra.mxu0 %v7350
        %9425 = vmatprep.subr.bf16.mxu0 0
        %9426 = vmatpush2.bf16.msra.mxu0 %v7349
        %9427 = vmatprep.subr.bf16.mxu0 0
        %9428 = vmatpush2.bf16.msra.mxu0 %v7348
        %9429 = vmatprep.subr.bf16.mxu0 0
        %9430 = vmatpush2.bf16.msra.mxu0 %v7347
        %9431 = vmatprep.subr.bf16.mxu0 0
        %9432 = vmatpush2.bf16.msra.mxu0 %v7346
        %9433 = vmatprep.subr.bf16.mxu0 0
        %9434 = vmatpush2.bf16.msra.mxu0 %v7345
        %9435 = vmatprep.subr.bf16.mxu0 0
        %9436 = vmatpush2.bf16.msra.mxu0 %v7344
        %9437 = vmatprep.subr.bf16.mxu0 0
        %9438 = vmatpush2.bf16.msra.mxu0 %v7343
        %9439 = vmatprep.mubr.bf16.mxu0 %v2358
        %9440 = vmatmul.mubr.bf16.gmra.mxu0 %v2356
        %v9441 = vpop.f32.mrf.mxu0
        %v9442 = vadd.f32 %v9402, %v9441
        %v9443 = vpop.f32.mrf.mxu0
        %v9444 = vpop.f32.mrf.mxu0
        %v9445 = vpop.f32.mrf.mxu0
        %9446 = vdwg.mxu0
        %9447 = vmatprep.subr.bf16.mxu0 0
        %9448 = vmatpush1.bf16.msra.mxu0 %v7358
        %9449 = vmatprep.subr.bf16.mxu0 0
        %9450 = vmatpush1.bf16.msra.mxu0 %v7357
        %9451 = vmatprep.subr.bf16.mxu0 0
        %9452 = vmatpush1.bf16.msra.mxu0 %v7356
        %9453 = vmatprep.subr.bf16.mxu0 0
        %9454 = vmatpush1.bf16.msra.mxu0 %v7355
        %9455 = vmatprep.subr.bf16.mxu0 0
        %9456 = vmatpush1.bf16.msra.mxu0 %v7354
        %9457 = vmatprep.subr.bf16.mxu0 0
        %9458 = vmatpush1.bf16.msra.mxu0 %v7353
        %9459 = vmatprep.subr.bf16.mxu0 0
        %9460 = vmatpush1.bf16.msra.mxu0 %v7352
        %9461 = vmatprep.subr.bf16.mxu0 0
        %9462 = vmatpush1.bf16.msra.mxu0 %v7351
        %9463 = vmatprep.subr.bf16.mxu0 0
        %9464 = vmatpush2.bf16.msra.mxu0 %v7366
        %9465 = vmatprep.subr.bf16.mxu0 0
        %9466 = vmatpush2.bf16.msra.mxu0 %v7365
        %9467 = vmatprep.subr.bf16.mxu0 0
        %9468 = vmatpush2.bf16.msra.mxu0 %v7364
        %9469 = vmatprep.subr.bf16.mxu0 0
        %9470 = vmatpush2.bf16.msra.mxu0 %v7363
        %9471 = vmatprep.subr.bf16.mxu0 0
        %9472 = vmatpush2.bf16.msra.mxu0 %v7362
        %9473 = vmatprep.subr.bf16.mxu0 0
        %9474 = vmatpush2.bf16.msra.mxu0 %v7361
        %9475 = vmatprep.subr.bf16.mxu0 0
        %9476 = vmatpush2.bf16.msra.mxu0 %v7360
        %9477 = vmatprep.subr.bf16.mxu0 0
        %9478 = vmatpush2.bf16.msra.mxu0 %v7359
        %9479 = vmatprep.mubr.bf16.mxu0 %v2355
        %9480 = vmatmul.mubr.bf16.gmra.mxu0 %v2341
        %v9481 = vpop.f32.mrf.mxu0
        %v9482 = vadd.f32 %v9442, %v9481
        %v9483 = vpop.f32.mrf.mxu0
        %v9484 = vpop.f32.mrf.mxu0
        %v9485 = vpop.f32.mrf.mxu0
        %9486 = vdwg.mxu0
        %9487 = vmatprep.subr.bf16.mxu0 0
        %9488 = vmatpush1.bf16.msra.mxu0 %v7374
        %9489 = vmatprep.subr.bf16.mxu0 0
        %9490 = vmatpush1.bf16.msra.mxu0 %v7373
        %9491 = vmatprep.subr.bf16.mxu0 0
        %9492 = vmatpush1.bf16.msra.mxu0 %v7372
        %9493 = vmatprep.subr.bf16.mxu0 0
        %9494 = vmatpush1.bf16.msra.mxu0 %v7371
        %9495 = vmatprep.subr.bf16.mxu0 0
        %9496 = vmatpush1.bf16.msra.mxu0 %v7370
        %9497 = vmatprep.subr.bf16.mxu0 0
        %9498 = vmatpush1.bf16.msra.mxu0 %v7369
        %9499 = vmatprep.subr.bf16.mxu0 0
        %9500 = vmatpush1.bf16.msra.mxu0 %v7368
        %9501 = vmatprep.subr.bf16.mxu0 0
        %9502 = vmatpush1.bf16.msra.mxu0 %v7367
        %9503 = vmatprep.subr.bf16.mxu0 0
        %9504 = vmatpush2.bf16.msra.mxu0 %v7382
        %9505 = vmatprep.subr.bf16.mxu0 0
        %9506 = vmatpush2.bf16.msra.mxu0 %v7381
        %9507 = vmatprep.subr.bf16.mxu0 0
        %9508 = vmatpush2.bf16.msra.mxu0 %v7380
        %9509 = vmatprep.subr.bf16.mxu0 0
        %9510 = vmatpush2.bf16.msra.mxu0 %v7379
        %9511 = vmatprep.subr.bf16.mxu0 0
        %9512 = vmatpush2.bf16.msra.mxu0 %v7378
        %9513 = vmatprep.subr.bf16.mxu0 0
        %9514 = vmatpush2.bf16.msra.mxu0 %v7377
        %9515 = vmatprep.subr.bf16.mxu0 0
        %9516 = vmatpush2.bf16.msra.mxu0 %v7376
        %9517 = vmatprep.subr.bf16.mxu0 0
        %9518 = vmatpush2.bf16.msra.mxu0 %v7375
        %9519 = vmatprep.mubr.bf16.mxu0 %v2359
        %9520 = vmatmul.mubr.bf16.gmra.mxu0 %v2357
        %v9521 = vpop.f32.mrf.mxu0
        %v9522 = vadd.f32 %v9482, %v9521
        %v9523 = vpop.f32.mrf.mxu0
        %v9524 = vpop.f32.mrf.mxu0
        %v9525 = vpop.f32.mrf.mxu0
        %9526 = vdwg.mxu0
        %9527 = vmatprep.subr.bf16.mxu0 0
        %9528 = vmatpush1.bf16.msra.mxu0 %v7390
        %9529 = vmatprep.subr.bf16.mxu0 0
        %9530 = vmatpush1.bf16.msra.mxu0 %v7389
        %9531 = vmatprep.subr.bf16.mxu0 0
        %9532 = vmatpush1.bf16.msra.mxu0 %v7388
        %9533 = vmatprep.subr.bf16.mxu0 0
        %9534 = vmatpush1.bf16.msra.mxu0 %v7387
        %9535 = vmatprep.subr.bf16.mxu0 0
        %9536 = vmatpush1.bf16.msra.mxu0 %v7386
        %9537 = vmatprep.subr.bf16.mxu0 0
        %9538 = vmatpush1.bf16.msra.mxu0 %v7385
        %9539 = vmatprep.subr.bf16.mxu0 0
        %9540 = vmatpush1.bf16.msra.mxu0 %v7384
        %9541 = vmatprep.subr.bf16.mxu0 0
        %9542 = vmatpush1.bf16.msra.mxu0 %v7383
        %9543 = vmatprep.subr.bf16.mxu0 0
        %9544 = vmatpush2.bf16.msra.mxu0 %v7398
        %9545 = vmatprep.subr.bf16.mxu0 0
        %9546 = vmatpush2.bf16.msra.mxu0 %v7397
        %9547 = vmatprep.subr.bf16.mxu0 0
        %9548 = vmatpush2.bf16.msra.mxu0 %v7396
        %9549 = vmatprep.subr.bf16.mxu0 0
        %9550 = vmatpush2.bf16.msra.mxu0 %v7395
        %9551 = vmatprep.subr.bf16.mxu0 0
        %9552 = vmatpush2.bf16.msra.mxu0 %v7394
        %9553 = vmatprep.subr.bf16.mxu0 0
        %9554 = vmatpush2.bf16.msra.mxu0 %v7393
        %9555 = vmatprep.subr.bf16.mxu0 0
        %9556 = vmatpush2.bf16.msra.mxu0 %v7392
        %9557 = vmatprep.subr.bf16.mxu0 0
        %9558 = vmatpush2.bf16.msra.mxu0 %v7391
        %9559 = vmatprep.mubr.bf16.mxu0 %v2397
        %9560 = vmatmul.mubr.bf16.gmra.mxu0 %v2383
        %v9561 = vpop.f32.mrf.mxu0
        %v9562 = vadd.f32 %v9522, %v9561
        %v9563 = vpop.f32.mrf.mxu0
        %v9564 = vpop.f32.mrf.mxu0
        %v9565 = vpop.f32.mrf.mxu0
        %9566 = vdwg.mxu0
        %9567 = vmatprep.subr.bf16.mxu0 0
        %9568 = vmatpush1.bf16.msra.mxu0 %v7406
        %9569 = vmatprep.subr.bf16.mxu0 0
        %9570 = vmatpush1.bf16.msra.mxu0 %v7405
        %9571 = vmatprep.subr.bf16.mxu0 0
        %9572 = vmatpush1.bf16.msra.mxu0 %v7404
        %9573 = vmatprep.subr.bf16.mxu0 0
        %9574 = vmatpush1.bf16.msra.mxu0 %v7403
        %9575 = vmatprep.subr.bf16.mxu0 0
        %9576 = vmatpush1.bf16.msra.mxu0 %v7402
        %9577 = vmatprep.subr.bf16.mxu0 0
        %9578 = vmatpush1.bf16.msra.mxu0 %v7401
        %9579 = vmatprep.subr.bf16.mxu0 0
        %9580 = vmatpush1.bf16.msra.mxu0 %v7400
        %9581 = vmatprep.subr.bf16.mxu0 0
        %9582 = vmatpush1.bf16.msra.mxu0 %v7399
        %9583 = vmatprep.subr.bf16.mxu0 0
        %9584 = vmatpush2.bf16.msra.mxu0 %v7414
        %9585 = vmatprep.subr.bf16.mxu0 0
        %9586 = vmatpush2.bf16.msra.mxu0 %v7413
        %9587 = vmatprep.subr.bf16.mxu0 0
        %9588 = vmatpush2.bf16.msra.mxu0 %v7412
        %9589 = vmatprep.subr.bf16.mxu0 0
        %9590 = vmatpush2.bf16.msra.mxu0 %v7411
        %9591 = vmatprep.subr.bf16.mxu0 0
        %9592 = vmatpush2.bf16.msra.mxu0 %v7410
        %9593 = vmatprep.subr.bf16.mxu0 0
        %9594 = vmatpush2.bf16.msra.mxu0 %v7409
        %9595 = vmatprep.subr.bf16.mxu0 0
        %9596 = vmatpush2.bf16.msra.mxu0 %v7408
        %9597 = vmatprep.subr.bf16.mxu0 0
        %9598 = vmatpush2.bf16.msra.mxu0 %v7407
        %9599 = vmatprep.mubr.bf16.mxu0 %v2407
        %9600 = vmatmul.mubr.bf16.gmra.mxu0 %v2405
        %v9601 = vpop.f32.mrf.mxu0
        %v9602 = vadd.f32 %v9562, %v9601
        %v9603 = vpop.f32.mrf.mxu0
        %v9604 = vpop.f32.mrf.mxu0
        %v9605 = vpop.f32.mrf.mxu0
        %9606 = vdwg.mxu0
        %9607 = vmatprep.subr.bf16.mxu0 0
        %9608 = vmatpush1.bf16.msra.mxu0 %v7422
        %9609 = vmatprep.subr.bf16.mxu0 0
        %9610 = vmatpush1.bf16.msra.mxu0 %v7421
        %9611 = vmatprep.subr.bf16.mxu0 0
        %9612 = vmatpush1.bf16.msra.mxu0 %v7420
        %9613 = vmatprep.subr.bf16.mxu0 0
        %9614 = vmatpush1.bf16.msra.mxu0 %v7419
        %9615 = vmatprep.subr.bf16.mxu0 0
        %9616 = vmatpush1.bf16.msra.mxu0 %v7418
        %9617 = vmatprep.subr.bf16.mxu0 0
        %9618 = vmatpush1.bf16.msra.mxu0 %v7417
        %9619 = vmatprep.subr.bf16.mxu0 0
        %9620 = vmatpush1.bf16.msra.mxu0 %v7416
        %9621 = vmatprep.subr.bf16.mxu0 0
        %9622 = vmatpush1.bf16.msra.mxu0 %v7415
        %9623 = vmatprep.subr.bf16.mxu0 0
        %9624 = vmatpush2.bf16.msra.mxu0 %v7430
        %9625 = vmatprep.subr.bf16.mxu0 0
        %9626 = vmatpush2.bf16.msra.mxu0 %v7429
        %9627 = vmatprep.subr.bf16.mxu0 0
        %9628 = vmatpush2.bf16.msra.mxu0 %v7428
        %9629 = vmatprep.subr.bf16.mxu0 0
        %9630 = vmatpush2.bf16.msra.mxu0 %v7427
        %9631 = vmatprep.subr.bf16.mxu0 0
        %9632 = vmatpush2.bf16.msra.mxu0 %v7426
        %9633 = vmatprep.subr.bf16.mxu0 0
        %9634 = vmatpush2.bf16.msra.mxu0 %v7425
        %9635 = vmatprep.subr.bf16.mxu0 0
        %9636 = vmatpush2.bf16.msra.mxu0 %v7424
        %9637 = vmatprep.subr.bf16.mxu0 0
        %9638 = vmatpush2.bf16.msra.mxu0 %v7423
        %9639 = vmatprep.mubr.bf16.mxu0 %v2404
        %9640 = vmatmul.mubr.bf16.gmra.mxu0 %v2390
        %v9641 = vpop.f32.mrf.mxu0
        %v9642 = vadd.f32 %v9602, %v9641
        %v9643 = vpop.f32.mrf.mxu0
        %v9644 = vpop.f32.mrf.mxu0
        %v9645 = vpop.f32.mrf.mxu0
        %9646 = vdwg.mxu0
        %9647 = vmatprep.subr.bf16.mxu0 0
        %9648 = vmatpush1.bf16.msra.mxu0 %v7438
        %9649 = vmatprep.subr.bf16.mxu0 0
        %9650 = vmatpush1.bf16.msra.mxu0 %v7437
        %9651 = vmatprep.subr.bf16.mxu0 0
        %9652 = vmatpush1.bf16.msra.mxu0 %v7436
        %9653 = vmatprep.subr.bf16.mxu0 0
        %9654 = vmatpush1.bf16.msra.mxu0 %v7435
        %9655 = vmatprep.subr.bf16.mxu0 0
        %9656 = vmatpush1.bf16.msra.mxu0 %v7434
        %9657 = vmatprep.subr.bf16.mxu0 0
        %9658 = vmatpush1.bf16.msra.mxu0 %v7433
        %9659 = vmatprep.subr.bf16.mxu0 0
        %9660 = vmatpush1.bf16.msra.mxu0 %v7432
        %9661 = vmatprep.subr.bf16.mxu0 0
        %9662 = vmatpush1.bf16.msra.mxu0 %v7431
        %9663 = vmatprep.subr.bf16.mxu0 0
        %9664 = vmatpush2.bf16.msra.mxu0 %v7446
        %9665 = vmatprep.subr.bf16.mxu0 0
        %9666 = vmatpush2.bf16.msra.mxu0 %v7445
        %9667 = vmatprep.subr.bf16.mxu0 0
        %9668 = vmatpush2.bf16.msra.mxu0 %v7444
        %9669 = vmatprep.subr.bf16.mxu0 0
        %9670 = vmatpush2.bf16.msra.mxu0 %v7443
        %9671 = vmatprep.subr.bf16.mxu0 0
        %9672 = vmatpush2.bf16.msra.mxu0 %v7442
        %9673 = vmatprep.subr.bf16.mxu0 0
        %9674 = vmatpush2.bf16.msra.mxu0 %v7441
        %9675 = vmatprep.subr.bf16.mxu0 0
        %9676 = vmatpush2.bf16.msra.mxu0 %v7440
        %9677 = vmatprep.subr.bf16.mxu0 0
        %9678 = vmatpush2.bf16.msra.mxu0 %v7439
        %9679 = vmatprep.mubr.bf16.mxu0 %v2408
        %9680 = vmatmul.mubr.bf16.gmra.mxu0 %v2406
        %v9681 = vpop.f32.mrf.mxu0
        %v9682 = vadd.f32 %v9642, %v9681
        %v9683 = vpop.f32.mrf.mxu0
        %v9684 = vpop.f32.mrf.mxu0
        %v9685 = vpop.f32.mrf.mxu0
        %9686 = vdwg.mxu0
        %9687 = vmatprep.subr.bf16.mxu0 0
        %9688 = vmatpush1.bf16.msra.mxu0 %v7454
        %9689 = vmatprep.subr.bf16.mxu0 0
        %9690 = vmatpush1.bf16.msra.mxu0 %v7453
        %9691 = vmatprep.subr.bf16.mxu0 0
        %9692 = vmatpush1.bf16.msra.mxu0 %v7452
        %9693 = vmatprep.subr.bf16.mxu0 0
        %9694 = vmatpush1.bf16.msra.mxu0 %v7451
        %9695 = vmatprep.subr.bf16.mxu0 0
        %9696 = vmatpush1.bf16.msra.mxu0 %v7450
        %9697 = vmatprep.subr.bf16.mxu0 0
        %9698 = vmatpush1.bf16.msra.mxu0 %v7449
        %9699 = vmatprep.subr.bf16.mxu0 0
        %9700 = vmatpush1.bf16.msra.mxu0 %v7448
        %9701 = vmatprep.subr.bf16.mxu0 0
        %9702 = vmatpush1.bf16.msra.mxu0 %v7447
        %9703 = vmatprep.subr.bf16.mxu0 0
        %9704 = vmatpush2.bf16.msra.mxu0 %v7462
        %9705 = vmatprep.subr.bf16.mxu0 0
        %9706 = vmatpush2.bf16.msra.mxu0 %v7461
        %9707 = vmatprep.subr.bf16.mxu0 0
        %9708 = vmatpush2.bf16.msra.mxu0 %v7460
        %9709 = vmatprep.subr.bf16.mxu0 0
        %9710 = vmatpush2.bf16.msra.mxu0 %v7459
        %9711 = vmatprep.subr.bf16.mxu0 0
        %9712 = vmatpush2.bf16.msra.mxu0 %v7458
        %9713 = vmatprep.subr.bf16.mxu0 0
        %9714 = vmatpush2.bf16.msra.mxu0 %v7457
        %9715 = vmatprep.subr.bf16.mxu0 0
        %9716 = vmatpush2.bf16.msra.mxu0 %v7456
        %9717 = vmatprep.subr.bf16.mxu0 0
        %9718 = vmatpush2.bf16.msra.mxu0 %v7455
        %9719 = vmatprep.mubr.bf16.mxu0 %v2446
        %9720 = vmatmul.mubr.bf16.gmra.mxu0 %v2432
        %v9721 = vpop.f32.mrf.mxu0
        %v9722 = vadd.f32 %v9682, %v9721
        %v9723 = vpop.f32.mrf.mxu0
        %v9724 = vpop.f32.mrf.mxu0
        %v9725 = vpop.f32.mrf.mxu0
        %9726 = vdwg.mxu0
        %9727 = vmatprep.subr.bf16.mxu0 0
        %9728 = vmatpush1.bf16.msra.mxu0 %v7470
        %9729 = vmatprep.subr.bf16.mxu0 0
        %9730 = vmatpush1.bf16.msra.mxu0 %v7469
        %9731 = vmatprep.subr.bf16.mxu0 0
        %9732 = vmatpush1.bf16.msra.mxu0 %v7468
        %9733 = vmatprep.subr.bf16.mxu0 0
        %9734 = vmatpush1.bf16.msra.mxu0 %v7467
        %9735 = vmatprep.subr.bf16.mxu0 0
        %9736 = vmatpush1.bf16.msra.mxu0 %v7466
        %9737 = vmatprep.subr.bf16.mxu0 0
        %9738 = vmatpush1.bf16.msra.mxu0 %v7465
        %9739 = vmatprep.subr.bf16.mxu0 0
        %9740 = vmatpush1.bf16.msra.mxu0 %v7464
        %9741 = vmatprep.subr.bf16.mxu0 0
        %9742 = vmatpush1.bf16.msra.mxu0 %v7463
        %9743 = vmatprep.subr.bf16.mxu0 0
        %9744 = vmatpush2.bf16.msra.mxu0 %v7478
        %9745 = vmatprep.subr.bf16.mxu0 0
        %9746 = vmatpush2.bf16.msra.mxu0 %v7477
        %9747 = vmatprep.subr.bf16.mxu0 0
        %9748 = vmatpush2.bf16.msra.mxu0 %v7476
        %9749 = vmatprep.subr.bf16.mxu0 0
        %9750 = vmatpush2.bf16.msra.mxu0 %v7475
        %9751 = vmatprep.subr.bf16.mxu0 0
        %9752 = vmatpush2.bf16.msra.mxu0 %v7474
        %9753 = vmatprep.subr.bf16.mxu0 0
        %9754 = vmatpush2.bf16.msra.mxu0 %v7473
        %9755 = vmatprep.subr.bf16.mxu0 0
        %9756 = vmatpush2.bf16.msra.mxu0 %v7472
        %9757 = vmatprep.subr.bf16.mxu0 0
        %9758 = vmatpush2.bf16.msra.mxu0 %v7471
        %9759 = vmatprep.mubr.bf16.mxu0 %v2456
        %9760 = vmatmul.mubr.bf16.gmra.mxu0 %v2454
        %v9761 = vpop.f32.mrf.mxu0
        %v9762 = vadd.f32 %v9722, %v9761
        %v9763 = vpop.f32.mrf.mxu0
        %v9764 = vpop.f32.mrf.mxu0
        %v9765 = vpop.f32.mrf.mxu0
        %9766 = vdwg.mxu0
        %9767 = vmatprep.subr.bf16.mxu0 0
        %9768 = vmatpush1.bf16.msra.mxu0 %v7486
        %9769 = vmatprep.subr.bf16.mxu0 0
        %9770 = vmatpush1.bf16.msra.mxu0 %v7485
        %9771 = vmatprep.subr.bf16.mxu0 0
        %9772 = vmatpush1.bf16.msra.mxu0 %v7484
        %9773 = vmatprep.subr.bf16.mxu0 0
        %9774 = vmatpush1.bf16.msra.mxu0 %v7483
        %9775 = vmatprep.subr.bf16.mxu0 0
        %9776 = vmatpush1.bf16.msra.mxu0 %v7482
        %9777 = vmatprep.subr.bf16.mxu0 0
        %9778 = vmatpush1.bf16.msra.mxu0 %v7481
        %9779 = vmatprep.subr.bf16.mxu0 0
        %9780 = vmatpush1.bf16.msra.mxu0 %v7480
        %9781 = vmatprep.subr.bf16.mxu0 0
        %9782 = vmatpush1.bf16.msra.mxu0 %v7479
        %9783 = vmatprep.subr.bf16.mxu0 0
        %9784 = vmatpush2.bf16.msra.mxu0 %v7494
        %9785 = vmatprep.subr.bf16.mxu0 0
        %9786 = vmatpush2.bf16.msra.mxu0 %v7493
        %9787 = vmatprep.subr.bf16.mxu0 0
        %9788 = vmatpush2.bf16.msra.mxu0 %v7492
        %9789 = vmatprep.subr.bf16.mxu0 0
        %9790 = vmatpush2.bf16.msra.mxu0 %v7491
        %9791 = vmatprep.subr.bf16.mxu0 0
        %9792 = vmatpush2.bf16.msra.mxu0 %v7490
        %9793 = vmatprep.subr.bf16.mxu0 0
        %9794 = vmatpush2.bf16.msra.mxu0 %v7489
        %9795 = vmatprep.subr.bf16.mxu0 0
        %9796 = vmatpush2.bf16.msra.mxu0 %v7488
        %9797 = vmatprep.subr.bf16.mxu0 0
        %9798 = vmatpush2.bf16.msra.mxu0 %v7487
        %9799 = vmatprep.mubr.bf16.mxu0 %v2453
        %9800 = vmatmul.mubr.bf16.gmra.mxu0 %v2439
        %v9801 = vpop.f32.mrf.mxu0
        %v9802 = vadd.f32 %v9762, %v9801
        %v9803 = vpop.f32.mrf.mxu0
        %v9804 = vpop.f32.mrf.mxu0
        %v9805 = vpop.f32.mrf.mxu0
        %9806 = vdwg.mxu0
        %9807 = vmatprep.subr.bf16.mxu0 0
        %9808 = vmatpush1.bf16.msra.mxu0 %v7502
        %9809 = vmatprep.subr.bf16.mxu0 0
        %9810 = vmatpush1.bf16.msra.mxu0 %v7501
        %9811 = vmatprep.subr.bf16.mxu0 0
        %9812 = vmatpush1.bf16.msra.mxu0 %v7500
        %9813 = vmatprep.subr.bf16.mxu0 0
        %9814 = vmatpush1.bf16.msra.mxu0 %v7499
        %9815 = vmatprep.subr.bf16.mxu0 0
        %9816 = vmatpush1.bf16.msra.mxu0 %v7498
        %9817 = vmatprep.subr.bf16.mxu0 0
        %9818 = vmatpush1.bf16.msra.mxu0 %v7497
        %9819 = vmatprep.subr.bf16.mxu0 0
        %9820 = vmatpush1.bf16.msra.mxu0 %v7496
        %9821 = vmatprep.subr.bf16.mxu0 0
        %9822 = vmatpush1.bf16.msra.mxu0 %v7495
        %9823 = vmatprep.subr.bf16.mxu0 0
        %9824 = vmatpush2.bf16.msra.mxu0 %v7510
        %9825 = vmatprep.subr.bf16.mxu0 0
        %9826 = vmatpush2.bf16.msra.mxu0 %v7509
        %9827 = vmatprep.subr.bf16.mxu0 0
        %9828 = vmatpush2.bf16.msra.mxu0 %v7508
        %9829 = vmatprep.subr.bf16.mxu0 0
        %9830 = vmatpush2.bf16.msra.mxu0 %v7507
        %9831 = vmatprep.subr.bf16.mxu0 0
        %9832 = vmatpush2.bf16.msra.mxu0 %v7506
        %9833 = vmatprep.subr.bf16.mxu0 0
        %9834 = vmatpush2.bf16.msra.mxu0 %v7505
        %9835 = vmatprep.subr.bf16.mxu0 0
        %9836 = vmatpush2.bf16.msra.mxu0 %v7504
        %9837 = vmatprep.subr.bf16.mxu0 0
        %9838 = vmatpush2.bf16.msra.mxu0 %v7503
        %9839 = vmatprep.mubr.bf16.mxu0 %v2457
        %9840 = vmatmul.mubr.bf16.gmra.mxu0 %v2455
        %v9841 = vpop.f32.mrf.mxu0
        %v9842 = vadd.f32 %v9802, %v9841
        %v9843 = vpop.f32.mrf.mxu0
        %v9844 = vpop.f32.mrf.mxu0
        %v9845 = vpop.f32.mrf.mxu0
        %9846 = vdwg.mxu0
        %9847 = vmatprep.subr.bf16.mxu0 0
        %9848 = vmatpush1.bf16.msra.mxu0 %v7518
        %9849 = vmatprep.subr.bf16.mxu0 0
        %9850 = vmatpush1.bf16.msra.mxu0 %v7517
        %9851 = vmatprep.subr.bf16.mxu0 0
        %9852 = vmatpush1.bf16.msra.mxu0 %v7516
        %9853 = vmatprep.subr.bf16.mxu0 0
        %9854 = vmatpush1.bf16.msra.mxu0 %v7515
        %9855 = vmatprep.subr.bf16.mxu0 0
        %9856 = vmatpush1.bf16.msra.mxu0 %v7514
        %9857 = vmatprep.subr.bf16.mxu0 0
        %9858 = vmatpush1.bf16.msra.mxu0 %v7513
        %9859 = vmatprep.subr.bf16.mxu0 0
        %9860 = vmatpush1.bf16.msra.mxu0 %v7512
        %9861 = vmatprep.subr.bf16.mxu0 0
        %9862 = vmatpush1.bf16.msra.mxu0 %v7511
        %9863 = vmatprep.subr.bf16.mxu0 0
        %9864 = vmatpush2.bf16.msra.mxu0 %v7526
        %9865 = vmatprep.subr.bf16.mxu0 0
        %9866 = vmatpush2.bf16.msra.mxu0 %v7525
        %9867 = vmatprep.subr.bf16.mxu0 0
        %9868 = vmatpush2.bf16.msra.mxu0 %v7524
        %9869 = vmatprep.subr.bf16.mxu0 0
        %9870 = vmatpush2.bf16.msra.mxu0 %v7523
        %9871 = vmatprep.subr.bf16.mxu0 0
        %9872 = vmatpush2.bf16.msra.mxu0 %v7522
        %9873 = vmatprep.subr.bf16.mxu0 0
        %9874 = vmatpush2.bf16.msra.mxu0 %v7521
        %9875 = vmatprep.subr.bf16.mxu0 0
        %9876 = vmatpush2.bf16.msra.mxu0 %v7520
        %9877 = vmatprep.subr.bf16.mxu0 0
        %9878 = vmatpush2.bf16.msra.mxu0 %v7519
        %9879 = vmatprep.mubr.bf16.mxu0 %v2495
        %9880 = vmatmul.mubr.bf16.gmra.mxu0 %v2481
        %v9881 = vpop.f32.mrf.mxu0
        %v9882 = vadd.f32 %v9842, %v9881
        %v9883 = vpop.f32.mrf.mxu0
        %v9884 = vpop.f32.mrf.mxu0
        %v9885 = vpop.f32.mrf.mxu0
        %9886 = vdwg.mxu0
        %9887 = vmatprep.subr.bf16.mxu0 0
        %9888 = vmatpush1.bf16.msra.mxu0 %v7534
        %9889 = vmatprep.subr.bf16.mxu0 0
        %9890 = vmatpush1.bf16.msra.mxu0 %v7533
        %9891 = vmatprep.subr.bf16.mxu0 0
        %9892 = vmatpush1.bf16.msra.mxu0 %v7532
        %9893 = vmatprep.subr.bf16.mxu0 0
        %9894 = vmatpush1.bf16.msra.mxu0 %v7531
        %9895 = vmatprep.subr.bf16.mxu0 0
        %9896 = vmatpush1.bf16.msra.mxu0 %v7530
        %9897 = vmatprep.subr.bf16.mxu0 0
        %9898 = vmatpush1.bf16.msra.mxu0 %v7529
        %9899 = vmatprep.subr.bf16.mxu0 0
        %9900 = vmatpush1.bf16.msra.mxu0 %v7528
        %9901 = vmatprep.subr.bf16.mxu0 0
        %9902 = vmatpush1.bf16.msra.mxu0 %v7527
        %9903 = vmatprep.subr.bf16.mxu0 0
        %9904 = vmatpush2.bf16.msra.mxu0 %v7542
        %9905 = vmatprep.subr.bf16.mxu0 0
        %9906 = vmatpush2.bf16.msra.mxu0 %v7541
        %9907 = vmatprep.subr.bf16.mxu0 0
        %9908 = vmatpush2.bf16.msra.mxu0 %v7540
        %9909 = vmatprep.subr.bf16.mxu0 0
        %9910 = vmatpush2.bf16.msra.mxu0 %v7539
        %9911 = vmatprep.subr.bf16.mxu0 0
        %9912 = vmatpush2.bf16.msra.mxu0 %v7538
        %9913 = vmatprep.subr.bf16.mxu0 0
        %9914 = vmatpush2.bf16.msra.mxu0 %v7537
        %9915 = vmatprep.subr.bf16.mxu0 0
        %9916 = vmatpush2.bf16.msra.mxu0 %v7536
        %9917 = vmatprep.subr.bf16.mxu0 0
        %9918 = vmatpush2.bf16.msra.mxu0 %v7535
        %9919 = vmatprep.mubr.bf16.mxu0 %v2505
        %9920 = vmatmul.mubr.bf16.gmra.mxu0 %v2503
        %v9921 = vpop.f32.mrf.mxu0
        %v9922 = vadd.f32 %v9882, %v9921
        %v9923 = vpop.f32.mrf.mxu0
        %v9924 = vpop.f32.mrf.mxu0
        %v9925 = vpop.f32.mrf.mxu0
        %9926 = vdwg.mxu0
        %9927 = vmatprep.subr.bf16.mxu0 0
        %9928 = vmatpush1.bf16.msra.mxu0 %v7550
        %9929 = vmatprep.subr.bf16.mxu0 0
        %9930 = vmatpush1.bf16.msra.mxu0 %v7549
        %9931 = vmatprep.subr.bf16.mxu0 0
        %9932 = vmatpush1.bf16.msra.mxu0 %v7548
        %9933 = vmatprep.subr.bf16.mxu0 0
        %9934 = vmatpush1.bf16.msra.mxu0 %v7547
        %9935 = vmatprep.subr.bf16.mxu0 0
        %9936 = vmatpush1.bf16.msra.mxu0 %v7546
        %9937 = vmatprep.subr.bf16.mxu0 0
        %9938 = vmatpush1.bf16.msra.mxu0 %v7545
        %9939 = vmatprep.subr.bf16.mxu0 0
        %9940 = vmatpush1.bf16.msra.mxu0 %v7544
        %9941 = vmatprep.subr.bf16.mxu0 0
        %9942 = vmatpush1.bf16.msra.mxu0 %v7543
        %9943 = vmatprep.subr.bf16.mxu0 0
        %9944 = vmatpush2.bf16.msra.mxu0 %v7558
        %9945 = vmatprep.subr.bf16.mxu0 0
        %9946 = vmatpush2.bf16.msra.mxu0 %v7557
        %9947 = vmatprep.subr.bf16.mxu0 0
        %9948 = vmatpush2.bf16.msra.mxu0 %v7556
        %9949 = vmatprep.subr.bf16.mxu0 0
        %9950 = vmatpush2.bf16.msra.mxu0 %v7555
        %9951 = vmatprep.subr.bf16.mxu0 0
        %9952 = vmatpush2.bf16.msra.mxu0 %v7554
        %9953 = vmatprep.subr.bf16.mxu0 0
        %9954 = vmatpush2.bf16.msra.mxu0 %v7553
        %9955 = vmatprep.subr.bf16.mxu0 0
        %9956 = vmatpush2.bf16.msra.mxu0 %v7552
        %9957 = vmatprep.subr.bf16.mxu0 0
        %9958 = vmatpush2.bf16.msra.mxu0 %v7551
        %9959 = vmatprep.mubr.bf16.mxu0 %v2502
        %9960 = vmatmul.mubr.bf16.gmra.mxu0 %v2488
        %v9961 = vpop.f32.mrf.mxu0
        %v9962 = vadd.f32 %v9922, %v9961
        %v9963 = vpop.f32.mrf.mxu0
        %v9964 = vpop.f32.mrf.mxu0
        %v9965 = vpop.f32.mrf.mxu0
        %9966 = vdwg.mxu0
        %9967 = vmatprep.subr.bf16.mxu0 0
        %9968 = vmatpush1.bf16.msra.mxu0 %v7566
        %9969 = vmatprep.subr.bf16.mxu0 0
        %9970 = vmatpush1.bf16.msra.mxu0 %v7565
        %9971 = vmatprep.subr.bf16.mxu0 0
        %9972 = vmatpush1.bf16.msra.mxu0 %v7564
        %9973 = vmatprep.subr.bf16.mxu0 0
        %9974 = vmatpush1.bf16.msra.mxu0 %v7563
        %9975 = vmatprep.subr.bf16.mxu0 0
        %9976 = vmatpush1.bf16.msra.mxu0 %v7562
        %9977 = vmatprep.subr.bf16.mxu0 0
        %9978 = vmatpush1.bf16.msra.mxu0 %v7561
        %9979 = vmatprep.subr.bf16.mxu0 0
        %9980 = vmatpush1.bf16.msra.mxu0 %v7560
        %9981 = vmatprep.subr.bf16.mxu0 0
        %9982 = vmatpush1.bf16.msra.mxu0 %v7559
        %9983 = vmatprep.subr.bf16.mxu0 0
        %9984 = vmatpush2.bf16.msra.mxu0 %v7574
        %9985 = vmatprep.subr.bf16.mxu0 0
        %9986 = vmatpush2.bf16.msra.mxu0 %v7573
        %9987 = vmatprep.subr.bf16.mxu0 0
        %9988 = vmatpush2.bf16.msra.mxu0 %v7572
        %9989 = vmatprep.subr.bf16.mxu0 0
        %9990 = vmatpush2.bf16.msra.mxu0 %v7571
        %9991 = vmatprep.subr.bf16.mxu0 0
        %9992 = vmatpush2.bf16.msra.mxu0 %v7570
        %9993 = vmatprep.subr.bf16.mxu0 0
        %9994 = vmatpush2.bf16.msra.mxu0 %v7569
        %9995 = vmatprep.subr.bf16.mxu0 0
        %9996 = vmatpush2.bf16.msra.mxu0 %v7568
        %9997 = vmatprep.subr.bf16.mxu0 0
        %9998 = vmatpush2.bf16.msra.mxu0 %v7567
        %9999 = vmatprep.mubr.bf16.mxu0 %v2506
        %10000 = vmatmul.mubr.bf16.gmra.mxu0 %v2504
        %v10001 = vpop.f32.mrf.mxu0
        %v10002 = vadd.f32 %v9962, %v10001
        %v10003 = vpop.f32.mrf.mxu0
        %v10004 = vpop.f32.mrf.mxu0
        %v10005 = vpop.f32.mrf.mxu0
        %10006 = vdwg.mxu0
        %10007 = vmatprep.subr.bf16.mxu0 0
        %10008 = vmatpush1.bf16.msra.mxu0 %v7582
        %10009 = vmatprep.subr.bf16.mxu0 0
        %10010 = vmatpush1.bf16.msra.mxu0 %v7581
        %10011 = vmatprep.subr.bf16.mxu0 0
        %10012 = vmatpush1.bf16.msra.mxu0 %v7580
        %10013 = vmatprep.subr.bf16.mxu0 0
        %10014 = vmatpush1.bf16.msra.mxu0 %v7579
        %10015 = vmatprep.subr.bf16.mxu0 0
        %10016 = vmatpush1.bf16.msra.mxu0 %v7578
        %10017 = vmatprep.subr.bf16.mxu0 0
        %10018 = vmatpush1.bf16.msra.mxu0 %v7577
        %10019 = vmatprep.subr.bf16.mxu0 0
        %10020 = vmatpush1.bf16.msra.mxu0 %v7576
        %10021 = vmatprep.subr.bf16.mxu0 0
        %10022 = vmatpush1.bf16.msra.mxu0 %v7575
        %10023 = vmatprep.subr.bf16.mxu0 0
        %10024 = vmatpush2.bf16.msra.mxu0 %v7590
        %10025 = vmatprep.subr.bf16.mxu0 0
        %10026 = vmatpush2.bf16.msra.mxu0 %v7589
        %10027 = vmatprep.subr.bf16.mxu0 0
        %10028 = vmatpush2.bf16.msra.mxu0 %v7588
        %10029 = vmatprep.subr.bf16.mxu0 0
        %10030 = vmatpush2.bf16.msra.mxu0 %v7587
        %10031 = vmatprep.subr.bf16.mxu0 0
        %10032 = vmatpush2.bf16.msra.mxu0 %v7586
        %10033 = vmatprep.subr.bf16.mxu0 0
        %10034 = vmatpush2.bf16.msra.mxu0 %v7585
        %10035 = vmatprep.subr.bf16.mxu0 0
        %10036 = vmatpush2.bf16.msra.mxu0 %v7584
        %10037 = vmatprep.subr.bf16.mxu0 0
        %10038 = vmatpush2.bf16.msra.mxu0 %v7583
        %10039 = vmatprep.mubr.bf16.mxu0 %v2544
        %10040 = vmatmul.mubr.bf16.gmra.mxu0 %v2530
        %v10041 = vpop.f32.mrf.mxu0
        %v10042 = vadd.f32 %v10002, %v10041
        %v10043 = vpop.f32.mrf.mxu0
        %v10044 = vpop.f32.mrf.mxu0
        %v10045 = vpop.f32.mrf.mxu0
        %10046 = vdwg.mxu0
        %10047 = vmatprep.subr.bf16.mxu0 0
        %10048 = vmatpush1.bf16.msra.mxu0 %v7598
        %10049 = vmatprep.subr.bf16.mxu0 0
        %10050 = vmatpush1.bf16.msra.mxu0 %v7597
        %10051 = vmatprep.subr.bf16.mxu0 0
        %10052 = vmatpush1.bf16.msra.mxu0 %v7596
        %10053 = vmatprep.subr.bf16.mxu0 0
        %10054 = vmatpush1.bf16.msra.mxu0 %v7595
        %10055 = vmatprep.subr.bf16.mxu0 0
        %10056 = vmatpush1.bf16.msra.mxu0 %v7594
        %10057 = vmatprep.subr.bf16.mxu0 0
        %10058 = vmatpush1.bf16.msra.mxu0 %v7593
        %10059 = vmatprep.subr.bf16.mxu0 0
        %10060 = vmatpush1.bf16.msra.mxu0 %v7592
        %10061 = vmatprep.subr.bf16.mxu0 0
        %10062 = vmatpush1.bf16.msra.mxu0 %v7591
        %10063 = vmatprep.subr.bf16.mxu0 0
        %10064 = vmatpush2.bf16.msra.mxu0 %v7606
        %10065 = vmatprep.subr.bf16.mxu0 0
        %10066 = vmatpush2.bf16.msra.mxu0 %v7605
        %10067 = vmatprep.subr.bf16.mxu0 0
        %10068 = vmatpush2.bf16.msra.mxu0 %v7604
        %10069 = vmatprep.subr.bf16.mxu0 0
        %10070 = vmatpush2.bf16.msra.mxu0 %v7603
        %10071 = vmatprep.subr.bf16.mxu0 0
        %10072 = vmatpush2.bf16.msra.mxu0 %v7602
        %10073 = vmatprep.subr.bf16.mxu0 0
        %10074 = vmatpush2.bf16.msra.mxu0 %v7601
        %10075 = vmatprep.subr.bf16.mxu0 0
        %10076 = vmatpush2.bf16.msra.mxu0 %v7600
        %10077 = vmatprep.subr.bf16.mxu0 0
        %10078 = vmatpush2.bf16.msra.mxu0 %v7599
        %10079 = vmatprep.mubr.bf16.mxu0 %v2554
        %10080 = vmatmul.mubr.bf16.gmra.mxu0 %v2552
        %v10081 = vpop.f32.mrf.mxu0
        %v10082 = vadd.f32 %v10042, %v10081
        %v10083 = vpop.f32.mrf.mxu0
        %v10084 = vpop.f32.mrf.mxu0
        %v10085 = vpop.f32.mrf.mxu0
        %10086 = vdwg.mxu0
        %10087 = vmatprep.subr.bf16.mxu0 0
        %10088 = vmatpush1.bf16.msra.mxu0 %v7614
        %10089 = vmatprep.subr.bf16.mxu0 0
        %10090 = vmatpush1.bf16.msra.mxu0 %v7613
        %10091 = vmatprep.subr.bf16.mxu0 0
        %10092 = vmatpush1.bf16.msra.mxu0 %v7612
        %10093 = vmatprep.subr.bf16.mxu0 0
        %10094 = vmatpush1.bf16.msra.mxu0 %v7611
        %10095 = vmatprep.subr.bf16.mxu0 0
        %10096 = vmatpush1.bf16.msra.mxu0 %v7610
        %10097 = vmatprep.subr.bf16.mxu0 0
        %10098 = vmatpush1.bf16.msra.mxu0 %v7609
        %10099 = vmatprep.subr.bf16.mxu0 0
        %10100 = vmatpush1.bf16.msra.mxu0 %v7608
        %10101 = vmatprep.subr.bf16.mxu0 0
        %10102 = vmatpush1.bf16.msra.mxu0 %v7607
        %10103 = vmatprep.subr.bf16.mxu0 0
        %10104 = vmatpush2.bf16.msra.mxu0 %v7622
        %10105 = vmatprep.subr.bf16.mxu0 0
        %10106 = vmatpush2.bf16.msra.mxu0 %v7621
        %10107 = vmatprep.subr.bf16.mxu0 0
        %10108 = vmatpush2.bf16.msra.mxu0 %v7620
        %10109 = vmatprep.subr.bf16.mxu0 0
        %10110 = vmatpush2.bf16.msra.mxu0 %v7619
        %10111 = vmatprep.subr.bf16.mxu0 0
        %10112 = vmatpush2.bf16.msra.mxu0 %v7618
        %10113 = vmatprep.subr.bf16.mxu0 0
        %10114 = vmatpush2.bf16.msra.mxu0 %v7617
        %10115 = vmatprep.subr.bf16.mxu0 0
        %10116 = vmatpush2.bf16.msra.mxu0 %v7616
        %10117 = vmatprep.subr.bf16.mxu0 0
        %10118 = vmatpush2.bf16.msra.mxu0 %v7615
        %10119 = vmatprep.mubr.bf16.mxu0 %v2551
        %10120 = vmatmul.mubr.bf16.gmra.mxu0 %v2537
        %v10121 = vpop.f32.mrf.mxu0
        %v10122 = vadd.f32 %v10082, %v10121
        %v10123 = vpop.f32.mrf.mxu0
        %v10124 = vpop.f32.mrf.mxu0
        %v10125 = vpop.f32.mrf.mxu0
        %10126 = vdwg.mxu0
        %10127 = vmatprep.subr.bf16.mxu0 0
        %10128 = vmatpush1.bf16.msra.mxu0 %v7630
        %10129 = vmatprep.subr.bf16.mxu0 0
        %10130 = vmatpush1.bf16.msra.mxu0 %v7629
        %10131 = vmatprep.subr.bf16.mxu0 0
        %10132 = vmatpush1.bf16.msra.mxu0 %v7628
        %10133 = vmatprep.subr.bf16.mxu0 0
        %10134 = vmatpush1.bf16.msra.mxu0 %v7627
        %10135 = vmatprep.subr.bf16.mxu0 0
        %10136 = vmatpush1.bf16.msra.mxu0 %v7626
        %10137 = vmatprep.subr.bf16.mxu0 0
        %10138 = vmatpush1.bf16.msra.mxu0 %v7625
        %10139 = vmatprep.subr.bf16.mxu0 0
        %10140 = vmatpush1.bf16.msra.mxu0 %v7624
        %10141 = vmatprep.subr.bf16.mxu0 0
        %10142 = vmatpush1.bf16.msra.mxu0 %v7623
        %10143 = vmatprep.subr.bf16.mxu0 0
        %10144 = vmatpush2.bf16.msra.mxu0 %v7638
        %10145 = vmatprep.subr.bf16.mxu0 0
        %10146 = vmatpush2.bf16.msra.mxu0 %v7637
        %10147 = vmatprep.subr.bf16.mxu0 0
        %10148 = vmatpush2.bf16.msra.mxu0 %v7636
        %10149 = vmatprep.subr.bf16.mxu0 0
        %10150 = vmatpush2.bf16.msra.mxu0 %v7635
        %10151 = vmatprep.subr.bf16.mxu0 0
        %10152 = vmatpush2.bf16.msra.mxu0 %v7634
        %10153 = vmatprep.subr.bf16.mxu0 0
        %10154 = vmatpush2.bf16.msra.mxu0 %v7633
        %10155 = vmatprep.subr.bf16.mxu0 0
        %10156 = vmatpush2.bf16.msra.mxu0 %v7632
        %10157 = vmatprep.subr.bf16.mxu0 0
        %10158 = vmatpush2.bf16.msra.mxu0 %v7631
        %10159 = vmatprep.mubr.bf16.mxu0 %v2555
        %10160 = vmatmul.mubr.bf16.gmra.mxu0 %v2553
        %v10161 = vpop.f32.mrf.mxu0
        %v10162 = vadd.f32 %v10122, %v10161
        %v10163 = vpop.f32.mrf.mxu0
        %v10164 = vpop.f32.mrf.mxu0
        %v10165 = vpop.f32.mrf.mxu0
        %10166 = vdwg.mxu0
        %10167 = vmatprep.subr.bf16.mxu0 0
        %10168 = vmatpush1.bf16.msra.mxu0 %v7646
        %10169 = vmatprep.subr.bf16.mxu0 0
        %10170 = vmatpush1.bf16.msra.mxu0 %v7645
        %10171 = vmatprep.subr.bf16.mxu0 0
        %10172 = vmatpush1.bf16.msra.mxu0 %v7644
        %10173 = vmatprep.subr.bf16.mxu0 0
        %10174 = vmatpush1.bf16.msra.mxu0 %v7643
        %10175 = vmatprep.subr.bf16.mxu0 0
        %10176 = vmatpush1.bf16.msra.mxu0 %v7642
        %10177 = vmatprep.subr.bf16.mxu0 0
        %10178 = vmatpush1.bf16.msra.mxu0 %v7641
        %10179 = vmatprep.subr.bf16.mxu0 0
        %10180 = vmatpush1.bf16.msra.mxu0 %v7640
        %10181 = vmatprep.subr.bf16.mxu0 0
        %10182 = vmatpush1.bf16.msra.mxu0 %v7639
        %10183 = vmatprep.subr.bf16.mxu0 0
        %10184 = vmatpush2.bf16.msra.mxu0 %v7654
        %10185 = vmatprep.subr.bf16.mxu0 0
        %10186 = vmatpush2.bf16.msra.mxu0 %v7653
        %10187 = vmatprep.subr.bf16.mxu0 0
        %10188 = vmatpush2.bf16.msra.mxu0 %v7652
        %10189 = vmatprep.subr.bf16.mxu0 0
        %10190 = vmatpush2.bf16.msra.mxu0 %v7651
        %10191 = vmatprep.subr.bf16.mxu0 0
        %10192 = vmatpush2.bf16.msra.mxu0 %v7650
        %10193 = vmatprep.subr.bf16.mxu0 0
        %10194 = vmatpush2.bf16.msra.mxu0 %v7649
        %10195 = vmatprep.subr.bf16.mxu0 0
        %10196 = vmatpush2.bf16.msra.mxu0 %v7648
        %10197 = vmatprep.subr.bf16.mxu0 0
        %10198 = vmatpush2.bf16.msra.mxu0 %v7647
        %10199 = vmatprep.mubr.bf16.mxu0 %v2593
        %10200 = vmatmul.mubr.bf16.gmra.mxu0 %v2579
        %v10201 = vpop.f32.mrf.mxu0
        %v10202 = vadd.f32 %v10162, %v10201
        %v10203 = vpop.f32.mrf.mxu0
        %v10204 = vpop.f32.mrf.mxu0
        %v10205 = vpop.f32.mrf.mxu0
        %10206 = vdwg.mxu0
        %10207 = vmatprep.subr.bf16.mxu0 0
        %10208 = vmatpush1.bf16.msra.mxu0 %v7662
        %10209 = vmatprep.subr.bf16.mxu0 0
        %10210 = vmatpush1.bf16.msra.mxu0 %v7661
        %10211 = vmatprep.subr.bf16.mxu0 0
        %10212 = vmatpush1.bf16.msra.mxu0 %v7660
        %10213 = vmatprep.subr.bf16.mxu0 0
        %10214 = vmatpush1.bf16.msra.mxu0 %v7659
        %10215 = vmatprep.subr.bf16.mxu0 0
        %10216 = vmatpush1.bf16.msra.mxu0 %v7658
        %10217 = vmatprep.subr.bf16.mxu0 0
        %10218 = vmatpush1.bf16.msra.mxu0 %v7657
        %10219 = vmatprep.subr.bf16.mxu0 0
        %10220 = vmatpush1.bf16.msra.mxu0 %v7656
        %10221 = vmatprep.subr.bf16.mxu0 0
        %10222 = vmatpush1.bf16.msra.mxu0 %v7655
        %10223 = vmatprep.subr.bf16.mxu0 0
        %10224 = vmatpush2.bf16.msra.mxu0 %v7670
        %10225 = vmatprep.subr.bf16.mxu0 0
        %10226 = vmatpush2.bf16.msra.mxu0 %v7669
        %10227 = vmatprep.subr.bf16.mxu0 0
        %10228 = vmatpush2.bf16.msra.mxu0 %v7668
        %10229 = vmatprep.subr.bf16.mxu0 0
        %10230 = vmatpush2.bf16.msra.mxu0 %v7667
        %10231 = vmatprep.subr.bf16.mxu0 0
        %10232 = vmatpush2.bf16.msra.mxu0 %v7666
        %10233 = vmatprep.subr.bf16.mxu0 0
        %10234 = vmatpush2.bf16.msra.mxu0 %v7665
        %10235 = vmatprep.subr.bf16.mxu0 0
        %10236 = vmatpush2.bf16.msra.mxu0 %v7664
        %10237 = vmatprep.subr.bf16.mxu0 0
        %10238 = vmatpush2.bf16.msra.mxu0 %v7663
        %10239 = vmatprep.mubr.bf16.mxu0 %v2603
        %10240 = vmatmul.mubr.bf16.gmra.mxu0 %v2601
        %v10241 = vpop.f32.mrf.mxu0
        %v10242 = vadd.f32 %v10202, %v10241
        %v10243 = vpop.f32.mrf.mxu0
        %v10244 = vpop.f32.mrf.mxu0
        %v10245 = vpop.f32.mrf.mxu0
        %10246 = vdwg.mxu0
        %10247 = vmatprep.subr.bf16.mxu0 0
        %10248 = vmatpush1.bf16.msra.mxu0 %v7678
        %10249 = vmatprep.subr.bf16.mxu0 0
        %10250 = vmatpush1.bf16.msra.mxu0 %v7677
        %10251 = vmatprep.subr.bf16.mxu0 0
        %10252 = vmatpush1.bf16.msra.mxu0 %v7676
        %10253 = vmatprep.subr.bf16.mxu0 0
        %10254 = vmatpush1.bf16.msra.mxu0 %v7675
        %10255 = vmatprep.subr.bf16.mxu0 0
        %10256 = vmatpush1.bf16.msra.mxu0 %v7674
        %10257 = vmatprep.subr.bf16.mxu0 0
        %10258 = vmatpush1.bf16.msra.mxu0 %v7673
        %10259 = vmatprep.subr.bf16.mxu0 0
        %10260 = vmatpush1.bf16.msra.mxu0 %v7672
        %10261 = vmatprep.subr.bf16.mxu0 0
        %10262 = vmatpush1.bf16.msra.mxu0 %v7671
        %10263 = vmatprep.subr.bf16.mxu0 0
        %10264 = vmatpush2.bf16.msra.mxu0 %v7686
        %10265 = vmatprep.subr.bf16.mxu0 0
        %10266 = vmatpush2.bf16.msra.mxu0 %v7685
        %10267 = vmatprep.subr.bf16.mxu0 0
        %10268 = vmatpush2.bf16.msra.mxu0 %v7684
        %10269 = vmatprep.subr.bf16.mxu0 0
        %10270 = vmatpush2.bf16.msra.mxu0 %v7683
        %10271 = vmatprep.subr.bf16.mxu0 0
        %10272 = vmatpush2.bf16.msra.mxu0 %v7682
        %10273 = vmatprep.subr.bf16.mxu0 0
        %10274 = vmatpush2.bf16.msra.mxu0 %v7681
        %10275 = vmatprep.subr.bf16.mxu0 0
        %10276 = vmatpush2.bf16.msra.mxu0 %v7680
        %10277 = vmatprep.subr.bf16.mxu0 0
        %10278 = vmatpush2.bf16.msra.mxu0 %v7679
        %10279 = vmatprep.mubr.bf16.mxu0 %v2600
        %10280 = vmatmul.mubr.bf16.gmra.mxu0 %v2586
        %v10281 = vpop.f32.mrf.mxu0
        %v10282 = vadd.f32 %v10242, %v10281
        %v10283 = vpop.f32.mrf.mxu0
        %v10284 = vpop.f32.mrf.mxu0
        %v10285 = vpop.f32.mrf.mxu0
        %10286 = vdwg.mxu0
        %10287 = vmatprep.subr.bf16.mxu0 0
        %10288 = vmatpush1.bf16.msra.mxu0 %v7694
        %10289 = vmatprep.subr.bf16.mxu0 0
        %10290 = vmatpush1.bf16.msra.mxu0 %v7693
        %10291 = vmatprep.subr.bf16.mxu0 0
        %10292 = vmatpush1.bf16.msra.mxu0 %v7692
        %10293 = vmatprep.subr.bf16.mxu0 0
        %10294 = vmatpush1.bf16.msra.mxu0 %v7691
        %10295 = vmatprep.subr.bf16.mxu0 0
        %10296 = vmatpush1.bf16.msra.mxu0 %v7690
        %10297 = vmatprep.subr.bf16.mxu0 0
        %10298 = vmatpush1.bf16.msra.mxu0 %v7689
        %10299 = vmatprep.subr.bf16.mxu0 0
        %10300 = vmatpush1.bf16.msra.mxu0 %v7688
        %10301 = vmatprep.subr.bf16.mxu0 0
        %10302 = vmatpush1.bf16.msra.mxu0 %v7687
        %10303 = vmatprep.subr.bf16.mxu0 0
        %10304 = vmatpush2.bf16.msra.mxu0 %v7702
        %10305 = vmatprep.subr.bf16.mxu0 0
        %10306 = vmatpush2.bf16.msra.mxu0 %v7701
        %10307 = vmatprep.subr.bf16.mxu0 0
        %10308 = vmatpush2.bf16.msra.mxu0 %v7700
        %10309 = vmatprep.subr.bf16.mxu0 0
        %10310 = vmatpush2.bf16.msra.mxu0 %v7699
        %10311 = vmatprep.subr.bf16.mxu0 0
        %10312 = vmatpush2.bf16.msra.mxu0 %v7698
        %10313 = vmatprep.subr.bf16.mxu0 0
        %10314 = vmatpush2.bf16.msra.mxu0 %v7697
        %10315 = vmatprep.subr.bf16.mxu0 0
        %10316 = vmatpush2.bf16.msra.mxu0 %v7696
        %10317 = vmatprep.subr.bf16.mxu0 0
        %10318 = vmatpush2.bf16.msra.mxu0 %v7695
        %10319 = vmatprep.mubr.bf16.mxu0 %v2604
        %10320 = vmatmul.mubr.bf16.gmra.mxu0 %v2602
        %v10321 = vpop.f32.mrf.mxu0
        %v10322 = vadd.f32 %v10282, %v10321
        %v10323 = vpop.f32.mrf.mxu0
        %v10324 = vpop.f32.mrf.mxu0
        %v10325 = vpop.f32.mrf.mxu0
        %10326 = vdwg.mxu0
        %10327 = vmatprep.subr.bf16.mxu0 0
        %10328 = vmatpush1.bf16.msra.mxu0 %v7710
        %10329 = vmatprep.subr.bf16.mxu0 0
        %10330 = vmatpush1.bf16.msra.mxu0 %v7709
        %10331 = vmatprep.subr.bf16.mxu0 0
        %10332 = vmatpush1.bf16.msra.mxu0 %v7708
        %10333 = vmatprep.subr.bf16.mxu0 0
        %10334 = vmatpush1.bf16.msra.mxu0 %v7707
        %10335 = vmatprep.subr.bf16.mxu0 0
        %10336 = vmatpush1.bf16.msra.mxu0 %v7706
        %10337 = vmatprep.subr.bf16.mxu0 0
        %10338 = vmatpush1.bf16.msra.mxu0 %v7705
        %10339 = vmatprep.subr.bf16.mxu0 0
        %10340 = vmatpush1.bf16.msra.mxu0 %v7704
        %10341 = vmatprep.subr.bf16.mxu0 0
        %10342 = vmatpush1.bf16.msra.mxu0 %v7703
        %10343 = vmatprep.subr.bf16.mxu0 0
        %10344 = vmatpush2.bf16.msra.mxu0 %v7718
        %10345 = vmatprep.subr.bf16.mxu0 0
        %10346 = vmatpush2.bf16.msra.mxu0 %v7717
        %10347 = vmatprep.subr.bf16.mxu0 0
        %10348 = vmatpush2.bf16.msra.mxu0 %v7716
        %10349 = vmatprep.subr.bf16.mxu0 0
        %10350 = vmatpush2.bf16.msra.mxu0 %v7715
        %10351 = vmatprep.subr.bf16.mxu0 0
        %10352 = vmatpush2.bf16.msra.mxu0 %v7714
        %10353 = vmatprep.subr.bf16.mxu0 0
        %10354 = vmatpush2.bf16.msra.mxu0 %v7713
        %10355 = vmatprep.subr.bf16.mxu0 0
        %10356 = vmatpush2.bf16.msra.mxu0 %v7712
        %10357 = vmatprep.subr.bf16.mxu0 0
        %10358 = vmatpush2.bf16.msra.mxu0 %v7711
        %10359 = vmatprep.mubr.bf16.mxu0 %v2642
        %10360 = vmatmul.mubr.bf16.gmra.mxu0 %v2628
        %v10361 = vpop.f32.mrf.mxu0
        %v10362 = vadd.f32 %v10322, %v10361
        %v10363 = vpop.f32.mrf.mxu0
        %v10364 = vpop.f32.mrf.mxu0
        %v10365 = vpop.f32.mrf.mxu0
        %10366 = vdwg.mxu0
        %10367 = vmatprep.subr.bf16.mxu0 0
        %10368 = vmatpush1.bf16.msra.mxu0 %v7726
        %10369 = vmatprep.subr.bf16.mxu0 0
        %10370 = vmatpush1.bf16.msra.mxu0 %v7725
        %10371 = vmatprep.subr.bf16.mxu0 0
        %10372 = vmatpush1.bf16.msra.mxu0 %v7724
        %10373 = vmatprep.subr.bf16.mxu0 0
        %10374 = vmatpush1.bf16.msra.mxu0 %v7723
        %10375 = vmatprep.subr.bf16.mxu0 0
        %10376 = vmatpush1.bf16.msra.mxu0 %v7722
        %10377 = vmatprep.subr.bf16.mxu0 0
        %10378 = vmatpush1.bf16.msra.mxu0 %v7721
        %10379 = vmatprep.subr.bf16.mxu0 0
        %10380 = vmatpush1.bf16.msra.mxu0 %v7720
        %10381 = vmatprep.subr.bf16.mxu0 0
        %10382 = vmatpush1.bf16.msra.mxu0 %v7719
        %10383 = vmatprep.subr.bf16.mxu0 0
        %10384 = vmatpush2.bf16.msra.mxu0 %v7734
        %10385 = vmatprep.subr.bf16.mxu0 0
        %10386 = vmatpush2.bf16.msra.mxu0 %v7733
        %10387 = vmatprep.subr.bf16.mxu0 0
        %10388 = vmatpush2.bf16.msra.mxu0 %v7732
        %10389 = vmatprep.subr.bf16.mxu0 0
        %10390 = vmatpush2.bf16.msra.mxu0 %v7731
        %10391 = vmatprep.subr.bf16.mxu0 0
        %10392 = vmatpush2.bf16.msra.mxu0 %v7730
        %10393 = vmatprep.subr.bf16.mxu0 0
        %10394 = vmatpush2.bf16.msra.mxu0 %v7729
        %10395 = vmatprep.subr.bf16.mxu0 0
        %10396 = vmatpush2.bf16.msra.mxu0 %v7728
        %10397 = vmatprep.subr.bf16.mxu0 0
        %10398 = vmatpush2.bf16.msra.mxu0 %v7727
        %10399 = vmatprep.mubr.bf16.mxu0 %v2652
        %10400 = vmatmul.mubr.bf16.gmra.mxu0 %v2650
        %v10401 = vpop.f32.mrf.mxu0
        %v10402 = vadd.f32 %v10362, %v10401
        %v10403 = vpop.f32.mrf.mxu0
        %v10404 = vpop.f32.mrf.mxu0
        %v10405 = vpop.f32.mrf.mxu0
        %10406 = vdwg.mxu0
        %10407 = vmatprep.subr.bf16.mxu0 0
        %10408 = vmatpush1.bf16.msra.mxu0 %v7742
        %10409 = vmatprep.subr.bf16.mxu0 0
        %10410 = vmatpush1.bf16.msra.mxu0 %v7741
        %10411 = vmatprep.subr.bf16.mxu0 0
        %10412 = vmatpush1.bf16.msra.mxu0 %v7740
        %10413 = vmatprep.subr.bf16.mxu0 0
        %10414 = vmatpush1.bf16.msra.mxu0 %v7739
        %10415 = vmatprep.subr.bf16.mxu0 0
        %10416 = vmatpush1.bf16.msra.mxu0 %v7738
        %10417 = vmatprep.subr.bf16.mxu0 0
        %10418 = vmatpush1.bf16.msra.mxu0 %v7737
        %10419 = vmatprep.subr.bf16.mxu0 0
        %10420 = vmatpush1.bf16.msra.mxu0 %v7736
        %10421 = vmatprep.subr.bf16.mxu0 0
        %10422 = vmatpush1.bf16.msra.mxu0 %v7735
        %10423 = vmatprep.subr.bf16.mxu0 0
        %10424 = vmatpush2.bf16.msra.mxu0 %v7750
        %10425 = vmatprep.subr.bf16.mxu0 0
        %10426 = vmatpush2.bf16.msra.mxu0 %v7749
        %10427 = vmatprep.subr.bf16.mxu0 0
        %10428 = vmatpush2.bf16.msra.mxu0 %v7748
        %10429 = vmatprep.subr.bf16.mxu0 0
        %10430 = vmatpush2.bf16.msra.mxu0 %v7747
        %10431 = vmatprep.subr.bf16.mxu0 0
        %10432 = vmatpush2.bf16.msra.mxu0 %v7746
        %10433 = vmatprep.subr.bf16.mxu0 0
        %10434 = vmatpush2.bf16.msra.mxu0 %v7745
        %10435 = vmatprep.subr.bf16.mxu0 0
        %10436 = vmatpush2.bf16.msra.mxu0 %v7744
        %10437 = vmatprep.subr.bf16.mxu0 0
        %10438 = vmatpush2.bf16.msra.mxu0 %v7743
        %10439 = vmatprep.mubr.bf16.mxu0 %v2649
        %10440 = vmatmul.mubr.bf16.gmra.mxu0 %v2635
        %v10441 = vpop.f32.mrf.mxu0
        %v10442 = vadd.f32 %v10402, %v10441
        %v10443 = vpop.f32.mrf.mxu0
        %v10444 = vpop.f32.mrf.mxu0
        %v10445 = vpop.f32.mrf.mxu0
        %10446 = vdwg.mxu0
        %10447 = vmatprep.subr.bf16.mxu0 0
        %10448 = vmatpush1.bf16.msra.mxu0 %v7758
        %10449 = vmatprep.subr.bf16.mxu0 0
        %10450 = vmatpush1.bf16.msra.mxu0 %v7757
        %10451 = vmatprep.subr.bf16.mxu0 0
        %10452 = vmatpush1.bf16.msra.mxu0 %v7756
        %10453 = vmatprep.subr.bf16.mxu0 0
        %10454 = vmatpush1.bf16.msra.mxu0 %v7755
        %10455 = vmatprep.subr.bf16.mxu0 0
        %10456 = vmatpush1.bf16.msra.mxu0 %v7754
        %10457 = vmatprep.subr.bf16.mxu0 0
        %10458 = vmatpush1.bf16.msra.mxu0 %v7753
        %10459 = vmatprep.subr.bf16.mxu0 0
        %10460 = vmatpush1.bf16.msra.mxu0 %v7752
        %10461 = vmatprep.subr.bf16.mxu0 0
        %10462 = vmatpush1.bf16.msra.mxu0 %v7751
        %10463 = vmatprep.subr.bf16.mxu0 0
        %10464 = vmatpush2.bf16.msra.mxu0 %v7766
        %10465 = vmatprep.subr.bf16.mxu0 0
        %10466 = vmatpush2.bf16.msra.mxu0 %v7765
        %10467 = vmatprep.subr.bf16.mxu0 0
        %10468 = vmatpush2.bf16.msra.mxu0 %v7764
        %10469 = vmatprep.subr.bf16.mxu0 0
        %10470 = vmatpush2.bf16.msra.mxu0 %v7763
        %10471 = vmatprep.subr.bf16.mxu0 0
        %10472 = vmatpush2.bf16.msra.mxu0 %v7762
        %10473 = vmatprep.subr.bf16.mxu0 0
        %10474 = vmatpush2.bf16.msra.mxu0 %v7761
        %10475 = vmatprep.subr.bf16.mxu0 0
        %10476 = vmatpush2.bf16.msra.mxu0 %v7760
        %10477 = vmatprep.subr.bf16.mxu0 0
        %10478 = vmatpush2.bf16.msra.mxu0 %v7759
        %10479 = vmatprep.mubr.bf16.mxu0 %v2653
        %10480 = vmatmul.mubr.bf16.gmra.mxu0 %v2651
        %v10481 = vpop.f32.mrf.mxu0
        %v10482 = vadd.f32 %v10442, %v10481
        %v10483 = vpop.f32.mrf.mxu0
        %v10484 = vpop.f32.mrf.mxu0
        %v10485 = vpop.f32.mrf.mxu0
        %10486 = vdwg.mxu0
        %10487 = vmatprep.subr.bf16.mxu0 0
        %10488 = vmatpush1.bf16.msra.mxu0 %v7774
        %10489 = vmatprep.subr.bf16.mxu0 0
        %10490 = vmatpush1.bf16.msra.mxu0 %v7773
        %10491 = vmatprep.subr.bf16.mxu0 0
        %10492 = vmatpush1.bf16.msra.mxu0 %v7772
        %10493 = vmatprep.subr.bf16.mxu0 0
        %10494 = vmatpush1.bf16.msra.mxu0 %v7771
        %10495 = vmatprep.subr.bf16.mxu0 0
        %10496 = vmatpush1.bf16.msra.mxu0 %v7770
        %10497 = vmatprep.subr.bf16.mxu0 0
        %10498 = vmatpush1.bf16.msra.mxu0 %v7769
        %10499 = vmatprep.subr.bf16.mxu0 0
        %10500 = vmatpush1.bf16.msra.mxu0 %v7768
        %10501 = vmatprep.subr.bf16.mxu0 0
        %10502 = vmatpush1.bf16.msra.mxu0 %v7767
        %10503 = vmatprep.subr.bf16.mxu0 0
        %10504 = vmatpush2.bf16.msra.mxu0 %v7782
        %10505 = vmatprep.subr.bf16.mxu0 0
        %10506 = vmatpush2.bf16.msra.mxu0 %v7781
        %10507 = vmatprep.subr.bf16.mxu0 0
        %10508 = vmatpush2.bf16.msra.mxu0 %v7780
        %10509 = vmatprep.subr.bf16.mxu0 0
        %10510 = vmatpush2.bf16.msra.mxu0 %v7779
        %10511 = vmatprep.subr.bf16.mxu0 0
        %10512 = vmatpush2.bf16.msra.mxu0 %v7778
        %10513 = vmatprep.subr.bf16.mxu0 0
        %10514 = vmatpush2.bf16.msra.mxu0 %v7777
        %10515 = vmatprep.subr.bf16.mxu0 0
        %10516 = vmatpush2.bf16.msra.mxu0 %v7776
        %10517 = vmatprep.subr.bf16.mxu0 0
        %10518 = vmatpush2.bf16.msra.mxu0 %v7775
        %10519 = vmatprep.mubr.bf16.mxu0 %v2691
        %10520 = vmatmul.mubr.bf16.gmra.mxu0 %v2677
        %v10521 = vpop.f32.mrf.mxu0
        %v10522 = vadd.f32 %v10482, %v10521
        %v10523 = vpop.f32.mrf.mxu0
        %v10524 = vpop.f32.mrf.mxu0
        %v10525 = vpop.f32.mrf.mxu0
        %10526 = vdwg.mxu0
        %10527 = vmatprep.subr.bf16.mxu0 0
        %10528 = vmatpush1.bf16.msra.mxu0 %v7790
        %10529 = vmatprep.subr.bf16.mxu0 0
        %10530 = vmatpush1.bf16.msra.mxu0 %v7789
        %10531 = vmatprep.subr.bf16.mxu0 0
        %10532 = vmatpush1.bf16.msra.mxu0 %v7788
        %10533 = vmatprep.subr.bf16.mxu0 0
        %10534 = vmatpush1.bf16.msra.mxu0 %v7787
        %10535 = vmatprep.subr.bf16.mxu0 0
        %10536 = vmatpush1.bf16.msra.mxu0 %v7786
        %10537 = vmatprep.subr.bf16.mxu0 0
        %10538 = vmatpush1.bf16.msra.mxu0 %v7785
        %10539 = vmatprep.subr.bf16.mxu0 0
        %10540 = vmatpush1.bf16.msra.mxu0 %v7784
        %10541 = vmatprep.subr.bf16.mxu0 0
        %10542 = vmatpush1.bf16.msra.mxu0 %v7783
        %10543 = vmatprep.subr.bf16.mxu0 0
        %10544 = vmatpush2.bf16.msra.mxu0 %v7798
        %10545 = vmatprep.subr.bf16.mxu0 0
        %10546 = vmatpush2.bf16.msra.mxu0 %v7797
        %10547 = vmatprep.subr.bf16.mxu0 0
        %10548 = vmatpush2.bf16.msra.mxu0 %v7796
        %10549 = vmatprep.subr.bf16.mxu0 0
        %10550 = vmatpush2.bf16.msra.mxu0 %v7795
        %10551 = vmatprep.subr.bf16.mxu0 0
        %10552 = vmatpush2.bf16.msra.mxu0 %v7794
        %10553 = vmatprep.subr.bf16.mxu0 0
        %10554 = vmatpush2.bf16.msra.mxu0 %v7793
        %10555 = vmatprep.subr.bf16.mxu0 0
        %10556 = vmatpush2.bf16.msra.mxu0 %v7792
        %10557 = vmatprep.subr.bf16.mxu0 0
        %10558 = vmatpush2.bf16.msra.mxu0 %v7791
        %10559 = vmatprep.mubr.bf16.mxu0 %v2701
        %10560 = vmatmul.mubr.bf16.gmra.mxu0 %v2699
        %v10561 = vpop.f32.mrf.mxu0
        %v10562 = vadd.f32 %v10522, %v10561
        %v10563 = vpop.f32.mrf.mxu0
        %v10564 = vpop.f32.mrf.mxu0
        %v10565 = vpop.f32.mrf.mxu0
        %10566 = vdwg.mxu0
        %10567 = vmatprep.subr.bf16.mxu0 0
        %10568 = vmatpush1.bf16.msra.mxu0 %v7806
        %10569 = vmatprep.subr.bf16.mxu0 0
        %10570 = vmatpush1.bf16.msra.mxu0 %v7805
        %10571 = vmatprep.subr.bf16.mxu0 0
        %10572 = vmatpush1.bf16.msra.mxu0 %v7804
        %10573 = vmatprep.subr.bf16.mxu0 0
        %10574 = vmatpush1.bf16.msra.mxu0 %v7803
        %10575 = vmatprep.subr.bf16.mxu0 0
        %10576 = vmatpush1.bf16.msra.mxu0 %v7802
        %10577 = vmatprep.subr.bf16.mxu0 0
        %10578 = vmatpush1.bf16.msra.mxu0 %v7801
        %10579 = vmatprep.subr.bf16.mxu0 0
        %10580 = vmatpush1.bf16.msra.mxu0 %v7800
        %10581 = vmatprep.subr.bf16.mxu0 0
        %10582 = vmatpush1.bf16.msra.mxu0 %v7799
        %10583 = vmatprep.subr.bf16.mxu0 0
        %10584 = vmatpush2.bf16.msra.mxu0 %v7814
        %10585 = vmatprep.subr.bf16.mxu0 0
        %10586 = vmatpush2.bf16.msra.mxu0 %v7813
        %10587 = vmatprep.subr.bf16.mxu0 0
        %10588 = vmatpush2.bf16.msra.mxu0 %v7812
        %10589 = vmatprep.subr.bf16.mxu0 0
        %10590 = vmatpush2.bf16.msra.mxu0 %v7811
        %10591 = vmatprep.subr.bf16.mxu0 0
        %10592 = vmatpush2.bf16.msra.mxu0 %v7810
        %10593 = vmatprep.subr.bf16.mxu0 0
        %10594 = vmatpush2.bf16.msra.mxu0 %v7809
        %10595 = vmatprep.subr.bf16.mxu0 0
        %10596 = vmatpush2.bf16.msra.mxu0 %v7808
        %10597 = vmatprep.subr.bf16.mxu0 0
        %10598 = vmatpush2.bf16.msra.mxu0 %v7807
        %10599 = vmatprep.mubr.bf16.mxu0 %v2698
        %10600 = vmatmul.mubr.bf16.gmra.mxu0 %v2684
        %v10601 = vpop.f32.mrf.mxu0
        %v10602 = vadd.f32 %v10562, %v10601
        %v10603 = vpop.f32.mrf.mxu0
        %v10604 = vpop.f32.mrf.mxu0
        %v10605 = vpop.f32.mrf.mxu0
        %10606 = vdwg.mxu0
        %10607 = vmatprep.subr.bf16.mxu0 0
        %10608 = vmatpush1.bf16.msra.mxu0 %v7822
        %10609 = vmatprep.subr.bf16.mxu0 0
        %10610 = vmatpush1.bf16.msra.mxu0 %v7821
        %10611 = vmatprep.subr.bf16.mxu0 0
        %10612 = vmatpush1.bf16.msra.mxu0 %v7820
        %10613 = vmatprep.subr.bf16.mxu0 0
        %10614 = vmatpush1.bf16.msra.mxu0 %v7819
        %10615 = vmatprep.subr.bf16.mxu0 0
        %10616 = vmatpush1.bf16.msra.mxu0 %v7818
        %10617 = vmatprep.subr.bf16.mxu0 0
        %10618 = vmatpush1.bf16.msra.mxu0 %v7817
        %10619 = vmatprep.subr.bf16.mxu0 0
        %10620 = vmatpush1.bf16.msra.mxu0 %v7816
        %10621 = vmatprep.subr.bf16.mxu0 0
        %10622 = vmatpush1.bf16.msra.mxu0 %v7815
        %10623 = vmatprep.subr.bf16.mxu0 0
        %10624 = vmatpush2.bf16.msra.mxu0 %v7830
        %10625 = vmatprep.subr.bf16.mxu0 0
        %10626 = vmatpush2.bf16.msra.mxu0 %v7829
        %10627 = vmatprep.subr.bf16.mxu0 0
        %10628 = vmatpush2.bf16.msra.mxu0 %v7828
        %10629 = vmatprep.subr.bf16.mxu0 0
        %10630 = vmatpush2.bf16.msra.mxu0 %v7827
        %10631 = vmatprep.subr.bf16.mxu0 0
        %10632 = vmatpush2.bf16.msra.mxu0 %v7826
        %10633 = vmatprep.subr.bf16.mxu0 0
        %10634 = vmatpush2.bf16.msra.mxu0 %v7825
        %10635 = vmatprep.subr.bf16.mxu0 0
        %10636 = vmatpush2.bf16.msra.mxu0 %v7824
        %10637 = vmatprep.subr.bf16.mxu0 0
        %10638 = vmatpush2.bf16.msra.mxu0 %v7823
        %10639 = vmatprep.mubr.bf16.mxu0 %v2702
        %10640 = vmatmul.mubr.bf16.gmra.mxu0 %v2700
        %v10641 = vpop.f32.mrf.mxu0
        %v10642 = vadd.f32 %v10602, %v10641
        %v10643 = vpop.f32.mrf.mxu0
        %v10644 = vpop.f32.mrf.mxu0
        %v10645 = vpop.f32.mrf.mxu0
        %10646 = vdwg.mxu0
        %10647 = vmatprep.subr.bf16.mxu0 0
        %10648 = vmatpush1.bf16.msra.mxu0 %v7838
        %10649 = vmatprep.subr.bf16.mxu0 0
        %10650 = vmatpush1.bf16.msra.mxu0 %v7837
        %10651 = vmatprep.subr.bf16.mxu0 0
        %10652 = vmatpush1.bf16.msra.mxu0 %v7836
        %10653 = vmatprep.subr.bf16.mxu0 0
        %10654 = vmatpush1.bf16.msra.mxu0 %v7835
        %10655 = vmatprep.subr.bf16.mxu0 0
        %10656 = vmatpush1.bf16.msra.mxu0 %v7834
        %10657 = vmatprep.subr.bf16.mxu0 0
        %10658 = vmatpush1.bf16.msra.mxu0 %v7833
        %10659 = vmatprep.subr.bf16.mxu0 0
        %10660 = vmatpush1.bf16.msra.mxu0 %v7832
        %10661 = vmatprep.subr.bf16.mxu0 0
        %10662 = vmatpush1.bf16.msra.mxu0 %v7831
        %10663 = vmatprep.subr.bf16.mxu0 0
        %10664 = vmatpush2.bf16.msra.mxu0 %v7846
        %10665 = vmatprep.subr.bf16.mxu0 0
        %10666 = vmatpush2.bf16.msra.mxu0 %v7845
        %10667 = vmatprep.subr.bf16.mxu0 0
        %10668 = vmatpush2.bf16.msra.mxu0 %v7844
        %10669 = vmatprep.subr.bf16.mxu0 0
        %10670 = vmatpush2.bf16.msra.mxu0 %v7843
        %10671 = vmatprep.subr.bf16.mxu0 0
        %10672 = vmatpush2.bf16.msra.mxu0 %v7842
        %10673 = vmatprep.subr.bf16.mxu0 0
        %10674 = vmatpush2.bf16.msra.mxu0 %v7841
        %10675 = vmatprep.subr.bf16.mxu0 0
        %10676 = vmatpush2.bf16.msra.mxu0 %v7840
        %10677 = vmatprep.subr.bf16.mxu0 0
        %10678 = vmatpush2.bf16.msra.mxu0 %v7839
        %10679 = vmatprep.mubr.bf16.mxu0 %v2740
        %10680 = vmatmul.mubr.bf16.gmra.mxu0 %v2726
        %v10681 = vpop.f32.mrf.mxu0
        %v10682 = vadd.f32 %v10642, %v10681
        %v10683 = vpop.f32.mrf.mxu0
        %v10684 = vpop.f32.mrf.mxu0
        %v10685 = vpop.f32.mrf.mxu0
        %10686 = vdwg.mxu0
        %10687 = vmatprep.subr.bf16.mxu0 0
        %10688 = vmatpush1.bf16.msra.mxu0 %v7854
        %10689 = vmatprep.subr.bf16.mxu0 0
        %10690 = vmatpush1.bf16.msra.mxu0 %v7853
        %10691 = vmatprep.subr.bf16.mxu0 0
        %10692 = vmatpush1.bf16.msra.mxu0 %v7852
        %10693 = vmatprep.subr.bf16.mxu0 0
        %10694 = vmatpush1.bf16.msra.mxu0 %v7851
        %10695 = vmatprep.subr.bf16.mxu0 0
        %10696 = vmatpush1.bf16.msra.mxu0 %v7850
        %10697 = vmatprep.subr.bf16.mxu0 0
        %10698 = vmatpush1.bf16.msra.mxu0 %v7849
        %10699 = vmatprep.subr.bf16.mxu0 0
        %10700 = vmatpush1.bf16.msra.mxu0 %v7848
        %10701 = vmatprep.subr.bf16.mxu0 0
        %10702 = vmatpush1.bf16.msra.mxu0 %v7847
        %10703 = vmatprep.subr.bf16.mxu0 0
        %10704 = vmatpush2.bf16.msra.mxu0 %v7862
        %10705 = vmatprep.subr.bf16.mxu0 0
        %10706 = vmatpush2.bf16.msra.mxu0 %v7861
        %10707 = vmatprep.subr.bf16.mxu0 0
        %10708 = vmatpush2.bf16.msra.mxu0 %v7860
        %10709 = vmatprep.subr.bf16.mxu0 0
        %10710 = vmatpush2.bf16.msra.mxu0 %v7859
        %10711 = vmatprep.subr.bf16.mxu0 0
        %10712 = vmatpush2.bf16.msra.mxu0 %v7858
        %10713 = vmatprep.subr.bf16.mxu0 0
        %10714 = vmatpush2.bf16.msra.mxu0 %v7857
        %10715 = vmatprep.subr.bf16.mxu0 0
        %10716 = vmatpush2.bf16.msra.mxu0 %v7856
        %10717 = vmatprep.subr.bf16.mxu0 0
        %10718 = vmatpush2.bf16.msra.mxu0 %v7855
        %10719 = vmatprep.mubr.bf16.mxu0 %v2750
        %10720 = vmatmul.mubr.bf16.gmra.mxu0 %v2748
        %v10721 = vpop.f32.mrf.mxu0
        %v10722 = vadd.f32 %v10682, %v10721
        %v10723 = vpop.f32.mrf.mxu0
        %v10724 = vpop.f32.mrf.mxu0
        %v10725 = vpop.f32.mrf.mxu0
        %10726 = vdwg.mxu0
        %10727 = vmatprep.subr.bf16.mxu0 0
        %10728 = vmatpush1.bf16.msra.mxu0 %v7870
        %10729 = vmatprep.subr.bf16.mxu0 0
        %10730 = vmatpush1.bf16.msra.mxu0 %v7869
        %10731 = vmatprep.subr.bf16.mxu0 0
        %10732 = vmatpush1.bf16.msra.mxu0 %v7868
        %10733 = vmatprep.subr.bf16.mxu0 0
        %10734 = vmatpush1.bf16.msra.mxu0 %v7867
        %10735 = vmatprep.subr.bf16.mxu0 0
        %10736 = vmatpush1.bf16.msra.mxu0 %v7866
        %10737 = vmatprep.subr.bf16.mxu0 0
        %10738 = vmatpush1.bf16.msra.mxu0 %v7865
        %10739 = vmatprep.subr.bf16.mxu0 0
        %10740 = vmatpush1.bf16.msra.mxu0 %v7864
        %10741 = vmatprep.subr.bf16.mxu0 0
        %10742 = vmatpush1.bf16.msra.mxu0 %v7863
        %10743 = vmatprep.subr.bf16.mxu0 0
        %10744 = vmatpush2.bf16.msra.mxu0 %v7878
        %10745 = vmatprep.subr.bf16.mxu0 0
        %10746 = vmatpush2.bf16.msra.mxu0 %v7877
        %10747 = vmatprep.subr.bf16.mxu0 0
        %10748 = vmatpush2.bf16.msra.mxu0 %v7876
        %10749 = vmatprep.subr.bf16.mxu0 0
        %10750 = vmatpush2.bf16.msra.mxu0 %v7875
        %10751 = vmatprep.subr.bf16.mxu0 0
        %10752 = vmatpush2.bf16.msra.mxu0 %v7874
        %10753 = vmatprep.subr.bf16.mxu0 0
        %10754 = vmatpush2.bf16.msra.mxu0 %v7873
        %10755 = vmatprep.subr.bf16.mxu0 0
        %10756 = vmatpush2.bf16.msra.mxu0 %v7872
        %10757 = vmatprep.subr.bf16.mxu0 0
        %10758 = vmatpush2.bf16.msra.mxu0 %v7871
        %10759 = vmatprep.mubr.bf16.mxu0 %v2747
        %10760 = vmatmul.mubr.bf16.gmra.mxu0 %v2733
        %v10761 = vpop.f32.mrf.mxu0
        %v10762 = vadd.f32 %v10722, %v10761
        %v10763 = vpop.f32.mrf.mxu0
        %v10764 = vpop.f32.mrf.mxu0
        %v10765 = vpop.f32.mrf.mxu0
        %10766 = vdwg.mxu0
        %10767 = vmatprep.subr.bf16.mxu0 0
        %10768 = vmatpush1.bf16.msra.mxu0 %v7886
        %10769 = vmatprep.subr.bf16.mxu0 0
        %10770 = vmatpush1.bf16.msra.mxu0 %v7885
        %10771 = vmatprep.subr.bf16.mxu0 0
        %10772 = vmatpush1.bf16.msra.mxu0 %v7884
        %10773 = vmatprep.subr.bf16.mxu0 0
        %10774 = vmatpush1.bf16.msra.mxu0 %v7883
        %10775 = vmatprep.subr.bf16.mxu0 0
        %10776 = vmatpush1.bf16.msra.mxu0 %v7882
        %10777 = vmatprep.subr.bf16.mxu0 0
        %10778 = vmatpush1.bf16.msra.mxu0 %v7881
        %10779 = vmatprep.subr.bf16.mxu0 0
        %10780 = vmatpush1.bf16.msra.mxu0 %v7880
        %10781 = vmatprep.subr.bf16.mxu0 0
        %10782 = vmatpush1.bf16.msra.mxu0 %v7879
        %10783 = vmatprep.subr.bf16.mxu0 0
        %10784 = vmatpush2.bf16.msra.mxu0 %v7894
        %10785 = vmatprep.subr.bf16.mxu0 0
        %10786 = vmatpush2.bf16.msra.mxu0 %v7893
        %10787 = vmatprep.subr.bf16.mxu0 0
        %10788 = vmatpush2.bf16.msra.mxu0 %v7892
        %10789 = vmatprep.subr.bf16.mxu0 0
        %10790 = vmatpush2.bf16.msra.mxu0 %v7891
        %10791 = vmatprep.subr.bf16.mxu0 0
        %10792 = vmatpush2.bf16.msra.mxu0 %v7890
        %10793 = vmatprep.subr.bf16.mxu0 0
        %10794 = vmatpush2.bf16.msra.mxu0 %v7889
        %10795 = vmatprep.subr.bf16.mxu0 0
        %10796 = vmatpush2.bf16.msra.mxu0 %v7888
        %10797 = vmatprep.subr.bf16.mxu0 0
        %10798 = vmatpush2.bf16.msra.mxu0 %v7887
        %10799 = vmatprep.mubr.bf16.mxu0 %v2751
        %10800 = vmatmul.mubr.bf16.gmra.mxu0 %v2749
        %v10801 = vpop.f32.mrf.mxu0
        %v10802 = vadd.f32 %v10762, %v10801
        %v10803 = vpop.f32.mrf.mxu0
        %v10804 = vpop.f32.mrf.mxu0
        %v10805 = vpop.f32.mrf.mxu0
        %10806 = vdwg.mxu0
        %10807 = vmatprep.subr.bf16.mxu0 0
        %10808 = vmatpush1.bf16.msra.mxu0 %v7902
        %10809 = vmatprep.subr.bf16.mxu0 0
        %10810 = vmatpush1.bf16.msra.mxu0 %v7901
        %10811 = vmatprep.subr.bf16.mxu0 0
        %10812 = vmatpush1.bf16.msra.mxu0 %v7900
        %10813 = vmatprep.subr.bf16.mxu0 0
        %10814 = vmatpush1.bf16.msra.mxu0 %v7899
        %10815 = vmatprep.subr.bf16.mxu0 0
        %10816 = vmatpush1.bf16.msra.mxu0 %v7898
        %10817 = vmatprep.subr.bf16.mxu0 0
        %10818 = vmatpush1.bf16.msra.mxu0 %v7897
        %10819 = vmatprep.subr.bf16.mxu0 0
        %10820 = vmatpush1.bf16.msra.mxu0 %v7896
        %10821 = vmatprep.subr.bf16.mxu0 0
        %10822 = vmatpush1.bf16.msra.mxu0 %v7895
        %10823 = vmatprep.subr.bf16.mxu0 0
        %10824 = vmatpush2.bf16.msra.mxu0 %v7910
        %10825 = vmatprep.subr.bf16.mxu0 0
        %10826 = vmatpush2.bf16.msra.mxu0 %v7909
        %10827 = vmatprep.subr.bf16.mxu0 0
        %10828 = vmatpush2.bf16.msra.mxu0 %v7908
        %10829 = vmatprep.subr.bf16.mxu0 0
        %10830 = vmatpush2.bf16.msra.mxu0 %v7907
        %10831 = vmatprep.subr.bf16.mxu0 0
        %10832 = vmatpush2.bf16.msra.mxu0 %v7906
        %10833 = vmatprep.subr.bf16.mxu0 0
        %10834 = vmatpush2.bf16.msra.mxu0 %v7905
        %10835 = vmatprep.subr.bf16.mxu0 0
        %10836 = vmatpush2.bf16.msra.mxu0 %v7904
        %10837 = vmatprep.subr.bf16.mxu0 0
        %10838 = vmatpush2.bf16.msra.mxu0 %v7903
        %10839 = vmatprep.mubr.bf16.mxu0 %v2789
        %10840 = vmatmul.mubr.bf16.gmra.mxu0 %v2775
        %v10841 = vpop.f32.mrf.mxu0
        %v10842 = vadd.f32 %v10802, %v10841
        %v10843 = vpop.f32.mrf.mxu0
        %v10844 = vpop.f32.mrf.mxu0
        %v10845 = vpop.f32.mrf.mxu0
        %10846 = vdwg.mxu0
        %10847 = vmatprep.subr.bf16.mxu0 0
        %10848 = vmatpush1.bf16.msra.mxu0 %v7918
        %10849 = vmatprep.subr.bf16.mxu0 0
        %10850 = vmatpush1.bf16.msra.mxu0 %v7917
        %10851 = vmatprep.subr.bf16.mxu0 0
        %10852 = vmatpush1.bf16.msra.mxu0 %v7916
        %10853 = vmatprep.subr.bf16.mxu0 0
        %10854 = vmatpush1.bf16.msra.mxu0 %v7915
        %10855 = vmatprep.subr.bf16.mxu0 0
        %10856 = vmatpush1.bf16.msra.mxu0 %v7914
        %10857 = vmatprep.subr.bf16.mxu0 0
        %10858 = vmatpush1.bf16.msra.mxu0 %v7913
        %10859 = vmatprep.subr.bf16.mxu0 0
        %10860 = vmatpush1.bf16.msra.mxu0 %v7912
        %10861 = vmatprep.subr.bf16.mxu0 0
        %10862 = vmatpush1.bf16.msra.mxu0 %v7911
        %10863 = vmatprep.subr.bf16.mxu0 0
        %10864 = vmatpush2.bf16.msra.mxu0 %v7926
        %10865 = vmatprep.subr.bf16.mxu0 0
        %10866 = vmatpush2.bf16.msra.mxu0 %v7925
        %10867 = vmatprep.subr.bf16.mxu0 0
        %10868 = vmatpush2.bf16.msra.mxu0 %v7924
        %10869 = vmatprep.subr.bf16.mxu0 0
        %10870 = vmatpush2.bf16.msra.mxu0 %v7923
        %10871 = vmatprep.subr.bf16.mxu0 0
        %10872 = vmatpush2.bf16.msra.mxu0 %v7922
        %10873 = vmatprep.subr.bf16.mxu0 0
        %10874 = vmatpush2.bf16.msra.mxu0 %v7921
        %10875 = vmatprep.subr.bf16.mxu0 0
        %10876 = vmatpush2.bf16.msra.mxu0 %v7920
        %10877 = vmatprep.subr.bf16.mxu0 0
        %10878 = vmatpush2.bf16.msra.mxu0 %v7919
        %10879 = vmatprep.mubr.bf16.mxu0 %v2799
        %10880 = vmatmul.mubr.bf16.gmra.mxu0 %v2797
        %v10881 = vpop.f32.mrf.mxu0
        %v10882 = vadd.f32 %v10842, %v10881
        %v10883 = vpop.f32.mrf.mxu0
        %v10884 = vpop.f32.mrf.mxu0
        %v10885 = vpop.f32.mrf.mxu0
        %10886 = vdwg.mxu0
        %10887 = vmatprep.subr.bf16.mxu0 0
        %10888 = vmatpush1.bf16.msra.mxu0 %v7934
        %10889 = vmatprep.subr.bf16.mxu0 0
        %10890 = vmatpush1.bf16.msra.mxu0 %v7933
        %10891 = vmatprep.subr.bf16.mxu0 0
        %10892 = vmatpush1.bf16.msra.mxu0 %v7932
        %10893 = vmatprep.subr.bf16.mxu0 0
        %10894 = vmatpush1.bf16.msra.mxu0 %v7931
        %10895 = vmatprep.subr.bf16.mxu0 0
        %10896 = vmatpush1.bf16.msra.mxu0 %v7930
        %10897 = vmatprep.subr.bf16.mxu0 0
        %10898 = vmatpush1.bf16.msra.mxu0 %v7929
        %10899 = vmatprep.subr.bf16.mxu0 0
        %10900 = vmatpush1.bf16.msra.mxu0 %v7928
        %10901 = vmatprep.subr.bf16.mxu0 0
        %10902 = vmatpush1.bf16.msra.mxu0 %v7927
        %10903 = vmatprep.subr.bf16.mxu0 0
        %10904 = vmatpush2.bf16.msra.mxu0 %v7942
        %10905 = vmatprep.subr.bf16.mxu0 0
        %10906 = vmatpush2.bf16.msra.mxu0 %v7941
        %10907 = vmatprep.subr.bf16.mxu0 0
        %10908 = vmatpush2.bf16.msra.mxu0 %v7940
        %10909 = vmatprep.subr.bf16.mxu0 0
        %10910 = vmatpush2.bf16.msra.mxu0 %v7939
        %10911 = vmatprep.subr.bf16.mxu0 0
        %10912 = vmatpush2.bf16.msra.mxu0 %v7938
        %10913 = vmatprep.subr.bf16.mxu0 0
        %10914 = vmatpush2.bf16.msra.mxu0 %v7937
        %10915 = vmatprep.subr.bf16.mxu0 0
        %10916 = vmatpush2.bf16.msra.mxu0 %v7936
        %10917 = vmatprep.subr.bf16.mxu0 0
        %10918 = vmatpush2.bf16.msra.mxu0 %v7935
        %10919 = vmatprep.mubr.bf16.mxu0 %v2796
        %10920 = vmatmul.mubr.bf16.gmra.mxu0 %v2782
        %v10921 = vpop.f32.mrf.mxu0
        %v10922 = vadd.f32 %v10882, %v10921
        %v10923 = vpop.f32.mrf.mxu0
        %v10924 = vpop.f32.mrf.mxu0
        %v10925 = vpop.f32.mrf.mxu0
        %10926 = vdwg.mxu0
        %10927 = vmatprep.subr.bf16.mxu0 0
        %10928 = vmatpush1.bf16.msra.mxu0 %v7950
        %10929 = vmatprep.subr.bf16.mxu0 0
        %10930 = vmatpush1.bf16.msra.mxu0 %v7949
        %10931 = vmatprep.subr.bf16.mxu0 0
        %10932 = vmatpush1.bf16.msra.mxu0 %v7948
        %10933 = vmatprep.subr.bf16.mxu0 0
        %10934 = vmatpush1.bf16.msra.mxu0 %v7947
        %10935 = vmatprep.subr.bf16.mxu0 0
        %10936 = vmatpush1.bf16.msra.mxu0 %v7946
        %10937 = vmatprep.subr.bf16.mxu0 0
        %10938 = vmatpush1.bf16.msra.mxu0 %v7945
        %10939 = vmatprep.subr.bf16.mxu0 0
        %10940 = vmatpush1.bf16.msra.mxu0 %v7944
        %10941 = vmatprep.subr.bf16.mxu0 0
        %10942 = vmatpush1.bf16.msra.mxu0 %v7943
        %10943 = vmatprep.subr.bf16.mxu0 0
        %10944 = vmatpush2.bf16.msra.mxu0 %v7958
        %10945 = vmatprep.subr.bf16.mxu0 0
        %10946 = vmatpush2.bf16.msra.mxu0 %v7957
        %10947 = vmatprep.subr.bf16.mxu0 0
        %10948 = vmatpush2.bf16.msra.mxu0 %v7956
        %10949 = vmatprep.subr.bf16.mxu0 0
        %10950 = vmatpush2.bf16.msra.mxu0 %v7955
        %10951 = vmatprep.subr.bf16.mxu0 0
        %10952 = vmatpush2.bf16.msra.mxu0 %v7954
        %10953 = vmatprep.subr.bf16.mxu0 0
        %10954 = vmatpush2.bf16.msra.mxu0 %v7953
        %10955 = vmatprep.subr.bf16.mxu0 0
        %10956 = vmatpush2.bf16.msra.mxu0 %v7952
        %10957 = vmatprep.subr.bf16.mxu0 0
        %10958 = vmatpush2.bf16.msra.mxu0 %v7951
        %10959 = vmatprep.mubr.bf16.mxu0 %v2800
        %10960 = vmatmul.mubr.bf16.gmra.mxu0 %v2798
        %v10961 = vpop.f32.mrf.mxu0
        %v10962 = vadd.f32 %v10922, %v10961
        %v10963 = vpop.f32.mrf.mxu0
        %v10964 = vpop.f32.mrf.mxu0
        %v10965 = vpop.f32.mrf.mxu0
        %10966 = vdwg.mxu0
        %10967 = vmatprep.subr.bf16.mxu0 0
        %10968 = vmatpush1.bf16.msra.mxu0 %v7966
        %10969 = vmatprep.subr.bf16.mxu0 0
        %10970 = vmatpush1.bf16.msra.mxu0 %v7965
        %10971 = vmatprep.subr.bf16.mxu0 0
        %10972 = vmatpush1.bf16.msra.mxu0 %v7964
        %10973 = vmatprep.subr.bf16.mxu0 0
        %10974 = vmatpush1.bf16.msra.mxu0 %v7963
        %10975 = vmatprep.subr.bf16.mxu0 0
        %10976 = vmatpush1.bf16.msra.mxu0 %v7962
        %10977 = vmatprep.subr.bf16.mxu0 0
        %10978 = vmatpush1.bf16.msra.mxu0 %v7961
        %10979 = vmatprep.subr.bf16.mxu0 0
        %10980 = vmatpush1.bf16.msra.mxu0 %v7960
        %10981 = vmatprep.subr.bf16.mxu0 0
        %10982 = vmatpush1.bf16.msra.mxu0 %v7959
        %10983 = vmatprep.subr.bf16.mxu0 0
        %10984 = vmatpush2.bf16.msra.mxu0 %v7974
        %10985 = vmatprep.subr.bf16.mxu0 0
        %10986 = vmatpush2.bf16.msra.mxu0 %v7973
        %10987 = vmatprep.subr.bf16.mxu0 0
        %10988 = vmatpush2.bf16.msra.mxu0 %v7972
        %10989 = vmatprep.subr.bf16.mxu0 0
        %10990 = vmatpush2.bf16.msra.mxu0 %v7971
        %10991 = vmatprep.subr.bf16.mxu0 0
        %10992 = vmatpush2.bf16.msra.mxu0 %v7970
        %10993 = vmatprep.subr.bf16.mxu0 0
        %10994 = vmatpush2.bf16.msra.mxu0 %v7969
        %10995 = vmatprep.subr.bf16.mxu0 0
        %10996 = vmatpush2.bf16.msra.mxu0 %v7968
        %10997 = vmatprep.subr.bf16.mxu0 0
        %10998 = vmatpush2.bf16.msra.mxu0 %v7967
        %10999 = vmatprep.mubr.bf16.mxu0 %v2838
        %11000 = vmatmul.mubr.bf16.gmra.mxu0 %v2824
        %v11001 = vpop.f32.mrf.mxu0
        %v11002 = vadd.f32 %v10962, %v11001
        %v11003 = vpop.f32.mrf.mxu0
        %v11004 = vpop.f32.mrf.mxu0
        %v11005 = vpop.f32.mrf.mxu0
        %11006 = vdwg.mxu0
        %11007 = vmatprep.subr.bf16.mxu0 0
        %11008 = vmatpush1.bf16.msra.mxu0 %v7982
        %11009 = vmatprep.subr.bf16.mxu0 0
        %11010 = vmatpush1.bf16.msra.mxu0 %v7981
        %11011 = vmatprep.subr.bf16.mxu0 0
        %11012 = vmatpush1.bf16.msra.mxu0 %v7980
        %11013 = vmatprep.subr.bf16.mxu0 0
        %11014 = vmatpush1.bf16.msra.mxu0 %v7979
        %11015 = vmatprep.subr.bf16.mxu0 0
        %11016 = vmatpush1.bf16.msra.mxu0 %v7978
        %11017 = vmatprep.subr.bf16.mxu0 0
        %11018 = vmatpush1.bf16.msra.mxu0 %v7977
        %11019 = vmatprep.subr.bf16.mxu0 0
        %11020 = vmatpush1.bf16.msra.mxu0 %v7976
        %11021 = vmatprep.subr.bf16.mxu0 0
        %11022 = vmatpush1.bf16.msra.mxu0 %v7975
        %11023 = vmatprep.subr.bf16.mxu0 0
        %11024 = vmatpush2.bf16.msra.mxu0 %v7990
        %11025 = vmatprep.subr.bf16.mxu0 0
        %11026 = vmatpush2.bf16.msra.mxu0 %v7989
        %11027 = vmatprep.subr.bf16.mxu0 0
        %11028 = vmatpush2.bf16.msra.mxu0 %v7988
        %11029 = vmatprep.subr.bf16.mxu0 0
        %11030 = vmatpush2.bf16.msra.mxu0 %v7987
        %11031 = vmatprep.subr.bf16.mxu0 0
        %11032 = vmatpush2.bf16.msra.mxu0 %v7986
        %11033 = vmatprep.subr.bf16.mxu0 0
        %11034 = vmatpush2.bf16.msra.mxu0 %v7985
        %11035 = vmatprep.subr.bf16.mxu0 0
        %11036 = vmatpush2.bf16.msra.mxu0 %v7984
        %11037 = vmatprep.subr.bf16.mxu0 0
        %11038 = vmatpush2.bf16.msra.mxu0 %v7983
        %11039 = vmatprep.mubr.bf16.mxu0 %v2848
        %11040 = vmatmul.mubr.bf16.gmra.mxu0 %v2846
        %v11041 = vpop.f32.mrf.mxu0
        %v11042 = vadd.f32 %v11002, %v11041
        %v11043 = vpop.f32.mrf.mxu0
        %v11044 = vpop.f32.mrf.mxu0
        %v11045 = vpop.f32.mrf.mxu0
        %11046 = vdwg.mxu0
        %11047 = vmatprep.subr.bf16.mxu0 0
        %11048 = vmatpush1.bf16.msra.mxu0 %v7998
        %11049 = vmatprep.subr.bf16.mxu0 0
        %11050 = vmatpush1.bf16.msra.mxu0 %v7997
        %11051 = vmatprep.subr.bf16.mxu0 0
        %11052 = vmatpush1.bf16.msra.mxu0 %v7996
        %11053 = vmatprep.subr.bf16.mxu0 0
        %11054 = vmatpush1.bf16.msra.mxu0 %v7995
        %11055 = vmatprep.subr.bf16.mxu0 0
        %11056 = vmatpush1.bf16.msra.mxu0 %v7994
        %11057 = vmatprep.subr.bf16.mxu0 0
        %11058 = vmatpush1.bf16.msra.mxu0 %v7993
        %11059 = vmatprep.subr.bf16.mxu0 0
        %11060 = vmatpush1.bf16.msra.mxu0 %v7992
        %11061 = vmatprep.subr.bf16.mxu0 0
        %11062 = vmatpush1.bf16.msra.mxu0 %v7991
        %11063 = vmatprep.subr.bf16.mxu0 0
        %11064 = vmatpush2.bf16.msra.mxu0 %v8006
        %11065 = vmatprep.subr.bf16.mxu0 0
        %11066 = vmatpush2.bf16.msra.mxu0 %v8005
        %11067 = vmatprep.subr.bf16.mxu0 0
        %11068 = vmatpush2.bf16.msra.mxu0 %v8004
        %11069 = vmatprep.subr.bf16.mxu0 0
        %11070 = vmatpush2.bf16.msra.mxu0 %v8003
        %11071 = vmatprep.subr.bf16.mxu0 0
        %11072 = vmatpush2.bf16.msra.mxu0 %v8002
        %11073 = vmatprep.subr.bf16.mxu0 0
        %11074 = vmatpush2.bf16.msra.mxu0 %v8001
        %11075 = vmatprep.subr.bf16.mxu0 0
        %11076 = vmatpush2.bf16.msra.mxu0 %v8000
        %11077 = vmatprep.subr.bf16.mxu0 0
        %11078 = vmatpush2.bf16.msra.mxu0 %v7999
        %11079 = vmatprep.mubr.bf16.mxu0 %v2845
        %11080 = vmatmul.mubr.bf16.gmra.mxu0 %v2831
        %v11081 = vpop.f32.mrf.mxu0
        %v11082 = vadd.f32 %v11042, %v11081
        %v11083 = vpop.f32.mrf.mxu0
        %v11084 = vpop.f32.mrf.mxu0
        %v11085 = vpop.f32.mrf.mxu0
        %11086 = vdwg.mxu0
        %11087 = vmatprep.subr.bf16.mxu0 0
        %11088 = vmatpush1.bf16.msra.mxu0 %v8014
        %11089 = vmatprep.subr.bf16.mxu0 0
        %11090 = vmatpush1.bf16.msra.mxu0 %v8013
        %11091 = vmatprep.subr.bf16.mxu0 0
        %11092 = vmatpush1.bf16.msra.mxu0 %v8012
        %11093 = vmatprep.subr.bf16.mxu0 0
        %11094 = vmatpush1.bf16.msra.mxu0 %v8011
        %11095 = vmatprep.subr.bf16.mxu0 0
        %11096 = vmatpush1.bf16.msra.mxu0 %v8010
        %11097 = vmatprep.subr.bf16.mxu0 0
        %11098 = vmatpush1.bf16.msra.mxu0 %v8009
        %11099 = vmatprep.subr.bf16.mxu0 0
        %11100 = vmatpush1.bf16.msra.mxu0 %v8008
        %11101 = vmatprep.subr.bf16.mxu0 0
        %11102 = vmatpush1.bf16.msra.mxu0 %v8007
        %11103 = vmatprep.subr.bf16.mxu0 0
        %11104 = vmatpush2.bf16.msra.mxu0 %v8022
        %11105 = vmatprep.subr.bf16.mxu0 0
        %11106 = vmatpush2.bf16.msra.mxu0 %v8021
        %11107 = vmatprep.subr.bf16.mxu0 0
        %11108 = vmatpush2.bf16.msra.mxu0 %v8020
        %11109 = vmatprep.subr.bf16.mxu0 0
        %11110 = vmatpush2.bf16.msra.mxu0 %v8019
        %11111 = vmatprep.subr.bf16.mxu0 0
        %11112 = vmatpush2.bf16.msra.mxu0 %v8018
        %11113 = vmatprep.subr.bf16.mxu0 0
        %11114 = vmatpush2.bf16.msra.mxu0 %v8017
        %11115 = vmatprep.subr.bf16.mxu0 0
        %11116 = vmatpush2.bf16.msra.mxu0 %v8016
        %11117 = vmatprep.subr.bf16.mxu0 0
        %11118 = vmatpush2.bf16.msra.mxu0 %v8015
        %11119 = vmatprep.mubr.bf16.mxu0 %v2849
        %11120 = vmatmul.mubr.bf16.gmra.mxu0 %v2847
        %v11121 = vpop.f32.mrf.mxu0
        %v11122 = vadd.f32 %v11082, %v11121
        %v11123 = vpop.f32.mrf.mxu0
        %v11124 = vpop.f32.mrf.mxu0
        %v11125 = vpop.f32.mrf.mxu0
        %11126 = vdwg.mxu0
        %11127 = vmatprep.subr.bf16.mxu0 0
        %11128 = vmatpush1.bf16.msra.mxu0 %v8030
        %11129 = vmatprep.subr.bf16.mxu0 0
        %11130 = vmatpush1.bf16.msra.mxu0 %v8029
        %11131 = vmatprep.subr.bf16.mxu0 0
        %11132 = vmatpush1.bf16.msra.mxu0 %v8028
        %11133 = vmatprep.subr.bf16.mxu0 0
        %11134 = vmatpush1.bf16.msra.mxu0 %v8027
        %11135 = vmatprep.subr.bf16.mxu0 0
        %11136 = vmatpush1.bf16.msra.mxu0 %v8026
        %11137 = vmatprep.subr.bf16.mxu0 0
        %11138 = vmatpush1.bf16.msra.mxu0 %v8025
        %11139 = vmatprep.subr.bf16.mxu0 0
        %11140 = vmatpush1.bf16.msra.mxu0 %v8024
        %11141 = vmatprep.subr.bf16.mxu0 0
        %11142 = vmatpush1.bf16.msra.mxu0 %v8023
        %11143 = vmatprep.subr.bf16.mxu0 0
        %11144 = vmatpush2.bf16.msra.mxu0 %v8038
        %11145 = vmatprep.subr.bf16.mxu0 0
        %11146 = vmatpush2.bf16.msra.mxu0 %v8037
        %11147 = vmatprep.subr.bf16.mxu0 0
        %11148 = vmatpush2.bf16.msra.mxu0 %v8036
        %11149 = vmatprep.subr.bf16.mxu0 0
        %11150 = vmatpush2.bf16.msra.mxu0 %v8035
        %11151 = vmatprep.subr.bf16.mxu0 0
        %11152 = vmatpush2.bf16.msra.mxu0 %v8034
        %11153 = vmatprep.subr.bf16.mxu0 0
        %11154 = vmatpush2.bf16.msra.mxu0 %v8033
        %11155 = vmatprep.subr.bf16.mxu0 0
        %11156 = vmatpush2.bf16.msra.mxu0 %v8032
        %11157 = vmatprep.subr.bf16.mxu0 0
        %11158 = vmatpush2.bf16.msra.mxu0 %v8031
        %11159 = vmatprep.mubr.bf16.mxu0 %v2887
        %11160 = vmatmul.mubr.bf16.gmra.mxu0 %v2873
        %v11161 = vpop.f32.mrf.mxu0
        %v11162 = vadd.f32 %v11122, %v11161
        %v11163 = vpop.f32.mrf.mxu0
        %v11164 = vpop.f32.mrf.mxu0
        %v11165 = vpop.f32.mrf.mxu0
        %11166 = vdwg.mxu0
        %11167 = vmatprep.subr.bf16.mxu0 0
        %11168 = vmatpush1.bf16.msra.mxu0 %v8046
        %11169 = vmatprep.subr.bf16.mxu0 0
        %11170 = vmatpush1.bf16.msra.mxu0 %v8045
        %11171 = vmatprep.subr.bf16.mxu0 0
        %11172 = vmatpush1.bf16.msra.mxu0 %v8044
        %11173 = vmatprep.subr.bf16.mxu0 0
        %11174 = vmatpush1.bf16.msra.mxu0 %v8043
        %11175 = vmatprep.subr.bf16.mxu0 0
        %11176 = vmatpush1.bf16.msra.mxu0 %v8042
        %11177 = vmatprep.subr.bf16.mxu0 0
        %11178 = vmatpush1.bf16.msra.mxu0 %v8041
        %11179 = vmatprep.subr.bf16.mxu0 0
        %11180 = vmatpush1.bf16.msra.mxu0 %v8040
        %11181 = vmatprep.subr.bf16.mxu0 0
        %11182 = vmatpush1.bf16.msra.mxu0 %v8039
        %11183 = vmatprep.subr.bf16.mxu0 0
        %11184 = vmatpush2.bf16.msra.mxu0 %v8054
        %11185 = vmatprep.subr.bf16.mxu0 0
        %11186 = vmatpush2.bf16.msra.mxu0 %v8053
        %11187 = vmatprep.subr.bf16.mxu0 0
        %11188 = vmatpush2.bf16.msra.mxu0 %v8052
        %11189 = vmatprep.subr.bf16.mxu0 0
        %11190 = vmatpush2.bf16.msra.mxu0 %v8051
        %11191 = vmatprep.subr.bf16.mxu0 0
        %11192 = vmatpush2.bf16.msra.mxu0 %v8050
        %11193 = vmatprep.subr.bf16.mxu0 0
        %11194 = vmatpush2.bf16.msra.mxu0 %v8049
        %11195 = vmatprep.subr.bf16.mxu0 0
        %11196 = vmatpush2.bf16.msra.mxu0 %v8048
        %11197 = vmatprep.subr.bf16.mxu0 0
        %11198 = vmatpush2.bf16.msra.mxu0 %v8047
        %11199 = vmatprep.mubr.bf16.mxu0 %v2897
        %11200 = vmatmul.mubr.bf16.gmra.mxu0 %v2895
        %v11201 = vpop.f32.mrf.mxu0
        %v11202 = vadd.f32 %v11162, %v11201
        %v11203 = vpop.f32.mrf.mxu0
        %v11204 = vpop.f32.mrf.mxu0
        %v11205 = vpop.f32.mrf.mxu0
        %11206 = vdwg.mxu0
        %11207 = vmatprep.subr.bf16.mxu0 0
        %11208 = vmatpush1.bf16.msra.mxu0 %v8062
        %11209 = vmatprep.subr.bf16.mxu0 0
        %11210 = vmatpush1.bf16.msra.mxu0 %v8061
        %11211 = vmatprep.subr.bf16.mxu0 0
        %11212 = vmatpush1.bf16.msra.mxu0 %v8060
        %11213 = vmatprep.subr.bf16.mxu0 0
        %11214 = vmatpush1.bf16.msra.mxu0 %v8059
        %11215 = vmatprep.subr.bf16.mxu0 0
        %11216 = vmatpush1.bf16.msra.mxu0 %v8058
        %11217 = vmatprep.subr.bf16.mxu0 0
        %11218 = vmatpush1.bf16.msra.mxu0 %v8057
        %11219 = vmatprep.subr.bf16.mxu0 0
        %11220 = vmatpush1.bf16.msra.mxu0 %v8056
        %11221 = vmatprep.subr.bf16.mxu0 0
        %11222 = vmatpush1.bf16.msra.mxu0 %v8055
        %11223 = vmatprep.subr.bf16.mxu0 0
        %11224 = vmatpush2.bf16.msra.mxu0 %v8070
        %11225 = vmatprep.subr.bf16.mxu0 0
        %11226 = vmatpush2.bf16.msra.mxu0 %v8069
        %11227 = vmatprep.subr.bf16.mxu0 0
        %11228 = vmatpush2.bf16.msra.mxu0 %v8068
        %11229 = vmatprep.subr.bf16.mxu0 0
        %11230 = vmatpush2.bf16.msra.mxu0 %v8067
        %11231 = vmatprep.subr.bf16.mxu0 0
        %11232 = vmatpush2.bf16.msra.mxu0 %v8066
        %11233 = vmatprep.subr.bf16.mxu0 0
        %11234 = vmatpush2.bf16.msra.mxu0 %v8065
        %11235 = vmatprep.subr.bf16.mxu0 0
        %11236 = vmatpush2.bf16.msra.mxu0 %v8064
        %11237 = vmatprep.subr.bf16.mxu0 0
        %11238 = vmatpush2.bf16.msra.mxu0 %v8063
        %11239 = vmatprep.mubr.bf16.mxu0 %v2894
        %11240 = vmatmul.mubr.bf16.gmra.mxu0 %v2880
        %v11241 = vpop.f32.mrf.mxu0
        %v11242 = vadd.f32 %v11202, %v11241
        %v11243 = vpop.f32.mrf.mxu0
        %v11244 = vpop.f32.mrf.mxu0
        %v11245 = vpop.f32.mrf.mxu0
        %11246 = vdwg.mxu0
        %11247 = vmatprep.subr.bf16.mxu0 0
        %11248 = vmatpush1.bf16.msra.mxu0 %v8078
        %11249 = vmatprep.subr.bf16.mxu0 0
        %11250 = vmatpush1.bf16.msra.mxu0 %v8077
        %11251 = vmatprep.subr.bf16.mxu0 0
        %11252 = vmatpush1.bf16.msra.mxu0 %v8076
        %11253 = vmatprep.subr.bf16.mxu0 0
        %11254 = vmatpush1.bf16.msra.mxu0 %v8075
        %11255 = vmatprep.subr.bf16.mxu0 0
        %11256 = vmatpush1.bf16.msra.mxu0 %v8074
        %11257 = vmatprep.subr.bf16.mxu0 0
        %11258 = vmatpush1.bf16.msra.mxu0 %v8073
        %11259 = vmatprep.subr.bf16.mxu0 0
        %11260 = vmatpush1.bf16.msra.mxu0 %v8072
        %11261 = vmatprep.subr.bf16.mxu0 0
        %11262 = vmatpush1.bf16.msra.mxu0 %v8071
        %11263 = vmatprep.subr.bf16.mxu0 0
        %11264 = vmatpush2.bf16.msra.mxu0 %v8086
        %11265 = vmatprep.subr.bf16.mxu0 0
        %11266 = vmatpush2.bf16.msra.mxu0 %v8085
        %11267 = vmatprep.subr.bf16.mxu0 0
        %11268 = vmatpush2.bf16.msra.mxu0 %v8084
        %11269 = vmatprep.subr.bf16.mxu0 0
        %11270 = vmatpush2.bf16.msra.mxu0 %v8083
        %11271 = vmatprep.subr.bf16.mxu0 0
        %11272 = vmatpush2.bf16.msra.mxu0 %v8082
        %11273 = vmatprep.subr.bf16.mxu0 0
        %11274 = vmatpush2.bf16.msra.mxu0 %v8081
        %11275 = vmatprep.subr.bf16.mxu0 0
        %11276 = vmatpush2.bf16.msra.mxu0 %v8080
        %11277 = vmatprep.subr.bf16.mxu0 0
        %11278 = vmatpush2.bf16.msra.mxu0 %v8079
        %11279 = vmatprep.mubr.bf16.mxu0 %v2898
        %11280 = vmatmul.mubr.bf16.gmra.mxu0 %v2896
        %v11281 = vpop.f32.mrf.mxu0
        %v11282 = vadd.f32 %v11242, %v11281
        %v11283 = vpop.f32.mrf.mxu0
        %v11284 = vpop.f32.mrf.mxu0
        %v11285 = vpop.f32.mrf.mxu0
        %11286 = vdwg.mxu0
        %11287 = vmatprep.subr.bf16.mxu0 0
        %11288 = vmatpush1.bf16.msra.mxu0 %v8094
        %11289 = vmatprep.subr.bf16.mxu0 0
        %11290 = vmatpush1.bf16.msra.mxu0 %v8093
        %11291 = vmatprep.subr.bf16.mxu0 0
        %11292 = vmatpush1.bf16.msra.mxu0 %v8092
        %11293 = vmatprep.subr.bf16.mxu0 0
        %11294 = vmatpush1.bf16.msra.mxu0 %v8091
        %11295 = vmatprep.subr.bf16.mxu0 0
        %11296 = vmatpush1.bf16.msra.mxu0 %v8090
        %11297 = vmatprep.subr.bf16.mxu0 0
        %11298 = vmatpush1.bf16.msra.mxu0 %v8089
        %11299 = vmatprep.subr.bf16.mxu0 0
        %11300 = vmatpush1.bf16.msra.mxu0 %v8088
        %11301 = vmatprep.subr.bf16.mxu0 0
        %11302 = vmatpush1.bf16.msra.mxu0 %v8087
        %11303 = vmatprep.subr.bf16.mxu0 0
        %11304 = vmatpush2.bf16.msra.mxu0 %v8102
        %11305 = vmatprep.subr.bf16.mxu0 0
        %11306 = vmatpush2.bf16.msra.mxu0 %v8101
        %11307 = vmatprep.subr.bf16.mxu0 0
        %11308 = vmatpush2.bf16.msra.mxu0 %v8100
        %11309 = vmatprep.subr.bf16.mxu0 0
        %11310 = vmatpush2.bf16.msra.mxu0 %v8099
        %11311 = vmatprep.subr.bf16.mxu0 0
        %11312 = vmatpush2.bf16.msra.mxu0 %v8098
        %11313 = vmatprep.subr.bf16.mxu0 0
        %11314 = vmatpush2.bf16.msra.mxu0 %v8097
        %11315 = vmatprep.subr.bf16.mxu0 0
        %11316 = vmatpush2.bf16.msra.mxu0 %v8096
        %11317 = vmatprep.subr.bf16.mxu0 0
        %11318 = vmatpush2.bf16.msra.mxu0 %v8095
        %11319 = vmatprep.mubr.bf16.mxu0 %v2936
        %11320 = vmatmul.mubr.bf16.gmra.mxu0 %v2922
        %v11321 = vpop.f32.mrf.mxu0
        %v11322 = vadd.f32 %v11282, %v11321
        %v11323 = vpop.f32.mrf.mxu0
        %v11324 = vpop.f32.mrf.mxu0
        %v11325 = vpop.f32.mrf.mxu0
        %11326 = vdwg.mxu0
        %11327 = vmatprep.subr.bf16.mxu0 0
        %11328 = vmatpush1.bf16.msra.mxu0 %v8110
        %11329 = vmatprep.subr.bf16.mxu0 0
        %11330 = vmatpush1.bf16.msra.mxu0 %v8109
        %11331 = vmatprep.subr.bf16.mxu0 0
        %11332 = vmatpush1.bf16.msra.mxu0 %v8108
        %11333 = vmatprep.subr.bf16.mxu0 0
        %11334 = vmatpush1.bf16.msra.mxu0 %v8107
        %11335 = vmatprep.subr.bf16.mxu0 0
        %11336 = vmatpush1.bf16.msra.mxu0 %v8106
        %11337 = vmatprep.subr.bf16.mxu0 0
        %11338 = vmatpush1.bf16.msra.mxu0 %v8105
        %11339 = vmatprep.subr.bf16.mxu0 0
        %11340 = vmatpush1.bf16.msra.mxu0 %v8104
        %11341 = vmatprep.subr.bf16.mxu0 0
        %11342 = vmatpush1.bf16.msra.mxu0 %v8103
        %11343 = vmatprep.subr.bf16.mxu0 0
        %11344 = vmatpush2.bf16.msra.mxu0 %v8118
        %11345 = vmatprep.subr.bf16.mxu0 0
        %11346 = vmatpush2.bf16.msra.mxu0 %v8117
        %11347 = vmatprep.subr.bf16.mxu0 0
        %11348 = vmatpush2.bf16.msra.mxu0 %v8116
        %11349 = vmatprep.subr.bf16.mxu0 0
        %11350 = vmatpush2.bf16.msra.mxu0 %v8115
        %11351 = vmatprep.subr.bf16.mxu0 0
        %11352 = vmatpush2.bf16.msra.mxu0 %v8114
        %11353 = vmatprep.subr.bf16.mxu0 0
        %11354 = vmatpush2.bf16.msra.mxu0 %v8113
        %11355 = vmatprep.subr.bf16.mxu0 0
        %11356 = vmatpush2.bf16.msra.mxu0 %v8112
        %11357 = vmatprep.subr.bf16.mxu0 0
        %11358 = vmatpush2.bf16.msra.mxu0 %v8111
        %11359 = vmatprep.mubr.bf16.mxu0 %v2946
        %11360 = vmatmul.mubr.bf16.gmra.mxu0 %v2944
        %v11361 = vpop.f32.mrf.mxu0
        %v11362 = vadd.f32 %v11322, %v11361
        %v11363 = vpop.f32.mrf.mxu0
        %v11364 = vpop.f32.mrf.mxu0
        %v11365 = vpop.f32.mrf.mxu0
        %11366 = vdwg.mxu0
        %11367 = vmatprep.subr.bf16.mxu0 0
        %11368 = vmatpush1.bf16.msra.mxu0 %v8126
        %11369 = vmatprep.subr.bf16.mxu0 0
        %11370 = vmatpush1.bf16.msra.mxu0 %v8125
        %11371 = vmatprep.subr.bf16.mxu0 0
        %11372 = vmatpush1.bf16.msra.mxu0 %v8124
        %11373 = vmatprep.subr.bf16.mxu0 0
        %11374 = vmatpush1.bf16.msra.mxu0 %v8123
        %11375 = vmatprep.subr.bf16.mxu0 0
        %11376 = vmatpush1.bf16.msra.mxu0 %v8122
        %11377 = vmatprep.subr.bf16.mxu0 0
        %11378 = vmatpush1.bf16.msra.mxu0 %v8121
        %11379 = vmatprep.subr.bf16.mxu0 0
        %11380 = vmatpush1.bf16.msra.mxu0 %v8120
        %11381 = vmatprep.subr.bf16.mxu0 0
        %11382 = vmatpush1.bf16.msra.mxu0 %v8119
        %11383 = vmatprep.subr.bf16.mxu0 0
        %11384 = vmatpush2.bf16.msra.mxu0 %v8134
        %11385 = vmatprep.subr.bf16.mxu0 0
        %11386 = vmatpush2.bf16.msra.mxu0 %v8133
        %11387 = vmatprep.subr.bf16.mxu0 0
        %11388 = vmatpush2.bf16.msra.mxu0 %v8132
        %11389 = vmatprep.subr.bf16.mxu0 0
        %11390 = vmatpush2.bf16.msra.mxu0 %v8131
        %11391 = vmatprep.subr.bf16.mxu0 0
        %11392 = vmatpush2.bf16.msra.mxu0 %v8130
        %11393 = vmatprep.subr.bf16.mxu0 0
        %11394 = vmatpush2.bf16.msra.mxu0 %v8129
        %11395 = vmatprep.subr.bf16.mxu0 0
        %11396 = vmatpush2.bf16.msra.mxu0 %v8128
        %11397 = vmatprep.subr.bf16.mxu0 0
        %11398 = vmatpush2.bf16.msra.mxu0 %v8127
        %11399 = vmatprep.mubr.bf16.mxu0 %v2943
        %11400 = vmatmul.mubr.bf16.gmra.mxu0 %v2929
        %v11401 = vpop.f32.mrf.mxu0
        %v11402 = vadd.f32 %v11362, %v11401
        %v11403 = vpop.f32.mrf.mxu0
        %v11404 = vpop.f32.mrf.mxu0
        %v11405 = vpop.f32.mrf.mxu0
        %11406 = vdwg.mxu0
        %11407 = vmatprep.subr.bf16.mxu0 0
        %11408 = vmatpush1.bf16.msra.mxu0 %v8142
        %11409 = vmatprep.subr.bf16.mxu0 0
        %11410 = vmatpush1.bf16.msra.mxu0 %v8141
        %11411 = vmatprep.subr.bf16.mxu0 0
        %11412 = vmatpush1.bf16.msra.mxu0 %v8140
        %11413 = vmatprep.subr.bf16.mxu0 0
        %11414 = vmatpush1.bf16.msra.mxu0 %v8139
        %11415 = vmatprep.subr.bf16.mxu0 0
        %11416 = vmatpush1.bf16.msra.mxu0 %v8138
        %11417 = vmatprep.subr.bf16.mxu0 0
        %11418 = vmatpush1.bf16.msra.mxu0 %v8137
        %11419 = vmatprep.subr.bf16.mxu0 0
        %11420 = vmatpush1.bf16.msra.mxu0 %v8136
        %11421 = vmatprep.subr.bf16.mxu0 0
        %11422 = vmatpush1.bf16.msra.mxu0 %v8135
        %11423 = vmatprep.subr.bf16.mxu0 0
        %11424 = vmatpush2.bf16.msra.mxu0 %v8150
        %11425 = vmatprep.subr.bf16.mxu0 0
        %11426 = vmatpush2.bf16.msra.mxu0 %v8149
        %11427 = vmatprep.subr.bf16.mxu0 0
        %11428 = vmatpush2.bf16.msra.mxu0 %v8148
        %11429 = vmatprep.subr.bf16.mxu0 0
        %11430 = vmatpush2.bf16.msra.mxu0 %v8147
        %11431 = vmatprep.subr.bf16.mxu0 0
        %11432 = vmatpush2.bf16.msra.mxu0 %v8146
        %11433 = vmatprep.subr.bf16.mxu0 0
        %11434 = vmatpush2.bf16.msra.mxu0 %v8145
        %11435 = vmatprep.subr.bf16.mxu0 0
        %11436 = vmatpush2.bf16.msra.mxu0 %v8144
        %11437 = vmatprep.subr.bf16.mxu0 0
        %11438 = vmatpush2.bf16.msra.mxu0 %v8143
        %11439 = vmatprep.mubr.bf16.mxu0 %v2947
        %11440 = vmatmul.mubr.bf16.gmra.mxu0 %v2945
        %v11441 = vpop.f32.mrf.mxu0
        %v11442 = vadd.f32 %v11402, %v11441
        %v11443 = vpop.f32.mrf.mxu0
        %v11444 = vpop.f32.mrf.mxu0
        %v11445 = vpop.f32.mrf.mxu0
        %11446 = vdwg.mxu0
        %11447 = vmatprep.subr.bf16.mxu0 0
        %11448 = vmatpush1.bf16.msra.mxu0 %v8158
        %11449 = vmatprep.subr.bf16.mxu0 0
        %11450 = vmatpush1.bf16.msra.mxu0 %v8157
        %11451 = vmatprep.subr.bf16.mxu0 0
        %11452 = vmatpush1.bf16.msra.mxu0 %v8156
        %11453 = vmatprep.subr.bf16.mxu0 0
        %11454 = vmatpush1.bf16.msra.mxu0 %v8155
        %11455 = vmatprep.subr.bf16.mxu0 0
        %11456 = vmatpush1.bf16.msra.mxu0 %v8154
        %11457 = vmatprep.subr.bf16.mxu0 0
        %11458 = vmatpush1.bf16.msra.mxu0 %v8153
        %11459 = vmatprep.subr.bf16.mxu0 0
        %11460 = vmatpush1.bf16.msra.mxu0 %v8152
        %11461 = vmatprep.subr.bf16.mxu0 0
        %11462 = vmatpush1.bf16.msra.mxu0 %v8151
        %11463 = vmatprep.subr.bf16.mxu0 0
        %11464 = vmatpush2.bf16.msra.mxu0 %v8166
        %11465 = vmatprep.subr.bf16.mxu0 0
        %11466 = vmatpush2.bf16.msra.mxu0 %v8165
        %11467 = vmatprep.subr.bf16.mxu0 0
        %11468 = vmatpush2.bf16.msra.mxu0 %v8164
        %11469 = vmatprep.subr.bf16.mxu0 0
        %11470 = vmatpush2.bf16.msra.mxu0 %v8163
        %11471 = vmatprep.subr.bf16.mxu0 0
        %11472 = vmatpush2.bf16.msra.mxu0 %v8162
        %11473 = vmatprep.subr.bf16.mxu0 0
        %11474 = vmatpush2.bf16.msra.mxu0 %v8161
        %11475 = vmatprep.subr.bf16.mxu0 0
        %11476 = vmatpush2.bf16.msra.mxu0 %v8160
        %11477 = vmatprep.subr.bf16.mxu0 0
        %11478 = vmatpush2.bf16.msra.mxu0 %v8159
        %11479 = vmatprep.mubr.bf16.mxu0 %v2985
        %11480 = vmatmul.mubr.bf16.gmra.mxu0 %v2971
        %v11481 = vpop.f32.mrf.mxu0
        %v11482 = vadd.f32 %v11442, %v11481
        %v11483 = vpop.f32.mrf.mxu0
        %v11484 = vpop.f32.mrf.mxu0
        %v11485 = vpop.f32.mrf.mxu0
        %11486 = vdwg.mxu0
        %11487 = vmatprep.subr.bf16.mxu0 0
        %11488 = vmatpush1.bf16.msra.mxu0 %v8174
        %11489 = vmatprep.subr.bf16.mxu0 0
        %11490 = vmatpush1.bf16.msra.mxu0 %v8173
        %11491 = vmatprep.subr.bf16.mxu0 0
        %11492 = vmatpush1.bf16.msra.mxu0 %v8172
        %11493 = vmatprep.subr.bf16.mxu0 0
        %11494 = vmatpush1.bf16.msra.mxu0 %v8171
        %11495 = vmatprep.subr.bf16.mxu0 0
        %11496 = vmatpush1.bf16.msra.mxu0 %v8170
        %11497 = vmatprep.subr.bf16.mxu0 0
        %11498 = vmatpush1.bf16.msra.mxu0 %v8169
        %11499 = vmatprep.subr.bf16.mxu0 0
        %11500 = vmatpush1.bf16.msra.mxu0 %v8168
        %11501 = vmatprep.subr.bf16.mxu0 0
        %11502 = vmatpush1.bf16.msra.mxu0 %v8167
        %11503 = vmatprep.subr.bf16.mxu0 0
        %11504 = vmatpush2.bf16.msra.mxu0 %v8182
        %11505 = vmatprep.subr.bf16.mxu0 0
        %11506 = vmatpush2.bf16.msra.mxu0 %v8181
        %11507 = vmatprep.subr.bf16.mxu0 0
        %11508 = vmatpush2.bf16.msra.mxu0 %v8180
        %11509 = vmatprep.subr.bf16.mxu0 0
        %11510 = vmatpush2.bf16.msra.mxu0 %v8179
        %11511 = vmatprep.subr.bf16.mxu0 0
        %11512 = vmatpush2.bf16.msra.mxu0 %v8178
        %11513 = vmatprep.subr.bf16.mxu0 0
        %11514 = vmatpush2.bf16.msra.mxu0 %v8177
        %11515 = vmatprep.subr.bf16.mxu0 0
        %11516 = vmatpush2.bf16.msra.mxu0 %v8176
        %11517 = vmatprep.subr.bf16.mxu0 0
        %11518 = vmatpush2.bf16.msra.mxu0 %v8175
        %11519 = vmatprep.mubr.bf16.mxu0 %v2995
        %11520 = vmatmul.mubr.bf16.gmra.mxu0 %v2993
        %v11521 = vpop.f32.mrf.mxu0
        %v11522 = vadd.f32 %v11482, %v11521
        %v11523 = vpop.f32.mrf.mxu0
        %v11524 = vpop.f32.mrf.mxu0
        %v11525 = vpop.f32.mrf.mxu0
        %11526 = vdwg.mxu0
        %11527 = vmatprep.subr.bf16.mxu0 0
        %11528 = vmatpush1.bf16.msra.mxu0 %v8190
        %11529 = vmatprep.subr.bf16.mxu0 0
        %11530 = vmatpush1.bf16.msra.mxu0 %v8189
        %11531 = vmatprep.subr.bf16.mxu0 0
        %11532 = vmatpush1.bf16.msra.mxu0 %v8188
        %11533 = vmatprep.subr.bf16.mxu0 0
        %11534 = vmatpush1.bf16.msra.mxu0 %v8187
        %11535 = vmatprep.subr.bf16.mxu0 0
        %11536 = vmatpush1.bf16.msra.mxu0 %v8186
        %11537 = vmatprep.subr.bf16.mxu0 0
        %11538 = vmatpush1.bf16.msra.mxu0 %v8185
        %11539 = vmatprep.subr.bf16.mxu0 0
        %11540 = vmatpush1.bf16.msra.mxu0 %v8184
        %11541 = vmatprep.subr.bf16.mxu0 0
        %11542 = vmatpush1.bf16.msra.mxu0 %v8183
        %11543 = vmatprep.subr.bf16.mxu0 0
        %11544 = vmatpush2.bf16.msra.mxu0 %v8198
        %11545 = vmatprep.subr.bf16.mxu0 0
        %11546 = vmatpush2.bf16.msra.mxu0 %v8197
        %11547 = vmatprep.subr.bf16.mxu0 0
        %11548 = vmatpush2.bf16.msra.mxu0 %v8196
        %11549 = vmatprep.subr.bf16.mxu0 0
        %11550 = vmatpush2.bf16.msra.mxu0 %v8195
        %11551 = vmatprep.subr.bf16.mxu0 0
        %11552 = vmatpush2.bf16.msra.mxu0 %v8194
        %11553 = vmatprep.subr.bf16.mxu0 0
        %11554 = vmatpush2.bf16.msra.mxu0 %v8193
        %11555 = vmatprep.subr.bf16.mxu0 0
        %11556 = vmatpush2.bf16.msra.mxu0 %v8192
        %11557 = vmatprep.subr.bf16.mxu0 0
        %11558 = vmatpush2.bf16.msra.mxu0 %v8191
        %11559 = vmatprep.mubr.bf16.mxu0 %v2992
        %11560 = vmatmul.mubr.bf16.gmra.mxu0 %v2978
        %v11561 = vpop.f32.mrf.mxu0
        %v11562 = vadd.f32 %v11522, %v11561
        %v11563 = vpop.f32.mrf.mxu0
        %v11564 = vpop.f32.mrf.mxu0
        %v11565 = vpop.f32.mrf.mxu0
        %11566 = vdwg.mxu0
        %11567 = vmatprep.subr.bf16.mxu0 0
        %11568 = vmatpush1.bf16.msra.mxu0 %v8206
        %11569 = vmatprep.subr.bf16.mxu0 0
        %11570 = vmatpush1.bf16.msra.mxu0 %v8205
        %11571 = vmatprep.subr.bf16.mxu0 0
        %11572 = vmatpush1.bf16.msra.mxu0 %v8204
        %11573 = vmatprep.subr.bf16.mxu0 0
        %11574 = vmatpush1.bf16.msra.mxu0 %v8203
        %11575 = vmatprep.subr.bf16.mxu0 0
        %11576 = vmatpush1.bf16.msra.mxu0 %v8202
        %11577 = vmatprep.subr.bf16.mxu0 0
        %11578 = vmatpush1.bf16.msra.mxu0 %v8201
        %11579 = vmatprep.subr.bf16.mxu0 0
        %11580 = vmatpush1.bf16.msra.mxu0 %v8200
        %11581 = vmatprep.subr.bf16.mxu0 0
        %11582 = vmatpush1.bf16.msra.mxu0 %v8199
        %11583 = vmatprep.subr.bf16.mxu0 0
        %11584 = vmatpush2.bf16.msra.mxu0 %v8214
        %11585 = vmatprep.subr.bf16.mxu0 0
        %11586 = vmatpush2.bf16.msra.mxu0 %v8213
        %11587 = vmatprep.subr.bf16.mxu0 0
        %11588 = vmatpush2.bf16.msra.mxu0 %v8212
        %11589 = vmatprep.subr.bf16.mxu0 0
        %11590 = vmatpush2.bf16.msra.mxu0 %v8211
        %11591 = vmatprep.subr.bf16.mxu0 0
        %11592 = vmatpush2.bf16.msra.mxu0 %v8210
        %11593 = vmatprep.subr.bf16.mxu0 0
        %11594 = vmatpush2.bf16.msra.mxu0 %v8209
        %11595 = vmatprep.subr.bf16.mxu0 0
        %11596 = vmatpush2.bf16.msra.mxu0 %v8208
        %11597 = vmatprep.subr.bf16.mxu0 0
        %11598 = vmatpush2.bf16.msra.mxu0 %v8207
        %11599 = vmatprep.mubr.bf16.mxu0 %v2996
        %11600 = vmatmul.mubr.bf16.gmra.mxu0 %v2994
        %v11601 = vpop.f32.mrf.mxu0
        %v11602 = vadd.f32 %v11562, %v11601
        %v11603 = vpop.f32.mrf.mxu0
        %v11604 = vpop.f32.mrf.mxu0
        %v11605 = vpop.f32.mrf.mxu0
        %11606 = vdwg.mxu0
        %11607 = vmatprep.subr.bf16.mxu0 0
        %11608 = vmatpush1.bf16.msra.mxu0 %v8222
        %11609 = vmatprep.subr.bf16.mxu0 0
        %11610 = vmatpush1.bf16.msra.mxu0 %v8221
        %11611 = vmatprep.subr.bf16.mxu0 0
        %11612 = vmatpush1.bf16.msra.mxu0 %v8220
        %11613 = vmatprep.subr.bf16.mxu0 0
        %11614 = vmatpush1.bf16.msra.mxu0 %v8219
        %11615 = vmatprep.subr.bf16.mxu0 0
        %11616 = vmatpush1.bf16.msra.mxu0 %v8218
        %11617 = vmatprep.subr.bf16.mxu0 0
        %11618 = vmatpush1.bf16.msra.mxu0 %v8217
        %11619 = vmatprep.subr.bf16.mxu0 0
        %11620 = vmatpush1.bf16.msra.mxu0 %v8216
        %11621 = vmatprep.subr.bf16.mxu0 0
        %11622 = vmatpush1.bf16.msra.mxu0 %v8215
        %11623 = vmatprep.subr.bf16.mxu0 0
        %11624 = vmatpush2.bf16.msra.mxu0 %v8230
        %11625 = vmatprep.subr.bf16.mxu0 0
        %11626 = vmatpush2.bf16.msra.mxu0 %v8229
        %11627 = vmatprep.subr.bf16.mxu0 0
        %11628 = vmatpush2.bf16.msra.mxu0 %v8228
        %11629 = vmatprep.subr.bf16.mxu0 0
        %11630 = vmatpush2.bf16.msra.mxu0 %v8227
        %11631 = vmatprep.subr.bf16.mxu0 0
        %11632 = vmatpush2.bf16.msra.mxu0 %v8226
        %11633 = vmatprep.subr.bf16.mxu0 0
        %11634 = vmatpush2.bf16.msra.mxu0 %v8225
        %11635 = vmatprep.subr.bf16.mxu0 0
        %11636 = vmatpush2.bf16.msra.mxu0 %v8224
        %11637 = vmatprep.subr.bf16.mxu0 0
        %11638 = vmatpush2.bf16.msra.mxu0 %v8223
        %11639 = vmatprep.mubr.bf16.mxu0 %v3034
        %11640 = vmatmul.mubr.bf16.gmra.mxu0 %v3020
        %v11641 = vpop.f32.mrf.mxu0
        %v11642 = vadd.f32 %v11602, %v11641
        %v11643 = vpop.f32.mrf.mxu0
        %v11644 = vpop.f32.mrf.mxu0
        %v11645 = vpop.f32.mrf.mxu0
        %11646 = vdwg.mxu0
        %11647 = vmatprep.subr.bf16.mxu0 0
        %11648 = vmatpush1.bf16.msra.mxu0 %v8238
        %11649 = vmatprep.subr.bf16.mxu0 0
        %11650 = vmatpush1.bf16.msra.mxu0 %v8237
        %11651 = vmatprep.subr.bf16.mxu0 0
        %11652 = vmatpush1.bf16.msra.mxu0 %v8236
        %11653 = vmatprep.subr.bf16.mxu0 0
        %11654 = vmatpush1.bf16.msra.mxu0 %v8235
        %11655 = vmatprep.subr.bf16.mxu0 0
        %11656 = vmatpush1.bf16.msra.mxu0 %v8234
        %11657 = vmatprep.subr.bf16.mxu0 0
        %11658 = vmatpush1.bf16.msra.mxu0 %v8233
        %11659 = vmatprep.subr.bf16.mxu0 0
        %11660 = vmatpush1.bf16.msra.mxu0 %v8232
        %11661 = vmatprep.subr.bf16.mxu0 0
        %11662 = vmatpush1.bf16.msra.mxu0 %v8231
        %11663 = vmatprep.subr.bf16.mxu0 0
        %11664 = vmatpush2.bf16.msra.mxu0 %v8246
        %11665 = vmatprep.subr.bf16.mxu0 0
        %11666 = vmatpush2.bf16.msra.mxu0 %v8245
        %11667 = vmatprep.subr.bf16.mxu0 0
        %11668 = vmatpush2.bf16.msra.mxu0 %v8244
        %11669 = vmatprep.subr.bf16.mxu0 0
        %11670 = vmatpush2.bf16.msra.mxu0 %v8243
        %11671 = vmatprep.subr.bf16.mxu0 0
        %11672 = vmatpush2.bf16.msra.mxu0 %v8242
        %11673 = vmatprep.subr.bf16.mxu0 0
        %11674 = vmatpush2.bf16.msra.mxu0 %v8241
        %11675 = vmatprep.subr.bf16.mxu0 0
        %11676 = vmatpush2.bf16.msra.mxu0 %v8240
        %11677 = vmatprep.subr.bf16.mxu0 0
        %11678 = vmatpush2.bf16.msra.mxu0 %v8239
        %11679 = vmatprep.mubr.bf16.mxu0 %v3044
        %11680 = vmatmul.mubr.bf16.gmra.mxu0 %v3042
        %v11681 = vpop.f32.mrf.mxu0
        %v11682 = vadd.f32 %v11642, %v11681
        %v11683 = vpop.f32.mrf.mxu0
        %v11684 = vpop.f32.mrf.mxu0
        %v11685 = vpop.f32.mrf.mxu0
        %11686 = vdwg.mxu0
        %11687 = vmatprep.subr.bf16.mxu0 0
        %11688 = vmatpush1.bf16.msra.mxu0 %v8254
        %11689 = vmatprep.subr.bf16.mxu0 0
        %11690 = vmatpush1.bf16.msra.mxu0 %v8253
        %11691 = vmatprep.subr.bf16.mxu0 0
        %11692 = vmatpush1.bf16.msra.mxu0 %v8252
        %11693 = vmatprep.subr.bf16.mxu0 0
        %11694 = vmatpush1.bf16.msra.mxu0 %v8251
        %11695 = vmatprep.subr.bf16.mxu0 0
        %11696 = vmatpush1.bf16.msra.mxu0 %v8250
        %11697 = vmatprep.subr.bf16.mxu0 0
        %11698 = vmatpush1.bf16.msra.mxu0 %v8249
        %11699 = vmatprep.subr.bf16.mxu0 0
        %11700 = vmatpush1.bf16.msra.mxu0 %v8248
        %11701 = vmatprep.subr.bf16.mxu0 0
        %11702 = vmatpush1.bf16.msra.mxu0 %v8247
        %11703 = vmatprep.subr.bf16.mxu0 0
        %11704 = vmatpush2.bf16.msra.mxu0 %v8262
        %11705 = vmatprep.subr.bf16.mxu0 0
        %11706 = vmatpush2.bf16.msra.mxu0 %v8261
        %11707 = vmatprep.subr.bf16.mxu0 0
        %11708 = vmatpush2.bf16.msra.mxu0 %v8260
        %11709 = vmatprep.subr.bf16.mxu0 0
        %11710 = vmatpush2.bf16.msra.mxu0 %v8259
        %11711 = vmatprep.subr.bf16.mxu0 0
        %11712 = vmatpush2.bf16.msra.mxu0 %v8258
        %11713 = vmatprep.subr.bf16.mxu0 0
        %11714 = vmatpush2.bf16.msra.mxu0 %v8257
        %11715 = vmatprep.subr.bf16.mxu0 0
        %11716 = vmatpush2.bf16.msra.mxu0 %v8256
        %11717 = vmatprep.subr.bf16.mxu0 0
        %11718 = vmatpush2.bf16.msra.mxu0 %v8255
        %11719 = vmatprep.mubr.bf16.mxu0 %v3041
        %11720 = vmatmul.mubr.bf16.gmra.mxu0 %v3027
        %v11721 = vpop.f32.mrf.mxu0
        %v11722 = vadd.f32 %v11682, %v11721
        %v11723 = vpop.f32.mrf.mxu0
        %v11724 = vpop.f32.mrf.mxu0
        %v11725 = vpop.f32.mrf.mxu0
        %11726 = vdwg.mxu0
        %11727 = vmatprep.subr.bf16.mxu0 0
        %11728 = vmatpush1.bf16.msra.mxu0 %v8270
        %11729 = vmatprep.subr.bf16.mxu0 0
        %11730 = vmatpush1.bf16.msra.mxu0 %v8269
        %11731 = vmatprep.subr.bf16.mxu0 0
        %11732 = vmatpush1.bf16.msra.mxu0 %v8268
        %11733 = vmatprep.subr.bf16.mxu0 0
        %11734 = vmatpush1.bf16.msra.mxu0 %v8267
        %11735 = vmatprep.subr.bf16.mxu0 0
        %11736 = vmatpush1.bf16.msra.mxu0 %v8266
        %11737 = vmatprep.subr.bf16.mxu0 0
        %11738 = vmatpush1.bf16.msra.mxu0 %v8265
        %11739 = vmatprep.subr.bf16.mxu0 0
        %11740 = vmatpush1.bf16.msra.mxu0 %v8264
        %11741 = vmatprep.subr.bf16.mxu0 0
        %11742 = vmatpush1.bf16.msra.mxu0 %v8263
        %11743 = vmatprep.subr.bf16.mxu0 0
        %11744 = vmatpush2.bf16.msra.mxu0 %v8278
        %11745 = vmatprep.subr.bf16.mxu0 0
        %11746 = vmatpush2.bf16.msra.mxu0 %v8277
        %11747 = vmatprep.subr.bf16.mxu0 0
        %11748 = vmatpush2.bf16.msra.mxu0 %v8276
        %11749 = vmatprep.subr.bf16.mxu0 0
        %11750 = vmatpush2.bf16.msra.mxu0 %v8275
        %11751 = vmatprep.subr.bf16.mxu0 0
        %11752 = vmatpush2.bf16.msra.mxu0 %v8274
        %11753 = vmatprep.subr.bf16.mxu0 0
        %11754 = vmatpush2.bf16.msra.mxu0 %v8273
        %11755 = vmatprep.subr.bf16.mxu0 0
        %11756 = vmatpush2.bf16.msra.mxu0 %v8272
        %11757 = vmatprep.subr.bf16.mxu0 0
        %11758 = vmatpush2.bf16.msra.mxu0 %v8271
        %11759 = vmatprep.mubr.bf16.mxu0 %v3045
        %11760 = vmatmul.mubr.bf16.gmra.mxu0 %v3043
        %v11761 = vpop.f32.mrf.mxu0
        %v11762 = vadd.f32 %v11722, %v11761
        %v11763 = vpop.f32.mrf.mxu0
        %v11764 = vpop.f32.mrf.mxu0
        %v11765 = vpop.f32.mrf.mxu0
        %11766 = vdwg.mxu0
        %11767 = vmatprep.subr.bf16.mxu0 0
        %11768 = vmatpush1.bf16.msra.mxu0 %v8286
        %11769 = vmatprep.subr.bf16.mxu0 0
        %11770 = vmatpush1.bf16.msra.mxu0 %v8285
        %11771 = vmatprep.subr.bf16.mxu0 0
        %11772 = vmatpush1.bf16.msra.mxu0 %v8284
        %11773 = vmatprep.subr.bf16.mxu0 0
        %11774 = vmatpush1.bf16.msra.mxu0 %v8283
        %11775 = vmatprep.subr.bf16.mxu0 0
        %11776 = vmatpush1.bf16.msra.mxu0 %v8282
        %11777 = vmatprep.subr.bf16.mxu0 0
        %11778 = vmatpush1.bf16.msra.mxu0 %v8281
        %11779 = vmatprep.subr.bf16.mxu0 0
        %11780 = vmatpush1.bf16.msra.mxu0 %v8280
        %11781 = vmatprep.subr.bf16.mxu0 0
        %11782 = vmatpush1.bf16.msra.mxu0 %v8279
        %11783 = vmatprep.subr.bf16.mxu0 0
        %11784 = vmatpush2.bf16.msra.mxu0 %v8294
        %11785 = vmatprep.subr.bf16.mxu0 0
        %11786 = vmatpush2.bf16.msra.mxu0 %v8293
        %11787 = vmatprep.subr.bf16.mxu0 0
        %11788 = vmatpush2.bf16.msra.mxu0 %v8292
        %11789 = vmatprep.subr.bf16.mxu0 0
        %11790 = vmatpush2.bf16.msra.mxu0 %v8291
        %11791 = vmatprep.subr.bf16.mxu0 0
        %11792 = vmatpush2.bf16.msra.mxu0 %v8290
        %11793 = vmatprep.subr.bf16.mxu0 0
        %11794 = vmatpush2.bf16.msra.mxu0 %v8289
        %11795 = vmatprep.subr.bf16.mxu0 0
        %11796 = vmatpush2.bf16.msra.mxu0 %v8288
        %11797 = vmatprep.subr.bf16.mxu0 0
        %11798 = vmatpush2.bf16.msra.mxu0 %v8287
        %11799 = vmatprep.mubr.bf16.mxu0 %v3083
        %11800 = vmatmul.mubr.bf16.gmra.mxu0 %v3069
        %v11801 = vpop.f32.mrf.mxu0
        %v11802 = vadd.f32 %v11762, %v11801
        %v11803 = vpop.f32.mrf.mxu0
        %v11804 = vpop.f32.mrf.mxu0
        %v11805 = vpop.f32.mrf.mxu0
        %11806 = vdwg.mxu0
        %11807 = vmatprep.subr.bf16.mxu0 0
        %11808 = vmatpush1.bf16.msra.mxu0 %v8302
        %11809 = vmatprep.subr.bf16.mxu0 0
        %11810 = vmatpush1.bf16.msra.mxu0 %v8301
        %11811 = vmatprep.subr.bf16.mxu0 0
        %11812 = vmatpush1.bf16.msra.mxu0 %v8300
        %11813 = vmatprep.subr.bf16.mxu0 0
        %11814 = vmatpush1.bf16.msra.mxu0 %v8299
        %11815 = vmatprep.subr.bf16.mxu0 0
        %11816 = vmatpush1.bf16.msra.mxu0 %v8298
        %11817 = vmatprep.subr.bf16.mxu0 0
        %11818 = vmatpush1.bf16.msra.mxu0 %v8297
        %11819 = vmatprep.subr.bf16.mxu0 0
        %11820 = vmatpush1.bf16.msra.mxu0 %v8296
        %11821 = vmatprep.subr.bf16.mxu0 0
        %11822 = vmatpush1.bf16.msra.mxu0 %v8295
        %11823 = vmatprep.subr.bf16.mxu0 0
        %11824 = vmatpush2.bf16.msra.mxu0 %v8310
        %11825 = vmatprep.subr.bf16.mxu0 0
        %11826 = vmatpush2.bf16.msra.mxu0 %v8309
        %11827 = vmatprep.subr.bf16.mxu0 0
        %11828 = vmatpush2.bf16.msra.mxu0 %v8308
        %11829 = vmatprep.subr.bf16.mxu0 0
        %11830 = vmatpush2.bf16.msra.mxu0 %v8307
        %11831 = vmatprep.subr.bf16.mxu0 0
        %11832 = vmatpush2.bf16.msra.mxu0 %v8306
        %11833 = vmatprep.subr.bf16.mxu0 0
        %11834 = vmatpush2.bf16.msra.mxu0 %v8305
        %11835 = vmatprep.subr.bf16.mxu0 0
        %11836 = vmatpush2.bf16.msra.mxu0 %v8304
        %11837 = vmatprep.subr.bf16.mxu0 0
        %11838 = vmatpush2.bf16.msra.mxu0 %v8303
        %11839 = vmatprep.mubr.bf16.mxu0 %v3093
        %11840 = vmatmul.mubr.bf16.gmra.mxu0 %v3091
        %v11841 = vpop.f32.mrf.mxu0
        %v11842 = vadd.f32 %v11802, %v11841
        %v11843 = vpop.f32.mrf.mxu0
        %v11844 = vpop.f32.mrf.mxu0
        %v11845 = vpop.f32.mrf.mxu0
        %11846 = vdwg.mxu0
        %11847 = vmatprep.subr.bf16.mxu0 0
        %11848 = vmatpush1.bf16.msra.mxu0 %v8318
        %11849 = vmatprep.subr.bf16.mxu0 0
        %11850 = vmatpush1.bf16.msra.mxu0 %v8317
        %11851 = vmatprep.subr.bf16.mxu0 0
        %11852 = vmatpush1.bf16.msra.mxu0 %v8316
        %11853 = vmatprep.subr.bf16.mxu0 0
        %11854 = vmatpush1.bf16.msra.mxu0 %v8315
        %11855 = vmatprep.subr.bf16.mxu0 0
        %11856 = vmatpush1.bf16.msra.mxu0 %v8314
        %11857 = vmatprep.subr.bf16.mxu0 0
        %11858 = vmatpush1.bf16.msra.mxu0 %v8313
        %11859 = vmatprep.subr.bf16.mxu0 0
        %11860 = vmatpush1.bf16.msra.mxu0 %v8312
        %11861 = vmatprep.subr.bf16.mxu0 0
        %11862 = vmatpush1.bf16.msra.mxu0 %v8311
        %11863 = vmatprep.subr.bf16.mxu0 0
        %11864 = vmatpush2.bf16.msra.mxu0 %v8326
        %11865 = vmatprep.subr.bf16.mxu0 0
        %11866 = vmatpush2.bf16.msra.mxu0 %v8325
        %11867 = vmatprep.subr.bf16.mxu0 0
        %11868 = vmatpush2.bf16.msra.mxu0 %v8324
        %11869 = vmatprep.subr.bf16.mxu0 0
        %11870 = vmatpush2.bf16.msra.mxu0 %v8323
        %11871 = vmatprep.subr.bf16.mxu0 0
        %11872 = vmatpush2.bf16.msra.mxu0 %v8322
        %11873 = vmatprep.subr.bf16.mxu0 0
        %11874 = vmatpush2.bf16.msra.mxu0 %v8321
        %11875 = vmatprep.subr.bf16.mxu0 0
        %11876 = vmatpush2.bf16.msra.mxu0 %v8320
        %11877 = vmatprep.subr.bf16.mxu0 0
        %11878 = vmatpush2.bf16.msra.mxu0 %v8319
        %11879 = vmatprep.mubr.bf16.mxu0 %v3090
        %11880 = vmatmul.mubr.bf16.gmra.mxu0 %v3076
        %v11881 = vpop.f32.mrf.mxu0
        %v11882 = vadd.f32 %v11842, %v11881
        %v11883 = vpop.f32.mrf.mxu0
        %v11884 = vpop.f32.mrf.mxu0
        %v11885 = vpop.f32.mrf.mxu0
        %11886 = vdwg.mxu0
        %11887 = vmatprep.subr.bf16.mxu0 0
        %11888 = vmatpush1.bf16.msra.mxu0 %v8334
        %11889 = vmatprep.subr.bf16.mxu0 0
        %11890 = vmatpush1.bf16.msra.mxu0 %v8333
        %11891 = vmatprep.subr.bf16.mxu0 0
        %11892 = vmatpush1.bf16.msra.mxu0 %v8332
        %11893 = vmatprep.subr.bf16.mxu0 0
        %11894 = vmatpush1.bf16.msra.mxu0 %v8331
        %11895 = vmatprep.subr.bf16.mxu0 0
        %11896 = vmatpush1.bf16.msra.mxu0 %v8330
        %11897 = vmatprep.subr.bf16.mxu0 0
        %11898 = vmatpush1.bf16.msra.mxu0 %v8329
        %11899 = vmatprep.subr.bf16.mxu0 0
        %11900 = vmatpush1.bf16.msra.mxu0 %v8328
        %11901 = vmatprep.subr.bf16.mxu0 0
        %11902 = vmatpush1.bf16.msra.mxu0 %v8327
        %11903 = vmatprep.subr.bf16.mxu0 0
        %11904 = vmatpush2.bf16.msra.mxu0 %v8342
        %11905 = vmatprep.subr.bf16.mxu0 0
        %11906 = vmatpush2.bf16.msra.mxu0 %v8341
        %11907 = vmatprep.subr.bf16.mxu0 0
        %11908 = vmatpush2.bf16.msra.mxu0 %v8340
        %11909 = vmatprep.subr.bf16.mxu0 0
        %11910 = vmatpush2.bf16.msra.mxu0 %v8339
        %11911 = vmatprep.subr.bf16.mxu0 0
        %11912 = vmatpush2.bf16.msra.mxu0 %v8338
        %11913 = vmatprep.subr.bf16.mxu0 0
        %11914 = vmatpush2.bf16.msra.mxu0 %v8337
        %11915 = vmatprep.subr.bf16.mxu0 0
        %11916 = vmatpush2.bf16.msra.mxu0 %v8336
        %11917 = vmatprep.subr.bf16.mxu0 0
        %11918 = vmatpush2.bf16.msra.mxu0 %v8335
        %11919 = vmatprep.mubr.bf16.mxu0 %v3094
        %11920 = vmatmul.mubr.bf16.gmra.mxu0 %v3092
        %v11921 = vpop.f32.mrf.mxu0
        %v11922 = vadd.f32 %v11882, %v11921
        %v11923 = vpop.f32.mrf.mxu0
        %v11924 = vpop.f32.mrf.mxu0
        %v11925 = vpop.f32.mrf.mxu0
        %11926 = vdwg.mxu0
        %11927 = vst [vmem:[%s222] sm:$0x3] %v11922
        %s11928 = sand.u32 %s104, 1
        %s11929 = scalar_lea.sflag [#allocation4], %s11928
        %s11930 = sand.u32 %s104, 1
        %s11931 = smul.addr %s11930, 2
        %s11932 = scalar_lea.vmem [#allocation7], %s11931
        // Predicated region
        $region41: #{spectrogram_encoder_forward.3} parent=31 // pred_check
          %p11933 = pneg %p114
        $region42: #{spectrogram_encoder_forward.3} parent=31 // pred_check_branch
          %11935 = sbr.rel (%p11933) target = $region44
        $region43: #{spectrogram_encoder_forward.3} parent=31 // pred_region
          %s11937 = ssub.s32 32, 32
          %11938 = vsyncadd %s11929, %s11937
          %s11939 = smul.addr %s23, 32
          %s11940 = scalar_lea.hbm %s3, %s11939
          %s11942 = sshll.u32 %s11932, 4
          %s11943 = int_to_ptr.vmem [resolvable:$true] %s11942
          %11945 = dma.vmem_to_hbm [thread:$0]  %s11943, 32, %s11940, %s11929
        $region44: #{spectrogram_encoder_forward.3} parent=31 // pred_fallthru
          _
      $region32: #{spectrogram_encoder_forward.3} parent=5 // pred_fallthru
        _
      %p11946 = scmp.le.s32.totalorder 2, %s18
      // Predicated region
      $region45: #{spectrogram_encoder_forward.3} parent=5 // pred_check
        %p11947 = pneg %p11946
      $region46: #{spectrogram_encoder_forward.3} parent=5 // pred_check_branch
        %11949 = sbr.rel (%p11947) target = $region48
      $region47: #{spectrogram_encoder_forward.3} parent=5 // pred_region
        %s11950 = ssub.s32 %s18, 2
        // Predicated region
        $region49: #{spectrogram_encoder_forward.3} parent=47 // pred_check
          %p11951 = pneg %p120
        $region50: #{spectrogram_encoder_forward.3} parent=47 // pred_check_branch
          %11953 = sbr.rel (%p11951) target = $region52
        $region51: #{spectrogram_encoder_forward.3} parent=47 // pred_region
          %s11954 = sand.u32 %s105, 1
          %s11955 = scalar_lea.sflag [#allocation4], %s11954
          %s11956 = sand.u32 %s105, 1
          %s11957 = smul.addr %s11956, 2
          %s11958 = scalar_lea.vmem [#allocation7], %s11957
          %11959 = dma.done %s11955, 32
        $region52: #{spectrogram_encoder_forward.3} parent=47 // pred_fallthru
          _
      $region48: #{spectrogram_encoder_forward.3} parent=5 // pred_fallthru
        _
    $region6: #{spectrogram_encoder_forward.3} parent=1 // loop_footer
      %s22 = sadd.s32 1, %s18
    $region7: #{spectrogram_encoder_forward.3} parent=1 // loop_footer_branch
      %17 = sbr.rel target = $region3
    $region8: #{spectrogram_encoder_forward.3} parent=1 // loop_exit
      _
    %11960 = vsyncpa [#allocation3], 1
    %s11961 = scalar_lea.sflag [#allocation3], 1
    %11962 = vsyncpa %s11961, 1
    %11963 = vsyncpa [#allocation6], 1
    %s11964 = scalar_lea.sflag [#allocation6], 1
    %11965 = vsyncpa %s11964, 1
    %11966 = vsyncpa [#allocation4], 1
    %s11967 = scalar_lea.sflag [#allocation4], 1
    %11968 = vsyncpa %s11967, 1

</llo_original>
